<compile_context>
chip_gen: v6e
topology: v6e:2x2x1
jax: 0.10.0
libtpu: 0.0.40
codegen_flags: <defaults>
</compile_context>

<pallas_src>
import math
from functools import partial

import jax
import jax.numpy as jnp
from jax import lax
from jax.experimental import pallas as pl
from jax.experimental.pallas import tpu as pltpu


def _attention_block_kernel(x_ref, mwdw_ref, bdw_ref,
                            ln1g_ref, ln1b_ref,
                            wqkv_ref, bqkv_ref,
                            wproj_ref, bproj_ref,
                            ln2g_ref, ln2b_ref,
                            wfc1_ref, bfc1_ref, wfc2_ref, bfc2_ref,
                            out_ref, scr_ref, *, N, W, num_heads, eps):
    # x_ref     : (bb*N, C)   bb batch elements flattened along the sublane axis
    # mwdw_ref  : (9, N, C)   depthwise 3x3 tap weights with the zero-padding
    #                         boundary mask pre-folded (row t = ky*3 + kx)
    # bdw_ref   : (1, C)
    # ln*_refs  : (1, C)
    # wqkv_ref  : (C, 3C)     packed qkv projection (qk-scale folded into q cols)
    # bqkv_ref  : (1, 3C)
    # wproj_ref : (C, C)      output projection, gamma_1 folded
    # bproj_ref : (1, C)
    # wfc1/bfc1 : (C, hidden) / (1, hidden)
    # wfc2/bfc2 : (hidden, C) / (1, C)    gamma_2 folded
    # out_ref   : (bb*N, C)
    # scr_ref   : (bb*N, C) f32 VMEM scratch (pos-embed acc, then per-head ctx)
    BN, C = x_ref.shape
    bb = BN // N
    hd = C // num_heads

    x = x_ref[...].astype(jnp.float32)

    # ---- pos_embed: depthwise 3x3 conv (padding=1) ---------------------------
    # Each (ky,kx) tap = one sublane roll (XLU, free slot) + one FMA against the
    # host-precomputed mask*weight tensor.  One batch element (N rows) at a
    # time keeps the tap loop at ~32 live vregs (no regalloc spills).
    for b in range(bb):
        xb = x[b * N:(b + 1) * N, :]
        accb = jnp.zeros((N, C), jnp.float32)
        for t in range(9):
            ky, kx = t // 3, t % 3
            off = (ky - 1) * W + (kx - 1)
            tap = xb if off == 0 else pltpu.roll(xb, shift=(-off) % N, axis=0)
            accb = accb + tap * mwdw_ref[t]
        scr_ref[b * N:(b + 1) * N, :] = accb
    x = x + scr_ref[...] + bdw_ref[...]

    def layer_norm(v, g_ref, b_ref):
        mu = jnp.mean(v, axis=-1, keepdims=True)
        d = v - mu
        var = jnp.mean(d * d, axis=-1, keepdims=True)
        return d * lax.rsqrt(var + eps) * g_ref[...] + b_ref[...]

    # ---- attention: x = x + gamma_1 * proj(MHA(LayerNorm1(x))) ---------------
    y = layer_norm(x, ln1g_ref, ln1b_ref)
    # One packed, lane-dense projection (M = bb*N, K = C, N = 3C).
    qkv = jnp.dot(y, wqkv_ref[...], preferred_element_type=jnp.float32) + bqkv_ref[...]
    q = qkv[:, 0:C]
    k = qkv[:, C:2 * C]
    v = qkv[:, 2 * C:3 * C]
    for b in range(bb):                                  # static, unrolled
        r0 = b * N
        for h in range(num_heads):
            c0 = h * hd
            qh = q[r0:r0 + N, c0:c0 + hd]
            kh = k[r0:r0 + N, c0:c0 + hd]
            vh = v[r0:r0 + N, c0:c0 + hd]
            s = lax.dot_general(qh, kh, (((1,), (1,)), ((), ())),
                                preferred_element_type=jnp.float32)      # (N, N)
            s = s - jnp.max(s, axis=-1, keepdims=True)
            p = jnp.exp(s)
            l = jnp.sum(p, axis=-1, keepdims=True)
            # EUP reciprocal + one Newton step on the (N,1) row sums (~f32
            # exact, negligible cost); normalization applied to ctx (N, hd)
            # instead of p (N, N).
            r = pl.reciprocal(l, approx=True)
            inv = r * (2.0 - l * r)
            ctx = jnp.dot(p, vh, preferred_element_type=jnp.float32) * inv
            # Place each head's output at its lane offset so the projection
            # below is a single lane-dense K=C matmul.
            scr_ref[r0:r0 + N, c0:c0 + hd] = ctx
    attn = jnp.dot(scr_ref[...], wproj_ref[...], preferred_element_type=jnp.float32)
    x = x + attn + bproj_ref[...]

    # ---- MLP: x = x + gamma_2 * fc2(gelu(fc1(LayerNorm2(x)))) ----------------
    y2 = layer_norm(x, ln2g_ref, ln2b_ref)
    h1 = jnp.dot(y2, wfc1_ref[...], preferred_element_type=jnp.float32) + bfc1_ref[...]
    h1 = jax.nn.gelu(h1, approximate=True)   # TODO(synk): exact erf GELU
    h2 = jnp.dot(h1, wfc2_ref[...], preferred_element_type=jnp.float32) + bfc2_ref[...]
    x = x + h2

    out_ref[...] = x.astype(out_ref.dtype)


def _pick_batch_block(B):
    """Batch elements per grid step: fuse the whole batch on single-TC chips
    (v5e/v6e); keep a 2-way 'parallel' grid on dual-TC v7x so each core takes
    half the batch.  Either choice is correct on any chip."""
    try:
        kind = jax.devices()[0].device_kind.lower()
    except Exception:
        kind = ""
    if ("v7" in kind or "tpu7" in kind) and B % 2 == 0:
        return B // 2
    return B


def attention_block_forward(x, params, *, H, W, num_heads, eps=1e-5,
                            batch_block=None):
    B, N, C = x.shape
    assert N == H * W and C % num_heads == 0
    hd = C // num_heads
    hidden = params["w_fc1"].shape[1]
    scale = hd ** (-0.5)

    bb = _pick_batch_block(B) if batch_block is None else batch_block
    assert B % bb == 0
    n_blocks = B // bb
    BN = bb * N

    # Packed qkv weight (C_in, 3*C_out); out index = which*C + head*hd + d
    # (matches PyTorch's reshape(B, N, 3, num_heads, hd)).  qk-scale folded
    # into the q columns / bias.
    scale_vec = jnp.concatenate([jnp.full((C,), scale, jnp.float32),
                                 jnp.ones((2 * C,), jnp.float32)])
    wqkv = params["w_qkv"] * scale_vec[None, :]
    bqkv = (params["b_qkv"] * scale_vec).reshape(1, 3 * C)

    # Output projection with gamma_1 (layer scale) folded; fc2 with gamma_2 folded.
    wproj = params["w_proj"] * params["gamma_1"][None, :]
    bproj = (params["b_proj"] * params["gamma_1"]).reshape(1, C)
    wfc2 = params["w_fc2"] * params["gamma_2"][None, :]
    bfc2 = (params["b_fc2"] * params["gamma_2"]).reshape(1, C)

    # Depthwise 3x3 taps with the zero-padding boundary mask folded in on the
    # host: mwdw[t, r, :] = mask(t, r) * w_dw[ky, kx, :], t = ky*3 + kx.
    r = jnp.arange(N)
    h_idx = r // W
    w_idx = r % W
    taps = []
    for ky in range(3):
        for kx in range(3):
            m = ((h_idx + ky - 1 >= 0) & (h_idx + ky - 1 < H) &
                 (w_idx + kx - 1 >= 0) & (w_idx + kx - 1 < W)).astype(jnp.float32)
            taps.append(m[:, None] * params["w_dw"][ky, kx][None, :])
    mwdw = jnp.stack(taps, axis=0)                       # (9, N, C)
    bdw = params["b_dw"].reshape(1, C)

    ln1g = params["ln1_g"].reshape(1, C)
    ln1b = params["ln1_b"].reshape(1, C)
    ln2g = params["ln2_g"].reshape(1, C)
    ln2b = params["ln2_b"].reshape(1, C)
    wfc1 = params["w_fc1"]
    bfc1 = params["b_fc1"].reshape(1, hidden)

    kernel = partial(_attention_block_kernel, N=N, W=W,
                     num_heads=num_heads, eps=eps)
    f2 = lambda g: (0, 0)
    f3 = lambda g: (0, 0, 0)
    out2d = pl.pallas_call(
        kernel,
        out_shape=jax.ShapeDtypeStruct((B * N, C), x.dtype),
        grid=(n_blocks,),
        in_specs=[
            pl.BlockSpec((BN, C), lambda g: (g, 0)),     # x (batch*seq flattened)
            pl.BlockSpec((9, N, C), f3),                 # mask*w_dw taps
            pl.BlockSpec((1, C), f2),                    # b_dw
            pl.BlockSpec((1, C), f2),                    # ln1 gamma
            pl.BlockSpec((1, C), f2),                    # ln1 beta
            pl.BlockSpec((C, 3 * C), f2),                # packed qkv (scale folded)
            pl.BlockSpec((1, 3 * C), f2),                # packed qkv bias
            pl.BlockSpec((C, C), f2),                    # proj (gamma_1 folded)
            pl.BlockSpec((1, C), f2),                    # proj bias (gamma_1 folded)
            pl.BlockSpec((1, C), f2),                    # ln2 gamma
            pl.BlockSpec((1, C), f2),                    # ln2 beta
            pl.BlockSpec((C, hidden), f2),               # fc1
            pl.BlockSpec((1, hidden), f2),               # fc1 bias
            pl.BlockSpec((hidden, C), f2),               # fc2 (gamma_2 folded)
            pl.BlockSpec((1, C), f2),                    # fc2 bias (gamma_2 folded)
        ],
        out_specs=pl.BlockSpec((BN, C), lambda g: (g, 0)),
        scratch_shapes=[pltpu.VMEM((BN, C), jnp.float32)],
        compiler_params=pltpu.CompilerParams(
            dimension_semantics=("parallel",)),
    )(x.reshape(B * N, C), mwdw, bdw, ln1g, ln1b, wqkv, bqkv, wproj, bproj,
      ln2g, ln2b, wfc1, bfc1, wfc2, bfc2)
    return out2d.reshape(B, N, C)


def attention_block_reference(x, params, *, H, W, num_heads, eps=1e-5):
    """Pure-JAX mirror of the PyTorch AttentionBlock forward (stride==1, in==out)."""
    B, N, C = x.shape
    hd = C // num_heads
    scale = hd ** (-0.5)
    hp = lax.Precision.HIGHEST

    # pos_embed: depthwise 3x3 conv, padding=1 (layout-agnostic: per-channel).
    x4 = x.reshape(B, H, W, C)
    kdw = params["w_dw"].reshape(3, 3, 1, C)
    pos = lax.conv_general_dilated(
        x4, kdw, (1, 1), "SAME",
        dimension_numbers=("NHWC", "HWIO", "NHWC"),
        feature_group_count=C, precision=hp) + params["b_dw"]
    x = x + pos.reshape(B, N, C)

    def ln(v, g, b):
        mu = v.mean(-1, keepdims=True)
        var = ((v - mu) ** 2).mean(-1, keepdims=True)
        return (v - mu) / jnp.sqrt(var + eps) * g + b

    # attention
    y = ln(x, params["ln1_g"], params["ln1_b"])
    qkv = jnp.einsum("bnc,cd->bnd", y, params["w_qkv"], precision=hp) + params["b_qkv"]
    qkv = qkv.reshape(B, N, 3, num_heads, hd).transpose(2, 0, 3, 1, 4)
    q, k, v = qkv[0], qkv[1], qkv[2]                          # (B, nh, N, hd)
    attn = jnp.einsum("bhnd,bhmd->bhnm", q, k, precision=hp) * scale
    attn = jax.nn.softmax(attn, axis=-1)
    ctx = jnp.einsum("bhnm,bhmd->bhnd", attn, v, precision=hp)
    ctx = ctx.transpose(0, 2, 1, 3).reshape(B, N, C)
    attn_out = jnp.einsum("bnc,co->bno", ctx, params["w_proj"], precision=hp) + params["b_proj"]
    x = x + params["gamma_1"] * attn_out

    # MLP
    y2 = ln(x, params["ln2_g"], params["ln2_b"])
    h1 = jnp.einsum("bnc,ch->bnh", y2, params["w_fc1"], precision=hp) + params["b_fc1"]
    h1 = jax.nn.gelu(h1, approximate=True)
    h2 = jnp.einsum("bnh,hc->bnc", h1, params["w_fc2"], precision=hp) + params["b_fc2"]
    x = x + params["gamma_2"] * h2
    return x


def make_params(key, C, hidden):
    ks = jax.random.split(key, 16)
    f32 = jnp.float32
    rnd = lambda k, shape, s=0.1: s * jax.random.normal(k, shape, f32)
    return {
        "w_dw": rnd(ks[0], (3, 3, C)),
        "b_dw": rnd(ks[1], (C,)),
        "ln1_g": 1.0 + rnd(ks[2], (C,)),
        "ln1_b": rnd(ks[3], (C,)),
        "w_qkv": rnd(ks[4], (C, 3 * C)),
        "b_qkv": rnd(ks[5], (3 * C,)),
        "w_proj": rnd(ks[6], (C, C)),
        "b_proj": rnd(ks[7], (C,)),
        # layer-scale params (PyTorch init = init_values*ones = 1e-6; use O(1)
        # "trained" values so the numerics check actually exercises the path)
        "gamma_1": 1.0 + rnd(ks[8], (C,)),
        "ln2_g": 1.0 + rnd(ks[9], (C,)),
        "ln2_b": rnd(ks[10], (C,)),
        "w_fc1": rnd(ks[11], (C, hidden)),
        "b_fc1": rnd(ks[12], (hidden,)),
        "w_fc2": rnd(ks[13], (hidden, C)),
        "b_fc2": rnd(ks[14], (C,)),
        "gamma_2": 1.0 + rnd(ks[15], (C,)),
    }


if __name__ == "__main__":
    # AttentionBlock(in_features=128, out_features=128, stride=1, head_dim=32,
    #                mlp_ratio=4, qkv_bias=True, seq_l=64) -> H = W = 8, heads = 4.
    B = 2
    C = 128
    head_dim = 32
    num_heads = C // head_dim
    mlp_ratio = 4
    seq_l = 64
    H = W = int(math.isqrt(seq_l))
    N = H * W

    key = jax.random.PRNGKey(0)
    kx, kp = jax.random.split(key)
    x = jax.random.normal(kx, (B, N, C), jnp.float32)
    params = make_params(kp, C, C * mlp_ratio)

    out = attention_block_forward(x, params, H=H, W=W, num_heads=num_heads)
    out = jax.block_until_ready(out)

    ref = attention_block_reference(x, params, H=H, W=W, num_heads=num_heads)
    assert out.shape == (B, N, C)
    max_err = float(jnp.max(jnp.abs(out - ref)))
    # 2e-3: absorbs default-precision in-kernel f32 MXU passes vs the HIGHEST-
    # precision reference and the EUP-reciprocal softmax normalization.
    assert jnp.allclose(out, ref, rtol=2e-3, atol=2e-3), max_err
    print("KERNEL_OK")
</pallas_src>

<mosaic_0001>
module attributes {stable_mosaic.version = 11 : i64} {
  func.func @_attention_block_kernel(%arg0: i32, %arg1: memref<128x128xf32, #tpu.memory_space<vmem>>, %arg2: memref<9x64x128xf32, #tpu.memory_space<vmem>>, %arg3: memref<1x128xf32, #tpu.memory_space<vmem>>, %arg4: memref<1x128xf32, #tpu.memory_space<vmem>>, %arg5: memref<1x128xf32, #tpu.memory_space<vmem>>, %arg6: memref<128x384xf32, #tpu.memory_space<vmem>>, %arg7: memref<1x384xf32, #tpu.memory_space<vmem>>, %arg8: memref<128x128xf32, #tpu.memory_space<vmem>>, %arg9: memref<1x128xf32, #tpu.memory_space<vmem>>, %arg10: memref<1x128xf32, #tpu.memory_space<vmem>>, %arg11: memref<1x128xf32, #tpu.memory_space<vmem>>, %arg12: memref<128x512xf32, #tpu.memory_space<vmem>>, %arg13: memref<1x512xf32, #tpu.memory_space<vmem>>, %arg14: memref<512x128xf32, #tpu.memory_space<vmem>>, %arg15: memref<1x128xf32, #tpu.memory_space<vmem>>, %arg16: memref<128x128xf32, #tpu.memory_space<vmem>>, %arg17: memref<128x128xf32, #tpu.memory_space<vmem>>) attributes {dimension_semantics = [#tpu.dimension_semantics<parallel>], iteration_bounds = array<i64: 1>, scalar_prefetch = 0 : i64, scratch_operands = 1 : i64, tpu.core_type = #tpu.core_type<tc>, window_params = [{transform_indices = @transform_0, window_bounds = array<i64: 128, 128>}, {pipeline_mode = #tpu.pipeline_mode<synchronous>, transform_indices = @transform_1, window_bounds = array<i64: 9, 64, 128>}, {pipeline_mode = #tpu.pipeline_mode<synchronous>, transform_indices = @transform_2, window_bounds = array<i64: 1, 128>}, {pipeline_mode = #tpu.pipeline_mode<synchronous>, transform_indices = @transform_3, window_bounds = array<i64: 1, 128>}, {pipeline_mode = #tpu.pipeline_mode<synchronous>, transform_indices = @transform_4, window_bounds = array<i64: 1, 128>}, {pipeline_mode = #tpu.pipeline_mode<synchronous>, transform_indices = @transform_5, window_bounds = array<i64: 128, 384>}, {pipeline_mode = #tpu.pipeline_mode<synchronous>, transform_indices = @transform_6, window_bounds = array<i64: 1, 384>}, {pipeline_mode = #tpu.pipeline_mode<synchronous>, transform_indices = @transform_7, window_bounds = array<i64: 128, 128>}, {pipeline_mode = #tpu.pipeline_mode<synchronous>, transform_indices = @transform_8, window_bounds = array<i64: 1, 128>}, {pipeline_mode = #tpu.pipeline_mode<synchronous>, transform_indices = @transform_9, window_bounds = array<i64: 1, 128>}, {pipeline_mode = #tpu.pipeline_mode<synchronous>, transform_indices = @transform_10, window_bounds = array<i64: 1, 128>}, {pipeline_mode = #tpu.pipeline_mode<synchronous>, transform_indices = @transform_11, window_bounds = array<i64: 128, 512>}, {pipeline_mode = #tpu.pipeline_mode<synchronous>, transform_indices = @transform_12, window_bounds = array<i64: 1, 512>}, {pipeline_mode = #tpu.pipeline_mode<synchronous>, transform_indices = @transform_13, window_bounds = array<i64: 512, 128>}, {pipeline_mode = #tpu.pipeline_mode<synchronous>, transform_indices = @transform_14, window_bounds = array<i64: 1, 128>}, {transform_indices = @transform_15, window_bounds = array<i64: 128, 128>}]} {
    %c0 = arith.constant 0 : index
    %c0_0 = arith.constant 0 : index
    %0 = vector.load %arg1[%c0, %c0_0] : memref<128x128xf32, #tpu.memory_space<vmem>>, vector<128x128xf32>
    %1 = vector.extract_strided_slice %0 {offsets = [0, 0], sizes = [64, 128], strides = [1, 1]} : vector<128x128xf32> to vector<64x128xf32>
    %cst = arith.constant 0.000000e+00 : f32
    %2 = vector.broadcast %cst : f32 to vector<64x128xf32>
    %c9_i32 = arith.constant 9 : i32
    %3 = tpu.dynamic_rotate %1 by %c9_i32 dim 0 : vector<64x128xf32>, i32 -> vector<64x128xf32>
    %c0_1 = arith.constant 0 : index
    %c0_2 = arith.constant 0 : index
    %c0_3 = arith.constant 0 : index
    %4 = vector.load %arg2[%c0_1, %c0_2, %c0_3] : memref<9x64x128xf32, #tpu.memory_space<vmem>>, vector<1x64x128xf32>
    %5 = vector.shape_cast %4 : vector<1x64x128xf32> to vector<64x128xf32>
    %6 = arith.mulf %3, %5 : vector<64x128xf32>
    %7 = arith.addf %2, %6 : vector<64x128xf32>
    %c8_i32 = arith.constant 8 : i32
    %8 = tpu.dynamic_rotate %1 by %c8_i32 dim 0 : vector<64x128xf32>, i32 -> vector<64x128xf32>
    %c1 = arith.constant 1 : index
    %c0_4 = arith.constant 0 : index
    %c0_5 = arith.constant 0 : index
    %9 = vector.load %arg2[%c1, %c0_4, %c0_5] : memref<9x64x128xf32, #tpu.memory_space<vmem>>, vector<1x64x128xf32>
    %10 = vector.shape_cast %9 : vector<1x64x128xf32> to vector<64x128xf32>
    %11 = arith.mulf %8, %10 : vector<64x128xf32>
    %12 = arith.addf %7, %11 : vector<64x128xf32>
    %c7_i32 = arith.constant 7 : i32
    %13 = tpu.dynamic_rotate %1 by %c7_i32 dim 0 : vector<64x128xf32>, i32 -> vector<64x128xf32>
    %c2 = arith.constant 2 : index
    %c0_6 = arith.constant 0 : index
    %c0_7 = arith.constant 0 : index
    %14 = vector.load %arg2[%c2, %c0_6, %c0_7] : memref<9x64x128xf32, #tpu.memory_space<vmem>>, vector<1x64x128xf32>
    %15 = vector.shape_cast %14 : vector<1x64x128xf32> to vector<64x128xf32>
    %16 = arith.mulf %13, %15 : vector<64x128xf32>
    %17 = arith.addf %12, %16 : vector<64x128xf32>
    %c1_i32 = arith.constant 1 : i32
    %18 = tpu.dynamic_rotate %1 by %c1_i32 dim 0 : vector<64x128xf32>, i32 -> vector<64x128xf32>
    %c3 = arith.constant 3 : index
    %c0_8 = arith.constant 0 : index
    %c0_9 = arith.constant 0 : index
    %19 = vector.load %arg2[%c3, %c0_8, %c0_9] : memref<9x64x128xf32, #tpu.memory_space<vmem>>, vector<1x64x128xf32>
    %20 = vector.shape_cast %19 : vector<1x64x128xf32> to vector<64x128xf32>
    %21 = arith.mulf %18, %20 : vector<64x128xf32>
    %22 = arith.addf %17, %21 : vector<64x128xf32>
    %c4 = arith.constant 4 : index
    %c0_10 = arith.constant 0 : index
    %c0_11 = arith.constant 0 : index
    %23 = vector.load %arg2[%c4, %c0_10, %c0_11] : memref<9x64x128xf32, #tpu.memory_space<vmem>>, vector<1x64x128xf32>
    %24 = vector.shape_cast %23 : vector<1x64x128xf32> to vector<64x128xf32>
    %25 = arith.mulf %1, %24 : vector<64x128xf32>
    %26 = arith.addf %22, %25 : vector<64x128xf32>
    %c63_i32 = arith.constant 63 : i32
    %27 = tpu.dynamic_rotate %1 by %c63_i32 dim 0 : vector<64x128xf32>, i32 -> vector<64x128xf32>
    %c5 = arith.constant 5 : index
    %c0_12 = arith.constant 0 : index
    %c0_13 = arith.constant 0 : index
    %28 = vector.load %arg2[%c5, %c0_12, %c0_13] : memref<9x64x128xf32, #tpu.memory_space<vmem>>, vector<1x64x128xf32>
    %29 = vector.shape_cast %28 : vector<1x64x128xf32> to vector<64x128xf32>
    %30 = arith.mulf %27, %29 : vector<64x128xf32>
    %31 = arith.addf %26, %30 : vector<64x128xf32>
    %c57_i32 = arith.constant 57 : i32
    %32 = tpu.dynamic_rotate %1 by %c57_i32 dim 0 : vector<64x128xf32>, i32 -> vector<64x128xf32>
    %c6 = arith.constant 6 : index
    %c0_14 = arith.constant 0 : index
    %c0_15 = arith.constant 0 : index
    %33 = vector.load %arg2[%c6, %c0_14, %c0_15] : memref<9x64x128xf32, #tpu.memory_space<vmem>>, vector<1x64x128xf32>
    %34 = vector.shape_cast %33 : vector<1x64x128xf32> to vector<64x128xf32>
    %35 = arith.mulf %32, %34 : vector<64x128xf32>
    %36 = arith.addf %31, %35 : vector<64x128xf32>
    %c56_i32 = arith.constant 56 : i32
    %37 = tpu.dynamic_rotate %1 by %c56_i32 dim 0 : vector<64x128xf32>, i32 -> vector<64x128xf32>
    %c7 = arith.constant 7 : index
    %c0_16 = arith.constant 0 : index
    %c0_17 = arith.constant 0 : index
    %38 = vector.load %arg2[%c7, %c0_16, %c0_17] : memref<9x64x128xf32, #tpu.memory_space<vmem>>, vector<1x64x128xf32>
    %39 = vector.shape_cast %38 : vector<1x64x128xf32> to vector<64x128xf32>
    %40 = arith.mulf %37, %39 : vector<64x128xf32>
    %41 = arith.addf %36, %40 : vector<64x128xf32>
    %c55_i32 = arith.constant 55 : i32
    %42 = tpu.dynamic_rotate %1 by %c55_i32 dim 0 : vector<64x128xf32>, i32 -> vector<64x128xf32>
    %c8 = arith.constant 8 : index
    %c0_18 = arith.constant 0 : index
    %c0_19 = arith.constant 0 : index
    %43 = vector.load %arg2[%c8, %c0_18, %c0_19] : memref<9x64x128xf32, #tpu.memory_space<vmem>>, vector<1x64x128xf32>
    %44 = vector.shape_cast %43 : vector<1x64x128xf32> to vector<64x128xf32>
    %45 = arith.mulf %42, %44 : vector<64x128xf32>
    %46 = arith.addf %41, %45 : vector<64x128xf32>
    %c0_20 = arith.constant 0 : index
    %c0_21 = arith.constant 0 : index
    %47 = vector.load %arg17[%c0_20, %c0_21] : memref<128x128xf32, #tpu.memory_space<vmem>>, vector<64x128xf32>
    tpu.vector_store %arg17[%c0_20, %c0_21], %46 {strides = array<i32>} : memref<128x128xf32, #tpu.memory_space<vmem>>, vector<64x128xf32>,
    %48 = vector.extract_strided_slice %0 {offsets = [64, 0], sizes = [64, 128], strides = [1, 1]} : vector<128x128xf32> to vector<64x128xf32>
    %cst_22 = arith.constant 0.000000e+00 : f32
    %49 = vector.broadcast %cst_22 : f32 to vector<64x128xf32>
    %c9_i32_23 = arith.constant 9 : i32
    %50 = tpu.dynamic_rotate %48 by %c9_i32_23 dim 0 : vector<64x128xf32>, i32 -> vector<64x128xf32>
    %c0_24 = arith.constant 0 : index
    %c0_25 = arith.constant 0 : index
    %c0_26 = arith.constant 0 : index
    %51 = vector.load %arg2[%c0_24, %c0_25, %c0_26] : memref<9x64x128xf32, #tpu.memory_space<vmem>>, vector<1x64x128xf32>
    %52 = vector.shape_cast %51 : vector<1x64x128xf32> to vector<64x128xf32>
    %53 = arith.mulf %50, %52 : vector<64x128xf32>
    %54 = arith.addf %49, %53 : vector<64x128xf32>
    %c8_i32_27 = arith.constant 8 : i32
    %55 = tpu.dynamic_rotate %48 by %c8_i32_27 dim 0 : vector<64x128xf32>, i32 -> vector<64x128xf32>
    %c1_28 = arith.constant 1 : index
    %c0_29 = arith.constant 0 : index
    %c0_30 = arith.constant 0 : index
    %56 = vector.load %arg2[%c1_28, %c0_29, %c0_30] : memref<9x64x128xf32, #tpu.memory_space<vmem>>, vector<1x64x128xf32>
    %57 = vector.shape_cast %56 : vector<1x64x128xf32> to vector<64x128xf32>
    %58 = arith.mulf %55, %57 : vector<64x128xf32>
    %59 = arith.addf %54, %58 : vector<64x128xf32>
    %c7_i32_31 = arith.constant 7 : i32
    %60 = tpu.dynamic_rotate %48 by %c7_i32_31 dim 0 : vector<64x128xf32>, i32 -> vector<64x128xf32>
    %c2_32 = arith.constant 2 : index
    %c0_33 = arith.constant 0 : index
    %c0_34 = arith.constant 0 : index
    %61 = vector.load %arg2[%c2_32, %c0_33, %c0_34] : memref<9x64x128xf32, #tpu.memory_space<vmem>>, vector<1x64x128xf32>
    %62 = vector.shape_cast %61 : vector<1x64x128xf32> to vector<64x128xf32>
    %63 = arith.mulf %60, %62 : vector<64x128xf32>
    %64 = arith.addf %59, %63 : vector<64x128xf32>
    %c1_i32_35 = arith.constant 1 : i32
    %65 = tpu.dynamic_rotate %48 by %c1_i32_35 dim 0 : vector<64x128xf32>, i32 -> vector<64x128xf32>
    %c3_36 = arith.constant 3 : index
    %c0_37 = arith.constant 0 : index
    %c0_38 = arith.constant 0 : index
    %66 = vector.load %arg2[%c3_36, %c0_37, %c0_38] : memref<9x64x128xf32, #tpu.memory_space<vmem>>, vector<1x64x128xf32>
    %67 = vector.shape_cast %66 : vector<1x64x128xf32> to vector<64x128xf32>
    %68 = arith.mulf %65, %67 : vector<64x128xf32>
    %69 = arith.addf %64, %68 : vector<64x128xf32>
    %c4_39 = arith.constant 4 : index
    %c0_40 = arith.constant 0 : index
    %c0_41 = arith.constant 0 : index
    %70 = vector.load %arg2[%c4_39, %c0_40, %c0_41] : memref<9x64x128xf32, #tpu.memory_space<vmem>>, vector<1x64x128xf32>
    %71 = vector.shape_cast %70 : vector<1x64x128xf32> to vector<64x128xf32>
    %72 = arith.mulf %48, %71 : vector<64x128xf32>
    %73 = arith.addf %69, %72 : vector<64x128xf32>
    %c63_i32_42 = arith.constant 63 : i32
    %74 = tpu.dynamic_rotate %48 by %c63_i32_42 dim 0 : vector<64x128xf32>, i32 -> vector<64x128xf32>
    %c5_43 = arith.constant 5 : index
    %c0_44 = arith.constant 0 : index
    %c0_45 = arith.constant 0 : index
    %75 = vector.load %arg2[%c5_43, %c0_44, %c0_45] : memref<9x64x128xf32, #tpu.memory_space<vmem>>, vector<1x64x128xf32>
    %76 = vector.shape_cast %75 : vector<1x64x128xf32> to vector<64x128xf32>
    %77 = arith.mulf %74, %76 : vector<64x128xf32>
    %78 = arith.addf %73, %77 : vector<64x128xf32>
    %c57_i32_46 = arith.constant 57 : i32
    %79 = tpu.dynamic_rotate %48 by %c57_i32_46 dim 0 : vector<64x128xf32>, i32 -> vector<64x128xf32>
    %c6_47 = arith.constant 6 : index
    %c0_48 = arith.constant 0 : index
    %c0_49 = arith.constant 0 : index
    %80 = vector.load %arg2[%c6_47, %c0_48, %c0_49] : memref<9x64x128xf32, #tpu.memory_space<vmem>>, vector<1x64x128xf32>
    %81 = vector.shape_cast %80 : vector<1x64x128xf32> to vector<64x128xf32>
    %82 = arith.mulf %79, %81 : vector<64x128xf32>
    %83 = arith.addf %78, %82 : vector<64x128xf32>
    %c56_i32_50 = arith.constant 56 : i32
    %84 = tpu.dynamic_rotate %48 by %c56_i32_50 dim 0 : vector<64x128xf32>, i32 -> vector<64x128xf32>
    %c7_51 = arith.constant 7 : index
    %c0_52 = arith.constant 0 : index
    %c0_53 = arith.constant 0 : index
    %85 = vector.load %arg2[%c7_51, %c0_52, %c0_53] : memref<9x64x128xf32, #tpu.memory_space<vmem>>, vector<1x64x128xf32>
    %86 = vector.shape_cast %85 : vector<1x64x128xf32> to vector<64x128xf32>
    %87 = arith.mulf %84, %86 : vector<64x128xf32>
    %88 = arith.addf %83, %87 : vector<64x128xf32>
    %c55_i32_54 = arith.constant 55 : i32
    %89 = tpu.dynamic_rotate %48 by %c55_i32_54 dim 0 : vector<64x128xf32>, i32 -> vector<64x128xf32>
    %c8_55 = arith.constant 8 : index
    %c0_56 = arith.constant 0 : index
    %c0_57 = arith.constant 0 : index
    %90 = vector.load %arg2[%c8_55, %c0_56, %c0_57] : memref<9x64x128xf32, #tpu.memory_space<vmem>>, vector<1x64x128xf32>
    %91 = vector.shape_cast %90 : vector<1x64x128xf32> to vector<64x128xf32>
    %92 = arith.mulf %89, %91 : vector<64x128xf32>
    %93 = arith.addf %88, %92 : vector<64x128xf32>
    %c64 = arith.constant 64 : index
    %c0_58 = arith.constant 0 : index
    %94 = vector.load %arg17[%c64, %c0_58] : memref<128x128xf32, #tpu.memory_space<vmem>>, vector<64x128xf32>
    tpu.vector_store %arg17[%c64, %c0_58], %93 {strides = array<i32>} : memref<128x128xf32, #tpu.memory_space<vmem>>, vector<64x128xf32>,
    %c0_59 = arith.constant 0 : index
    %c0_60 = arith.constant 0 : index
    %95 = vector.load %arg17[%c0_59, %c0_60] : memref<128x128xf32, #tpu.memory_space<vmem>>, vector<128x128xf32>
    %96 = arith.addf %0, %95 : vector<128x128xf32>
    %c0_61 = arith.constant 0 : index
    %c0_62 = arith.constant 0 : index
    %97 = vector.load %arg3[%c0_61, %c0_62] : memref<1x128xf32, #tpu.memory_space<vmem>>, vector<1x128xf32>
    %98 = vector.broadcast %97 : vector<1x128xf32> to vector<128x128xf32>
    %99 = arith.addf %96, %98 : vector<128x128xf32>
    %cst_63 = arith.constant dense<0.000000e+00> : vector<128xf32>
    %100 = vector.multi_reduction <add>, %99, %cst_63 [1] : vector<128x128xf32> to vector<128xf32>
    %101 = vector.shape_cast %100 : vector<128xf32> to vector<128x1xf32>
    %cst_64 = arith.constant 1.280000e+02 : f32
    %102 = vector.broadcast %cst_64 : f32 to vector<128x1xf32>
    %103 = arith.divf %101, %102 : vector<128x1xf32>
    %104 = vector.broadcast %103 : vector<128x1xf32> to vector<128x128xf32>
    %105 = arith.subf %99, %104 : vector<128x128xf32>
    %106 = arith.mulf %105, %105 : vector<128x128xf32>
    %cst_65 = arith.constant dense<0.000000e+00> : vector<128xf32>
    %107 = vector.multi_reduction <add>, %106, %cst_65 [1] : vector<128x128xf32> to vector<128xf32>
    %108 = vector.shape_cast %107 : vector<128xf32> to vector<128x1xf32>
    %cst_66 = arith.constant 1.280000e+02 : f32
    %109 = vector.broadcast %cst_66 : f32 to vector<128x1xf32>
    %110 = arith.divf %108, %109 : vector<128x1xf32>
    %cst_67 = arith.constant 9.99999974E-6 : f32
    %111 = vector.broadcast %cst_67 : f32 to vector<128x1xf32>
    %112 = arith.addf %110, %111 : vector<128x1xf32>
    %113 = math.rsqrt %112 : vector<128x1xf32>
    %114 = vector.broadcast %113 : vector<128x1xf32> to vector<128x128xf32>
    %115 = arith.mulf %105, %114 : vector<128x128xf32>
    %c0_68 = arith.constant 0 : index
    %c0_69 = arith.constant 0 : index
    %116 = vector.load %arg4[%c0_68, %c0_69] : memref<1x128xf32, #tpu.memory_space<vmem>>, vector<1x128xf32>
    %117 = vector.broadcast %116 : vector<1x128xf32> to vector<128x128xf32>
    %118 = arith.mulf %115, %117 : vector<128x128xf32>
    %c0_70 = arith.constant 0 : index
    %c0_71 = arith.constant 0 : index
    %119 = vector.load %arg5[%c0_70, %c0_71] : memref<1x128xf32, #tpu.memory_space<vmem>>, vector<1x128xf32>
    %120 = vector.broadcast %119 : vector<1x128xf32> to vector<128x128xf32>
    %121 = arith.addf %118, %120 : vector<128x128xf32>
    %c0_72 = arith.constant 0 : index
    %c0_73 = arith.constant 0 : index
    %122 = vector.load %arg6[%c0_72, %c0_73] : memref<128x384xf32, #tpu.memory_space<vmem>>, vector<128x384xf32>
    %cst_74 = arith.constant dense<0.000000e+00> : vector<128x384xf32>
    %123 = tpu.matmul %121, %122, %cst_74 {dimension_numbers = #tpu.dot_dimension_numbers<[1], [0], [0], [1], [0, 0, 1, 1], [], []>} : vector<128x128xf32>, vector<128x384xf32>, vector<128x384xf32> -> vector<128x384xf32>
    %c0_75 = arith.constant 0 : index
    %c0_76 = arith.constant 0 : index
    %124 = vector.load %arg7[%c0_75, %c0_76] : memref<1x384xf32, #tpu.memory_space<vmem>>, vector<1x384xf32>
    %125 = vector.broadcast %124 : vector<1x384xf32> to vector<128x384xf32>
    %126 = arith.addf %123, %125 : vector<128x384xf32>
    %127 = vector.extract_strided_slice %126 {offsets = [0, 0], sizes = [128, 128], strides = [1, 1]} : vector<128x384xf32> to vector<128x128xf32>
    %128 = vector.extract_strided_slice %126 {offsets = [0, 128], sizes = [128, 128], strides = [1, 1]} : vector<128x384xf32> to vector<128x128xf32>
    %129 = vector.extract_strided_slice %126 {offsets = [0, 256], sizes = [128, 128], strides = [1, 1]} : vector<128x384xf32> to vector<128x128xf32>
    %130 = vector.extract_strided_slice %127 {offsets = [0, 0], sizes = [64, 32], strides = [1, 1]} : vector<128x128xf32> to vector<64x32xf32>
    %131 = vector.extract_strided_slice %128 {offsets = [0, 0], sizes = [64, 32], strides = [1, 1]} : vector<128x128xf32> to vector<64x32xf32>
    %132 = vector.extract_strided_slice %129 {offsets = [0, 0], sizes = [64, 32], strides = [1, 1]} : vector<128x128xf32> to vector<64x32xf32>
    %cst_77 = arith.constant dense<0.000000e+00> : vector<64x64xf32>
    %133 = tpu.matmul %130, %131, %cst_77 {dimension_numbers = #tpu.dot_dimension_numbers<[1], [1], [0], [0], [0, 0, 1, 0], [], []>} : vector<64x32xf32>, vector<64x32xf32>, vector<64x64xf32> -> vector<64x64xf32>
    %cst_78 = arith.constant dense<0xFF800000> : vector<64xf32>
    %134 = vector.multi_reduction <maximumf>, %133, %cst_78 [1] : vector<64x64xf32> to vector<64xf32>
    %135 = vector.shape_cast %134 : vector<64xf32> to vector<64x1xf32>
    %136 = vector.broadcast %135 : vector<64x1xf32> to vector<64x64xf32>
    %137 = arith.subf %133, %136 : vector<64x64xf32>
    %138 = math.exp %137 : vector<64x64xf32>
    %cst_79 = arith.constant dense<0.000000e+00> : vector<64xf32>
    %139 = vector.multi_reduction <add>, %138, %cst_79 [1] : vector<64x64xf32> to vector<64xf32>
    %140 = vector.shape_cast %139 : vector<64xf32> to vector<64x1xf32>
    %141 = tpu.reciprocal %140 {approx = true} : vector<64x1xf32> -> vector<64x1xf32>
    %142 = arith.mulf %140, %141 : vector<64x1xf32>
    %cst_80 = arith.constant 2.000000e+00 : f32
    %143 = vector.broadcast %cst_80 : f32 to vector<64x1xf32>
    %144 = arith.subf %143, %142 : vector<64x1xf32>
    %145 = arith.mulf %141, %144 : vector<64x1xf32>
    %cst_81 = arith.constant dense<0.000000e+00> : vector<64x32xf32>
    %146 = tpu.matmul %138, %132, %cst_81 {dimension_numbers = #tpu.dot_dimension_numbers<[1], [0], [0], [1], [0, 0, 1, 1], [], []>} : vector<64x64xf32>, vector<64x32xf32>, vector<64x32xf32> -> vector<64x32xf32>
    %147 = vector.broadcast %145 : vector<64x1xf32> to vector<64x32xf32>
    %148 = arith.mulf %146, %147 : vector<64x32xf32>
    %c0_82 = arith.constant 0 : index
    %c0_83 = arith.constant 0 : index
    %149 = vector.load %arg17[%c0_82, %c0_83] : memref<128x128xf32, #tpu.memory_space<vmem>>, vector<64x32xf32>
    tpu.vector_store %arg17[%c0_82, %c0_83], %148 {strides = array<i32>} : memref<128x128xf32, #tpu.memory_space<vmem>>, vector<64x32xf32>,
    %150 = vector.extract_strided_slice %127 {offsets = [0, 32], sizes = [64, 32], strides = [1, 1]} : vector<128x128xf32> to vector<64x32xf32>
    %151 = vector.extract_strided_slice %128 {offsets = [0, 32], sizes = [64, 32], strides = [1, 1]} : vector<128x128xf32> to vector<64x32xf32>
    %152 = vector.extract_strided_slice %129 {offsets = [0, 32], sizes = [64, 32], strides = [1, 1]} : vector<128x128xf32> to vector<64x32xf32>
    %cst_84 = arith.constant dense<0.000000e+00> : vector<64x64xf32>
    %153 = tpu.matmul %150, %151, %cst_84 {dimension_numbers = #tpu.dot_dimension_numbers<[1], [1], [0], [0], [0, 0, 1, 0], [], []>} : vector<64x32xf32>, vector<64x32xf32>, vector<64x64xf32> -> vector<64x64xf32>
    %cst_85 = arith.constant dense<0xFF800000> : vector<64xf32>
    %154 = vector.multi_reduction <maximumf>, %153, %cst_85 [1] : vector<64x64xf32> to vector<64xf32>
    %155 = vector.shape_cast %154 : vector<64xf32> to vector<64x1xf32>
    %156 = vector.broadcast %155 : vector<64x1xf32> to vector<64x64xf32>
    %157 = arith.subf %153, %156 : vector<64x64xf32>
    %158 = math.exp %157 : vector<64x64xf32>
    %cst_86 = arith.constant dense<0.000000e+00> : vector<64xf32>
    %159 = vector.multi_reduction <add>, %158, %cst_86 [1] : vector<64x64xf32> to vector<64xf32>
    %160 = vector.shape_cast %159 : vector<64xf32> to vector<64x1xf32>
    %161 = tpu.reciprocal %160 {approx = true} : vector<64x1xf32> -> vector<64x1xf32>
    %162 = arith.mulf %160, %161 : vector<64x1xf32>
    %cst_87 = arith.constant 2.000000e+00 : f32
    %163 = vector.broadcast %cst_87 : f32 to vector<64x1xf32>
    %164 = arith.subf %163, %162 : vector<64x1xf32>
    %165 = arith.mulf %161, %164 : vector<64x1xf32>
    %cst_88 = arith.constant dense<0.000000e+00> : vector<64x32xf32>
    %166 = tpu.matmul %158, %152, %cst_88 {dimension_numbers = #tpu.dot_dimension_numbers<[1], [0], [0], [1], [0, 0, 1, 1], [], []>} : vector<64x64xf32>, vector<64x32xf32>, vector<64x32xf32> -> vector<64x32xf32>
    %167 = vector.broadcast %165 : vector<64x1xf32> to vector<64x32xf32>
    %168 = arith.mulf %166, %167 : vector<64x32xf32>
    %c0_89 = arith.constant 0 : index
    %c32 = arith.constant 32 : index
    %169 = vector.load %arg17[%c0_89, %c32] : memref<128x128xf32, #tpu.memory_space<vmem>>, vector<64x32xf32>
    tpu.vector_store %arg17[%c0_89, %c32], %168 {strides = array<i32>} : memref<128x128xf32, #tpu.memory_space<vmem>>, vector<64x32xf32>,
    %170 = vector.extract_strided_slice %127 {offsets = [0, 64], sizes = [64, 32], strides = [1, 1]} : vector<128x128xf32> to vector<64x32xf32>
    %171 = vector.extract_strided_slice %128 {offsets = [0, 64], sizes = [64, 32], strides = [1, 1]} : vector<128x128xf32> to vector<64x32xf32>
    %172 = vector.extract_strided_slice %129 {offsets = [0, 64], sizes = [64, 32], strides = [1, 1]} : vector<128x128xf32> to vector<64x32xf32>
    %cst_90 = arith.constant dense<0.000000e+00> : vector<64x64xf32>
    %173 = tpu.matmul %170, %171, %cst_90 {dimension_numbers = #tpu.dot_dimension_numbers<[1], [1], [0], [0], [0, 0, 1, 0], [], []>} : vector<64x32xf32>, vector<64x32xf32>, vector<64x64xf32> -> vector<64x64xf32>
    %cst_91 = arith.constant dense<0xFF800000> : vector<64xf32>
    %174 = vector.multi_reduction <maximumf>, %173, %cst_91 [1] : vector<64x64xf32> to vector<64xf32>
    %175 = vector.shape_cast %174 : vector<64xf32> to vector<64x1xf32>
    %176 = vector.broadcast %175 : vector<64x1xf32> to vector<64x64xf32>
    %177 = arith.subf %173, %176 : vector<64x64xf32>
    %178 = math.exp %177 : vector<64x64xf32>
    %cst_92 = arith.constant dense<0.000000e+00> : vector<64xf32>
    %179 = vector.multi_reduction <add>, %178, %cst_92 [1] : vector<64x64xf32> to vector<64xf32>
    %180 = vector.shape_cast %179 : vector<64xf32> to vector<64x1xf32>
    %181 = tpu.reciprocal %180 {approx = true} : vector<64x1xf32> -> vector<64x1xf32>
    %182 = arith.mulf %180, %181 : vector<64x1xf32>
    %cst_93 = arith.constant 2.000000e+00 : f32
    %183 = vector.broadcast %cst_93 : f32 to vector<64x1xf32>
    %184 = arith.subf %183, %182 : vector<64x1xf32>
    %185 = arith.mulf %181, %184 : vector<64x1xf32>
    %cst_94 = arith.constant dense<0.000000e+00> : vector<64x32xf32>
    %186 = tpu.matmul %178, %172, %cst_94 {dimension_numbers = #tpu.dot_dimension_numbers<[1], [0], [0], [1], [0, 0, 1, 1], [], []>} : vector<64x64xf32>, vector<64x32xf32>, vector<64x32xf32> -> vector<64x32xf32>
    %187 = vector.broadcast %185 : vector<64x1xf32> to vector<64x32xf32>
    %188 = arith.mulf %186, %187 : vector<64x32xf32>
    %c0_95 = arith.constant 0 : index
    %c64_96 = arith.constant 64 : index
    %189 = vector.load %arg17[%c0_95, %c64_96] : memref<128x128xf32, #tpu.memory_space<vmem>>, vector<64x32xf32>
    tpu.vector_store %arg17[%c0_95, %c64_96], %188 {strides = array<i32>} : memref<128x128xf32, #tpu.memory_space<vmem>>, vector<64x32xf32>,
    %190 = vector.extract_strided_slice %127 {offsets = [0, 96], sizes = [64, 32], strides = [1, 1]} : vector<128x128xf32> to vector<64x32xf32>
    %191 = vector.extract_strided_slice %128 {offsets = [0, 96], sizes = [64, 32], strides = [1, 1]} : vector<128x128xf32> to vector<64x32xf32>
    %192 = vector.extract_strided_slice %129 {offsets = [0, 96], sizes = [64, 32], strides = [1, 1]} : vector<128x128xf32> to vector<64x32xf32>
    %cst_97 = arith.constant dense<0.000000e+00> : vector<64x64xf32>
    %193 = tpu.matmul %190, %191, %cst_97 {dimension_numbers = #tpu.dot_dimension_numbers<[1], [1], [0], [0], [0, 0, 1, 0], [], []>} : vector<64x32xf32>, vector<64x32xf32>, vector<64x64xf32> -> vector<64x64xf32>
    %cst_98 = arith.constant dense<0xFF800000> : vector<64xf32>
    %194 = vector.multi_reduction <maximumf>, %193, %cst_98 [1] : vector<64x64xf32> to vector<64xf32>
    %195 = vector.shape_cast %194 : vector<64xf32> to vector<64x1xf32>
    %196 = vector.broadcast %195 : vector<64x1xf32> to vector<64x64xf32>
    %197 = arith.subf %193, %196 : vector<64x64xf32>
    %198 = math.exp %197 : vector<64x64xf32>
    %cst_99 = arith.constant dense<0.000000e+00> : vector<64xf32>
    %199 = vector.multi_reduction <add>, %198, %cst_99 [1] : vector<64x64xf32> to vector<64xf32>
    %200 = vector.shape_cast %199 : vector<64xf32> to vector<64x1xf32>
    %201 = tpu.reciprocal %200 {approx = true} : vector<64x1xf32> -> vector<64x1xf32>
    %202 = arith.mulf %200, %201 : vector<64x1xf32>
    %cst_100 = arith.constant 2.000000e+00 : f32
    %203 = vector.broadcast %cst_100 : f32 to vector<64x1xf32>
    %204 = arith.subf %203, %202 : vector<64x1xf32>
    %205 = arith.mulf %201, %204 : vector<64x1xf32>
    %cst_101 = arith.constant dense<0.000000e+00> : vector<64x32xf32>
    %206 = tpu.matmul %198, %192, %cst_101 {dimension_numbers = #tpu.dot_dimension_numbers<[1], [0], [0], [1], [0, 0, 1, 1], [], []>} : vector<64x64xf32>, vector<64x32xf32>, vector<64x32xf32> -> vector<64x32xf32>
    %207 = vector.broadcast %205 : vector<64x1xf32> to vector<64x32xf32>
    %208 = arith.mulf %206, %207 : vector<64x32xf32>
    %c0_102 = arith.constant 0 : index
    %c96 = arith.constant 96 : index
    %209 = vector.load %arg17[%c0_102, %c96] : memref<128x128xf32, #tpu.memory_space<vmem>>, vector<64x32xf32>
    tpu.vector_store %arg17[%c0_102, %c96], %208 {strides = array<i32>} : memref<128x128xf32, #tpu.memory_space<vmem>>, vector<64x32xf32>,
    %210 = vector.extract_strided_slice %127 {offsets = [64, 0], sizes = [64, 32], strides = [1, 1]} : vector<128x128xf32> to vector<64x32xf32>
    %211 = vector.extract_strided_slice %128 {offsets = [64, 0], sizes = [64, 32], strides = [1, 1]} : vector<128x128xf32> to vector<64x32xf32>
    %212 = vector.extract_strided_slice %129 {offsets = [64, 0], sizes = [64, 32], strides = [1, 1]} : vector<128x128xf32> to vector<64x32xf32>
    %cst_103 = arith.constant dense<0.000000e+00> : vector<64x64xf32>
    %213 = tpu.matmul %210, %211, %cst_103 {dimension_numbers = #tpu.dot_dimension_numbers<[1], [1], [0], [0], [0, 0, 1, 0], [], []>} : vector<64x32xf32>, vector<64x32xf32>, vector<64x64xf32> -> vector<64x64xf32>
    %cst_104 = arith.constant dense<0xFF800000> : vector<64xf32>
    %214 = vector.multi_reduction <maximumf>, %213, %cst_104 [1] : vector<64x64xf32> to vector<64xf32>
    %215 = vector.shape_cast %214 : vector<64xf32> to vector<64x1xf32>
    %216 = vector.broadcast %215 : vector<64x1xf32> to vector<64x64xf32>
    %217 = arith.subf %213, %216 : vector<64x64xf32>
    %218 = math.exp %217 : vector<64x64xf32>
    %cst_105 = arith.constant dense<0.000000e+00> : vector<64xf32>
    %219 = vector.multi_reduction <add>, %218, %cst_105 [1] : vector<64x64xf32> to vector<64xf32>
    %220 = vector.shape_cast %219 : vector<64xf32> to vector<64x1xf32>
    %221 = tpu.reciprocal %220 {approx = true} : vector<64x1xf32> -> vector<64x1xf32>
    %222 = arith.mulf %220, %221 : vector<64x1xf32>
    %cst_106 = arith.constant 2.000000e+00 : f32
    %223 = vector.broadcast %cst_106 : f32 to vector<64x1xf32>
    %224 = arith.subf %223, %222 : vector<64x1xf32>
    %225 = arith.mulf %221, %224 : vector<64x1xf32>
    %cst_107 = arith.constant dense<0.000000e+00> : vector<64x32xf32>
    %226 = tpu.matmul %218, %212, %cst_107 {dimension_numbers = #tpu.dot_dimension_numbers<[1], [0], [0], [1], [0, 0, 1, 1], [], []>} : vector<64x64xf32>, vector<64x32xf32>, vector<64x32xf32> -> vector<64x32xf32>
    %227 = vector.broadcast %225 : vector<64x1xf32> to vector<64x32xf32>
    %228 = arith.mulf %226, %227 : vector<64x32xf32>
    %c64_108 = arith.constant 64 : index
    %c0_109 = arith.constant 0 : index
    %229 = vector.load %arg17[%c64_108, %c0_109] : memref<128x128xf32, #tpu.memory_space<vmem>>, vector<64x32xf32>
    tpu.vector_store %arg17[%c64_108, %c0_109], %228 {strides = array<i32>} : memref<128x128xf32, #tpu.memory_space<vmem>>, vector<64x32xf32>,
    %230 = vector.extract_strided_slice %127 {offsets = [64, 32], sizes = [64, 32], strides = [1, 1]} : vector<128x128xf32> to vector<64x32xf32>
    %231 = vector.extract_strided_slice %128 {offsets = [64, 32], sizes = [64, 32], strides = [1, 1]} : vector<128x128xf32> to vector<64x32xf32>
    %232 = vector.extract_strided_slice %129 {offsets = [64, 32], sizes = [64, 32], strides = [1, 1]} : vector<128x128xf32> to vector<64x32xf32>
    %cst_110 = arith.constant dense<0.000000e+00> : vector<64x64xf32>
    %233 = tpu.matmul %230, %231, %cst_110 {dimension_numbers = #tpu.dot_dimension_numbers<[1], [1], [0], [0], [0, 0, 1, 0], [], []>} : vector<64x32xf32>, vector<64x32xf32>, vector<64x64xf32> -> vector<64x64xf32>
    %cst_111 = arith.constant dense<0xFF800000> : vector<64xf32>
    %234 = vector.multi_reduction <maximumf>, %233, %cst_111 [1] : vector<64x64xf32> to vector<64xf32>
    %235 = vector.shape_cast %234 : vector<64xf32> to vector<64x1xf32>
    %236 = vector.broadcast %235 : vector<64x1xf32> to vector<64x64xf32>
    %237 = arith.subf %233, %236 : vector<64x64xf32>
    %238 = math.exp %237 : vector<64x64xf32>
    %cst_112 = arith.constant dense<0.000000e+00> : vector<64xf32>
    %239 = vector.multi_reduction <add>, %238, %cst_112 [1] : vector<64x64xf32> to vector<64xf32>
    %240 = vector.shape_cast %239 : vector<64xf32> to vector<64x1xf32>
    %241 = tpu.reciprocal %240 {approx = true} : vector<64x1xf32> -> vector<64x1xf32>
    %242 = arith.mulf %240, %241 : vector<64x1xf32>
    %cst_113 = arith.constant 2.000000e+00 : f32
    %243 = vector.broadcast %cst_113 : f32 to vector<64x1xf32>
    %244 = arith.subf %243, %242 : vector<64x1xf32>
    %245 = arith.mulf %241, %244 : vector<64x1xf32>
    %cst_114 = arith.constant dense<0.000000e+00> : vector<64x32xf32>
    %246 = tpu.matmul %238, %232, %cst_114 {dimension_numbers = #tpu.dot_dimension_numbers<[1], [0], [0], [1], [0, 0, 1, 1], [], []>} : vector<64x64xf32>, vector<64x32xf32>, vector<64x32xf32> -> vector<64x32xf32>
    %247 = vector.broadcast %245 : vector<64x1xf32> to vector<64x32xf32>
    %248 = arith.mulf %246, %247 : vector<64x32xf32>
    %c64_115 = arith.constant 64 : index
    %c32_116 = arith.constant 32 : index
    %249 = vector.load %arg17[%c64_115, %c32_116] : memref<128x128xf32, #tpu.memory_space<vmem>>, vector<64x32xf32>
    tpu.vector_store %arg17[%c64_115, %c32_116], %248 {strides = array<i32>} : memref<128x128xf32, #tpu.memory_space<vmem>>, vector<64x32xf32>,
    %250 = vector.extract_strided_slice %127 {offsets = [64, 64], sizes = [64, 32], strides = [1, 1]} : vector<128x128xf32> to vector<64x32xf32>
    %251 = vector.extract_strided_slice %128 {offsets = [64, 64], sizes = [64, 32], strides = [1, 1]} : vector<128x128xf32> to vector<64x32xf32>
    %252 = vector.extract_strided_slice %129 {offsets = [64, 64], sizes = [64, 32], strides = [1, 1]} : vector<128x128xf32> to vector<64x32xf32>
    %cst_117 = arith.constant dense<0.000000e+00> : vector<64x64xf32>
    %253 = tpu.matmul %250, %251, %cst_117 {dimension_numbers = #tpu.dot_dimension_numbers<[1], [1], [0], [0], [0, 0, 1, 0], [], []>} : vector<64x32xf32>, vector<64x32xf32>, vector<64x64xf32> -> vector<64x64xf32>
    %cst_118 = arith.constant dense<0xFF800000> : vector<64xf32>
    %254 = vector.multi_reduction <maximumf>, %253, %cst_118 [1] : vector<64x64xf32> to vector<64xf32>
    %255 = vector.shape_cast %254 : vector<64xf32> to vector<64x1xf32>
    %256 = vector.broadcast %255 : vector<64x1xf32> to vector<64x64xf32>
    %257 = arith.subf %253, %256 : vector<64x64xf32>
    %258 = math.exp %257 : vector<64x64xf32>
    %cst_119 = arith.constant dense<0.000000e+00> : vector<64xf32>
    %259 = vector.multi_reduction <add>, %258, %cst_119 [1] : vector<64x64xf32> to vector<64xf32>
    %260 = vector.shape_cast %259 : vector<64xf32> to vector<64x1xf32>
    %261 = tpu.reciprocal %260 {approx = true} : vector<64x1xf32> -> vector<64x1xf32>
    %262 = arith.mulf %260, %261 : vector<64x1xf32>
    %cst_120 = arith.constant 2.000000e+00 : f32
    %263 = vector.broadcast %cst_120 : f32 to vector<64x1xf32>
    %264 = arith.subf %263, %262 : vector<64x1xf32>
    %265 = arith.mulf %261, %264 : vector<64x1xf32>
    %cst_121 = arith.constant dense<0.000000e+00> : vector<64x32xf32>
    %266 = tpu.matmul %258, %252, %cst_121 {dimension_numbers = #tpu.dot_dimension_numbers<[1], [0], [0], [1], [0, 0, 1, 1], [], []>} : vector<64x64xf32>, vector<64x32xf32>, vector<64x32xf32> -> vector<64x32xf32>
    %267 = vector.broadcast %265 : vector<64x1xf32> to vector<64x32xf32>
    %268 = arith.mulf %266, %267 : vector<64x32xf32>
    %c64_122 = arith.constant 64 : index
    %c64_123 = arith.constant 64 : index
    %269 = vector.load %arg17[%c64_122, %c64_123] : memref<128x128xf32, #tpu.memory_space<vmem>>, vector<64x32xf32>
    tpu.vector_store %arg17[%c64_122, %c64_123], %268 {strides = array<i32>} : memref<128x128xf32, #tpu.memory_space<vmem>>, vector<64x32xf32>,
    %270 = vector.extract_strided_slice %127 {offsets = [64, 96], sizes = [64, 32], strides = [1, 1]} : vector<128x128xf32> to vector<64x32xf32>
    %271 = vector.extract_strided_slice %128 {offsets = [64, 96], sizes = [64, 32], strides = [1, 1]} : vector<128x128xf32> to vector<64x32xf32>
    %272 = vector.extract_strided_slice %129 {offsets = [64, 96], sizes = [64, 32], strides = [1, 1]} : vector<128x128xf32> to vector<64x32xf32>
    %cst_124 = arith.constant dense<0.000000e+00> : vector<64x64xf32>
    %273 = tpu.matmul %270, %271, %cst_124 {dimension_numbers = #tpu.dot_dimension_numbers<[1], [1], [0], [0], [0, 0, 1, 0], [], []>} : vector<64x32xf32>, vector<64x32xf32>, vector<64x64xf32> -> vector<64x64xf32>
    %cst_125 = arith.constant dense<0xFF800000> : vector<64xf32>
    %274 = vector.multi_reduction <maximumf>, %273, %cst_125 [1] : vector<64x64xf32> to vector<64xf32>
    %275 = vector.shape_cast %274 : vector<64xf32> to vector<64x1xf32>
    %276 = vector.broadcast %275 : vector<64x1xf32> to vector<64x64xf32>
    %277 = arith.subf %273, %276 : vector<64x64xf32>
    %278 = math.exp %277 : vector<64x64xf32>
    %cst_126 = arith.constant dense<0.000000e+00> : vector<64xf32>
    %279 = vector.multi_reduction <add>, %278, %cst_126 [1] : vector<64x64xf32> to vector<64xf32>
    %280 = vector.shape_cast %279 : vector<64xf32> to vector<64x1xf32>
    %281 = tpu.reciprocal %280 {approx = true} : vector<64x1xf32> -> vector<64x1xf32>
    %282 = arith.mulf %280, %281 : vector<64x1xf32>
    %cst_127 = arith.constant 2.000000e+00 : f32
    %283 = vector.broadcast %cst_127 : f32 to vector<64x1xf32>
    %284 = arith.subf %283, %282 : vector<64x1xf32>
    %285 = arith.mulf %281, %284 : vector<64x1xf32>
    %cst_128 = arith.constant dense<0.000000e+00> : vector<64x32xf32>
    %286 = tpu.matmul %278, %272, %cst_128 {dimension_numbers = #tpu.dot_dimension_numbers<[1], [0], [0], [1], [0, 0, 1, 1], [], []>} : vector<64x64xf32>, vector<64x32xf32>, vector<64x32xf32> -> vector<64x32xf32>
    %287 = vector.broadcast %285 : vector<64x1xf32> to vector<64x32xf32>
    %288 = arith.mulf %286, %287 : vector<64x32xf32>
    %c64_129 = arith.constant 64 : index
    %c96_130 = arith.constant 96 : index
    %289 = vector.load %arg17[%c64_129, %c96_130] : memref<128x128xf32, #tpu.memory_space<vmem>>, vector<64x32xf32>
    tpu.vector_store %arg17[%c64_129, %c96_130], %288 {strides = array<i32>} : memref<128x128xf32, #tpu.memory_space<vmem>>, vector<64x32xf32>,
    %c0_131 = arith.constant 0 : index
    %c0_132 = arith.constant 0 : index
    %290 = vector.load %arg17[%c0_131, %c0_132] : memref<128x128xf32, #tpu.memory_space<vmem>>, vector<128x128xf32>
    %c0_133 = arith.constant 0 : index
    %c0_134 = arith.constant 0 : index
    %291 = vector.load %arg8[%c0_133, %c0_134] : memref<128x128xf32, #tpu.memory_space<vmem>>, vector<128x128xf32>
    %cst_135 = arith.constant dense<0.000000e+00> : vector<128x128xf32>
    %292 = tpu.matmul %290, %291, %cst_135 {dimension_numbers = #tpu.dot_dimension_numbers<[1], [0], [0], [1], [0, 0, 1, 1], [], []>} : vector<128x128xf32>, vector<128x128xf32>, vector<128x128xf32> -> vector<128x128xf32>
    %293 = arith.addf %99, %292 : vector<128x128xf32>
    %c0_136 = arith.constant 0 : index
    %c0_137 = arith.constant 0 : index
    %294 = vector.load %arg9[%c0_136, %c0_137] : memref<1x128xf32, #tpu.memory_space<vmem>>, vector<1x128xf32>
    %295 = vector.broadcast %294 : vector<1x128xf32> to vector<128x128xf32>
    %296 = arith.addf %293, %295 : vector<128x128xf32>
    %cst_138 = arith.constant dense<0.000000e+00> : vector<128xf32>
    %297 = vector.multi_reduction <add>, %296, %cst_138 [1] : vector<128x128xf32> to vector<128xf32>
    %298 = vector.shape_cast %297 : vector<128xf32> to vector<128x1xf32>
    %cst_139 = arith.constant 1.280000e+02 : f32
    %299 = vector.broadcast %cst_139 : f32 to vector<128x1xf32>
    %300 = arith.divf %298, %299 : vector<128x1xf32>
    %301 = vector.broadcast %300 : vector<128x1xf32> to vector<128x128xf32>
    %302 = arith.subf %296, %301 : vector<128x128xf32>
    %303 = arith.mulf %302, %302 : vector<128x128xf32>
    %cst_140 = arith.constant dense<0.000000e+00> : vector<128xf32>
    %304 = vector.multi_reduction <add>, %303, %cst_140 [1] : vector<128x128xf32> to vector<128xf32>
    %305 = vector.shape_cast %304 : vector<128xf32> to vector<128x1xf32>
    %cst_141 = arith.constant 1.280000e+02 : f32
    %306 = vector.broadcast %cst_141 : f32 to vector<128x1xf32>
    %307 = arith.divf %305, %306 : vector<128x1xf32>
    %cst_142 = arith.constant 9.99999974E-6 : f32
    %308 = vector.broadcast %cst_142 : f32 to vector<128x1xf32>
    %309 = arith.addf %307, %308 : vector<128x1xf32>
    %310 = math.rsqrt %309 : vector<128x1xf32>
    %311 = vector.broadcast %310 : vector<128x1xf32> to vector<128x128xf32>
    %312 = arith.mulf %302, %311 : vector<128x128xf32>
    %c0_143 = arith.constant 0 : index
    %c0_144 = arith.constant 0 : index
    %313 = vector.load %arg10[%c0_143, %c0_144] : memref<1x128xf32, #tpu.memory_space<vmem>>, vector<1x128xf32>
    %314 = vector.broadcast %313 : vector<1x128xf32> to vector<128x128xf32>
    %315 = arith.mulf %312, %314 : vector<128x128xf32>
    %c0_145 = arith.constant 0 : index
    %c0_146 = arith.constant 0 : index
    %316 = vector.load %arg11[%c0_145, %c0_146] : memref<1x128xf32, #tpu.memory_space<vmem>>, vector<1x128xf32>
    %317 = vector.broadcast %316 : vector<1x128xf32> to vector<128x128xf32>
    %318 = arith.addf %315, %317 : vector<128x128xf32>
    %c0_147 = arith.constant 0 : index
    %c0_148 = arith.constant 0 : index
    %319 = vector.load %arg12[%c0_147, %c0_148] : memref<128x512xf32, #tpu.memory_space<vmem>>, vector<128x512xf32>
    %cst_149 = arith.constant dense<0.000000e+00> : vector<128x512xf32>
    %320 = tpu.matmul %318, %319, %cst_149 {dimension_numbers = #tpu.dot_dimension_numbers<[1], [0], [0], [1], [0, 0, 1, 1], [], []>} : vector<128x128xf32>, vector<128x512xf32>, vector<128x512xf32> -> vector<128x512xf32>
    %c0_150 = arith.constant 0 : index
    %c0_151 = arith.constant 0 : index
    %321 = vector.load %arg13[%c0_150, %c0_151] : memref<1x512xf32, #tpu.memory_space<vmem>>, vector<1x512xf32>
    %322 = vector.broadcast %321 : vector<1x512xf32> to vector<128x512xf32>
    %323 = arith.addf %320, %322 : vector<128x512xf32>
    %324 = arith.mulf %323, %323 : vector<128x512xf32>
    %325 = arith.mulf %323, %324 : vector<128x512xf32>
    %cst_152 = arith.constant 4.471500e-02 : f32
    %326 = vector.broadcast %cst_152 : f32 to vector<128x512xf32>
    %327 = arith.mulf %326, %325 : vector<128x512xf32>
    %328 = arith.addf %323, %327 : vector<128x512xf32>
    %cst_153 = arith.constant 0.797884583 : f32
    %329 = vector.broadcast %cst_153 : f32 to vector<128x512xf32>
    %330 = arith.mulf %329, %328 : vector<128x512xf32>
    %331 = math.tanh %330 : vector<128x512xf32>
    %cst_154 = arith.constant 1.000000e+00 : f32
    %332 = vector.broadcast %cst_154 : f32 to vector<128x512xf32>
    %333 = arith.addf %332, %331 : vector<128x512xf32>
    %cst_155 = arith.constant 5.000000e-01 : f32
    %334 = vector.broadcast %cst_155 : f32 to vector<128x512xf32>
    %335 = arith.mulf %334, %333 : vector<128x512xf32>
    %336 = arith.mulf %323, %335 : vector<128x512xf32>
    %c0_156 = arith.constant 0 : index
    %c0_157 = arith.constant 0 : index
    %337 = vector.load %arg14[%c0_156, %c0_157] : memref<512x128xf32, #tpu.memory_space<vmem>>, vector<512x128xf32>
    %cst_158 = arith.constant dense<0.000000e+00> : vector<128x128xf32>
    %338 = tpu.matmul %336, %337, %cst_158 {dimension_numbers = #tpu.dot_dimension_numbers<[1], [0], [0], [1], [0, 0, 1, 1], [], []>} : vector<128x512xf32>, vector<512x128xf32>, vector<128x128xf32> -> vector<128x128xf32>
    %c0_159 = arith.constant 0 : index
    %c0_160 = arith.constant 0 : index
    %339 = vector.load %arg15[%c0_159, %c0_160] : memref<1x128xf32, #tpu.memory_space<vmem>>, vector<1x128xf32>
    %340 = vector.broadcast %339 : vector<1x128xf32> to vector<128x128xf32>
    %341 = arith.addf %338, %340 : vector<128x128xf32>
    %342 = arith.addf %296, %341 : vector<128x128xf32>
    %c0_161 = arith.constant 0 : index
    %c0_162 = arith.constant 0 : index
    %343 = vector.load %arg16[%c0_161, %c0_162] : memref<128x128xf32, #tpu.memory_space<vmem>>, vector<128x128xf32>
    tpu.vector_store %arg16[%c0_161, %c0_162], %342 {strides = array<i32>} : memref<128x128xf32, #tpu.memory_space<vmem>>, vector<128x128xf32>,
    return
  }
  func.func @transform_0(%arg0: i32) -> (i32, i32) {
    %c0_i32 = arith.constant 0 : i32
    %c0_i32_0 = arith.constant 0 : i32
    return %arg0, %c0_i32 : i32, i32
  }
  func.func @transform_1(%arg0: i32) -> (i32, i32, i32) {
    %c0_i32 = arith.constant 0 : i32
    %c0_i32_0 = arith.constant 0 : i32
    %c0_i32_1 = arith.constant 0 : i32
    %c0_i32_2 = arith.constant 0 : i32
    return %c0_i32, %c0_i32_0, %c0_i32_1 : i32, i32, i32
  }
  func.func @transform_2(%arg0: i32) -> (i32, i32) {
    %c0_i32 = arith.constant 0 : i32
    %c0_i32_0 = arith.constant 0 : i32
    %c0_i32_1 = arith.constant 0 : i32
    return %c0_i32, %c0_i32_0 : i32, i32
  }
  func.func @transform_3(%arg0: i32) -> (i32, i32) {
    %c0_i32 = arith.constant 0 : i32
    %c0_i32_0 = arith.constant 0 : i32
    %c0_i32_1 = arith.constant 0 : i32
    return %c0_i32, %c0_i32_0 : i32, i32
  }
  func.func @transform_4(%arg0: i32) -> (i32, i32) {
    %c0_i32 = arith.constant 0 : i32
    %c0_i32_0 = arith.constant 0 : i32
    %c0_i32_1 = arith.constant 0 : i32
    return %c0_i32, %c0_i32_0 : i32, i32
  }
  func.func @transform_5(%arg0: i32) -> (i32, i32) {
    %c0_i32 = arith.constant 0 : i32
    %c0_i32_0 = arith.constant 0 : i32
    %c0_i32_1 = arith.constant 0 : i32
    return %c0_i32, %c0_i32_0 : i32, i32
  }
  func.func @transform_6(%arg0: i32) -> (i32, i32) {
    %c0_i32 = arith.constant 0 : i32
    %c0_i32_0 = arith.constant 0 : i32
    %c0_i32_1 = arith.constant 0 : i32
    return %c0_i32, %c0_i32_0 : i32, i32
  }
  func.func @transform_7(%arg0: i32) -> (i32, i32) {
    %c0_i32 = arith.constant 0 : i32
    %c0_i32_0 = arith.constant 0 : i32
    %c0_i32_1 = arith.constant 0 : i32
    return %c0_i32, %c0_i32_0 : i32, i32
  }
  func.func @transform_8(%arg0: i32) -> (i32, i32) {
    %c0_i32 = arith.constant 0 : i32
    %c0_i32_0 = arith.constant 0 : i32
    %c0_i32_1 = arith.constant 0 : i32
    return %c0_i32, %c0_i32_0 : i32, i32
  }
  func.func @transform_9(%arg0: i32) -> (i32, i32) {
    %c0_i32 = arith.constant 0 : i32
    %c0_i32_0 = arith.constant 0 : i32
    %c0_i32_1 = arith.constant 0 : i32
    return %c0_i32, %c0_i32_0 : i32, i32
  }
  func.func @transform_10(%arg0: i32) -> (i32, i32) {
    %c0_i32 = arith.constant 0 : i32
    %c0_i32_0 = arith.constant 0 : i32
    %c0_i32_1 = arith.constant 0 : i32
    return %c0_i32, %c0_i32_0 : i32, i32
  }
  func.func @transform_11(%arg0: i32) -> (i32, i32) {
    %c0_i32 = arith.constant 0 : i32
    %c0_i32_0 = arith.constant 0 : i32
    %c0_i32_1 = arith.constant 0 : i32
    return %c0_i32, %c0_i32_0 : i32, i32
  }
  func.func @transform_12(%arg0: i32) -> (i32, i32) {
    %c0_i32 = arith.constant 0 : i32
    %c0_i32_0 = arith.constant 0 : i32
    %c0_i32_1 = arith.constant 0 : i32
    return %c0_i32, %c0_i32_0 : i32, i32
  }
  func.func @transform_13(%arg0: i32) -> (i32, i32) {
    %c0_i32 = arith.constant 0 : i32
    %c0_i32_0 = arith.constant 0 : i32
    %c0_i32_1 = arith.constant 0 : i32
    return %c0_i32, %c0_i32_0 : i32, i32
  }
  func.func @transform_14(%arg0: i32) -> (i32, i32) {
    %c0_i32 = arith.constant 0 : i32
    %c0_i32_0 = arith.constant 0 : i32
    %c0_i32_1 = arith.constant 0 : i32
    return %c0_i32, %c0_i32_0 : i32, i32
  }
  func.func @transform_15(%arg0: i32) -> (i32, i32) {
    %c0_i32 = arith.constant 0 : i32
    %c0_i32_0 = arith.constant 0 : i32
    return %arg0, %c0_i32 : i32, i32
  }
}

</mosaic_0001>

<llo_original>
// kernel: tpu_custom_call.1
$region0: #{tpu_custom_call.1}
  #allocation0 [shape = 'u32[]', space=smem, size = 0x4, offset = 0x4, fixed_abs, tag = 'smem constant byte address 0x4 - core index']
  #allocation1 [shape = 'u32[144,128]{1,0:T(1,128)}', space=vmem, size = 0x12000, scoped, tag = 'internal scratch']
  #allocation2 [shape = 'f32[128,128]{1,0:T(8,128)}', space=vmem, size = 0x10000, scoped, tag = 'scratch operand']
  %s0 = inlined_call_operand.hbm [shape: f32[128,128], index: 0, kind: input, shape index: {}]
  %s1 = inlined_call_operand.hbm [shape: f32[9,64,128], index: 1, kind: input, shape index: {}]
  %s2 = inlined_call_operand.hbm [shape: f32[1,128], index: 2, kind: input, shape index: {}]
  %s3 = inlined_call_operand.hbm [shape: f32[1,128], index: 3, kind: input, shape index: {}]
  %s4 = inlined_call_operand.hbm [shape: f32[1,128], index: 4, kind: input, shape index: {}]
  %s5 = inlined_call_operand.hbm [shape: f32[128,384], index: 5, kind: input, shape index: {}]
  %s6 = inlined_call_operand.vmem [shape: f32[1,384], index: 6, kind: input, shape index: {}]
  %s7 = inlined_call_operand.hbm [shape: f32[128,128], index: 7, kind: input, shape index: {}]
  %s8 = inlined_call_operand.vmem [shape: f32[1,128], index: 8, kind: input, shape index: {}]
  %s9 = inlined_call_operand.vmem [shape: f32[1,128], index: 9, kind: input, shape index: {}]
  %s10 = inlined_call_operand.vmem [shape: f32[1,128], index: 10, kind: input, shape index: {}]
  %s11 = inlined_call_operand.hbm [shape: f32[128,512], index: 11, kind: input, shape index: {}]
  %s12 = inlined_call_operand.vmem [shape: f32[1,512], index: 12, kind: input, shape index: {}]
  %s13 = inlined_call_operand.hbm [shape: f32[512,128], index: 13, kind: input, shape index: {}]
  %s14 = inlined_call_operand.vmem [shape: f32[1,128], index: 14, kind: input, shape index: {}]
  %s15 = inlined_call_operand.hbm [shape: f32[128,128], index: 15, kind: output, shape index: {}]
  %s16 = sld [smem:[#allocation0]]
  $region106: #{tpu_custom_call.1} parent=0
    _
  %s18 = ssub.s32 1, %s16
  %s19 = scalar_select 0, %s18, %s16
  $region1: #{tpu_custom_call.1} parent=0
    #allocation3 [shape = 'u8[65536]{0}', space=vmem, size = 0x10000, scoped, tag = 'input window, operand 0, single buffered']
    #allocation4 [shape = 's32[1]{0}', space=sflag, size = 0x4, scoped, tag = 'scoped memory for tpu_custom_call.1']
    #allocation5 [shape = 's32[1]{0}', space=sflag, size = 0x4, scoped, tag = 'scoped memory for tpu_custom_call.1']
    #allocation6 [shape = 'u8[294912]{0}', space=vmem, size = 0x48000, scoped, tag = 'input window, operand 1, single buffered']
    #allocation7 [shape = 's32[1]{0}', space=sflag, size = 0x4, scoped, tag = 'scoped memory for tpu_custom_call.1']
    #allocation8 [shape = 'u8[512]{0}', space=vmem, size = 0x400, scoped, tag = 'input window, operand 2, single buffered']
    #allocation9 [shape = 'u8[512]{0}', space=vmem, size = 0x400, scoped, tag = 'input window, operand 3, single buffered']
    #allocation10 [shape = 's32[1]{0}', space=sflag, size = 0x4, scoped, tag = 'scoped memory for tpu_custom_call.1']
    #allocation11 [shape = 'u8[512]{0}', space=vmem, size = 0x400, scoped, tag = 'input window, operand 4, single buffered']
    #allocation12 [shape = 'u8[196608]{0}', space=vmem, size = 0x30000, scoped, tag = 'input window, operand 5, single buffered']
    #allocation13 [shape = 's32[1]{0}', space=sflag, size = 0x4, scoped, tag = 'scoped memory for tpu_custom_call.1']
    #allocation14 [shape = 'u8[65536]{0}', space=vmem, size = 0x10000, scoped, tag = 'input window, operand 7, single buffered']
    #allocation15 [shape = 'u8[262144]{0}', space=vmem, size = 0x40000, scoped, tag = 'input window, operand 11, single buffered']
    #allocation16 [shape = 's32[1]{0}', space=sflag, size = 0x4, scoped, tag = 'scoped memory for tpu_custom_call.1']
    #allocation17 [shape = 'u8[262144]{0}', space=vmem, size = 0x40000, scoped, tag = 'input window, operand 13, single buffered']
    #allocation18 [shape = 'u8[65536]{0}', space=vmem, size = 0x10000, scoped, tag = 'output window, operand 0, single buffered']
    %20 = vsyncpa [#allocation4], 0
    %21 = vsyncpa [#allocation7], 0
    %22 = vsyncpa [#allocation10], 0
    %23 = vsyncpa [#allocation13], 0
    %24 = vsyncpa [#allocation16], 0
    %25 = vsyncpa [#allocation5], 0
    // Predicated region
    $region2: #{tpu_custom_call.1} parent=1 // pred_check
      _
    $region3: #{tpu_custom_call.1} parent=1 // pred_check_branch
      %27 = sbr.rel (0) target = $region5
    $region4: #{tpu_custom_call.1} parent=1 // pred_region
      %s29 = ssub.s32 2048, 2048
      %30 = vsyncadd [#allocation4], %s29
      %s31 = sshll.u32 [#allocation3], 4
      %s32 = int_to_ptr.vmem [resolvable:$true] %s31
      %37 = dma.hbm_to_vmem [thread:$0]  %s0, 2048, %s32, [#allocation4], 128, 128, 8
    $region5: #{tpu_custom_call.1} parent=1 // pred_fallthru
      _
    // Predicated region
    $region6: #{tpu_custom_call.1} parent=1 // pred_check
      _
    $region7: #{tpu_custom_call.1} parent=1 // pred_check_branch
      %39 = sbr.rel (0) target = $region9
    $region8: #{tpu_custom_call.1} parent=1 // pred_region
      %s41 = ssub.s32 9216, 9216
      %42 = vsyncadd [#allocation7], %s41
      %s43 = sshll.u32 [#allocation6], 4
      %s44 = int_to_ptr.vmem [resolvable:$true] %s43
      %49 = dma.hbm_to_vmem [thread:$0]  %s1, 9216, %s44, [#allocation7], 128, 128, 8
    $region9: #{tpu_custom_call.1} parent=1 // pred_fallthru
      _
    // Predicated region
    $region10: #{tpu_custom_call.1} parent=1 // pred_check
      _
    $region11: #{tpu_custom_call.1} parent=1 // pred_check_branch
      %51 = sbr.rel (0) target = $region13
    $region12: #{tpu_custom_call.1} parent=1 // pred_region
      %s53 = ssub.s32 16, 16
      %54 = vsyncadd [#allocation7], %s53
      %s56 = sshll.u32 [#allocation8], 4
      %s57 = int_to_ptr.vmem [resolvable:$true] %s56
      %59 = dma.hbm_to_vmem [thread:$0]  %s2, 16, %s57, [#allocation7]
    $region13: #{tpu_custom_call.1} parent=1 // pred_fallthru
      _
    // Predicated region
    $region14: #{tpu_custom_call.1} parent=1 // pred_check
      _
    $region15: #{tpu_custom_call.1} parent=1 // pred_check_branch
      %61 = sbr.rel (0) target = $region17
    $region16: #{tpu_custom_call.1} parent=1 // pred_region
      %s63 = ssub.s32 16, 16
      %64 = vsyncadd [#allocation10], %s63
      %s66 = sshll.u32 [#allocation9], 4
      %s67 = int_to_ptr.vmem [resolvable:$true] %s66
      %69 = dma.hbm_to_vmem [thread:$0]  %s3, 16, %s67, [#allocation10]
    $region17: #{tpu_custom_call.1} parent=1 // pred_fallthru
      _
    // Predicated region
    $region18: #{tpu_custom_call.1} parent=1 // pred_check
      _
    $region19: #{tpu_custom_call.1} parent=1 // pred_check_branch
      %71 = sbr.rel (0) target = $region21
    $region20: #{tpu_custom_call.1} parent=1 // pred_region
      %s73 = ssub.s32 16, 16
      %74 = vsyncadd [#allocation10], %s73
      %s76 = sshll.u32 [#allocation11], 4
      %s77 = int_to_ptr.vmem [resolvable:$true] %s76
      %79 = dma.hbm_to_vmem [thread:$0]  %s4, 16, %s77, [#allocation10]
    $region21: #{tpu_custom_call.1} parent=1 // pred_fallthru
      _
    // Predicated region
    $region22: #{tpu_custom_call.1} parent=1 // pred_check
      _
    $region23: #{tpu_custom_call.1} parent=1 // pred_check_branch
      %81 = sbr.rel (0) target = $region25
    $region24: #{tpu_custom_call.1} parent=1 // pred_region
      %s83 = ssub.s32 6144, 6144
      %84 = vsyncadd [#allocation13], %s83
      %s85 = sshll.u32 [#allocation12], 4
      %s86 = int_to_ptr.vmem [resolvable:$true] %s85
      %91 = dma.hbm_to_vmem [thread:$0]  %s5, 6144, %s86, [#allocation13], 384, 384, 24
    $region25: #{tpu_custom_call.1} parent=1 // pred_fallthru
      _
    // Predicated region
    $region26: #{tpu_custom_call.1} parent=1 // pred_check
      _
    $region27: #{tpu_custom_call.1} parent=1 // pred_check_branch
      %93 = sbr.rel (0) target = $region29
    $region28: #{tpu_custom_call.1} parent=1 // pred_region
      _
    $region29: #{tpu_custom_call.1} parent=1 // pred_fallthru
      _
    // Predicated region
    $region30: #{tpu_custom_call.1} parent=1 // pred_check
      _
    $region31: #{tpu_custom_call.1} parent=1 // pred_check_branch
      %95 = sbr.rel (0) target = $region33
    $region32: #{tpu_custom_call.1} parent=1 // pred_region
      %s97 = ssub.s32 2048, 2048
      %98 = vsyncadd [#allocation13], %s97
      %s99 = sshll.u32 [#allocation14], 4
      %s100 = int_to_ptr.vmem [resolvable:$true] %s99
      %105 = dma.hbm_to_vmem [thread:$0]  %s7, 2048, %s100, [#allocation13], 128, 128, 8
    $region33: #{tpu_custom_call.1} parent=1 // pred_fallthru
      _
    // Predicated region
    $region34: #{tpu_custom_call.1} parent=1 // pred_check
      _
    $region35: #{tpu_custom_call.1} parent=1 // pred_check_branch
      %107 = sbr.rel (0) target = $region37
    $region36: #{tpu_custom_call.1} parent=1 // pred_region
      _
    $region37: #{tpu_custom_call.1} parent=1 // pred_fallthru
      _
    // Predicated region
    $region38: #{tpu_custom_call.1} parent=1 // pred_check
      _
    $region39: #{tpu_custom_call.1} parent=1 // pred_check_branch
      %109 = sbr.rel (0) target = $region41
    $region40: #{tpu_custom_call.1} parent=1 // pred_region
      _
    $region41: #{tpu_custom_call.1} parent=1 // pred_fallthru
      _
    // Predicated region
    $region42: #{tpu_custom_call.1} parent=1 // pred_check
      _
    $region43: #{tpu_custom_call.1} parent=1 // pred_check_branch
      %111 = sbr.rel (0) target = $region45
    $region44: #{tpu_custom_call.1} parent=1 // pred_region
      _
    $region45: #{tpu_custom_call.1} parent=1 // pred_fallthru
      _
    // Predicated region
    $region46: #{tpu_custom_call.1} parent=1 // pred_check
      _
    $region47: #{tpu_custom_call.1} parent=1 // pred_check_branch
      %113 = sbr.rel (0) target = $region49
    $region48: #{tpu_custom_call.1} parent=1 // pred_region
      %s115 = ssub.s32 8192, 8192
      %116 = vsyncadd [#allocation16], %s115
      %s117 = sshll.u32 [#allocation15], 4
      %s118 = int_to_ptr.vmem [resolvable:$true] %s117
      %123 = dma.hbm_to_vmem [thread:$0]  %s11, 8192, %s118, [#allocation16], 512, 512, 32
    $region49: #{tpu_custom_call.1} parent=1 // pred_fallthru
      _
    // Predicated region
    $region50: #{tpu_custom_call.1} parent=1 // pred_check
      _
    $region51: #{tpu_custom_call.1} parent=1 // pred_check_branch
      %125 = sbr.rel (0) target = $region53
    $region52: #{tpu_custom_call.1} parent=1 // pred_region
      _
    $region53: #{tpu_custom_call.1} parent=1 // pred_fallthru
      _
    // Predicated region
    $region54: #{tpu_custom_call.1} parent=1 // pred_check
      _
    $region55: #{tpu_custom_call.1} parent=1 // pred_check_branch
      %127 = sbr.rel (0) target = $region57
    $region56: #{tpu_custom_call.1} parent=1 // pred_region
      %s129 = ssub.s32 8192, 8192
      %130 = vsyncadd [#allocation16], %s129
      %s131 = sshll.u32 [#allocation17], 4
      %s132 = int_to_ptr.vmem [resolvable:$true] %s131
      %137 = dma.hbm_to_vmem [thread:$0]  %s13, 8192, %s132, [#allocation16], 128, 128, 8
    $region57: #{tpu_custom_call.1} parent=1 // pred_fallthru
      _
    // Predicated region
    $region58: #{tpu_custom_call.1} parent=1 // pred_check
      _
    $region59: #{tpu_custom_call.1} parent=1 // pred_check_branch
      %139 = sbr.rel (0) target = $region61
    $region60: #{tpu_custom_call.1} parent=1 // pred_region
      _
    $region61: #{tpu_custom_call.1} parent=1 // pred_fallthru
      _
    // Predicated region
    $region62: #{tpu_custom_call.1} parent=1 // pred_check
      _
    $region63: #{tpu_custom_call.1} parent=1 // pred_check_branch
      %141 = sbr.rel (0) target = $region65
    $region64: #{tpu_custom_call.1} parent=1 // pred_region
      %142 = dma.done [#allocation4], 2048
    $region65: #{tpu_custom_call.1} parent=1 // pred_fallthru
      _
    // Predicated region
    $region66: #{tpu_custom_call.1} parent=1 // pred_check
      _
    $region67: #{tpu_custom_call.1} parent=1 // pred_check_branch
      %144 = sbr.rel (0) target = $region69
    $region68: #{tpu_custom_call.1} parent=1 // pred_region
      %145 = dma.done [#allocation7], 9216
    $region69: #{tpu_custom_call.1} parent=1 // pred_fallthru
      _
    // Predicated region
    $region70: #{tpu_custom_call.1} parent=1 // pred_check
      _
    $region71: #{tpu_custom_call.1} parent=1 // pred_check_branch
      %147 = sbr.rel (0) target = $region73
    $region72: #{tpu_custom_call.1} parent=1 // pred_region
      %148 = dma.done [#allocation7], 16
    $region73: #{tpu_custom_call.1} parent=1 // pred_fallthru
      _
    // Predicated region
    $region74: #{tpu_custom_call.1} parent=1 // pred_check
      _
    $region75: #{tpu_custom_call.1} parent=1 // pred_check_branch
      %150 = sbr.rel (0) target = $region77
    $region76: #{tpu_custom_call.1} parent=1 // pred_region
      %151 = dma.done [#allocation10], 16
    $region77: #{tpu_custom_call.1} parent=1 // pred_fallthru
      _
    // Predicated region
    $region78: #{tpu_custom_call.1} parent=1 // pred_check
      _
    $region79: #{tpu_custom_call.1} parent=1 // pred_check_branch
      %153 = sbr.rel (0) target = $region81
    $region80: #{tpu_custom_call.1} parent=1 // pred_region
      %154 = dma.done [#allocation10], 16
    $region81: #{tpu_custom_call.1} parent=1 // pred_fallthru
      _
    // Predicated region
    $region82: #{tpu_custom_call.1} parent=1 // pred_check
      _
    $region83: #{tpu_custom_call.1} parent=1 // pred_check_branch
      %156 = sbr.rel (0) target = $region85
    $region84: #{tpu_custom_call.1} parent=1 // pred_region
      %157 = dma.done [#allocation13], 6144
    $region85: #{tpu_custom_call.1} parent=1 // pred_fallthru
      _
    // Predicated region
    $region86: #{tpu_custom_call.1} parent=1 // pred_check
      _
    $region87: #{tpu_custom_call.1} parent=1 // pred_check_branch
      %159 = sbr.rel (0) target = $region89
    $region88: #{tpu_custom_call.1} parent=1 // pred_region
      %160 = dma.done [#allocation13], 2048
    $region89: #{tpu_custom_call.1} parent=1 // pred_fallthru
      _
    // Predicated region
    $region90: #{tpu_custom_call.1} parent=1 // pred_check
      _
    $region91: #{tpu_custom_call.1} parent=1 // pred_check_branch
      %162 = sbr.rel (0) target = $region93
    $region92: #{tpu_custom_call.1} parent=1 // pred_region
      %163 = dma.done [#allocation16], 8192
    $region93: #{tpu_custom_call.1} parent=1 // pred_fallthru
      _
    // Predicated region
    $region94: #{tpu_custom_call.1} parent=1 // pred_check
      _
    $region95: #{tpu_custom_call.1} parent=1 // pred_check_branch
      %165 = sbr.rel (0) target = $region97
    $region96: #{tpu_custom_call.1} parent=1 // pred_region
      %166 = dma.done [#allocation16], 8192
    $region97: #{tpu_custom_call.1} parent=1 // pred_fallthru
      _
    %v167 = vld [vmem:[#allocation3] sm:$0xff]
    %v168 = vld [vmem:[#allocation3 + $0x8] sm:$0xff]
    %v169 = vld [vmem:[#allocation3 + $0x10] sm:$0xff]
    %v170 = vld [vmem:[#allocation3 + $0x18] sm:$0xff]
    %v171 = vld [vmem:[#allocation3 + $0x20] sm:$0xff]
    %v172 = vld [vmem:[#allocation3 + $0x28] sm:$0xff]
    %v173 = vld [vmem:[#allocation3 + $0x30] sm:$0xff]
    %v174 = vld [vmem:[#allocation3 + $0x38] sm:$0xff]
    %v175 = vld [vmem:[#allocation3 + $0x40] sm:$0xff]
    %v176 = vld [vmem:[#allocation3 + $0x48] sm:$0xff]
    %v177 = vld [vmem:[#allocation3 + $0x50] sm:$0xff]
    %v178 = vld [vmem:[#allocation3 + $0x58] sm:$0xff]
    %v179 = vld [vmem:[#allocation3 + $0x60] sm:$0xff]
    %v180 = vld [vmem:[#allocation3 + $0x68] sm:$0xff]
    %v181 = vld [vmem:[#allocation3 + $0x70] sm:$0xff]
    %v182 = vld [vmem:[#allocation3 + $0x78] sm:$0xff]
    %v183 = vrot.slane %v167, 7
    %v184 = vrot.slane %v168, 7
    %v185 = vrot.slane %v169, 7
    %v186 = vrot.slane %v170, 7
    %v187 = vrot.slane %v171, 7
    %v188 = vrot.slane %v172, 7
    %v189 = vrot.slane %v173, 7
    %v190 = vrot.slane %v174, 7
    %v191 = vlaneseq
    %v192 = vshrl.u32 %v191, 7
    %vm193 = vcmp.lt.s32.totalorder %v192, 1
    %v194 = vsel %vm193, %v189, %v190
    %v195 = vsel %vm193, %v188, %v189
    %v196 = vsel %vm193, %v187, %v188
    %v197 = vsel %vm193, %v186, %v187
    %v198 = vsel %vm193, %v185, %v186
    %v199 = vsel %vm193, %v184, %v185
    %v200 = vsel %vm193, %v183, %v184
    %v201 = vsel %vm193, %v190, %v183
    %v202 = vld [vmem:[#allocation6] sm:$0xff]
    %v203 = vld [vmem:[#allocation6 + $0x8] sm:$0xff]
    %v204 = vld [vmem:[#allocation6 + $0x10] sm:$0xff]
    %v205 = vld [vmem:[#allocation6 + $0x18] sm:$0xff]
    %v206 = vld [vmem:[#allocation6 + $0x20] sm:$0xff]
    %v207 = vld [vmem:[#allocation6 + $0x28] sm:$0xff]
    %v208 = vld [vmem:[#allocation6 + $0x30] sm:$0xff]
    %v209 = vld [vmem:[#allocation6 + $0x38] sm:$0xff]
    %v210 = vmul.f32 %v194, %v202
    %v211 = vmul.f32 %v201, %v203
    %v212 = vmul.f32 %v200, %v204
    %v213 = vmul.f32 %v199, %v205
    %v214 = vmul.f32 %v198, %v206
    %v215 = vmul.f32 %v197, %v207
    %v216 = vmul.f32 %v196, %v208
    %v217 = vmul.f32 %v195, %v209
    %v218 = vadd.f32 %v210, 0.0
    %v219 = vadd.f32 %v211, 0.0
    %v220 = vadd.f32 %v212, 0.0
    %v221 = vadd.f32 %v213, 0.0
    %v222 = vadd.f32 %v214, 0.0
    %v223 = vadd.f32 %v215, 0.0
    %v224 = vadd.f32 %v216, 0.0
    %v225 = vadd.f32 %v217, 0.0
    %s226 = scalar_lea.vmem [#allocation6], 64
    %v227 = vld [vmem:[%s226] sm:$0xff]
    %v228 = vld [vmem:[%s226 + $0x8] sm:$0xff]
    %v229 = vld [vmem:[%s226 + $0x10] sm:$0xff]
    %v230 = vld [vmem:[%s226 + $0x18] sm:$0xff]
    %v231 = vld [vmem:[%s226 + $0x20] sm:$0xff]
    %v232 = vld [vmem:[%s226 + $0x28] sm:$0xff]
    %v233 = vld [vmem:[%s226 + $0x30] sm:$0xff]
    %v234 = vld [vmem:[%s226 + $0x38] sm:$0xff]
    %v235 = vmul.f32 %v174, %v227
    %v236 = vmul.f32 %v167, %v228
    %v237 = vmul.f32 %v168, %v229
    %v238 = vmul.f32 %v169, %v230
    %v239 = vmul.f32 %v170, %v231
    %v240 = vmul.f32 %v171, %v232
    %v241 = vmul.f32 %v172, %v233
    %v242 = vmul.f32 %v173, %v234
    %v243 = vadd.f32 %v218, %v235
    %v244 = vadd.f32 %v219, %v236
    %v245 = vadd.f32 %v220, %v237
    %v246 = vadd.f32 %v221, %v238
    %v247 = vadd.f32 %v222, %v239
    %v248 = vadd.f32 %v223, %v240
    %v249 = vadd.f32 %v224, %v241
    %v250 = vadd.f32 %v225, %v242
    %v251 = vrot.slane %v167, 1
    %v252 = vrot.slane %v168, 1
    %v253 = vrot.slane %v169, 1
    %v254 = vrot.slane %v170, 1
    %v255 = vrot.slane %v171, 1
    %v256 = vrot.slane %v172, 1
    %v257 = vrot.slane %v173, 1
    %v258 = vrot.slane %v174, 1
    %vm259 = vcmp.lt.s32.totalorder %v192, 7
    %v260 = vsel %vm259, %v257, %v258
    %v261 = vsel %vm259, %v256, %v257
    %v262 = vsel %vm259, %v255, %v256
    %v263 = vsel %vm259, %v254, %v255
    %v264 = vsel %vm259, %v253, %v254
    %v265 = vsel %vm259, %v252, %v253
    %v266 = vsel %vm259, %v251, %v252
    %v267 = vsel %vm259, %v258, %v251
    %s268 = scalar_lea.vmem [#allocation6], 128
    %v269 = vld [vmem:[%s268] sm:$0xff]
    %v270 = vld [vmem:[%s268 + $0x8] sm:$0xff]
    %v271 = vld [vmem:[%s268 + $0x10] sm:$0xff]
    %v272 = vld [vmem:[%s268 + $0x18] sm:$0xff]
    %v273 = vld [vmem:[%s268 + $0x20] sm:$0xff]
    %v274 = vld [vmem:[%s268 + $0x28] sm:$0xff]
    %v275 = vld [vmem:[%s268 + $0x30] sm:$0xff]
    %v276 = vld [vmem:[%s268 + $0x38] sm:$0xff]
    %v277 = vmul.f32 %v267, %v269
    %v278 = vmul.f32 %v266, %v270
    %v279 = vmul.f32 %v265, %v271
    %v280 = vmul.f32 %v264, %v272
    %v281 = vmul.f32 %v263, %v273
    %v282 = vmul.f32 %v262, %v274
    %v283 = vmul.f32 %v261, %v275
    %v284 = vmul.f32 %v260, %v276
    %v285 = vadd.f32 %v243, %v277
    %v286 = vadd.f32 %v244, %v278
    %v287 = vadd.f32 %v245, %v279
    %v288 = vadd.f32 %v246, %v280
    %v289 = vadd.f32 %v247, %v281
    %v290 = vadd.f32 %v248, %v282
    %v291 = vadd.f32 %v249, %v283
    %v292 = vadd.f32 %v250, %v284
    %s293 = scalar_lea.vmem [#allocation6], 192
    %v294 = vld [vmem:[%s293] sm:$0xff]
    %v295 = vld [vmem:[%s293 + $0x8] sm:$0xff]
    %v296 = vld [vmem:[%s293 + $0x10] sm:$0xff]
    %v297 = vld [vmem:[%s293 + $0x18] sm:$0xff]
    %v298 = vld [vmem:[%s293 + $0x20] sm:$0xff]
    %v299 = vld [vmem:[%s293 + $0x28] sm:$0xff]
    %v300 = vld [vmem:[%s293 + $0x30] sm:$0xff]
    %v301 = vld [vmem:[%s293 + $0x38] sm:$0xff]
    %v302 = vmul.f32 %v201, %v294
    %v303 = vmul.f32 %v200, %v295
    %v304 = vmul.f32 %v199, %v296
    %v305 = vmul.f32 %v198, %v297
    %v306 = vmul.f32 %v197, %v298
    %v307 = vmul.f32 %v196, %v299
    %v308 = vmul.f32 %v195, %v300
    %v309 = vmul.f32 %v194, %v301
    %v310 = vadd.f32 %v285, %v302
    %v311 = vadd.f32 %v286, %v303
    %v312 = vadd.f32 %v287, %v304
    %v313 = vadd.f32 %v288, %v305
    %v314 = vadd.f32 %v289, %v306
    %v315 = vadd.f32 %v290, %v307
    %v316 = vadd.f32 %v291, %v308
    %v317 = vadd.f32 %v292, %v309
    %s318 = scalar_lea.vmem [#allocation6], 256
    %v319 = vld [vmem:[%s318] sm:$0xff]
    %v320 = vld [vmem:[%s318 + $0x8] sm:$0xff]
    %v321 = vld [vmem:[%s318 + $0x10] sm:$0xff]
    %v322 = vld [vmem:[%s318 + $0x18] sm:$0xff]
    %v323 = vld [vmem:[%s318 + $0x20] sm:$0xff]
    %v324 = vld [vmem:[%s318 + $0x28] sm:$0xff]
    %v325 = vld [vmem:[%s318 + $0x30] sm:$0xff]
    %v326 = vld [vmem:[%s318 + $0x38] sm:$0xff]
    %v327 = vmul.f32 %v167, %v319
    %v328 = vmul.f32 %v168, %v320
    %v329 = vmul.f32 %v169, %v321
    %v330 = vmul.f32 %v170, %v322
    %v331 = vmul.f32 %v171, %v323
    %v332 = vmul.f32 %v172, %v324
    %v333 = vmul.f32 %v173, %v325
    %v334 = vmul.f32 %v174, %v326
    %v335 = vadd.f32 %v310, %v327
    %v336 = vadd.f32 %v311, %v328
    %v337 = vadd.f32 %v312, %v329
    %v338 = vadd.f32 %v313, %v330
    %v339 = vadd.f32 %v314, %v331
    %v340 = vadd.f32 %v315, %v332
    %v341 = vadd.f32 %v316, %v333
    %v342 = vadd.f32 %v317, %v334
    %s343 = scalar_lea.vmem [#allocation6], 320
    %v344 = vld [vmem:[%s343] sm:$0xff]
    %v345 = vld [vmem:[%s343 + $0x8] sm:$0xff]
    %v346 = vld [vmem:[%s343 + $0x10] sm:$0xff]
    %v347 = vld [vmem:[%s343 + $0x18] sm:$0xff]
    %v348 = vld [vmem:[%s343 + $0x20] sm:$0xff]
    %v349 = vld [vmem:[%s343 + $0x28] sm:$0xff]
    %v350 = vld [vmem:[%s343 + $0x30] sm:$0xff]
    %v351 = vld [vmem:[%s343 + $0x38] sm:$0xff]
    %v352 = vmul.f32 %v266, %v344
    %v353 = vmul.f32 %v265, %v345
    %v354 = vmul.f32 %v264, %v346
    %v355 = vmul.f32 %v263, %v347
    %v356 = vmul.f32 %v262, %v348
    %v357 = vmul.f32 %v261, %v349
    %v358 = vmul.f32 %v260, %v350
    %v359 = vmul.f32 %v267, %v351
    %v360 = vadd.f32 %v335, %v352
    %v361 = vadd.f32 %v336, %v353
    %v362 = vadd.f32 %v337, %v354
    %v363 = vadd.f32 %v338, %v355
    %v364 = vadd.f32 %v339, %v356
    %v365 = vadd.f32 %v340, %v357
    %v366 = vadd.f32 %v341, %v358
    %v367 = vadd.f32 %v342, %v359
    %s368 = scalar_lea.vmem [#allocation6], 384
    %v369 = vld [vmem:[%s368] sm:$0xff]
    %v370 = vld [vmem:[%s368 + $0x8] sm:$0xff]
    %v371 = vld [vmem:[%s368 + $0x10] sm:$0xff]
    %v372 = vld [vmem:[%s368 + $0x18] sm:$0xff]
    %v373 = vld [vmem:[%s368 + $0x20] sm:$0xff]
    %v374 = vld [vmem:[%s368 + $0x28] sm:$0xff]
    %v375 = vld [vmem:[%s368 + $0x30] sm:$0xff]
    %v376 = vld [vmem:[%s368 + $0x38] sm:$0xff]
    %v377 = vmul.f32 %v200, %v369
    %v378 = vmul.f32 %v199, %v370
    %v379 = vmul.f32 %v198, %v371
    %v380 = vmul.f32 %v197, %v372
    %v381 = vmul.f32 %v196, %v373
    %v382 = vmul.f32 %v195, %v374
    %v383 = vmul.f32 %v194, %v375
    %v384 = vmul.f32 %v201, %v376
    %v385 = vadd.f32 %v360, %v377
    %v386 = vadd.f32 %v361, %v378
    %v387 = vadd.f32 %v362, %v379
    %v388 = vadd.f32 %v363, %v380
    %v389 = vadd.f32 %v364, %v381
    %v390 = vadd.f32 %v365, %v382
    %v391 = vadd.f32 %v366, %v383
    %v392 = vadd.f32 %v367, %v384
    %s393 = scalar_lea.vmem [#allocation6], 448
    %v394 = vld [vmem:[%s393] sm:$0xff]
    %v395 = vld [vmem:[%s393 + $0x8] sm:$0xff]
    %v396 = vld [vmem:[%s393 + $0x10] sm:$0xff]
    %v397 = vld [vmem:[%s393 + $0x18] sm:$0xff]
    %v398 = vld [vmem:[%s393 + $0x20] sm:$0xff]
    %v399 = vld [vmem:[%s393 + $0x28] sm:$0xff]
    %v400 = vld [vmem:[%s393 + $0x30] sm:$0xff]
    %v401 = vld [vmem:[%s393 + $0x38] sm:$0xff]
    %v402 = vmul.f32 %v168, %v394
    %v403 = vmul.f32 %v169, %v395
    %v404 = vmul.f32 %v170, %v396
    %v405 = vmul.f32 %v171, %v397
    %v406 = vmul.f32 %v172, %v398
    %v407 = vmul.f32 %v173, %v399
    %v408 = vmul.f32 %v174, %v400
    %v409 = vmul.f32 %v167, %v401
    %v410 = vadd.f32 %v385, %v402
    %v411 = vadd.f32 %v386, %v403
    %v412 = vadd.f32 %v387, %v404
    %v413 = vadd.f32 %v388, %v405
    %v414 = vadd.f32 %v389, %v406
    %v415 = vadd.f32 %v390, %v407
    %v416 = vadd.f32 %v391, %v408
    %v417 = vadd.f32 %v392, %v409
    %s418 = scalar_lea.vmem [#allocation6], 512
    %v419 = vld [vmem:[%s418] sm:$0xff]
    %v420 = vld [vmem:[%s418 + $0x8] sm:$0xff]
    %v421 = vld [vmem:[%s418 + $0x10] sm:$0xff]
    %v422 = vld [vmem:[%s418 + $0x18] sm:$0xff]
    %v423 = vld [vmem:[%s418 + $0x20] sm:$0xff]
    %v424 = vld [vmem:[%s418 + $0x28] sm:$0xff]
    %v425 = vld [vmem:[%s418 + $0x30] sm:$0xff]
    %v426 = vld [vmem:[%s418 + $0x38] sm:$0xff]
    %v427 = vmul.f32 %v265, %v419
    %v428 = vmul.f32 %v264, %v420
    %v429 = vmul.f32 %v263, %v421
    %v430 = vmul.f32 %v262, %v422
    %v431 = vmul.f32 %v261, %v423
    %v432 = vmul.f32 %v260, %v424
    %v433 = vmul.f32 %v267, %v425
    %v434 = vmul.f32 %v266, %v426
    %v435 = vadd.f32 %v410, %v427
    %v436 = vadd.f32 %v411, %v428
    %v437 = vadd.f32 %v412, %v429
    %v438 = vadd.f32 %v413, %v430
    %v439 = vadd.f32 %v414, %v431
    %v440 = vadd.f32 %v415, %v432
    %v441 = vadd.f32 %v416, %v433
    %v442 = vadd.f32 %v417, %v434
    %443 = vst [vmem:[#allocation2] sm:$0xff] %v435
    %444 = vst [vmem:[#allocation2 + $0x8] sm:$0xff] %v436
    %445 = vst [vmem:[#allocation2 + $0x10] sm:$0xff] %v437
    %446 = vst [vmem:[#allocation2 + $0x18] sm:$0xff] %v438
    %447 = vst [vmem:[#allocation2 + $0x20] sm:$0xff] %v439
    %448 = vst [vmem:[#allocation2 + $0x28] sm:$0xff] %v440
    %449 = vst [vmem:[#allocation2 + $0x30] sm:$0xff] %v441
    %450 = vst [vmem:[#allocation2 + $0x38] sm:$0xff] %v442
    %v451 = vrot.slane %v175, 7
    %v452 = vrot.slane %v176, 7
    %v453 = vrot.slane %v177, 7
    %v454 = vrot.slane %v178, 7
    %v455 = vrot.slane %v179, 7
    %v456 = vrot.slane %v180, 7
    %v457 = vrot.slane %v181, 7
    %v458 = vrot.slane %v182, 7
    %v459 = vsel %vm193, %v457, %v458
    %v460 = vsel %vm193, %v456, %v457
    %v461 = vsel %vm193, %v455, %v456
    %v462 = vsel %vm193, %v454, %v455
    %v463 = vsel %vm193, %v453, %v454
    %v464 = vsel %vm193, %v452, %v453
    %v465 = vsel %vm193, %v451, %v452
    %v466 = vsel %vm193, %v458, %v451
    %v467 = vld [vmem:[#allocation6] sm:$0xff]
    %v468 = vld [vmem:[#allocation6 + $0x8] sm:$0xff]
    %v469 = vld [vmem:[#allocation6 + $0x10] sm:$0xff]
    %v470 = vld [vmem:[#allocation6 + $0x18] sm:$0xff]
    %v471 = vld [vmem:[#allocation6 + $0x20] sm:$0xff]
    %v472 = vld [vmem:[#allocation6 + $0x28] sm:$0xff]
    %v473 = vld [vmem:[#allocation6 + $0x30] sm:$0xff]
    %v474 = vld [vmem:[#allocation6 + $0x38] sm:$0xff]
    %v475 = vmul.f32 %v459, %v467
    %v476 = vmul.f32 %v466, %v468
    %v477 = vmul.f32 %v465, %v469
    %v478 = vmul.f32 %v464, %v470
    %v479 = vmul.f32 %v463, %v471
    %v480 = vmul.f32 %v462, %v472
    %v481 = vmul.f32 %v461, %v473
    %v482 = vmul.f32 %v460, %v474
    %v483 = vadd.f32 %v475, 0.0
    %v484 = vadd.f32 %v476, 0.0
    %v485 = vadd.f32 %v477, 0.0
    %v486 = vadd.f32 %v478, 0.0
    %v487 = vadd.f32 %v479, 0.0
    %v488 = vadd.f32 %v480, 0.0
    %v489 = vadd.f32 %v481, 0.0
    %v490 = vadd.f32 %v482, 0.0
    %v491 = vld [vmem:[%s226] sm:$0xff]
    %v492 = vld [vmem:[%s226 + $0x8] sm:$0xff]
    %v493 = vld [vmem:[%s226 + $0x10] sm:$0xff]
    %v494 = vld [vmem:[%s226 + $0x18] sm:$0xff]
    %v495 = vld [vmem:[%s226 + $0x20] sm:$0xff]
    %v496 = vld [vmem:[%s226 + $0x28] sm:$0xff]
    %v497 = vld [vmem:[%s226 + $0x30] sm:$0xff]
    %v498 = vld [vmem:[%s226 + $0x38] sm:$0xff]
    %v499 = vmul.f32 %v182, %v491
    %v500 = vmul.f32 %v175, %v492
    %v501 = vmul.f32 %v176, %v493
    %v502 = vmul.f32 %v177, %v494
    %v503 = vmul.f32 %v178, %v495
    %v504 = vmul.f32 %v179, %v496
    %v505 = vmul.f32 %v180, %v497
    %v506 = vmul.f32 %v181, %v498
    %v507 = vadd.f32 %v483, %v499
    %v508 = vadd.f32 %v484, %v500
    %v509 = vadd.f32 %v485, %v501
    %v510 = vadd.f32 %v486, %v502
    %v511 = vadd.f32 %v487, %v503
    %v512 = vadd.f32 %v488, %v504
    %v513 = vadd.f32 %v489, %v505
    %v514 = vadd.f32 %v490, %v506
    %v515 = vrot.slane %v175, 1
    %v516 = vrot.slane %v176, 1
    %v517 = vrot.slane %v177, 1
    %v518 = vrot.slane %v178, 1
    %v519 = vrot.slane %v179, 1
    %v520 = vrot.slane %v180, 1
    %v521 = vrot.slane %v181, 1
    %v522 = vrot.slane %v182, 1
    %v523 = vsel %vm259, %v521, %v522
    %v524 = vsel %vm259, %v520, %v521
    %v525 = vsel %vm259, %v519, %v520
    %v526 = vsel %vm259, %v518, %v519
    %v527 = vsel %vm259, %v517, %v518
    %v528 = vsel %vm259, %v516, %v517
    %v529 = vsel %vm259, %v515, %v516
    %v530 = vsel %vm259, %v522, %v515
    %v531 = vld [vmem:[%s268] sm:$0xff]
    %v532 = vld [vmem:[%s268 + $0x8] sm:$0xff]
    %v533 = vld [vmem:[%s268 + $0x10] sm:$0xff]
    %v534 = vld [vmem:[%s268 + $0x18] sm:$0xff]
    %v535 = vld [vmem:[%s268 + $0x20] sm:$0xff]
    %v536 = vld [vmem:[%s268 + $0x28] sm:$0xff]
    %v537 = vld [vmem:[%s268 + $0x30] sm:$0xff]
    %v538 = vld [vmem:[%s268 + $0x38] sm:$0xff]
    %v539 = vmul.f32 %v530, %v531
    %v540 = vmul.f32 %v529, %v532
    %v541 = vmul.f32 %v528, %v533
    %v542 = vmul.f32 %v527, %v534
    %v543 = vmul.f32 %v526, %v535
    %v544 = vmul.f32 %v525, %v536
    %v545 = vmul.f32 %v524, %v537
    %v546 = vmul.f32 %v523, %v538
    %v547 = vadd.f32 %v507, %v539
    %v548 = vadd.f32 %v508, %v540
    %v549 = vadd.f32 %v509, %v541
    %v550 = vadd.f32 %v510, %v542
    %v551 = vadd.f32 %v511, %v543
    %v552 = vadd.f32 %v512, %v544
    %v553 = vadd.f32 %v513, %v545
    %v554 = vadd.f32 %v514, %v546
    %v555 = vld [vmem:[%s293] sm:$0xff]
    %v556 = vld [vmem:[%s293 + $0x8] sm:$0xff]
    %v557 = vld [vmem:[%s293 + $0x10] sm:$0xff]
    %v558 = vld [vmem:[%s293 + $0x18] sm:$0xff]
    %v559 = vld [vmem:[%s293 + $0x20] sm:$0xff]
    %v560 = vld [vmem:[%s293 + $0x28] sm:$0xff]
    %v561 = vld [vmem:[%s293 + $0x30] sm:$0xff]
    %v562 = vld [vmem:[%s293 + $0x38] sm:$0xff]
    %v563 = vmul.f32 %v466, %v555
    %v564 = vmul.f32 %v465, %v556
    %v565 = vmul.f32 %v464, %v557
    %v566 = vmul.f32 %v463, %v558
    %v567 = vmul.f32 %v462, %v559
    %v568 = vmul.f32 %v461, %v560
    %v569 = vmul.f32 %v460, %v561
    %v570 = vmul.f32 %v459, %v562
    %v571 = vadd.f32 %v547, %v563
    %v572 = vadd.f32 %v548, %v564
    %v573 = vadd.f32 %v549, %v565
    %v574 = vadd.f32 %v550, %v566
    %v575 = vadd.f32 %v551, %v567
    %v576 = vadd.f32 %v552, %v568
    %v577 = vadd.f32 %v553, %v569
    %v578 = vadd.f32 %v554, %v570
    %v579 = vld [vmem:[%s318] sm:$0xff]
    %v580 = vld [vmem:[%s318 + $0x8] sm:$0xff]
    %v581 = vld [vmem:[%s318 + $0x10] sm:$0xff]
    %v582 = vld [vmem:[%s318 + $0x18] sm:$0xff]
    %v583 = vld [vmem:[%s318 + $0x20] sm:$0xff]
    %v584 = vld [vmem:[%s318 + $0x28] sm:$0xff]
    %v585 = vld [vmem:[%s318 + $0x30] sm:$0xff]
    %v586 = vld [vmem:[%s318 + $0x38] sm:$0xff]
    %v587 = vmul.f32 %v175, %v579
    %v588 = vmul.f32 %v176, %v580
    %v589 = vmul.f32 %v177, %v581
    %v590 = vmul.f32 %v178, %v582
    %v591 = vmul.f32 %v179, %v583
    %v592 = vmul.f32 %v180, %v584
    %v593 = vmul.f32 %v181, %v585
    %v594 = vmul.f32 %v182, %v586
    %v595 = vadd.f32 %v571, %v587
    %v596 = vadd.f32 %v572, %v588
    %v597 = vadd.f32 %v573, %v589
    %v598 = vadd.f32 %v574, %v590
    %v599 = vadd.f32 %v575, %v591
    %v600 = vadd.f32 %v576, %v592
    %v601 = vadd.f32 %v577, %v593
    %v602 = vadd.f32 %v578, %v594
    %v603 = vld [vmem:[%s343] sm:$0xff]
    %v604 = vld [vmem:[%s343 + $0x8] sm:$0xff]
    %v605 = vld [vmem:[%s343 + $0x10] sm:$0xff]
    %v606 = vld [vmem:[%s343 + $0x18] sm:$0xff]
    %v607 = vld [vmem:[%s343 + $0x20] sm:$0xff]
    %v608 = vld [vmem:[%s343 + $0x28] sm:$0xff]
    %v609 = vld [vmem:[%s343 + $0x30] sm:$0xff]
    %v610 = vld [vmem:[%s343 + $0x38] sm:$0xff]
    %v611 = vmul.f32 %v529, %v603
    %v612 = vmul.f32 %v528, %v604
    %v613 = vmul.f32 %v527, %v605
    %v614 = vmul.f32 %v526, %v606
    %v615 = vmul.f32 %v525, %v607
    %v616 = vmul.f32 %v524, %v608
    %v617 = vmul.f32 %v523, %v609
    %v618 = vmul.f32 %v530, %v610
    %v619 = vadd.f32 %v595, %v611
    %v620 = vadd.f32 %v596, %v612
    %v621 = vadd.f32 %v597, %v613
    %v622 = vadd.f32 %v598, %v614
    %v623 = vadd.f32 %v599, %v615
    %v624 = vadd.f32 %v600, %v616
    %v625 = vadd.f32 %v601, %v617
    %v626 = vadd.f32 %v602, %v618
    %v627 = vld [vmem:[%s368] sm:$0xff]
    %v628 = vld [vmem:[%s368 + $0x8] sm:$0xff]
    %v629 = vld [vmem:[%s368 + $0x10] sm:$0xff]
    %v630 = vld [vmem:[%s368 + $0x18] sm:$0xff]
    %v631 = vld [vmem:[%s368 + $0x20] sm:$0xff]
    %v632 = vld [vmem:[%s368 + $0x28] sm:$0xff]
    %v633 = vld [vmem:[%s368 + $0x30] sm:$0xff]
    %v634 = vld [vmem:[%s368 + $0x38] sm:$0xff]
    %v635 = vmul.f32 %v465, %v627
    %v636 = vmul.f32 %v464, %v628
    %v637 = vmul.f32 %v463, %v629
    %v638 = vmul.f32 %v462, %v630
    %v639 = vmul.f32 %v461, %v631
    %v640 = vmul.f32 %v460, %v632
    %v641 = vmul.f32 %v459, %v633
    %v642 = vmul.f32 %v466, %v634
    %v643 = vadd.f32 %v619, %v635
    %v644 = vadd.f32 %v620, %v636
    %v645 = vadd.f32 %v621, %v637
    %v646 = vadd.f32 %v622, %v638
    %v647 = vadd.f32 %v623, %v639
    %v648 = vadd.f32 %v624, %v640
    %v649 = vadd.f32 %v625, %v641
    %v650 = vadd.f32 %v626, %v642
    %v651 = vld [vmem:[%s393] sm:$0xff]
    %v652 = vld [vmem:[%s393 + $0x8] sm:$0xff]
    %v653 = vld [vmem:[%s393 + $0x10] sm:$0xff]
    %v654 = vld [vmem:[%s393 + $0x18] sm:$0xff]
    %v655 = vld [vmem:[%s393 + $0x20] sm:$0xff]
    %v656 = vld [vmem:[%s393 + $0x28] sm:$0xff]
    %v657 = vld [vmem:[%s393 + $0x30] sm:$0xff]
    %v658 = vld [vmem:[%s393 + $0x38] sm:$0xff]
    %v659 = vmul.f32 %v176, %v651
    %v660 = vmul.f32 %v177, %v652
    %v661 = vmul.f32 %v178, %v653
    %v662 = vmul.f32 %v179, %v654
    %v663 = vmul.f32 %v180, %v655
    %v664 = vmul.f32 %v181, %v656
    %v665 = vmul.f32 %v182, %v657
    %v666 = vmul.f32 %v175, %v658
    %v667 = vadd.f32 %v643, %v659
    %v668 = vadd.f32 %v644, %v660
    %v669 = vadd.f32 %v645, %v661
    %v670 = vadd.f32 %v646, %v662
    %v671 = vadd.f32 %v647, %v663
    %v672 = vadd.f32 %v648, %v664
    %v673 = vadd.f32 %v649, %v665
    %v674 = vadd.f32 %v650, %v666
    %v675 = vld [vmem:[%s418] sm:$0xff]
    %v676 = vld [vmem:[%s418 + $0x8] sm:$0xff]
    %v677 = vld [vmem:[%s418 + $0x10] sm:$0xff]
    %v678 = vld [vmem:[%s418 + $0x18] sm:$0xff]
    %v679 = vld [vmem:[%s418 + $0x20] sm:$0xff]
    %v680 = vld [vmem:[%s418 + $0x28] sm:$0xff]
    %v681 = vld [vmem:[%s418 + $0x30] sm:$0xff]
    %v682 = vld [vmem:[%s418 + $0x38] sm:$0xff]
    %v683 = vmul.f32 %v528, %v675
    %v684 = vmul.f32 %v527, %v676
    %v685 = vmul.f32 %v526, %v677
    %v686 = vmul.f32 %v525, %v678
    %v687 = vmul.f32 %v524, %v679
    %v688 = vmul.f32 %v523, %v680
    %v689 = vmul.f32 %v530, %v681
    %v690 = vmul.f32 %v529, %v682
    %v691 = vadd.f32 %v667, %v683
    %v692 = vadd.f32 %v668, %v684
    %v693 = vadd.f32 %v669, %v685
    %v694 = vadd.f32 %v670, %v686
    %v695 = vadd.f32 %v671, %v687
    %v696 = vadd.f32 %v672, %v688
    %v697 = vadd.f32 %v673, %v689
    %v698 = vadd.f32 %v674, %v690
    %699 = vst [vmem:[#allocation2 + $0x40] sm:$0xff] %v691
    %700 = vst [vmem:[#allocation2 + $0x48] sm:$0xff] %v692
    %701 = vst [vmem:[#allocation2 + $0x50] sm:$0xff] %v693
    %702 = vst [vmem:[#allocation2 + $0x58] sm:$0xff] %v694
    %703 = vst [vmem:[#allocation2 + $0x60] sm:$0xff] %v695
    %704 = vst [vmem:[#allocation2 + $0x68] sm:$0xff] %v696
    %705 = vst [vmem:[#allocation2 + $0x70] sm:$0xff] %v697
    %706 = vst [vmem:[#allocation2 + $0x78] sm:$0xff] %v698
    %v707 = vld [vmem:[#allocation2] sm:$0xff]
    %v708 = vld [vmem:[#allocation2 + $0x8] sm:$0xff]
    %v709 = vld [vmem:[#allocation2 + $0x10] sm:$0xff]
    %v710 = vld [vmem:[#allocation2 + $0x18] sm:$0xff]
    %v711 = vld [vmem:[#allocation2 + $0x20] sm:$0xff]
    %v712 = vld [vmem:[#allocation2 + $0x28] sm:$0xff]
    %v713 = vld [vmem:[#allocation2 + $0x30] sm:$0xff]
    %v714 = vld [vmem:[#allocation2 + $0x38] sm:$0xff]
    %v715 = vld [vmem:[#allocation2 + $0x40] sm:$0xff]
    %v716 = vld [vmem:[#allocation2 + $0x48] sm:$0xff]
    %v717 = vld [vmem:[#allocation2 + $0x50] sm:$0xff]
    %v718 = vld [vmem:[#allocation2 + $0x58] sm:$0xff]
    %v719 = vld [vmem:[#allocation2 + $0x60] sm:$0xff]
    %v720 = vld [vmem:[#allocation2 + $0x68] sm:$0xff]
    %v721 = vld [vmem:[#allocation2 + $0x70] sm:$0xff]
    %v722 = vld [vmem:[#allocation2 + $0x78] sm:$0xff]
    %v723 = vadd.f32 %v167, %v707
    %v724 = vadd.f32 %v168, %v708
    %v725 = vadd.f32 %v169, %v709
    %v726 = vadd.f32 %v170, %v710
    %v727 = vadd.f32 %v171, %v711
    %v728 = vadd.f32 %v172, %v712
    %v729 = vadd.f32 %v173, %v713
    %v730 = vadd.f32 %v174, %v714
    %v731 = vadd.f32 %v175, %v715
    %v732 = vadd.f32 %v176, %v716
    %v733 = vadd.f32 %v177, %v717
    %v734 = vadd.f32 %v178, %v718
    %v735 = vadd.f32 %v179, %v719
    %v736 = vadd.f32 %v180, %v720
    %v737 = vadd.f32 %v181, %v721
    %v738 = vadd.f32 %v182, %v722
    %v739 = vld [vmem:[#allocation8] sm:$0x1]
    %v741 = vlaneseq
    %v742 = vshrl.u32 %v741, 7
    %v743 = vsub.s32 0, %v742
    %v744 = vrot.slane %v739, %v743
    %v746 = vadd.f32 %v723, %v744
    %v747 = vadd.f32 %v724, %v744
    %v748 = vadd.f32 %v725, %v744
    %v749 = vadd.f32 %v726, %v744
    %v750 = vadd.f32 %v727, %v744
    %v751 = vadd.f32 %v728, %v744
    %v752 = vadd.f32 %v729, %v744
    %v753 = vadd.f32 %v730, %v744
    %v754 = vadd.f32 %v731, %v744
    %v755 = vadd.f32 %v732, %v744
    %v756 = vadd.f32 %v733, %v744
    %v757 = vadd.f32 %v734, %v744
    %v758 = vadd.f32 %v735, %v744
    %v759 = vadd.f32 %v736, %v744
    %v760 = vadd.f32 %v737, %v744
    %v761 = vadd.f32 %v738, %v744
    %762 = vadd.xlane.f32.xlu0 %v746
    %v763 = vpop.xlane.xlu0 %762
    %764 = vadd.xlane.f32.xlu0 %v747
    %v765 = vpop.xlane.xlu0 %764
    %766 = vadd.xlane.f32.xlu0 %v748
    %v767 = vpop.xlane.xlu0 %766
    %768 = vadd.xlane.f32.xlu0 %v749
    %v769 = vpop.xlane.xlu0 %768
    %770 = vadd.xlane.f32.xlu0 %v750
    %v771 = vpop.xlane.xlu0 %770
    %772 = vadd.xlane.f32.xlu0 %v751
    %v773 = vpop.xlane.xlu0 %772
    %774 = vadd.xlane.f32.xlu0 %v752
    %v775 = vpop.xlane.xlu0 %774
    %776 = vadd.xlane.f32.xlu0 %v753
    %v777 = vpop.xlane.xlu0 %776
    %778 = vadd.xlane.f32.xlu0 %v754
    %v779 = vpop.xlane.xlu0 %778
    %780 = vadd.xlane.f32.xlu0 %v755
    %v781 = vpop.xlane.xlu0 %780
    %782 = vadd.xlane.f32.xlu0 %v756
    %v783 = vpop.xlane.xlu0 %782
    %784 = vadd.xlane.f32.xlu0 %v757
    %v785 = vpop.xlane.xlu0 %784
    %786 = vadd.xlane.f32.xlu0 %v758
    %v787 = vpop.xlane.xlu0 %786
    %788 = vadd.xlane.f32.xlu0 %v759
    %v789 = vpop.xlane.xlu0 %788
    %790 = vadd.xlane.f32.xlu0 %v760
    %v791 = vpop.xlane.xlu0 %790
    %792 = vadd.xlane.f32.xlu0 %v761
    %v793 = vpop.xlane.xlu0 %792
    %v794 = vrcp.pop 128.0
    %v795 = vmul.f32 %v763, %v794
    %v796 = vmul.f32 %v765, %v794
    %v797 = vmul.f32 %v767, %v794
    %v798 = vmul.f32 %v769, %v794
    %v799 = vmul.f32 %v771, %v794
    %v800 = vmul.f32 %v773, %v794
    %v801 = vmul.f32 %v775, %v794
    %v802 = vmul.f32 %v777, %v794
    %v803 = vmul.f32 %v779, %v794
    %v804 = vmul.f32 %v781, %v794
    %v805 = vmul.f32 %v783, %v794
    %v806 = vmul.f32 %v785, %v794
    %v807 = vmul.f32 %v787, %v794
    %v808 = vmul.f32 %v789, %v794
    %v809 = vmul.f32 %v791, %v794
    %v810 = vmul.f32 %v793, %v794
    %v811 = vsub.f32 %v746, %v795
    %v812 = vsub.f32 %v747, %v796
    %v813 = vsub.f32 %v748, %v797
    %v814 = vsub.f32 %v749, %v798
    %v815 = vsub.f32 %v750, %v799
    %v816 = vsub.f32 %v751, %v800
    %v817 = vsub.f32 %v752, %v801
    %v818 = vsub.f32 %v753, %v802
    %v819 = vsub.f32 %v754, %v803
    %v820 = vsub.f32 %v755, %v804
    %v821 = vsub.f32 %v756, %v805
    %v822 = vsub.f32 %v757, %v806
    %v823 = vsub.f32 %v758, %v807
    %v824 = vsub.f32 %v759, %v808
    %v825 = vsub.f32 %v760, %v809
    %v826 = vsub.f32 %v761, %v810
    %v827 = vmul.f32 %v811, %v811
    %v828 = vmul.f32 %v812, %v812
    %v829 = vmul.f32 %v813, %v813
    %v830 = vmul.f32 %v814, %v814
    %v831 = vmul.f32 %v815, %v815
    %v832 = vmul.f32 %v816, %v816
    %v833 = vmul.f32 %v817, %v817
    %v834 = vmul.f32 %v818, %v818
    %v835 = vmul.f32 %v819, %v819
    %v836 = vmul.f32 %v820, %v820
    %v837 = vmul.f32 %v821, %v821
    %v838 = vmul.f32 %v822, %v822
    %v839 = vmul.f32 %v823, %v823
    %v840 = vmul.f32 %v824, %v824
    %v841 = vmul.f32 %v825, %v825
    %v842 = vmul.f32 %v826, %v826
    %843 = vadd.xlane.f32.xlu0 %v827
    %v844 = vpop.xlane.xlu0 %843
    %845 = vadd.xlane.f32.xlu0 %v828
    %v846 = vpop.xlane.xlu0 %845
    %847 = vadd.xlane.f32.xlu0 %v829
    %v848 = vpop.xlane.xlu0 %847
    %849 = vadd.xlane.f32.xlu0 %v830
    %v850 = vpop.xlane.xlu0 %849
    %851 = vadd.xlane.f32.xlu0 %v831
    %v852 = vpop.xlane.xlu0 %851
    %853 = vadd.xlane.f32.xlu0 %v832
    %v854 = vpop.xlane.xlu0 %853
    %855 = vadd.xlane.f32.xlu0 %v833
    %v856 = vpop.xlane.xlu0 %855
    %857 = vadd.xlane.f32.xlu0 %v834
    %v858 = vpop.xlane.xlu0 %857
    %859 = vadd.xlane.f32.xlu0 %v835
    %v860 = vpop.xlane.xlu0 %859
    %861 = vadd.xlane.f32.xlu0 %v836
    %v862 = vpop.xlane.xlu0 %861
    %863 = vadd.xlane.f32.xlu0 %v837
    %v864 = vpop.xlane.xlu0 %863
    %865 = vadd.xlane.f32.xlu0 %v838
    %v866 = vpop.xlane.xlu0 %865
    %867 = vadd.xlane.f32.xlu0 %v839
    %v868 = vpop.xlane.xlu0 %867
    %869 = vadd.xlane.f32.xlu0 %v840
    %v870 = vpop.xlane.xlu0 %869
    %871 = vadd.xlane.f32.xlu0 %v841
    %v872 = vpop.xlane.xlu0 %871
    %873 = vadd.xlane.f32.xlu0 %v842
    %v874 = vpop.xlane.xlu0 %873
    %v875 = vmul.f32 %v844, %v794
    %v876 = vmul.f32 %v846, %v794
    %v877 = vmul.f32 %v848, %v794
    %v878 = vmul.f32 %v850, %v794
    %v879 = vmul.f32 %v852, %v794
    %v880 = vmul.f32 %v854, %v794
    %v881 = vmul.f32 %v856, %v794
    %v882 = vmul.f32 %v858, %v794
    %v883 = vmul.f32 %v860, %v794
    %v884 = vmul.f32 %v862, %v794
    %v885 = vmul.f32 %v864, %v794
    %v886 = vmul.f32 %v866, %v794
    %v887 = vmul.f32 %v868, %v794
    %v888 = vmul.f32 %v870, %v794
    %v889 = vmul.f32 %v872, %v794
    %v890 = vmul.f32 %v874, %v794
    %v891 = vadd.f32 %v875, 1e-05
    %v892 = vadd.f32 %v876, 1e-05
    %v893 = vadd.f32 %v877, 1e-05
    %v894 = vadd.f32 %v878, 1e-05
    %v895 = vadd.f32 %v879, 1e-05
    %v896 = vadd.f32 %v880, 1e-05
    %v897 = vadd.f32 %v881, 1e-05
    %v898 = vadd.f32 %v882, 1e-05
    %v899 = vadd.f32 %v883, 1e-05
    %v900 = vadd.f32 %v884, 1e-05
    %v901 = vadd.f32 %v885, 1e-05
    %v902 = vadd.f32 %v886, 1e-05
    %v903 = vadd.f32 %v887, 1e-05
    %v904 = vadd.f32 %v888, 1e-05
    %v905 = vadd.f32 %v889, 1e-05
    %v906 = vadd.f32 %v890, 1e-05
    %v907 = vrsqrt.pop %v891
    %v908 = vrsqrt.pop %v892
    %v909 = vrsqrt.pop %v893
    %v910 = vrsqrt.pop %v894
    %v911 = vrsqrt.pop %v895
    %v912 = vrsqrt.pop %v896
    %v913 = vrsqrt.pop %v897
    %v914 = vrsqrt.pop %v898
    %v915 = vrsqrt.pop %v899
    %v916 = vrsqrt.pop %v900
    %v917 = vrsqrt.pop %v901
    %v918 = vrsqrt.pop %v902
    %v919 = vrsqrt.pop %v903
    %v920 = vrsqrt.pop %v904
    %v921 = vrsqrt.pop %v905
    %v922 = vrsqrt.pop %v906
    %v923 = vmul.f32 %v811, %v907
    %v924 = vmul.f32 %v812, %v908
    %v925 = vmul.f32 %v813, %v909
    %v926 = vmul.f32 %v814, %v910
    %v927 = vmul.f32 %v815, %v911
    %v928 = vmul.f32 %v816, %v912
    %v929 = vmul.f32 %v817, %v913
    %v930 = vmul.f32 %v818, %v914
    %v931 = vmul.f32 %v819, %v915
    %v932 = vmul.f32 %v820, %v916
    %v933 = vmul.f32 %v821, %v917
    %v934 = vmul.f32 %v822, %v918
    %v935 = vmul.f32 %v823, %v919
    %v936 = vmul.f32 %v824, %v920
    %v937 = vmul.f32 %v825, %v921
    %v938 = vmul.f32 %v826, %v922
    %v939 = vld [vmem:[#allocation9] sm:$0x1]
    %v941 = vlaneseq
    %v942 = vshrl.u32 %v941, 7
    %v943 = vsub.s32 0, %v942
    %v944 = vrot.slane %v939, %v943
    %v946 = vmul.f32 %v923, %v944
    %v947 = vmul.f32 %v924, %v944
    %v948 = vmul.f32 %v925, %v944
    %v949 = vmul.f32 %v926, %v944
    %v950 = vmul.f32 %v927, %v944
    %v951 = vmul.f32 %v928, %v944
    %v952 = vmul.f32 %v929, %v944
    %v953 = vmul.f32 %v930, %v944
    %v954 = vmul.f32 %v931, %v944
    %v955 = vmul.f32 %v932, %v944
    %v956 = vmul.f32 %v933, %v944
    %v957 = vmul.f32 %v934, %v944
    %v958 = vmul.f32 %v935, %v944
    %v959 = vmul.f32 %v936, %v944
    %v960 = vmul.f32 %v937, %v944
    %v961 = vmul.f32 %v938, %v944
    %v962 = vld [vmem:[#allocation11] sm:$0x1]
    %v964 = vlaneseq
    %v965 = vshrl.u32 %v964, 7
    %v966 = vsub.s32 0, %v965
    %v967 = vrot.slane %v962, %v966
    %v969 = vadd.f32 %v946, %v967
    %v970 = vadd.f32 %v947, %v967
    %v971 = vadd.f32 %v948, %v967
    %v972 = vadd.f32 %v949, %v967
    %v973 = vadd.f32 %v950, %v967
    %v974 = vadd.f32 %v951, %v967
    %v975 = vadd.f32 %v952, %v967
    %v976 = vadd.f32 %v953, %v967
    %v977 = vadd.f32 %v954, %v967
    %v978 = vadd.f32 %v955, %v967
    %v979 = vadd.f32 %v956, %v967
    %v980 = vadd.f32 %v957, %v967
    %v981 = vadd.f32 %v958, %v967
    %v982 = vadd.f32 %v959, %v967
    %v983 = vadd.f32 %v960, %v967
    %v984 = vadd.f32 %v961, %v967
    %v985 = vld [vmem:[#allocation12] sm:$0xff]
    %v986 = vld [vmem:[#allocation12 + $0x8] sm:$0xff]
    %v987 = vld [vmem:[#allocation12 + $0x10] sm:$0xff]
    %v988 = vld [vmem:[#allocation12 + $0x18] sm:$0xff]
    %v989 = vld [vmem:[#allocation12 + $0x20] sm:$0xff]
    %v990 = vld [vmem:[#allocation12 + $0x28] sm:$0xff]
    %v991 = vld [vmem:[#allocation12 + $0x30] sm:$0xff]
    %v992 = vld [vmem:[#allocation12 + $0x38] sm:$0xff]
    %v993 = vld [vmem:[#allocation12 + $0x40] sm:$0xff]
    %v994 = vld [vmem:[#allocation12 + $0x48] sm:$0xff]
    %v995 = vld [vmem:[#allocation12 + $0x50] sm:$0xff]
    %v996 = vld [vmem:[#allocation12 + $0x58] sm:$0xff]
    %v997 = vld [vmem:[#allocation12 + $0x60] sm:$0xff]
    %v998 = vld [vmem:[#allocation12 + $0x68] sm:$0xff]
    %v999 = vld [vmem:[#allocation12 + $0x70] sm:$0xff]
    %v1000 = vld [vmem:[#allocation12 + $0x78] sm:$0xff]
    %v1001 = vld [vmem:[#allocation12 + $0x80] sm:$0xff]
    %v1002 = vld [vmem:[#allocation12 + $0x88] sm:$0xff]
    %v1003 = vld [vmem:[#allocation12 + $0x90] sm:$0xff]
    %v1004 = vld [vmem:[#allocation12 + $0x98] sm:$0xff]
    %v1005 = vld [vmem:[#allocation12 + $0xa0] sm:$0xff]
    %v1006 = vld [vmem:[#allocation12 + $0xa8] sm:$0xff]
    %v1007 = vld [vmem:[#allocation12 + $0xb0] sm:$0xff]
    %v1008 = vld [vmem:[#allocation12 + $0xb8] sm:$0xff]
    %v1009 = vld [vmem:[#allocation12 + $0xc0] sm:$0xff]
    %v1010 = vld [vmem:[#allocation12 + $0xc8] sm:$0xff]
    %v1011 = vld [vmem:[#allocation12 + $0xd0] sm:$0xff]
    %v1012 = vld [vmem:[#allocation12 + $0xd8] sm:$0xff]
    %v1013 = vld [vmem:[#allocation12 + $0xe0] sm:$0xff]
    %v1014 = vld [vmem:[#allocation12 + $0xe8] sm:$0xff]
    %v1015 = vld [vmem:[#allocation12 + $0xf0] sm:$0xff]
    %v1016 = vld [vmem:[#allocation12 + $0xf8] sm:$0xff]
    %v1017 = vld [vmem:[#allocation12 + $0x100] sm:$0xff]
    %v1018 = vld [vmem:[#allocation12 + $0x108] sm:$0xff]
    %v1019 = vld [vmem:[#allocation12 + $0x110] sm:$0xff]
    %v1020 = vld [vmem:[#allocation12 + $0x118] sm:$0xff]
    %v1021 = vld [vmem:[#allocation12 + $0x120] sm:$0xff]
    %v1022 = vld [vmem:[#allocation12 + $0x128] sm:$0xff]
    %v1023 = vld [vmem:[#allocation12 + $0x130] sm:$0xff]
    %v1024 = vld [vmem:[#allocation12 + $0x138] sm:$0xff]
    %v1025 = vld [vmem:[#allocation12 + $0x140] sm:$0xff]
    %v1026 = vld [vmem:[#allocation12 + $0x148] sm:$0xff]
    %v1027 = vld [vmem:[#allocation12 + $0x150] sm:$0xff]
    %v1028 = vld [vmem:[#allocation12 + $0x158] sm:$0xff]
    %v1029 = vld [vmem:[#allocation12 + $0x160] sm:$0xff]
    %v1030 = vld [vmem:[#allocation12 + $0x168] sm:$0xff]
    %v1031 = vld [vmem:[#allocation12 + $0x170] sm:$0xff]
    %v1032 = vld [vmem:[#allocation12 + $0x178] sm:$0xff]
    %v1033 = vld [vmem:[%s6] sm:$0x7]
    %v1035 = vlaneseq
    %v1036 = vshrl.u32 %v1035, 7
    %v1037 = vsub.s32 0, %v1036
    %v1038 = vrot.slane %v1033, %v1037
    %v1039 = vlaneseq
    %v1040 = vshrl.u32 %v1039, 7
    %v1041 = vsub.s32 1, %v1040
    %v1042 = vrot.slane %v1033, %v1041
    %v1043 = vlaneseq
    %v1044 = vshrl.u32 %v1043, 7
    %v1045 = vsub.s32 2, %v1044
    %v1046 = vrot.slane %v1033, %v1045
    %1050 = vmatprep.subr.mxu0 %v1031
    %1051 = vmatpush1.msra.mxu0 %v1030
    %1052 = vmatprep.subr.mxu0 %v1028
    %1053 = vmatpush1.msra.mxu0 %v1027
    %1054 = vmatprep.subr.mxu0 %v1025
    %1055 = vmatpush1.msra.mxu0 %v1024
    %1056 = vmatprep.subr.mxu0 %v1022
    %1057 = vmatpush1.msra.mxu0 %v1021
    %1058 = vmatprep.subr.mxu0 %v1019
    %1059 = vmatpush1.msra.mxu0 %v1018
    %1060 = vmatprep.subr.mxu0 %v1016
    %1061 = vmatpush1.msra.mxu0 %v1015
    %1062 = vmatprep.subr.mxu0 %v1013
    %1063 = vmatpush1.msra.mxu0 %v1012
    %1064 = vmatprep.subr.mxu0 %v1010
    %1065 = vmatpush1.msra.mxu0 %v1009
    %1066 = vmatprep.subr.mxu0 %v1007
    %1067 = vmatpush1.msra.mxu0 %v1006
    %1068 = vmatprep.subr.mxu0 %v1004
    %1069 = vmatpush1.msra.mxu0 %v1003
    %1070 = vmatprep.subr.mxu0 %v1001
    %1071 = vmatpush1.msra.mxu0 %v1000
    %1072 = vmatprep.subr.mxu0 %v998
    %1073 = vmatpush1.msra.mxu0 %v997
    %1074 = vmatprep.subr.mxu0 %v995
    %1075 = vmatpush1.msra.mxu0 %v994
    %1076 = vmatprep.subr.mxu0 %v992
    %1077 = vmatpush1.msra.mxu0 %v991
    %1078 = vmatprep.subr.mxu0 %v989
    %1079 = vmatpush1.msra.mxu0 %v988
    %1080 = vmatprep.subr.mxu0 %v986
    %1081 = vmatpush1.msra.mxu0 %v985
    %1082 = vmatprep.subr.mxu0 0.0
    %1083 = vmatpush2.msra.mxu0 0.0
    %1084 = vmatprep.subr.mxu0 0.0
    %1085 = vmatpush2.msra.mxu0 0.0
    %1086 = vmatprep.subr.mxu0 0.0
    %1087 = vmatpush2.msra.mxu0 0.0
    %1088 = vmatprep.subr.mxu0 0.0
    %1089 = vmatpush2.msra.mxu0 0.0
    %1090 = vmatprep.subr.mxu0 0.0
    %1091 = vmatpush2.msra.mxu0 0.0
    %1092 = vmatprep.subr.mxu0 0.0
    %1093 = vmatpush2.msra.mxu0 0.0
    %1094 = vmatprep.subr.mxu0 0.0
    %1095 = vmatpush2.msra.mxu0 0.0
    %1096 = vmatprep.subr.mxu0 0.0
    %1097 = vmatpush2.msra.mxu0 0.0
    %1098 = vmatprep.subr.mxu0 0.0
    %1099 = vmatpush2.msra.mxu0 0.0
    %1100 = vmatprep.subr.mxu0 0.0
    %1101 = vmatpush2.msra.mxu0 0.0
    %1102 = vmatprep.subr.mxu0 0.0
    %1103 = vmatpush2.msra.mxu0 0.0
    %1104 = vmatprep.subr.mxu0 0.0
    %1105 = vmatpush2.msra.mxu0 0.0
    %1106 = vmatprep.subr.mxu0 0.0
    %1107 = vmatpush2.msra.mxu0 0.0
    %1108 = vmatprep.subr.mxu0 0.0
    %1109 = vmatpush2.msra.mxu0 0.0
    %1110 = vmatprep.subr.mxu0 0.0
    %1111 = vmatpush2.msra.mxu0 0.0
    %1112 = vmatprep.subr.mxu0 0.0
    %1113 = vmatpush2.msra.mxu0 0.0
    %1114 = vmatprep.mubr.f32.mxu0 0.0
    %1115 = vmatmul.mubr.f32.gmra.mxu0 %v969
    %v1116 = vpop.f32.mrf.mxu0
    %v1117 = vadd.f32 %v1038, %v1116
    %v1118 = vpop.f32.mrf.mxu0
    %v1119 = vadd.f32 %v1042, %v1118
    %1120 = vmatprep.mubr.f32.mxu0 0.0
    %1121 = vmatmul.mubr.f32.gmra.mxu0 %v970
    %v1122 = vpop.f32.mrf.mxu0
    %v1123 = vadd.f32 %v1038, %v1122
    %v1124 = vpop.f32.mrf.mxu0
    %v1125 = vadd.f32 %v1042, %v1124
    %1126 = vmatprep.mubr.f32.mxu0 0.0
    %1127 = vmatmul.mubr.f32.gmra.mxu0 %v971
    %v1128 = vpop.f32.mrf.mxu0
    %v1129 = vadd.f32 %v1038, %v1128
    %v1130 = vpop.f32.mrf.mxu0
    %v1131 = vadd.f32 %v1042, %v1130
    %1132 = vmatprep.mubr.f32.mxu0 0.0
    %1133 = vmatmul.mubr.f32.gmra.mxu0 %v972
    %v1134 = vpop.f32.mrf.mxu0
    %v1135 = vadd.f32 %v1038, %v1134
    %v1136 = vpop.f32.mrf.mxu0
    %v1137 = vadd.f32 %v1042, %v1136
    %1138 = vmatprep.mubr.f32.mxu0 0.0
    %1139 = vmatmul.mubr.f32.gmra.mxu0 %v973
    %v1140 = vpop.f32.mrf.mxu0
    %v1141 = vadd.f32 %v1038, %v1140
    %v1142 = vpop.f32.mrf.mxu0
    %v1143 = vadd.f32 %v1042, %v1142
    %1144 = vmatprep.mubr.f32.mxu0 0.0
    %1145 = vmatmul.mubr.f32.gmra.mxu0 %v974
    %v1146 = vpop.f32.mrf.mxu0
    %v1147 = vadd.f32 %v1038, %v1146
    %v1148 = vpop.f32.mrf.mxu0
    %v1149 = vadd.f32 %v1042, %v1148
    %1150 = vmatprep.mubr.f32.mxu0 0.0
    %1151 = vmatmul.mubr.f32.gmra.mxu0 %v975
    %v1152 = vpop.f32.mrf.mxu0
    %v1153 = vadd.f32 %v1038, %v1152
    %v1154 = vpop.f32.mrf.mxu0
    %v1155 = vadd.f32 %v1042, %v1154
    %1156 = vmatprep.mubr.f32.mxu0 0.0
    %1157 = vmatmul.mubr.f32.gmra.mxu0 %v976
    %v1158 = vpop.f32.mrf.mxu0
    %v1159 = vadd.f32 %v1038, %v1158
    %v1160 = vpop.f32.mrf.mxu0
    %v1161 = vadd.f32 %v1042, %v1160
    %1162 = vmatprep.mubr.f32.mxu0 0.0
    %1163 = vmatmul.mubr.f32.gmra.mxu0 %v977
    %v1164 = vpop.f32.mrf.mxu0
    %v1165 = vadd.f32 %v1038, %v1164
    %v1166 = vpop.f32.mrf.mxu0
    %v1167 = vadd.f32 %v1042, %v1166
    %1168 = vmatprep.mubr.f32.mxu0 0.0
    %1169 = vmatmul.mubr.f32.gmra.mxu0 %v978
    %v1170 = vpop.f32.mrf.mxu0
    %v1171 = vadd.f32 %v1038, %v1170
    %v1172 = vpop.f32.mrf.mxu0
    %v1173 = vadd.f32 %v1042, %v1172
    %1174 = vmatprep.mubr.f32.mxu0 0.0
    %1175 = vmatmul.mubr.f32.gmra.mxu0 %v979
    %v1176 = vpop.f32.mrf.mxu0
    %v1177 = vadd.f32 %v1038, %v1176
    %v1178 = vpop.f32.mrf.mxu0
    %v1179 = vadd.f32 %v1042, %v1178
    %1180 = vmatprep.mubr.f32.mxu0 0.0
    %1181 = vmatmul.mubr.f32.gmra.mxu0 %v980
    %v1182 = vpop.f32.mrf.mxu0
    %v1183 = vadd.f32 %v1038, %v1182
    %v1184 = vpop.f32.mrf.mxu0
    %v1185 = vadd.f32 %v1042, %v1184
    %1186 = vmatprep.mubr.f32.mxu0 0.0
    %1187 = vmatmul.mubr.f32.gmra.mxu0 %v981
    %v1188 = vpop.f32.mrf.mxu0
    %v1189 = vadd.f32 %v1038, %v1188
    %v1190 = vpop.f32.mrf.mxu0
    %v1191 = vadd.f32 %v1042, %v1190
    %1192 = vmatprep.mubr.f32.mxu0 0.0
    %1193 = vmatmul.mubr.f32.gmra.mxu0 %v982
    %v1194 = vpop.f32.mrf.mxu0
    %v1195 = vadd.f32 %v1038, %v1194
    %v1196 = vpop.f32.mrf.mxu0
    %v1197 = vadd.f32 %v1042, %v1196
    %1198 = vmatprep.mubr.f32.mxu0 0.0
    %1199 = vmatmul.mubr.f32.gmra.mxu0 %v983
    %v1200 = vpop.f32.mrf.mxu0
    %v1201 = vadd.f32 %v1038, %v1200
    %v1202 = vpop.f32.mrf.mxu0
    %v1203 = vadd.f32 %v1042, %v1202
    %1204 = vmatprep.mubr.f32.mxu0 0.0
    %1205 = vmatmul.mubr.f32.gmra.mxu0 %v984
    %v1206 = vpop.f32.mrf.mxu0
    %v1207 = vadd.f32 %v1038, %v1206
    %v1208 = vpop.f32.mrf.mxu0
    %v1209 = vadd.f32 %v1042, %v1208
    %1210 = vdwg.mxu0
    %1211 = vmatprep.subr.mxu0 0.0
    %1212 = vmatpush1.msra.mxu0 %v1032
    %1213 = vmatprep.subr.mxu0 0.0
    %1214 = vmatpush1.msra.mxu0 %v1029
    %1215 = vmatprep.subr.mxu0 0.0
    %1216 = vmatpush1.msra.mxu0 %v1026
    %1217 = vmatprep.subr.mxu0 0.0
    %1218 = vmatpush1.msra.mxu0 %v1023
    %1219 = vmatprep.subr.mxu0 0.0
    %1220 = vmatpush1.msra.mxu0 %v1020
    %1221 = vmatprep.subr.mxu0 0.0
    %1222 = vmatpush1.msra.mxu0 %v1017
    %1223 = vmatprep.subr.mxu0 0.0
    %1224 = vmatpush1.msra.mxu0 %v1014
    %1225 = vmatprep.subr.mxu0 0.0
    %1226 = vmatpush1.msra.mxu0 %v1011
    %1227 = vmatprep.subr.mxu0 0.0
    %1228 = vmatpush1.msra.mxu0 %v1008
    %1229 = vmatprep.subr.mxu0 0.0
    %1230 = vmatpush1.msra.mxu0 %v1005
    %1231 = vmatprep.subr.mxu0 0.0
    %1232 = vmatpush1.msra.mxu0 %v1002
    %1233 = vmatprep.subr.mxu0 0.0
    %1234 = vmatpush1.msra.mxu0 %v999
    %1235 = vmatprep.subr.mxu0 0.0
    %1236 = vmatpush1.msra.mxu0 %v996
    %1237 = vmatprep.subr.mxu0 0.0
    %1238 = vmatpush1.msra.mxu0 %v993
    %1239 = vmatprep.subr.mxu0 0.0
    %1240 = vmatpush1.msra.mxu0 %v990
    %1241 = vmatprep.subr.mxu0 0.0
    %1242 = vmatpush1.msra.mxu0 %v987
    %1243 = vmatprep.subr.mxu0 0.0
    %1244 = vmatpush2.msra.mxu0 0.0
    %1245 = vmatprep.subr.mxu0 0.0
    %1246 = vmatpush2.msra.mxu0 0.0
    %1247 = vmatprep.subr.mxu0 0.0
    %1248 = vmatpush2.msra.mxu0 0.0
    %1249 = vmatprep.subr.mxu0 0.0
    %1250 = vmatpush2.msra.mxu0 0.0
    %1251 = vmatprep.subr.mxu0 0.0
    %1252 = vmatpush2.msra.mxu0 0.0
    %1253 = vmatprep.subr.mxu0 0.0
    %1254 = vmatpush2.msra.mxu0 0.0
    %1255 = vmatprep.subr.mxu0 0.0
    %1256 = vmatpush2.msra.mxu0 0.0
    %1257 = vmatprep.subr.mxu0 0.0
    %1258 = vmatpush2.msra.mxu0 0.0
    %1259 = vmatprep.subr.mxu0 0.0
    %1260 = vmatpush2.msra.mxu0 0.0
    %1261 = vmatprep.subr.mxu0 0.0
    %1262 = vmatpush2.msra.mxu0 0.0
    %1263 = vmatprep.subr.mxu0 0.0
    %1264 = vmatpush2.msra.mxu0 0.0
    %1265 = vmatprep.subr.mxu0 0.0
    %1266 = vmatpush2.msra.mxu0 0.0
    %1267 = vmatprep.subr.mxu0 0.0
    %1268 = vmatpush2.msra.mxu0 0.0
    %1269 = vmatprep.subr.mxu0 0.0
    %1270 = vmatpush2.msra.mxu0 0.0
    %1271 = vmatprep.subr.mxu0 0.0
    %1272 = vmatpush2.msra.mxu0 0.0
    %1273 = vmatprep.subr.mxu0 0.0
    %1274 = vmatpush2.msra.mxu0 0.0
    %1275 = vmatprep.mubr.f32.mxu0 0.0
    %1276 = vmatmul.mubr.f32.gmra.mxu0 %v969
    %v1277 = vpop.f32.mrf.mxu0
    %v1278 = vadd.f32 %v1046, %v1277
    %v1279 = vpop.f32.mrf.mxu0
    %1280 = vmatprep.mubr.f32.mxu0 0.0
    %1281 = vmatmul.mubr.f32.gmra.mxu0 %v970
    %v1282 = vpop.f32.mrf.mxu0
    %v1283 = vadd.f32 %v1046, %v1282
    %v1284 = vpop.f32.mrf.mxu0
    %1285 = vmatprep.mubr.f32.mxu0 0.0
    %1286 = vmatmul.mubr.f32.gmra.mxu0 %v971
    %v1287 = vpop.f32.mrf.mxu0
    %v1288 = vadd.f32 %v1046, %v1287
    %v1289 = vpop.f32.mrf.mxu0
    %1290 = vmatprep.mubr.f32.mxu0 0.0
    %1291 = vmatmul.mubr.f32.gmra.mxu0 %v972
    %v1292 = vpop.f32.mrf.mxu0
    %v1293 = vadd.f32 %v1046, %v1292
    %v1294 = vpop.f32.mrf.mxu0
    %1295 = vmatprep.mubr.f32.mxu0 0.0
    %1296 = vmatmul.mubr.f32.gmra.mxu0 %v973
    %v1297 = vpop.f32.mrf.mxu0
    %v1298 = vadd.f32 %v1046, %v1297
    %v1299 = vpop.f32.mrf.mxu0
    %1300 = vmatprep.mubr.f32.mxu0 0.0
    %1301 = vmatmul.mubr.f32.gmra.mxu0 %v974
    %v1302 = vpop.f32.mrf.mxu0
    %v1303 = vadd.f32 %v1046, %v1302
    %v1304 = vpop.f32.mrf.mxu0
    %1305 = vmatprep.mubr.f32.mxu0 0.0
    %1306 = vmatmul.mubr.f32.gmra.mxu0 %v975
    %v1307 = vpop.f32.mrf.mxu0
    %v1308 = vadd.f32 %v1046, %v1307
    %v1309 = vpop.f32.mrf.mxu0
    %1310 = vmatprep.mubr.f32.mxu0 0.0
    %1311 = vmatmul.mubr.f32.gmra.mxu0 %v976
    %v1312 = vpop.f32.mrf.mxu0
    %v1313 = vadd.f32 %v1046, %v1312
    %v1314 = vpop.f32.mrf.mxu0
    %1315 = vmatprep.mubr.f32.mxu0 0.0
    %1316 = vmatmul.mubr.f32.gmra.mxu0 %v977
    %v1317 = vpop.f32.mrf.mxu0
    %v1318 = vadd.f32 %v1046, %v1317
    %v1319 = vpop.f32.mrf.mxu0
    %1320 = vmatprep.mubr.f32.mxu0 0.0
    %1321 = vmatmul.mubr.f32.gmra.mxu0 %v978
    %v1322 = vpop.f32.mrf.mxu0
    %v1323 = vadd.f32 %v1046, %v1322
    %v1324 = vpop.f32.mrf.mxu0
    %1325 = vmatprep.mubr.f32.mxu0 0.0
    %1326 = vmatmul.mubr.f32.gmra.mxu0 %v979
    %v1327 = vpop.f32.mrf.mxu0
    %v1328 = vadd.f32 %v1046, %v1327
    %v1329 = vpop.f32.mrf.mxu0
    %1330 = vmatprep.mubr.f32.mxu0 0.0
    %1331 = vmatmul.mubr.f32.gmra.mxu0 %v980
    %v1332 = vpop.f32.mrf.mxu0
    %v1333 = vadd.f32 %v1046, %v1332
    %v1334 = vpop.f32.mrf.mxu0
    %1335 = vmatprep.mubr.f32.mxu0 0.0
    %1336 = vmatmul.mubr.f32.gmra.mxu0 %v981
    %v1337 = vpop.f32.mrf.mxu0
    %v1338 = vadd.f32 %v1046, %v1337
    %v1339 = vpop.f32.mrf.mxu0
    %1340 = vmatprep.mubr.f32.mxu0 0.0
    %1341 = vmatmul.mubr.f32.gmra.mxu0 %v982
    %v1342 = vpop.f32.mrf.mxu0
    %v1343 = vadd.f32 %v1046, %v1342
    %v1344 = vpop.f32.mrf.mxu0
    %1345 = vmatprep.mubr.f32.mxu0 0.0
    %1346 = vmatmul.mubr.f32.gmra.mxu0 %v983
    %v1347 = vpop.f32.mrf.mxu0
    %v1348 = vadd.f32 %v1046, %v1347
    %v1349 = vpop.f32.mrf.mxu0
    %1350 = vmatprep.mubr.f32.mxu0 0.0
    %1351 = vmatmul.mubr.f32.gmra.mxu0 %v984
    %v1352 = vpop.f32.mrf.mxu0
    %v1353 = vadd.f32 %v1046, %v1352
    %v1354 = vpop.f32.mrf.mxu0
    %1355 = vdwg.mxu0
    %vm1356 = vcmask 261120
    %v1358 = vsel %vm1356, %v1117, 0
    %v1361 = vsel %vm1356, %v1123, 0
    %v1364 = vsel %vm1356, %v1129, 0
    %v1367 = vsel %vm1356, %v1135, 0
    %v1370 = vsel %vm1356, %v1141, 0
    %v1373 = vsel %vm1356, %v1147, 0
    %v1376 = vsel %vm1356, %v1153, 0
    %v1379 = vsel %vm1356, %v1159, 0
    %v1382 = vsel %vm1356, %v1119, 0
    %v1385 = vsel %vm1356, %v1125, 0
    %v1388 = vsel %vm1356, %v1131, 0
    %v1391 = vsel %vm1356, %v1137, 0
    %v1394 = vsel %vm1356, %v1143, 0
    %v1397 = vsel %vm1356, %v1149, 0
    %v1400 = vsel %vm1356, %v1155, 0
    %v1403 = vsel %vm1356, %v1161, 0
    %1405 = vmatprep.subr.mxu0 0.0
    %1406 = vmatpush1.xpose.msra.mxu0 0.0
    %1407 = vmatprep.subr.mxu0 0.0
    %1408 = vmatpush1.xpose.msra.mxu0 0.0
    %1409 = vmatprep.subr.mxu0 0.0
    %1410 = vmatpush1.xpose.msra.mxu0 0.0
    %1411 = vmatprep.subr.mxu0 0.0
    %1412 = vmatpush1.xpose.msra.mxu0 0.0
    %1413 = vmatprep.subr.mxu0 0.0
    %1414 = vmatpush1.xpose.msra.mxu0 0.0
    %1415 = vmatprep.subr.mxu0 0.0
    %1416 = vmatpush1.xpose.msra.mxu0 0.0
    %1417 = vmatprep.subr.mxu0 0.0
    %1418 = vmatpush1.xpose.msra.mxu0 0.0
    %1419 = vmatprep.subr.mxu0 0.0
    %1420 = vmatpush1.xpose.msra.mxu0 0.0
    %1421 = vmatprep.subr.mxu0 0.0
    %1422 = vmatpush1.xpose.msra.mxu0 %v1403
    %1423 = vmatprep.subr.mxu0 0.0
    %1424 = vmatpush1.xpose.msra.mxu0 %v1400
    %1425 = vmatprep.subr.mxu0 0.0
    %1426 = vmatpush1.xpose.msra.mxu0 %v1397
    %1427 = vmatprep.subr.mxu0 0.0
    %1428 = vmatpush1.xpose.msra.mxu0 %v1394
    %1429 = vmatprep.subr.mxu0 0.0
    %1430 = vmatpush1.xpose.msra.mxu0 %v1391
    %1431 = vmatprep.subr.mxu0 0.0
    %1432 = vmatpush1.xpose.msra.mxu0 %v1388
    %1433 = vmatprep.subr.mxu0 0.0
    %1434 = vmatpush1.xpose.msra.mxu0 %v1385
    %1435 = vmatprep.subr.mxu0 0.0
    %1436 = vmatpush1.xpose.msra.mxu0 %v1382
    %1437 = vmatprep.subr.mxu0 0.0
    %1438 = vmatpush2.xpose.msra.mxu0 0.0
    %1439 = vmatprep.subr.mxu0 0.0
    %1440 = vmatpush2.xpose.msra.mxu0 0.0
    %1441 = vmatprep.subr.mxu0 0.0
    %1442 = vmatpush2.xpose.msra.mxu0 0.0
    %1443 = vmatprep.subr.mxu0 0.0
    %1444 = vmatpush2.xpose.msra.mxu0 0.0
    %1445 = vmatprep.subr.mxu0 0.0
    %1446 = vmatpush2.xpose.msra.mxu0 0.0
    %1447 = vmatprep.subr.mxu0 0.0
    %1448 = vmatpush2.xpose.msra.mxu0 0.0
    %1449 = vmatprep.subr.mxu0 0.0
    %1450 = vmatpush2.xpose.msra.mxu0 0.0
    %1451 = vmatprep.subr.mxu0 0.0
    %1452 = vmatpush2.xpose.msra.mxu0 0.0
    %1453 = vmatprep.subr.mxu0 0.0
    %1454 = vmatpush2.xpose.msra.mxu0 0.0
    %1455 = vmatprep.subr.mxu0 0.0
    %1456 = vmatpush2.xpose.msra.mxu0 0.0
    %1457 = vmatprep.subr.mxu0 0.0
    %1458 = vmatpush2.xpose.msra.mxu0 0.0
    %1459 = vmatprep.subr.mxu0 0.0
    %1460 = vmatpush2.xpose.msra.mxu0 0.0
    %1461 = vmatprep.subr.mxu0 0.0
    %1462 = vmatpush2.xpose.msra.mxu0 0.0
    %1463 = vmatprep.subr.mxu0 0.0
    %1464 = vmatpush2.xpose.msra.mxu0 0.0
    %1465 = vmatprep.subr.mxu0 0.0
    %1466 = vmatpush2.xpose.msra.mxu0 0.0
    %1467 = vmatprep.subr.mxu0 0.0
    %1468 = vmatpush2.xpose.msra.mxu0 0.0
    %1469 = vmatprep.mubr.f32.mxu0 0.0
    %1470 = vmatmul.mubr.f32.gmra.mxu0 %v1358
    %v1471 = vpop.f32.mrf.mxu0
    %v1472 = vadd.f32 0.0, %v1471
    %v1473 = vpop.f32.mrf.mxu0
    %1474 = vmatprep.mubr.f32.mxu0 0.0
    %1475 = vmatmul.mubr.f32.gmra.mxu0 %v1361
    %v1476 = vpop.f32.mrf.mxu0
    %v1477 = vadd.f32 0.0, %v1476
    %v1478 = vpop.f32.mrf.mxu0
    %1479 = vmatprep.mubr.f32.mxu0 0.0
    %1480 = vmatmul.mubr.f32.gmra.mxu0 %v1364
    %v1481 = vpop.f32.mrf.mxu0
    %v1482 = vadd.f32 0.0, %v1481
    %v1483 = vpop.f32.mrf.mxu0
    %1484 = vmatprep.mubr.f32.mxu0 0.0
    %1485 = vmatmul.mubr.f32.gmra.mxu0 %v1367
    %v1486 = vpop.f32.mrf.mxu0
    %v1487 = vadd.f32 0.0, %v1486
    %v1488 = vpop.f32.mrf.mxu0
    %1489 = vmatprep.mubr.f32.mxu0 0.0
    %1490 = vmatmul.mubr.f32.gmra.mxu0 %v1370
    %v1491 = vpop.f32.mrf.mxu0
    %v1492 = vadd.f32 0.0, %v1491
    %v1493 = vpop.f32.mrf.mxu0
    %1494 = vmatprep.mubr.f32.mxu0 0.0
    %1495 = vmatmul.mubr.f32.gmra.mxu0 %v1373
    %v1496 = vpop.f32.mrf.mxu0
    %v1497 = vadd.f32 0.0, %v1496
    %v1498 = vpop.f32.mrf.mxu0
    %1499 = vmatprep.mubr.f32.mxu0 0.0
    %1500 = vmatmul.mubr.f32.gmra.mxu0 %v1376
    %v1501 = vpop.f32.mrf.mxu0
    %v1502 = vadd.f32 0.0, %v1501
    %v1503 = vpop.f32.mrf.mxu0
    %1504 = vmatprep.mubr.f32.mxu0 0.0
    %1505 = vmatmul.mubr.f32.gmra.mxu0 %v1379
    %v1506 = vpop.f32.mrf.mxu0
    %v1507 = vadd.f32 0.0, %v1506
    %v1508 = vpop.f32.mrf.mxu0
    %1509 = vdwg.mxu0
    %vm1510 = vcmask 523264
    %v1511 = vsel %vm1510, %v1472, -inf
    %1512 = vmax.xlane.f32.xlu0 %v1511
    %v1513 = vpop.xlane.xlu0 %1512
    %v1514 = vsel %vm1510, %v1477, -inf
    %1515 = vmax.xlane.f32.xlu0 %v1514
    %v1516 = vpop.xlane.xlu0 %1515
    %v1517 = vsel %vm1510, %v1482, -inf
    %1518 = vmax.xlane.f32.xlu0 %v1517
    %v1519 = vpop.xlane.xlu0 %1518
    %v1520 = vsel %vm1510, %v1487, -inf
    %1521 = vmax.xlane.f32.xlu0 %v1520
    %v1522 = vpop.xlane.xlu0 %1521
    %v1523 = vsel %vm1510, %v1492, -inf
    %1524 = vmax.xlane.f32.xlu0 %v1523
    %v1525 = vpop.xlane.xlu0 %1524
    %v1526 = vsel %vm1510, %v1497, -inf
    %1527 = vmax.xlane.f32.xlu0 %v1526
    %v1528 = vpop.xlane.xlu0 %1527
    %v1529 = vsel %vm1510, %v1502, -inf
    %1530 = vmax.xlane.f32.xlu0 %v1529
    %v1531 = vpop.xlane.xlu0 %1530
    %v1532 = vsel %vm1510, %v1507, -inf
    %1533 = vmax.xlane.f32.xlu0 %v1532
    %v1534 = vpop.xlane.xlu0 %1533
    %v1535 = vsub.f32 %v1472, %v1513
    %v1536 = vsub.f32 %v1477, %v1516
    %v1537 = vsub.f32 %v1482, %v1519
    %v1538 = vsub.f32 %v1487, %v1522
    %v1539 = vsub.f32 %v1492, %v1525
    %v1540 = vsub.f32 %v1497, %v1528
    %v1541 = vsub.f32 %v1502, %v1531
    %v1542 = vsub.f32 %v1507, %v1534
    %v1543 = vmul.f32 %v1535, 1.442695
    %v1544 = vpow.pop %v1543
    %v1545 = vmul.f32 %v1536, 1.442695
    %v1546 = vpow.pop %v1545
    %v1547 = vmul.f32 %v1537, 1.442695
    %v1548 = vpow.pop %v1547
    %v1549 = vmul.f32 %v1538, 1.442695
    %v1550 = vpow.pop %v1549
    %v1551 = vmul.f32 %v1539, 1.442695
    %v1552 = vpow.pop %v1551
    %v1553 = vmul.f32 %v1540, 1.442695
    %v1554 = vpow.pop %v1553
    %v1555 = vmul.f32 %v1541, 1.442695
    %v1556 = vpow.pop %v1555
    %v1557 = vmul.f32 %v1542, 1.442695
    %v1558 = vpow.pop %v1557
    %v1559 = vsel %vm1510, %v1544, 0.0
    %1560 = vadd.xlane.f32.xlu0 %v1559
    %v1561 = vpop.xlane.xlu0 %1560
    %v1562 = vsel %vm1510, %v1546, 0.0
    %1563 = vadd.xlane.f32.xlu0 %v1562
    %v1564 = vpop.xlane.xlu0 %1563
    %v1565 = vsel %vm1510, %v1548, 0.0
    %1566 = vadd.xlane.f32.xlu0 %v1565
    %v1567 = vpop.xlane.xlu0 %1566
    %v1568 = vsel %vm1510, %v1550, 0.0
    %1569 = vadd.xlane.f32.xlu0 %v1568
    %v1570 = vpop.xlane.xlu0 %1569
    %v1571 = vsel %vm1510, %v1552, 0.0
    %1572 = vadd.xlane.f32.xlu0 %v1571
    %v1573 = vpop.xlane.xlu0 %1572
    %v1574 = vsel %vm1510, %v1554, 0.0
    %1575 = vadd.xlane.f32.xlu0 %v1574
    %v1576 = vpop.xlane.xlu0 %1575
    %v1577 = vsel %vm1510, %v1556, 0.0
    %1578 = vadd.xlane.f32.xlu0 %v1577
    %v1579 = vpop.xlane.xlu0 %1578
    %v1580 = vsel %vm1510, %v1558, 0.0
    %1581 = vadd.xlane.f32.xlu0 %v1580
    %v1582 = vpop.xlane.xlu0 %1581
    %v1583 = vrcp.pop %v1561
    %v1584 = vrcp.pop %v1564
    %v1585 = vrcp.pop %v1567
    %v1586 = vrcp.pop %v1570
    %v1587 = vrcp.pop %v1573
    %v1588 = vrcp.pop %v1576
    %v1589 = vrcp.pop %v1579
    %v1590 = vrcp.pop %v1582
    %v1591 = vmul.f32 %v1561, %v1583
    %v1592 = vmul.f32 %v1564, %v1584
    %v1593 = vmul.f32 %v1567, %v1585
    %v1594 = vmul.f32 %v1570, %v1586
    %v1595 = vmul.f32 %v1573, %v1587
    %v1596 = vmul.f32 %v1576, %v1588
    %v1597 = vmul.f32 %v1579, %v1589
    %v1598 = vmul.f32 %v1582, %v1590
    %v1599 = vsub.f32 2.0, %v1591
    %v1600 = vsub.f32 2.0, %v1592
    %v1601 = vsub.f32 2.0, %v1593
    %v1602 = vsub.f32 2.0, %v1594
    %v1603 = vsub.f32 2.0, %v1595
    %v1604 = vsub.f32 2.0, %v1596
    %v1605 = vsub.f32 2.0, %v1597
    %v1606 = vsub.f32 2.0, %v1598
    %v1607 = vmul.f32 %v1583, %v1599
    %v1608 = vmul.f32 %v1584, %v1600
    %v1609 = vmul.f32 %v1585, %v1601
    %v1610 = vmul.f32 %v1586, %v1602
    %v1611 = vmul.f32 %v1587, %v1603
    %v1612 = vmul.f32 %v1588, %v1604
    %v1613 = vmul.f32 %v1589, %v1605
    %v1614 = vmul.f32 %v1590, %v1606
    %v1616 = vsel %vm1510, %v1544, 0
    %v1619 = vsel %vm1510, %v1546, 0
    %v1622 = vsel %vm1510, %v1548, 0
    %v1625 = vsel %vm1510, %v1550, 0
    %v1628 = vsel %vm1510, %v1552, 0
    %v1631 = vsel %vm1510, %v1554, 0
    %v1634 = vsel %vm1510, %v1556, 0
    %v1637 = vsel %vm1510, %v1558, 0
    %1639 = vmatprep.subr.mxu0 0.0
    %1640 = vmatpush1.msra.mxu0 0.0
    %1641 = vmatprep.subr.mxu0 0.0
    %1642 = vmatpush1.msra.mxu0 0.0
    %1643 = vmatprep.subr.mxu0 0.0
    %1644 = vmatpush1.msra.mxu0 0.0
    %1645 = vmatprep.subr.mxu0 0.0
    %1646 = vmatpush1.msra.mxu0 0.0
    %1647 = vmatprep.subr.mxu0 0.0
    %1648 = vmatpush1.msra.mxu0 0.0
    %1649 = vmatprep.subr.mxu0 0.0
    %1650 = vmatpush1.msra.mxu0 0.0
    %1651 = vmatprep.subr.mxu0 0.0
    %1652 = vmatpush1.msra.mxu0 0.0
    %1653 = vmatprep.subr.mxu0 0.0
    %1654 = vmatpush1.msra.mxu0 0.0
    %1655 = vmatprep.subr.mxu0 0.0
    %1656 = vmatpush1.msra.mxu0 %v1313
    %1657 = vmatprep.subr.mxu0 0.0
    %1658 = vmatpush1.msra.mxu0 %v1308
    %1659 = vmatprep.subr.mxu0 0.0
    %1660 = vmatpush1.msra.mxu0 %v1303
    %1661 = vmatprep.subr.mxu0 0.0
    %1662 = vmatpush1.msra.mxu0 %v1298
    %1663 = vmatprep.subr.mxu0 0.0
    %1664 = vmatpush1.msra.mxu0 %v1293
    %1665 = vmatprep.subr.mxu0 0.0
    %1666 = vmatpush1.msra.mxu0 %v1288
    %1667 = vmatprep.subr.mxu0 0.0
    %1668 = vmatpush1.msra.mxu0 %v1283
    %1669 = vmatprep.subr.mxu0 0.0
    %1670 = vmatpush1.msra.mxu0 %v1278
    %1671 = vmatprep.subr.mxu0 0.0
    %1672 = vmatpush2.msra.mxu0 0.0
    %1673 = vmatprep.subr.mxu0 0.0
    %1674 = vmatpush2.msra.mxu0 0.0
    %1675 = vmatprep.subr.mxu0 0.0
    %1676 = vmatpush2.msra.mxu0 0.0
    %1677 = vmatprep.subr.mxu0 0.0
    %1678 = vmatpush2.msra.mxu0 0.0
    %1679 = vmatprep.subr.mxu0 0.0
    %1680 = vmatpush2.msra.mxu0 0.0
    %1681 = vmatprep.subr.mxu0 0.0
    %1682 = vmatpush2.msra.mxu0 0.0
    %1683 = vmatprep.subr.mxu0 0.0
    %1684 = vmatpush2.msra.mxu0 0.0
    %1685 = vmatprep.subr.mxu0 0.0
    %1686 = vmatpush2.msra.mxu0 0.0
    %1687 = vmatprep.subr.mxu0 0.0
    %1688 = vmatpush2.msra.mxu0 0.0
    %1689 = vmatprep.subr.mxu0 0.0
    %1690 = vmatpush2.msra.mxu0 0.0
    %1691 = vmatprep.subr.mxu0 0.0
    %1692 = vmatpush2.msra.mxu0 0.0
    %1693 = vmatprep.subr.mxu0 0.0
    %1694 = vmatpush2.msra.mxu0 0.0
    %1695 = vmatprep.subr.mxu0 0.0
    %1696 = vmatpush2.msra.mxu0 0.0
    %1697 = vmatprep.subr.mxu0 0.0
    %1698 = vmatpush2.msra.mxu0 0.0
    %1699 = vmatprep.subr.mxu0 0.0
    %1700 = vmatpush2.msra.mxu0 0.0
    %1701 = vmatprep.subr.mxu0 0.0
    %1702 = vmatpush2.msra.mxu0 0.0
    %1703 = vmatprep.mubr.f32.mxu0 0.0
    %1704 = vmatmul.mubr.f32.gmra.mxu0 %v1616
    %v1705 = vpop.f32.mrf.mxu0
    %v1706 = vadd.f32 0.0, %v1705
    %v1707 = vpop.f32.mrf.mxu0
    %1708 = vmatprep.mubr.f32.mxu0 0.0
    %1709 = vmatmul.mubr.f32.gmra.mxu0 %v1619
    %v1710 = vpop.f32.mrf.mxu0
    %v1711 = vadd.f32 0.0, %v1710
    %v1712 = vpop.f32.mrf.mxu0
    %1713 = vmatprep.mubr.f32.mxu0 0.0
    %1714 = vmatmul.mubr.f32.gmra.mxu0 %v1622
    %v1715 = vpop.f32.mrf.mxu0
    %v1716 = vadd.f32 0.0, %v1715
    %v1717 = vpop.f32.mrf.mxu0
    %1718 = vmatprep.mubr.f32.mxu0 0.0
    %1719 = vmatmul.mubr.f32.gmra.mxu0 %v1625
    %v1720 = vpop.f32.mrf.mxu0
    %v1721 = vadd.f32 0.0, %v1720
    %v1722 = vpop.f32.mrf.mxu0
    %1723 = vmatprep.mubr.f32.mxu0 0.0
    %1724 = vmatmul.mubr.f32.gmra.mxu0 %v1628
    %v1725 = vpop.f32.mrf.mxu0
    %v1726 = vadd.f32 0.0, %v1725
    %v1727 = vpop.f32.mrf.mxu0
    %1728 = vmatprep.mubr.f32.mxu0 0.0
    %1729 = vmatmul.mubr.f32.gmra.mxu0 %v1631
    %v1730 = vpop.f32.mrf.mxu0
    %v1731 = vadd.f32 0.0, %v1730
    %v1732 = vpop.f32.mrf.mxu0
    %1733 = vmatprep.mubr.f32.mxu0 0.0
    %1734 = vmatmul.mubr.f32.gmra.mxu0 %v1634
    %v1735 = vpop.f32.mrf.mxu0
    %v1736 = vadd.f32 0.0, %v1735
    %v1737 = vpop.f32.mrf.mxu0
    %1738 = vmatprep.mubr.f32.mxu0 0.0
    %1739 = vmatmul.mubr.f32.gmra.mxu0 %v1637
    %v1740 = vpop.f32.mrf.mxu0
    %v1741 = vadd.f32 0.0, %v1740
    %v1742 = vpop.f32.mrf.mxu0
    %1743 = vdwg.mxu0
    %v1744 = vmul.f32 %v1706, %v1607
    %v1745 = vmul.f32 %v1711, %v1608
    %v1746 = vmul.f32 %v1716, %v1609
    %v1747 = vmul.f32 %v1721, %v1610
    %v1748 = vmul.f32 %v1726, %v1611
    %v1749 = vmul.f32 %v1731, %v1612
    %v1750 = vmul.f32 %v1736, %v1613
    %v1751 = vmul.f32 %v1741, %v1614
    %1752 = vst.msk [vmem:[#allocation2] sm:$0xff] %vm1356, %v1744
    %1753 = vst.msk [vmem:[#allocation2 + $0x8] sm:$0xff] %vm1356, %v1745
    %1754 = vst.msk [vmem:[#allocation2 + $0x10] sm:$0xff] %vm1356, %v1746
    %1755 = vst.msk [vmem:[#allocation2 + $0x18] sm:$0xff] %vm1356, %v1747
    %1756 = vst.msk [vmem:[#allocation2 + $0x20] sm:$0xff] %vm1356, %v1748
    %1757 = vst.msk [vmem:[#allocation2 + $0x28] sm:$0xff] %vm1356, %v1749
    %1758 = vst.msk [vmem:[#allocation2 + $0x30] sm:$0xff] %vm1356, %v1750
    %1759 = vst.msk [vmem:[#allocation2 + $0x38] sm:$0xff] %vm1356, %v1751
    %1760 = vrot.lane.b32.xlu0 %v1117, 96
    %v1761 = vpop.permute.xlu0 %1760
    %1762 = vrot.lane.b32.xlu0 %v1123, 96
    %v1763 = vpop.permute.xlu0 %1762
    %1764 = vrot.lane.b32.xlu0 %v1129, 96
    %v1765 = vpop.permute.xlu0 %1764
    %1766 = vrot.lane.b32.xlu0 %v1135, 96
    %v1767 = vpop.permute.xlu0 %1766
    %1768 = vrot.lane.b32.xlu0 %v1141, 96
    %v1769 = vpop.permute.xlu0 %1768
    %1770 = vrot.lane.b32.xlu0 %v1147, 96
    %v1771 = vpop.permute.xlu0 %1770
    %1772 = vrot.lane.b32.xlu0 %v1153, 96
    %v1773 = vpop.permute.xlu0 %1772
    %1774 = vrot.lane.b32.xlu0 %v1159, 96
    %v1775 = vpop.permute.xlu0 %1774
    %1776 = vrot.lane.b32.xlu0 %v1119, 96
    %v1777 = vpop.permute.xlu0 %1776
    %1778 = vrot.lane.b32.xlu0 %v1125, 96
    %v1779 = vpop.permute.xlu0 %1778
    %1780 = vrot.lane.b32.xlu0 %v1131, 96
    %v1781 = vpop.permute.xlu0 %1780
    %1782 = vrot.lane.b32.xlu0 %v1137, 96
    %v1783 = vpop.permute.xlu0 %1782
    %1784 = vrot.lane.b32.xlu0 %v1143, 96
    %v1785 = vpop.permute.xlu0 %1784
    %1786 = vrot.lane.b32.xlu0 %v1149, 96
    %v1787 = vpop.permute.xlu0 %1786
    %1788 = vrot.lane.b32.xlu0 %v1155, 96
    %v1789 = vpop.permute.xlu0 %1788
    %1790 = vrot.lane.b32.xlu0 %v1161, 96
    %v1791 = vpop.permute.xlu0 %1790
    %v1792 = vsel %vm1356, %v1761, 0
    %v1794 = vsel %vm1356, %v1763, 0
    %v1796 = vsel %vm1356, %v1765, 0
    %v1798 = vsel %vm1356, %v1767, 0
    %v1800 = vsel %vm1356, %v1769, 0
    %v1802 = vsel %vm1356, %v1771, 0
    %v1804 = vsel %vm1356, %v1773, 0
    %v1806 = vsel %vm1356, %v1775, 0
    %v1808 = vsel %vm1356, %v1777, 0
    %v1810 = vsel %vm1356, %v1779, 0
    %v1812 = vsel %vm1356, %v1781, 0
    %v1814 = vsel %vm1356, %v1783, 0
    %v1816 = vsel %vm1356, %v1785, 0
    %v1818 = vsel %vm1356, %v1787, 0
    %v1820 = vsel %vm1356, %v1789, 0
    %v1822 = vsel %vm1356, %v1791, 0
    %1824 = vmatprep.subr.mxu0 0.0
    %1825 = vmatpush1.xpose.msra.mxu0 0.0
    %1826 = vmatprep.subr.mxu0 0.0
    %1827 = vmatpush1.xpose.msra.mxu0 0.0
    %1828 = vmatprep.subr.mxu0 0.0
    %1829 = vmatpush1.xpose.msra.mxu0 0.0
    %1830 = vmatprep.subr.mxu0 0.0
    %1831 = vmatpush1.xpose.msra.mxu0 0.0
    %1832 = vmatprep.subr.mxu0 0.0
    %1833 = vmatpush1.xpose.msra.mxu0 0.0
    %1834 = vmatprep.subr.mxu0 0.0
    %1835 = vmatpush1.xpose.msra.mxu0 0.0
    %1836 = vmatprep.subr.mxu0 0.0
    %1837 = vmatpush1.xpose.msra.mxu0 0.0
    %1838 = vmatprep.subr.mxu0 0.0
    %1839 = vmatpush1.xpose.msra.mxu0 0.0
    %1840 = vmatprep.subr.mxu0 0.0
    %1841 = vmatpush1.xpose.msra.mxu0 %v1822
    %1842 = vmatprep.subr.mxu0 0.0
    %1843 = vmatpush1.xpose.msra.mxu0 %v1820
    %1844 = vmatprep.subr.mxu0 0.0
    %1845 = vmatpush1.xpose.msra.mxu0 %v1818
    %1846 = vmatprep.subr.mxu0 0.0
    %1847 = vmatpush1.xpose.msra.mxu0 %v1816
    %1848 = vmatprep.subr.mxu0 0.0
    %1849 = vmatpush1.xpose.msra.mxu0 %v1814
    %1850 = vmatprep.subr.mxu0 0.0
    %1851 = vmatpush1.xpose.msra.mxu0 %v1812
    %1852 = vmatprep.subr.mxu0 0.0
    %1853 = vmatpush1.xpose.msra.mxu0 %v1810
    %1854 = vmatprep.subr.mxu0 0.0
    %1855 = vmatpush1.xpose.msra.mxu0 %v1808
    %1856 = vmatprep.subr.mxu0 0.0
    %1857 = vmatpush2.xpose.msra.mxu0 0.0
    %1858 = vmatprep.subr.mxu0 0.0
    %1859 = vmatpush2.xpose.msra.mxu0 0.0
    %1860 = vmatprep.subr.mxu0 0.0
    %1861 = vmatpush2.xpose.msra.mxu0 0.0
    %1862 = vmatprep.subr.mxu0 0.0
    %1863 = vmatpush2.xpose.msra.mxu0 0.0
    %1864 = vmatprep.subr.mxu0 0.0
    %1865 = vmatpush2.xpose.msra.mxu0 0.0
    %1866 = vmatprep.subr.mxu0 0.0
    %1867 = vmatpush2.xpose.msra.mxu0 0.0
    %1868 = vmatprep.subr.mxu0 0.0
    %1869 = vmatpush2.xpose.msra.mxu0 0.0
    %1870 = vmatprep.subr.mxu0 0.0
    %1871 = vmatpush2.xpose.msra.mxu0 0.0
    %1872 = vmatprep.subr.mxu0 0.0
    %1873 = vmatpush2.xpose.msra.mxu0 0.0
    %1874 = vmatprep.subr.mxu0 0.0
    %1875 = vmatpush2.xpose.msra.mxu0 0.0
    %1876 = vmatprep.subr.mxu0 0.0
    %1877 = vmatpush2.xpose.msra.mxu0 0.0
    %1878 = vmatprep.subr.mxu0 0.0
    %1879 = vmatpush2.xpose.msra.mxu0 0.0
    %1880 = vmatprep.subr.mxu0 0.0
    %1881 = vmatpush2.xpose.msra.mxu0 0.0
    %1882 = vmatprep.subr.mxu0 0.0
    %1883 = vmatpush2.xpose.msra.mxu0 0.0
    %1884 = vmatprep.subr.mxu0 0.0
    %1885 = vmatpush2.xpose.msra.mxu0 0.0
    %1886 = vmatprep.subr.mxu0 0.0
    %1887 = vmatpush2.xpose.msra.mxu0 0.0
    %1888 = vmatprep.mubr.f32.mxu0 0.0
    %1889 = vmatmul.mubr.f32.gmra.mxu0 %v1792
    %v1890 = vpop.f32.mrf.mxu0
    %v1891 = vadd.f32 0.0, %v1890
    %v1892 = vpop.f32.mrf.mxu0
    %1893 = vmatprep.mubr.f32.mxu0 0.0
    %1894 = vmatmul.mubr.f32.gmra.mxu0 %v1794
    %v1895 = vpop.f32.mrf.mxu0
    %v1896 = vadd.f32 0.0, %v1895
    %v1897 = vpop.f32.mrf.mxu0
    %1898 = vmatprep.mubr.f32.mxu0 0.0
    %1899 = vmatmul.mubr.f32.gmra.mxu0 %v1796
    %v1900 = vpop.f32.mrf.mxu0
    %v1901 = vadd.f32 0.0, %v1900
    %v1902 = vpop.f32.mrf.mxu0
    %1903 = vmatprep.mubr.f32.mxu0 0.0
    %1904 = vmatmul.mubr.f32.gmra.mxu0 %v1798
    %v1905 = vpop.f32.mrf.mxu0
    %v1906 = vadd.f32 0.0, %v1905
    %v1907 = vpop.f32.mrf.mxu0
    %1908 = vmatprep.mubr.f32.mxu0 0.0
    %1909 = vmatmul.mubr.f32.gmra.mxu0 %v1800
    %v1910 = vpop.f32.mrf.mxu0
    %v1911 = vadd.f32 0.0, %v1910
    %v1912 = vpop.f32.mrf.mxu0
    %1913 = vmatprep.mubr.f32.mxu0 0.0
    %1914 = vmatmul.mubr.f32.gmra.mxu0 %v1802
    %v1915 = vpop.f32.mrf.mxu0
    %v1916 = vadd.f32 0.0, %v1915
    %v1917 = vpop.f32.mrf.mxu0
    %1918 = vmatprep.mubr.f32.mxu0 0.0
    %1919 = vmatmul.mubr.f32.gmra.mxu0 %v1804
    %v1920 = vpop.f32.mrf.mxu0
    %v1921 = vadd.f32 0.0, %v1920
    %v1922 = vpop.f32.mrf.mxu0
    %1923 = vmatprep.mubr.f32.mxu0 0.0
    %1924 = vmatmul.mubr.f32.gmra.mxu0 %v1806
    %v1925 = vpop.f32.mrf.mxu0
    %v1926 = vadd.f32 0.0, %v1925
    %v1927 = vpop.f32.mrf.mxu0
    %1928 = vdwg.mxu0
    %v1929 = vsel %vm1510, %v1891, -inf
    %1930 = vmax.xlane.f32.xlu0 %v1929
    %v1931 = vpop.xlane.xlu0 %1930
    %v1932 = vsel %vm1510, %v1896, -inf
    %1933 = vmax.xlane.f32.xlu0 %v1932
    %v1934 = vpop.xlane.xlu0 %1933
    %v1935 = vsel %vm1510, %v1901, -inf
    %1936 = vmax.xlane.f32.xlu0 %v1935
    %v1937 = vpop.xlane.xlu0 %1936
    %v1938 = vsel %vm1510, %v1906, -inf
    %1939 = vmax.xlane.f32.xlu0 %v1938
    %v1940 = vpop.xlane.xlu0 %1939
    %v1941 = vsel %vm1510, %v1911, -inf
    %1942 = vmax.xlane.f32.xlu0 %v1941
    %v1943 = vpop.xlane.xlu0 %1942
    %v1944 = vsel %vm1510, %v1916, -inf
    %1945 = vmax.xlane.f32.xlu0 %v1944
    %v1946 = vpop.xlane.xlu0 %1945
    %v1947 = vsel %vm1510, %v1921, -inf
    %1948 = vmax.xlane.f32.xlu0 %v1947
    %v1949 = vpop.xlane.xlu0 %1948
    %v1950 = vsel %vm1510, %v1926, -inf
    %1951 = vmax.xlane.f32.xlu0 %v1950
    %v1952 = vpop.xlane.xlu0 %1951
    %v1953 = vsub.f32 %v1891, %v1931
    %v1954 = vsub.f32 %v1896, %v1934
    %v1955 = vsub.f32 %v1901, %v1937
    %v1956 = vsub.f32 %v1906, %v1940
    %v1957 = vsub.f32 %v1911, %v1943
    %v1958 = vsub.f32 %v1916, %v1946
    %v1959 = vsub.f32 %v1921, %v1949
    %v1960 = vsub.f32 %v1926, %v1952
    %v1961 = vmul.f32 %v1953, 1.442695
    %v1962 = vpow.pop %v1961
    %v1963 = vmul.f32 %v1954, 1.442695
    %v1964 = vpow.pop %v1963
    %v1965 = vmul.f32 %v1955, 1.442695
    %v1966 = vpow.pop %v1965
    %v1967 = vmul.f32 %v1956, 1.442695
    %v1968 = vpow.pop %v1967
    %v1969 = vmul.f32 %v1957, 1.442695
    %v1970 = vpow.pop %v1969
    %v1971 = vmul.f32 %v1958, 1.442695
    %v1972 = vpow.pop %v1971
    %v1973 = vmul.f32 %v1959, 1.442695
    %v1974 = vpow.pop %v1973
    %v1975 = vmul.f32 %v1960, 1.442695
    %v1976 = vpow.pop %v1975
    %v1977 = vsel %vm1510, %v1962, 0.0
    %1978 = vadd.xlane.f32.xlu0 %v1977
    %v1979 = vpop.xlane.xlu0 %1978
    %v1980 = vsel %vm1510, %v1964, 0.0
    %1981 = vadd.xlane.f32.xlu0 %v1980
    %v1982 = vpop.xlane.xlu0 %1981
    %v1983 = vsel %vm1510, %v1966, 0.0
    %1984 = vadd.xlane.f32.xlu0 %v1983
    %v1985 = vpop.xlane.xlu0 %1984
    %v1986 = vsel %vm1510, %v1968, 0.0
    %1987 = vadd.xlane.f32.xlu0 %v1986
    %v1988 = vpop.xlane.xlu0 %1987
    %v1989 = vsel %vm1510, %v1970, 0.0
    %1990 = vadd.xlane.f32.xlu0 %v1989
    %v1991 = vpop.xlane.xlu0 %1990
    %v1992 = vsel %vm1510, %v1972, 0.0
    %1993 = vadd.xlane.f32.xlu0 %v1992
    %v1994 = vpop.xlane.xlu0 %1993
    %v1995 = vsel %vm1510, %v1974, 0.0
    %1996 = vadd.xlane.f32.xlu0 %v1995
    %v1997 = vpop.xlane.xlu0 %1996
    %v1998 = vsel %vm1510, %v1976, 0.0
    %1999 = vadd.xlane.f32.xlu0 %v1998
    %v2000 = vpop.xlane.xlu0 %1999
    %v2001 = vrcp.pop %v1979
    %v2002 = vrcp.pop %v1982
    %v2003 = vrcp.pop %v1985
    %v2004 = vrcp.pop %v1988
    %v2005 = vrcp.pop %v1991
    %v2006 = vrcp.pop %v1994
    %v2007 = vrcp.pop %v1997
    %v2008 = vrcp.pop %v2000
    %v2009 = vmul.f32 %v1979, %v2001
    %v2010 = vmul.f32 %v1982, %v2002
    %v2011 = vmul.f32 %v1985, %v2003
    %v2012 = vmul.f32 %v1988, %v2004
    %v2013 = vmul.f32 %v1991, %v2005
    %v2014 = vmul.f32 %v1994, %v2006
    %v2015 = vmul.f32 %v1997, %v2007
    %v2016 = vmul.f32 %v2000, %v2008
    %v2017 = vsub.f32 2.0, %v2009
    %v2018 = vsub.f32 2.0, %v2010
    %v2019 = vsub.f32 2.0, %v2011
    %v2020 = vsub.f32 2.0, %v2012
    %v2021 = vsub.f32 2.0, %v2013
    %v2022 = vsub.f32 2.0, %v2014
    %v2023 = vsub.f32 2.0, %v2015
    %v2024 = vsub.f32 2.0, %v2016
    %v2025 = vmul.f32 %v2001, %v2017
    %v2026 = vmul.f32 %v2002, %v2018
    %v2027 = vmul.f32 %v2003, %v2019
    %v2028 = vmul.f32 %v2004, %v2020
    %v2029 = vmul.f32 %v2005, %v2021
    %v2030 = vmul.f32 %v2006, %v2022
    %v2031 = vmul.f32 %v2007, %v2023
    %v2032 = vmul.f32 %v2008, %v2024
    %2041 = vrot.lane.b32.xlu0 %v1278, 96
    %v2042 = vpop.permute.xlu0 %2041
    %2043 = vrot.lane.b32.xlu0 %v1283, 96
    %v2044 = vpop.permute.xlu0 %2043
    %2045 = vrot.lane.b32.xlu0 %v1288, 96
    %v2046 = vpop.permute.xlu0 %2045
    %2047 = vrot.lane.b32.xlu0 %v1293, 96
    %v2048 = vpop.permute.xlu0 %2047
    %2049 = vrot.lane.b32.xlu0 %v1298, 96
    %v2050 = vpop.permute.xlu0 %2049
    %2051 = vrot.lane.b32.xlu0 %v1303, 96
    %v2052 = vpop.permute.xlu0 %2051
    %2053 = vrot.lane.b32.xlu0 %v1308, 96
    %v2054 = vpop.permute.xlu0 %2053
    %2055 = vrot.lane.b32.xlu0 %v1313, 96
    %v2056 = vpop.permute.xlu0 %2055
    %v2066 = vsel %vm1510, %v1962, 0
    %v2069 = vsel %vm1510, %v1964, 0
    %v2072 = vsel %vm1510, %v1966, 0
    %v2075 = vsel %vm1510, %v1968, 0
    %v2078 = vsel %vm1510, %v1970, 0
    %v2081 = vsel %vm1510, %v1972, 0
    %v2084 = vsel %vm1510, %v1974, 0
    %v2087 = vsel %vm1510, %v1976, 0
    %2089 = vmatprep.subr.mxu0 0.0
    %2090 = vmatpush1.msra.mxu0 0.0
    %2091 = vmatprep.subr.mxu0 0.0
    %2092 = vmatpush1.msra.mxu0 0.0
    %2093 = vmatprep.subr.mxu0 0.0
    %2094 = vmatpush1.msra.mxu0 0.0
    %2095 = vmatprep.subr.mxu0 0.0
    %2096 = vmatpush1.msra.mxu0 0.0
    %2097 = vmatprep.subr.mxu0 0.0
    %2098 = vmatpush1.msra.mxu0 0.0
    %2099 = vmatprep.subr.mxu0 0.0
    %2100 = vmatpush1.msra.mxu0 0.0
    %2101 = vmatprep.subr.mxu0 0.0
    %2102 = vmatpush1.msra.mxu0 0.0
    %2103 = vmatprep.subr.mxu0 0.0
    %2104 = vmatpush1.msra.mxu0 0.0
    %2105 = vmatprep.subr.mxu0 0.0
    %2106 = vmatpush1.msra.mxu0 %v2056
    %2107 = vmatprep.subr.mxu0 0.0
    %2108 = vmatpush1.msra.mxu0 %v2054
    %2109 = vmatprep.subr.mxu0 0.0
    %2110 = vmatpush1.msra.mxu0 %v2052
    %2111 = vmatprep.subr.mxu0 0.0
    %2112 = vmatpush1.msra.mxu0 %v2050
    %2113 = vmatprep.subr.mxu0 0.0
    %2114 = vmatpush1.msra.mxu0 %v2048
    %2115 = vmatprep.subr.mxu0 0.0
    %2116 = vmatpush1.msra.mxu0 %v2046
    %2117 = vmatprep.subr.mxu0 0.0
    %2118 = vmatpush1.msra.mxu0 %v2044
    %2119 = vmatprep.subr.mxu0 0.0
    %2120 = vmatpush1.msra.mxu0 %v2042
    %2121 = vmatprep.subr.mxu0 0.0
    %2122 = vmatpush2.msra.mxu0 0.0
    %2123 = vmatprep.subr.mxu0 0.0
    %2124 = vmatpush2.msra.mxu0 0.0
    %2125 = vmatprep.subr.mxu0 0.0
    %2126 = vmatpush2.msra.mxu0 0.0
    %2127 = vmatprep.subr.mxu0 0.0
    %2128 = vmatpush2.msra.mxu0 0.0
    %2129 = vmatprep.subr.mxu0 0.0
    %2130 = vmatpush2.msra.mxu0 0.0
    %2131 = vmatprep.subr.mxu0 0.0
    %2132 = vmatpush2.msra.mxu0 0.0
    %2133 = vmatprep.subr.mxu0 0.0
    %2134 = vmatpush2.msra.mxu0 0.0
    %2135 = vmatprep.subr.mxu0 0.0
    %2136 = vmatpush2.msra.mxu0 0.0
    %2137 = vmatprep.subr.mxu0 0.0
    %2138 = vmatpush2.msra.mxu0 0.0
    %2139 = vmatprep.subr.mxu0 0.0
    %2140 = vmatpush2.msra.mxu0 0.0
    %2141 = vmatprep.subr.mxu0 0.0
    %2142 = vmatpush2.msra.mxu0 0.0
    %2143 = vmatprep.subr.mxu0 0.0
    %2144 = vmatpush2.msra.mxu0 0.0
    %2145 = vmatprep.subr.mxu0 0.0
    %2146 = vmatpush2.msra.mxu0 0.0
    %2147 = vmatprep.subr.mxu0 0.0
    %2148 = vmatpush2.msra.mxu0 0.0
    %2149 = vmatprep.subr.mxu0 0.0
    %2150 = vmatpush2.msra.mxu0 0.0
    %2151 = vmatprep.subr.mxu0 0.0
    %2152 = vmatpush2.msra.mxu0 0.0
    %2153 = vmatprep.mubr.f32.mxu0 0.0
    %2154 = vmatmul.mubr.f32.gmra.mxu0 %v2066
    %v2155 = vpop.f32.mrf.mxu0
    %v2156 = vadd.f32 0.0, %v2155
    %v2157 = vpop.f32.mrf.mxu0
    %2158 = vmatprep.mubr.f32.mxu0 0.0
    %2159 = vmatmul.mubr.f32.gmra.mxu0 %v2069
    %v2160 = vpop.f32.mrf.mxu0
    %v2161 = vadd.f32 0.0, %v2160
    %v2162 = vpop.f32.mrf.mxu0
    %2163 = vmatprep.mubr.f32.mxu0 0.0
    %2164 = vmatmul.mubr.f32.gmra.mxu0 %v2072
    %v2165 = vpop.f32.mrf.mxu0
    %v2166 = vadd.f32 0.0, %v2165
    %v2167 = vpop.f32.mrf.mxu0
    %2168 = vmatprep.mubr.f32.mxu0 0.0
    %2169 = vmatmul.mubr.f32.gmra.mxu0 %v2075
    %v2170 = vpop.f32.mrf.mxu0
    %v2171 = vadd.f32 0.0, %v2170
    %v2172 = vpop.f32.mrf.mxu0
    %2173 = vmatprep.mubr.f32.mxu0 0.0
    %2174 = vmatmul.mubr.f32.gmra.mxu0 %v2078
    %v2175 = vpop.f32.mrf.mxu0
    %v2176 = vadd.f32 0.0, %v2175
    %v2177 = vpop.f32.mrf.mxu0
    %2178 = vmatprep.mubr.f32.mxu0 0.0
    %2179 = vmatmul.mubr.f32.gmra.mxu0 %v2081
    %v2180 = vpop.f32.mrf.mxu0
    %v2181 = vadd.f32 0.0, %v2180
    %v2182 = vpop.f32.mrf.mxu0
    %2183 = vmatprep.mubr.f32.mxu0 0.0
    %2184 = vmatmul.mubr.f32.gmra.mxu0 %v2084
    %v2185 = vpop.f32.mrf.mxu0
    %v2186 = vadd.f32 0.0, %v2185
    %v2187 = vpop.f32.mrf.mxu0
    %2188 = vmatprep.mubr.f32.mxu0 0.0
    %2189 = vmatmul.mubr.f32.gmra.mxu0 %v2087
    %v2190 = vpop.f32.mrf.mxu0
    %v2191 = vadd.f32 0.0, %v2190
    %v2192 = vpop.f32.mrf.mxu0
    %2193 = vdwg.mxu0
    %v2194 = vmul.f32 %v2156, %v2025
    %v2195 = vmul.f32 %v2161, %v2026
    %v2196 = vmul.f32 %v2166, %v2027
    %v2197 = vmul.f32 %v2171, %v2028
    %v2198 = vmul.f32 %v2176, %v2029
    %v2199 = vmul.f32 %v2181, %v2030
    %v2200 = vmul.f32 %v2186, %v2031
    %v2201 = vmul.f32 %v2191, %v2032
    %2210 = vrot.lane.b32.xlu0 %v2194, 32
    %v2211 = vpop.permute.xlu0 %2210
    %2212 = vrot.lane.b32.xlu0 %v2195, 32
    %v2213 = vpop.permute.xlu0 %2212
    %2214 = vrot.lane.b32.xlu0 %v2196, 32
    %v2215 = vpop.permute.xlu0 %2214
    %2216 = vrot.lane.b32.xlu0 %v2197, 32
    %v2217 = vpop.permute.xlu0 %2216
    %2218 = vrot.lane.b32.xlu0 %v2198, 32
    %v2219 = vpop.permute.xlu0 %2218
    %2220 = vrot.lane.b32.xlu0 %v2199, 32
    %v2221 = vpop.permute.xlu0 %2220
    %2222 = vrot.lane.b32.xlu0 %v2200, 32
    %v2223 = vpop.permute.xlu0 %2222
    %2224 = vrot.lane.b32.xlu0 %v2201, 32
    %v2225 = vpop.permute.xlu0 %2224
    %vm2234 = vcmask 523520
    %2235 = vst.msk [vmem:[#allocation2] sm:$0xff] %vm2234, %v2211
    %2236 = vst.msk [vmem:[#allocation2 + $0x8] sm:$0xff] %vm2234, %v2213
    %2237 = vst.msk [vmem:[#allocation2 + $0x10] sm:$0xff] %vm2234, %v2215
    %2238 = vst.msk [vmem:[#allocation2 + $0x18] sm:$0xff] %vm2234, %v2217
    %2239 = vst.msk [vmem:[#allocation2 + $0x20] sm:$0xff] %vm2234, %v2219
    %2240 = vst.msk [vmem:[#allocation2 + $0x28] sm:$0xff] %vm2234, %v2221
    %2241 = vst.msk [vmem:[#allocation2 + $0x30] sm:$0xff] %vm2234, %v2223
    %2242 = vst.msk [vmem:[#allocation2 + $0x38] sm:$0xff] %vm2234, %v2225
    %2243 = vrot.lane.b32.xlu0 %v1117, 64
    %v2244 = vpop.permute.xlu0 %2243
    %2245 = vrot.lane.b32.xlu0 %v1123, 64
    %v2246 = vpop.permute.xlu0 %2245
    %2247 = vrot.lane.b32.xlu0 %v1129, 64
    %v2248 = vpop.permute.xlu0 %2247
    %2249 = vrot.lane.b32.xlu0 %v1135, 64
    %v2250 = vpop.permute.xlu0 %2249
    %2251 = vrot.lane.b32.xlu0 %v1141, 64
    %v2252 = vpop.permute.xlu0 %2251
    %2253 = vrot.lane.b32.xlu0 %v1147, 64
    %v2254 = vpop.permute.xlu0 %2253
    %2255 = vrot.lane.b32.xlu0 %v1153, 64
    %v2256 = vpop.permute.xlu0 %2255
    %2257 = vrot.lane.b32.xlu0 %v1159, 64
    %v2258 = vpop.permute.xlu0 %2257
    %2259 = vrot.lane.b32.xlu0 %v1119, 64
    %v2260 = vpop.permute.xlu0 %2259
    %2261 = vrot.lane.b32.xlu0 %v1125, 64
    %v2262 = vpop.permute.xlu0 %2261
    %2263 = vrot.lane.b32.xlu0 %v1131, 64
    %v2264 = vpop.permute.xlu0 %2263
    %2265 = vrot.lane.b32.xlu0 %v1137, 64
    %v2266 = vpop.permute.xlu0 %2265
    %2267 = vrot.lane.b32.xlu0 %v1143, 64
    %v2268 = vpop.permute.xlu0 %2267
    %2269 = vrot.lane.b32.xlu0 %v1149, 64
    %v2270 = vpop.permute.xlu0 %2269
    %2271 = vrot.lane.b32.xlu0 %v1155, 64
    %v2272 = vpop.permute.xlu0 %2271
    %2273 = vrot.lane.b32.xlu0 %v1161, 64
    %v2274 = vpop.permute.xlu0 %2273
    %v2275 = vsel %vm1356, %v2244, 0
    %v2277 = vsel %vm1356, %v2246, 0
    %v2279 = vsel %vm1356, %v2248, 0
    %v2281 = vsel %vm1356, %v2250, 0
    %v2283 = vsel %vm1356, %v2252, 0
    %v2285 = vsel %vm1356, %v2254, 0
    %v2287 = vsel %vm1356, %v2256, 0
    %v2289 = vsel %vm1356, %v2258, 0
    %v2291 = vsel %vm1356, %v2260, 0
    %v2293 = vsel %vm1356, %v2262, 0
    %v2295 = vsel %vm1356, %v2264, 0
    %v2297 = vsel %vm1356, %v2266, 0
    %v2299 = vsel %vm1356, %v2268, 0
    %v2301 = vsel %vm1356, %v2270, 0
    %v2303 = vsel %vm1356, %v2272, 0
    %v2305 = vsel %vm1356, %v2274, 0
    %2307 = vmatprep.subr.mxu0 0.0
    %2308 = vmatpush1.xpose.msra.mxu0 0.0
    %2309 = vmatprep.subr.mxu0 0.0
    %2310 = vmatpush1.xpose.msra.mxu0 0.0
    %2311 = vmatprep.subr.mxu0 0.0
    %2312 = vmatpush1.xpose.msra.mxu0 0.0
    %2313 = vmatprep.subr.mxu0 0.0
    %2314 = vmatpush1.xpose.msra.mxu0 0.0
    %2315 = vmatprep.subr.mxu0 0.0
    %2316 = vmatpush1.xpose.msra.mxu0 0.0
    %2317 = vmatprep.subr.mxu0 0.0
    %2318 = vmatpush1.xpose.msra.mxu0 0.0
    %2319 = vmatprep.subr.mxu0 0.0
    %2320 = vmatpush1.xpose.msra.mxu0 0.0
    %2321 = vmatprep.subr.mxu0 0.0
    %2322 = vmatpush1.xpose.msra.mxu0 0.0
    %2323 = vmatprep.subr.mxu0 0.0
    %2324 = vmatpush1.xpose.msra.mxu0 %v2305
    %2325 = vmatprep.subr.mxu0 0.0
    %2326 = vmatpush1.xpose.msra.mxu0 %v2303
    %2327 = vmatprep.subr.mxu0 0.0
    %2328 = vmatpush1.xpose.msra.mxu0 %v2301
    %2329 = vmatprep.subr.mxu0 0.0
    %2330 = vmatpush1.xpose.msra.mxu0 %v2299
    %2331 = vmatprep.subr.mxu0 0.0
    %2332 = vmatpush1.xpose.msra.mxu0 %v2297
    %2333 = vmatprep.subr.mxu0 0.0
    %2334 = vmatpush1.xpose.msra.mxu0 %v2295
    %2335 = vmatprep.subr.mxu0 0.0
    %2336 = vmatpush1.xpose.msra.mxu0 %v2293
    %2337 = vmatprep.subr.mxu0 0.0
    %2338 = vmatpush1.xpose.msra.mxu0 %v2291
    %2339 = vmatprep.subr.mxu0 0.0
    %2340 = vmatpush2.xpose.msra.mxu0 0.0
    %2341 = vmatprep.subr.mxu0 0.0
    %2342 = vmatpush2.xpose.msra.mxu0 0.0
    %2343 = vmatprep.subr.mxu0 0.0
    %2344 = vmatpush2.xpose.msra.mxu0 0.0
    %2345 = vmatprep.subr.mxu0 0.0
    %2346 = vmatpush2.xpose.msra.mxu0 0.0
    %2347 = vmatprep.subr.mxu0 0.0
    %2348 = vmatpush2.xpose.msra.mxu0 0.0
    %2349 = vmatprep.subr.mxu0 0.0
    %2350 = vmatpush2.xpose.msra.mxu0 0.0
    %2351 = vmatprep.subr.mxu0 0.0
    %2352 = vmatpush2.xpose.msra.mxu0 0.0
    %2353 = vmatprep.subr.mxu0 0.0
    %2354 = vmatpush2.xpose.msra.mxu0 0.0
    %2355 = vmatprep.subr.mxu0 0.0
    %2356 = vmatpush2.xpose.msra.mxu0 0.0
    %2357 = vmatprep.subr.mxu0 0.0
    %2358 = vmatpush2.xpose.msra.mxu0 0.0
    %2359 = vmatprep.subr.mxu0 0.0
    %2360 = vmatpush2.xpose.msra.mxu0 0.0
    %2361 = vmatprep.subr.mxu0 0.0
    %2362 = vmatpush2.xpose.msra.mxu0 0.0
    %2363 = vmatprep.subr.mxu0 0.0
    %2364 = vmatpush2.xpose.msra.mxu0 0.0
    %2365 = vmatprep.subr.mxu0 0.0
    %2366 = vmatpush2.xpose.msra.mxu0 0.0
    %2367 = vmatprep.subr.mxu0 0.0
    %2368 = vmatpush2.xpose.msra.mxu0 0.0
    %2369 = vmatprep.subr.mxu0 0.0
    %2370 = vmatpush2.xpose.msra.mxu0 0.0
    %2371 = vmatprep.mubr.f32.mxu0 0.0
    %2372 = vmatmul.mubr.f32.gmra.mxu0 %v2275
    %v2373 = vpop.f32.mrf.mxu0
    %v2374 = vadd.f32 0.0, %v2373
    %v2375 = vpop.f32.mrf.mxu0
    %2376 = vmatprep.mubr.f32.mxu0 0.0
    %2377 = vmatmul.mubr.f32.gmra.mxu0 %v2277
    %v2378 = vpop.f32.mrf.mxu0
    %v2379 = vadd.f32 0.0, %v2378
    %v2380 = vpop.f32.mrf.mxu0
    %2381 = vmatprep.mubr.f32.mxu0 0.0
    %2382 = vmatmul.mubr.f32.gmra.mxu0 %v2279
    %v2383 = vpop.f32.mrf.mxu0
    %v2384 = vadd.f32 0.0, %v2383
    %v2385 = vpop.f32.mrf.mxu0
    %2386 = vmatprep.mubr.f32.mxu0 0.0
    %2387 = vmatmul.mubr.f32.gmra.mxu0 %v2281
    %v2388 = vpop.f32.mrf.mxu0
    %v2389 = vadd.f32 0.0, %v2388
    %v2390 = vpop.f32.mrf.mxu0
    %2391 = vmatprep.mubr.f32.mxu0 0.0
    %2392 = vmatmul.mubr.f32.gmra.mxu0 %v2283
    %v2393 = vpop.f32.mrf.mxu0
    %v2394 = vadd.f32 0.0, %v2393
    %v2395 = vpop.f32.mrf.mxu0
    %2396 = vmatprep.mubr.f32.mxu0 0.0
    %2397 = vmatmul.mubr.f32.gmra.mxu0 %v2285
    %v2398 = vpop.f32.mrf.mxu0
    %v2399 = vadd.f32 0.0, %v2398
    %v2400 = vpop.f32.mrf.mxu0
    %2401 = vmatprep.mubr.f32.mxu0 0.0
    %2402 = vmatmul.mubr.f32.gmra.mxu0 %v2287
    %v2403 = vpop.f32.mrf.mxu0
    %v2404 = vadd.f32 0.0, %v2403
    %v2405 = vpop.f32.mrf.mxu0
    %2406 = vmatprep.mubr.f32.mxu0 0.0
    %2407 = vmatmul.mubr.f32.gmra.mxu0 %v2289
    %v2408 = vpop.f32.mrf.mxu0
    %v2409 = vadd.f32 0.0, %v2408
    %v2410 = vpop.f32.mrf.mxu0
    %2411 = vdwg.mxu0
    %v2412 = vsel %vm1510, %v2374, -inf
    %2413 = vmax.xlane.f32.xlu0 %v2412
    %v2414 = vpop.xlane.xlu0 %2413
    %v2415 = vsel %vm1510, %v2379, -inf
    %2416 = vmax.xlane.f32.xlu0 %v2415
    %v2417 = vpop.xlane.xlu0 %2416
    %v2418 = vsel %vm1510, %v2384, -inf
    %2419 = vmax.xlane.f32.xlu0 %v2418
    %v2420 = vpop.xlane.xlu0 %2419
    %v2421 = vsel %vm1510, %v2389, -inf
    %2422 = vmax.xlane.f32.xlu0 %v2421
    %v2423 = vpop.xlane.xlu0 %2422
    %v2424 = vsel %vm1510, %v2394, -inf
    %2425 = vmax.xlane.f32.xlu0 %v2424
    %v2426 = vpop.xlane.xlu0 %2425
    %v2427 = vsel %vm1510, %v2399, -inf
    %2428 = vmax.xlane.f32.xlu0 %v2427
    %v2429 = vpop.xlane.xlu0 %2428
    %v2430 = vsel %vm1510, %v2404, -inf
    %2431 = vmax.xlane.f32.xlu0 %v2430
    %v2432 = vpop.xlane.xlu0 %2431
    %v2433 = vsel %vm1510, %v2409, -inf
    %2434 = vmax.xlane.f32.xlu0 %v2433
    %v2435 = vpop.xlane.xlu0 %2434
    %v2436 = vsub.f32 %v2374, %v2414
    %v2437 = vsub.f32 %v2379, %v2417
    %v2438 = vsub.f32 %v2384, %v2420
    %v2439 = vsub.f32 %v2389, %v2423
    %v2440 = vsub.f32 %v2394, %v2426
    %v2441 = vsub.f32 %v2399, %v2429
    %v2442 = vsub.f32 %v2404, %v2432
    %v2443 = vsub.f32 %v2409, %v2435
    %v2444 = vmul.f32 %v2436, 1.442695
    %v2445 = vpow.pop %v2444
    %v2446 = vmul.f32 %v2437, 1.442695
    %v2447 = vpow.pop %v2446
    %v2448 = vmul.f32 %v2438, 1.442695
    %v2449 = vpow.pop %v2448
    %v2450 = vmul.f32 %v2439, 1.442695
    %v2451 = vpow.pop %v2450
    %v2452 = vmul.f32 %v2440, 1.442695
    %v2453 = vpow.pop %v2452
    %v2454 = vmul.f32 %v2441, 1.442695
    %v2455 = vpow.pop %v2454
    %v2456 = vmul.f32 %v2442, 1.442695
    %v2457 = vpow.pop %v2456
    %v2458 = vmul.f32 %v2443, 1.442695
    %v2459 = vpow.pop %v2458
    %v2460 = vsel %vm1510, %v2445, 0.0
    %2461 = vadd.xlane.f32.xlu0 %v2460
    %v2462 = vpop.xlane.xlu0 %2461
    %v2463 = vsel %vm1510, %v2447, 0.0
    %2464 = vadd.xlane.f32.xlu0 %v2463
    %v2465 = vpop.xlane.xlu0 %2464
    %v2466 = vsel %vm1510, %v2449, 0.0
    %2467 = vadd.xlane.f32.xlu0 %v2466
    %v2468 = vpop.xlane.xlu0 %2467
    %v2469 = vsel %vm1510, %v2451, 0.0
    %2470 = vadd.xlane.f32.xlu0 %v2469
    %v2471 = vpop.xlane.xlu0 %2470
    %v2472 = vsel %vm1510, %v2453, 0.0
    %2473 = vadd.xlane.f32.xlu0 %v2472
    %v2474 = vpop.xlane.xlu0 %2473
    %v2475 = vsel %vm1510, %v2455, 0.0
    %2476 = vadd.xlane.f32.xlu0 %v2475
    %v2477 = vpop.xlane.xlu0 %2476
    %v2478 = vsel %vm1510, %v2457, 0.0
    %2479 = vadd.xlane.f32.xlu0 %v2478
    %v2480 = vpop.xlane.xlu0 %2479
    %v2481 = vsel %vm1510, %v2459, 0.0
    %2482 = vadd.xlane.f32.xlu0 %v2481
    %v2483 = vpop.xlane.xlu0 %2482
    %v2484 = vrcp.pop %v2462
    %v2485 = vrcp.pop %v2465
    %v2486 = vrcp.pop %v2468
    %v2487 = vrcp.pop %v2471
    %v2488 = vrcp.pop %v2474
    %v2489 = vrcp.pop %v2477
    %v2490 = vrcp.pop %v2480
    %v2491 = vrcp.pop %v2483
    %v2492 = vmul.f32 %v2462, %v2484
    %v2493 = vmul.f32 %v2465, %v2485
    %v2494 = vmul.f32 %v2468, %v2486
    %v2495 = vmul.f32 %v2471, %v2487
    %v2496 = vmul.f32 %v2474, %v2488
    %v2497 = vmul.f32 %v2477, %v2489
    %v2498 = vmul.f32 %v2480, %v2490
    %v2499 = vmul.f32 %v2483, %v2491
    %v2500 = vsub.f32 2.0, %v2492
    %v2501 = vsub.f32 2.0, %v2493
    %v2502 = vsub.f32 2.0, %v2494
    %v2503 = vsub.f32 2.0, %v2495
    %v2504 = vsub.f32 2.0, %v2496
    %v2505 = vsub.f32 2.0, %v2497
    %v2506 = vsub.f32 2.0, %v2498
    %v2507 = vsub.f32 2.0, %v2499
    %v2508 = vmul.f32 %v2484, %v2500
    %v2509 = vmul.f32 %v2485, %v2501
    %v2510 = vmul.f32 %v2486, %v2502
    %v2511 = vmul.f32 %v2487, %v2503
    %v2512 = vmul.f32 %v2488, %v2504
    %v2513 = vmul.f32 %v2489, %v2505
    %v2514 = vmul.f32 %v2490, %v2506
    %v2515 = vmul.f32 %v2491, %v2507
    %2516 = vrot.lane.b32.xlu0 %v1278, 64
    %v2517 = vpop.permute.xlu0 %2516
    %2518 = vrot.lane.b32.xlu0 %v1283, 64
    %v2519 = vpop.permute.xlu0 %2518
    %2520 = vrot.lane.b32.xlu0 %v1288, 64
    %v2521 = vpop.permute.xlu0 %2520
    %2522 = vrot.lane.b32.xlu0 %v1293, 64
    %v2523 = vpop.permute.xlu0 %2522
    %2524 = vrot.lane.b32.xlu0 %v1298, 64
    %v2525 = vpop.permute.xlu0 %2524
    %2526 = vrot.lane.b32.xlu0 %v1303, 64
    %v2527 = vpop.permute.xlu0 %2526
    %2528 = vrot.lane.b32.xlu0 %v1308, 64
    %v2529 = vpop.permute.xlu0 %2528
    %2530 = vrot.lane.b32.xlu0 %v1313, 64
    %v2531 = vpop.permute.xlu0 %2530
    %v2541 = vsel %vm1510, %v2445, 0
    %v2544 = vsel %vm1510, %v2447, 0
    %v2547 = vsel %vm1510, %v2449, 0
    %v2550 = vsel %vm1510, %v2451, 0
    %v2553 = vsel %vm1510, %v2453, 0
    %v2556 = vsel %vm1510, %v2455, 0
    %v2559 = vsel %vm1510, %v2457, 0
    %v2562 = vsel %vm1510, %v2459, 0
    %2564 = vmatprep.subr.mxu0 0.0
    %2565 = vmatpush1.msra.mxu0 0.0
    %2566 = vmatprep.subr.mxu0 0.0
    %2567 = vmatpush1.msra.mxu0 0.0
    %2568 = vmatprep.subr.mxu0 0.0
    %2569 = vmatpush1.msra.mxu0 0.0
    %2570 = vmatprep.subr.mxu0 0.0
    %2571 = vmatpush1.msra.mxu0 0.0
    %2572 = vmatprep.subr.mxu0 0.0
    %2573 = vmatpush1.msra.mxu0 0.0
    %2574 = vmatprep.subr.mxu0 0.0
    %2575 = vmatpush1.msra.mxu0 0.0
    %2576 = vmatprep.subr.mxu0 0.0
    %2577 = vmatpush1.msra.mxu0 0.0
    %2578 = vmatprep.subr.mxu0 0.0
    %2579 = vmatpush1.msra.mxu0 0.0
    %2580 = vmatprep.subr.mxu0 0.0
    %2581 = vmatpush1.msra.mxu0 %v2531
    %2582 = vmatprep.subr.mxu0 0.0
    %2583 = vmatpush1.msra.mxu0 %v2529
    %2584 = vmatprep.subr.mxu0 0.0
    %2585 = vmatpush1.msra.mxu0 %v2527
    %2586 = vmatprep.subr.mxu0 0.0
    %2587 = vmatpush1.msra.mxu0 %v2525
    %2588 = vmatprep.subr.mxu0 0.0
    %2589 = vmatpush1.msra.mxu0 %v2523
    %2590 = vmatprep.subr.mxu0 0.0
    %2591 = vmatpush1.msra.mxu0 %v2521
    %2592 = vmatprep.subr.mxu0 0.0
    %2593 = vmatpush1.msra.mxu0 %v2519
    %2594 = vmatprep.subr.mxu0 0.0
    %2595 = vmatpush1.msra.mxu0 %v2517
    %2596 = vmatprep.subr.mxu0 0.0
    %2597 = vmatpush2.msra.mxu0 0.0
    %2598 = vmatprep.subr.mxu0 0.0
    %2599 = vmatpush2.msra.mxu0 0.0
    %2600 = vmatprep.subr.mxu0 0.0
    %2601 = vmatpush2.msra.mxu0 0.0
    %2602 = vmatprep.subr.mxu0 0.0
    %2603 = vmatpush2.msra.mxu0 0.0
    %2604 = vmatprep.subr.mxu0 0.0
    %2605 = vmatpush2.msra.mxu0 0.0
    %2606 = vmatprep.subr.mxu0 0.0
    %2607 = vmatpush2.msra.mxu0 0.0
    %2608 = vmatprep.subr.mxu0 0.0
    %2609 = vmatpush2.msra.mxu0 0.0
    %2610 = vmatprep.subr.mxu0 0.0
    %2611 = vmatpush2.msra.mxu0 0.0
    %2612 = vmatprep.subr.mxu0 0.0
    %2613 = vmatpush2.msra.mxu0 0.0
    %2614 = vmatprep.subr.mxu0 0.0
    %2615 = vmatpush2.msra.mxu0 0.0
    %2616 = vmatprep.subr.mxu0 0.0
    %2617 = vmatpush2.msra.mxu0 0.0
    %2618 = vmatprep.subr.mxu0 0.0
    %2619 = vmatpush2.msra.mxu0 0.0
    %2620 = vmatprep.subr.mxu0 0.0
    %2621 = vmatpush2.msra.mxu0 0.0
    %2622 = vmatprep.subr.mxu0 0.0
    %2623 = vmatpush2.msra.mxu0 0.0
    %2624 = vmatprep.subr.mxu0 0.0
    %2625 = vmatpush2.msra.mxu0 0.0
    %2626 = vmatprep.subr.mxu0 0.0
    %2627 = vmatpush2.msra.mxu0 0.0
    %2628 = vmatprep.mubr.f32.mxu0 0.0
    %2629 = vmatmul.mubr.f32.gmra.mxu0 %v2541
    %v2630 = vpop.f32.mrf.mxu0
    %v2631 = vadd.f32 0.0, %v2630
    %v2632 = vpop.f32.mrf.mxu0
    %2633 = vmatprep.mubr.f32.mxu0 0.0
    %2634 = vmatmul.mubr.f32.gmra.mxu0 %v2544
    %v2635 = vpop.f32.mrf.mxu0
    %v2636 = vadd.f32 0.0, %v2635
    %v2637 = vpop.f32.mrf.mxu0
    %2638 = vmatprep.mubr.f32.mxu0 0.0
    %2639 = vmatmul.mubr.f32.gmra.mxu0 %v2547
    %v2640 = vpop.f32.mrf.mxu0
    %v2641 = vadd.f32 0.0, %v2640
    %v2642 = vpop.f32.mrf.mxu0
    %2643 = vmatprep.mubr.f32.mxu0 0.0
    %2644 = vmatmul.mubr.f32.gmra.mxu0 %v2550
    %v2645 = vpop.f32.mrf.mxu0
    %v2646 = vadd.f32 0.0, %v2645
    %v2647 = vpop.f32.mrf.mxu0
    %2648 = vmatprep.mubr.f32.mxu0 0.0
    %2649 = vmatmul.mubr.f32.gmra.mxu0 %v2553
    %v2650 = vpop.f32.mrf.mxu0
    %v2651 = vadd.f32 0.0, %v2650
    %v2652 = vpop.f32.mrf.mxu0
    %2653 = vmatprep.mubr.f32.mxu0 0.0
    %2654 = vmatmul.mubr.f32.gmra.mxu0 %v2556
    %v2655 = vpop.f32.mrf.mxu0
    %v2656 = vadd.f32 0.0, %v2655
    %v2657 = vpop.f32.mrf.mxu0
    %2658 = vmatprep.mubr.f32.mxu0 0.0
    %2659 = vmatmul.mubr.f32.gmra.mxu0 %v2559
    %v2660 = vpop.f32.mrf.mxu0
    %v2661 = vadd.f32 0.0, %v2660
    %v2662 = vpop.f32.mrf.mxu0
    %2663 = vmatprep.mubr.f32.mxu0 0.0
    %2664 = vmatmul.mubr.f32.gmra.mxu0 %v2562
    %v2665 = vpop.f32.mrf.mxu0
    %v2666 = vadd.f32 0.0, %v2665
    %v2667 = vpop.f32.mrf.mxu0
    %2668 = vdwg.mxu0
    %v2669 = vmul.f32 %v2631, %v2508
    %v2670 = vmul.f32 %v2636, %v2509
    %v2671 = vmul.f32 %v2641, %v2510
    %v2672 = vmul.f32 %v2646, %v2511
    %v2673 = vmul.f32 %v2651, %v2512
    %v2674 = vmul.f32 %v2656, %v2513
    %v2675 = vmul.f32 %v2661, %v2514
    %v2676 = vmul.f32 %v2666, %v2515
    %2685 = vrot.lane.b32.xlu0 %v2669, 64
    %v2686 = vpop.permute.xlu0 %2685
    %2687 = vrot.lane.b32.xlu0 %v2670, 64
    %v2688 = vpop.permute.xlu0 %2687
    %2689 = vrot.lane.b32.xlu0 %v2671, 64
    %v2690 = vpop.permute.xlu0 %2689
    %2691 = vrot.lane.b32.xlu0 %v2672, 64
    %v2692 = vpop.permute.xlu0 %2691
    %2693 = vrot.lane.b32.xlu0 %v2673, 64
    %v2694 = vpop.permute.xlu0 %2693
    %2695 = vrot.lane.b32.xlu0 %v2674, 64
    %v2696 = vpop.permute.xlu0 %2695
    %2697 = vrot.lane.b32.xlu0 %v2675, 64
    %v2698 = vpop.permute.xlu0 %2697
    %2699 = vrot.lane.b32.xlu0 %v2676, 64
    %v2700 = vpop.permute.xlu0 %2699
    %vm2709 = vcmask 785920
    %2710 = vst.msk [vmem:[#allocation2] sm:$0xff] %vm2709, %v2686
    %2711 = vst.msk [vmem:[#allocation2 + $0x8] sm:$0xff] %vm2709, %v2688
    %2712 = vst.msk [vmem:[#allocation2 + $0x10] sm:$0xff] %vm2709, %v2690
    %2713 = vst.msk [vmem:[#allocation2 + $0x18] sm:$0xff] %vm2709, %v2692
    %2714 = vst.msk [vmem:[#allocation2 + $0x20] sm:$0xff] %vm2709, %v2694
    %2715 = vst.msk [vmem:[#allocation2 + $0x28] sm:$0xff] %vm2709, %v2696
    %2716 = vst.msk [vmem:[#allocation2 + $0x30] sm:$0xff] %vm2709, %v2698
    %2717 = vst.msk [vmem:[#allocation2 + $0x38] sm:$0xff] %vm2709, %v2700
    %2718 = vrot.lane.b32.xlu0 %v1117, 32
    %v2719 = vpop.permute.xlu0 %2718
    %2720 = vrot.lane.b32.xlu0 %v1123, 32
    %v2721 = vpop.permute.xlu0 %2720
    %2722 = vrot.lane.b32.xlu0 %v1129, 32
    %v2723 = vpop.permute.xlu0 %2722
    %2724 = vrot.lane.b32.xlu0 %v1135, 32
    %v2725 = vpop.permute.xlu0 %2724
    %2726 = vrot.lane.b32.xlu0 %v1141, 32
    %v2727 = vpop.permute.xlu0 %2726
    %2728 = vrot.lane.b32.xlu0 %v1147, 32
    %v2729 = vpop.permute.xlu0 %2728
    %2730 = vrot.lane.b32.xlu0 %v1153, 32
    %v2731 = vpop.permute.xlu0 %2730
    %2732 = vrot.lane.b32.xlu0 %v1159, 32
    %v2733 = vpop.permute.xlu0 %2732
    %2734 = vrot.lane.b32.xlu0 %v1119, 32
    %v2735 = vpop.permute.xlu0 %2734
    %2736 = vrot.lane.b32.xlu0 %v1125, 32
    %v2737 = vpop.permute.xlu0 %2736
    %2738 = vrot.lane.b32.xlu0 %v1131, 32
    %v2739 = vpop.permute.xlu0 %2738
    %2740 = vrot.lane.b32.xlu0 %v1137, 32
    %v2741 = vpop.permute.xlu0 %2740
    %2742 = vrot.lane.b32.xlu0 %v1143, 32
    %v2743 = vpop.permute.xlu0 %2742
    %2744 = vrot.lane.b32.xlu0 %v1149, 32
    %v2745 = vpop.permute.xlu0 %2744
    %2746 = vrot.lane.b32.xlu0 %v1155, 32
    %v2747 = vpop.permute.xlu0 %2746
    %2748 = vrot.lane.b32.xlu0 %v1161, 32
    %v2749 = vpop.permute.xlu0 %2748
    %v2750 = vsel %vm1356, %v2719, 0
    %v2752 = vsel %vm1356, %v2721, 0
    %v2754 = vsel %vm1356, %v2723, 0
    %v2756 = vsel %vm1356, %v2725, 0
    %v2758 = vsel %vm1356, %v2727, 0
    %v2760 = vsel %vm1356, %v2729, 0
    %v2762 = vsel %vm1356, %v2731, 0
    %v2764 = vsel %vm1356, %v2733, 0
    %v2766 = vsel %vm1356, %v2735, 0
    %v2768 = vsel %vm1356, %v2737, 0
    %v2770 = vsel %vm1356, %v2739, 0
    %v2772 = vsel %vm1356, %v2741, 0
    %v2774 = vsel %vm1356, %v2743, 0
    %v2776 = vsel %vm1356, %v2745, 0
    %v2778 = vsel %vm1356, %v2747, 0
    %v2780 = vsel %vm1356, %v2749, 0
    %2782 = vmatprep.subr.mxu0 0.0
    %2783 = vmatpush1.xpose.msra.mxu0 0.0
    %2784 = vmatprep.subr.mxu0 0.0
    %2785 = vmatpush1.xpose.msra.mxu0 0.0
    %2786 = vmatprep.subr.mxu0 0.0
    %2787 = vmatpush1.xpose.msra.mxu0 0.0
    %2788 = vmatprep.subr.mxu0 0.0
    %2789 = vmatpush1.xpose.msra.mxu0 0.0
    %2790 = vmatprep.subr.mxu0 0.0
    %2791 = vmatpush1.xpose.msra.mxu0 0.0
    %2792 = vmatprep.subr.mxu0 0.0
    %2793 = vmatpush1.xpose.msra.mxu0 0.0
    %2794 = vmatprep.subr.mxu0 0.0
    %2795 = vmatpush1.xpose.msra.mxu0 0.0
    %2796 = vmatprep.subr.mxu0 0.0
    %2797 = vmatpush1.xpose.msra.mxu0 0.0
    %2798 = vmatprep.subr.mxu0 0.0
    %2799 = vmatpush1.xpose.msra.mxu0 %v2780
    %2800 = vmatprep.subr.mxu0 0.0
    %2801 = vmatpush1.xpose.msra.mxu0 %v2778
    %2802 = vmatprep.subr.mxu0 0.0
    %2803 = vmatpush1.xpose.msra.mxu0 %v2776
    %2804 = vmatprep.subr.mxu0 0.0
    %2805 = vmatpush1.xpose.msra.mxu0 %v2774
    %2806 = vmatprep.subr.mxu0 0.0
    %2807 = vmatpush1.xpose.msra.mxu0 %v2772
    %2808 = vmatprep.subr.mxu0 0.0
    %2809 = vmatpush1.xpose.msra.mxu0 %v2770
    %2810 = vmatprep.subr.mxu0 0.0
    %2811 = vmatpush1.xpose.msra.mxu0 %v2768
    %2812 = vmatprep.subr.mxu0 0.0
    %2813 = vmatpush1.xpose.msra.mxu0 %v2766
    %2814 = vmatprep.subr.mxu0 0.0
    %2815 = vmatpush2.xpose.msra.mxu0 0.0
    %2816 = vmatprep.subr.mxu0 0.0
    %2817 = vmatpush2.xpose.msra.mxu0 0.0
    %2818 = vmatprep.subr.mxu0 0.0
    %2819 = vmatpush2.xpose.msra.mxu0 0.0
    %2820 = vmatprep.subr.mxu0 0.0
    %2821 = vmatpush2.xpose.msra.mxu0 0.0
    %2822 = vmatprep.subr.mxu0 0.0
    %2823 = vmatpush2.xpose.msra.mxu0 0.0
    %2824 = vmatprep.subr.mxu0 0.0
    %2825 = vmatpush2.xpose.msra.mxu0 0.0
    %2826 = vmatprep.subr.mxu0 0.0
    %2827 = vmatpush2.xpose.msra.mxu0 0.0
    %2828 = vmatprep.subr.mxu0 0.0
    %2829 = vmatpush2.xpose.msra.mxu0 0.0
    %2830 = vmatprep.subr.mxu0 0.0
    %2831 = vmatpush2.xpose.msra.mxu0 0.0
    %2832 = vmatprep.subr.mxu0 0.0
    %2833 = vmatpush2.xpose.msra.mxu0 0.0
    %2834 = vmatprep.subr.mxu0 0.0
    %2835 = vmatpush2.xpose.msra.mxu0 0.0
    %2836 = vmatprep.subr.mxu0 0.0
    %2837 = vmatpush2.xpose.msra.mxu0 0.0
    %2838 = vmatprep.subr.mxu0 0.0
    %2839 = vmatpush2.xpose.msra.mxu0 0.0
    %2840 = vmatprep.subr.mxu0 0.0
    %2841 = vmatpush2.xpose.msra.mxu0 0.0
    %2842 = vmatprep.subr.mxu0 0.0
    %2843 = vmatpush2.xpose.msra.mxu0 0.0
    %2844 = vmatprep.subr.mxu0 0.0
    %2845 = vmatpush2.xpose.msra.mxu0 0.0
    %2846 = vmatprep.mubr.f32.mxu0 0.0
    %2847 = vmatmul.mubr.f32.gmra.mxu0 %v2750
    %v2848 = vpop.f32.mrf.mxu0
    %v2849 = vadd.f32 0.0, %v2848
    %v2850 = vpop.f32.mrf.mxu0
    %2851 = vmatprep.mubr.f32.mxu0 0.0
    %2852 = vmatmul.mubr.f32.gmra.mxu0 %v2752
    %v2853 = vpop.f32.mrf.mxu0
    %v2854 = vadd.f32 0.0, %v2853
    %v2855 = vpop.f32.mrf.mxu0
    %2856 = vmatprep.mubr.f32.mxu0 0.0
    %2857 = vmatmul.mubr.f32.gmra.mxu0 %v2754
    %v2858 = vpop.f32.mrf.mxu0
    %v2859 = vadd.f32 0.0, %v2858
    %v2860 = vpop.f32.mrf.mxu0
    %2861 = vmatprep.mubr.f32.mxu0 0.0
    %2862 = vmatmul.mubr.f32.gmra.mxu0 %v2756
    %v2863 = vpop.f32.mrf.mxu0
    %v2864 = vadd.f32 0.0, %v2863
    %v2865 = vpop.f32.mrf.mxu0
    %2866 = vmatprep.mubr.f32.mxu0 0.0
    %2867 = vmatmul.mubr.f32.gmra.mxu0 %v2758
    %v2868 = vpop.f32.mrf.mxu0
    %v2869 = vadd.f32 0.0, %v2868
    %v2870 = vpop.f32.mrf.mxu0
    %2871 = vmatprep.mubr.f32.mxu0 0.0
    %2872 = vmatmul.mubr.f32.gmra.mxu0 %v2760
    %v2873 = vpop.f32.mrf.mxu0
    %v2874 = vadd.f32 0.0, %v2873
    %v2875 = vpop.f32.mrf.mxu0
    %2876 = vmatprep.mubr.f32.mxu0 0.0
    %2877 = vmatmul.mubr.f32.gmra.mxu0 %v2762
    %v2878 = vpop.f32.mrf.mxu0
    %v2879 = vadd.f32 0.0, %v2878
    %v2880 = vpop.f32.mrf.mxu0
    %2881 = vmatprep.mubr.f32.mxu0 0.0
    %2882 = vmatmul.mubr.f32.gmra.mxu0 %v2764
    %v2883 = vpop.f32.mrf.mxu0
    %v2884 = vadd.f32 0.0, %v2883
    %v2885 = vpop.f32.mrf.mxu0
    %2886 = vdwg.mxu0
    %v2887 = vsel %vm1510, %v2849, -inf
    %2888 = vmax.xlane.f32.xlu0 %v2887
    %v2889 = vpop.xlane.xlu0 %2888
    %v2890 = vsel %vm1510, %v2854, -inf
    %2891 = vmax.xlane.f32.xlu0 %v2890
    %v2892 = vpop.xlane.xlu0 %2891
    %v2893 = vsel %vm1510, %v2859, -inf
    %2894 = vmax.xlane.f32.xlu0 %v2893
    %v2895 = vpop.xlane.xlu0 %2894
    %v2896 = vsel %vm1510, %v2864, -inf
    %2897 = vmax.xlane.f32.xlu0 %v2896
    %v2898 = vpop.xlane.xlu0 %2897
    %v2899 = vsel %vm1510, %v2869, -inf
    %2900 = vmax.xlane.f32.xlu0 %v2899
    %v2901 = vpop.xlane.xlu0 %2900
    %v2902 = vsel %vm1510, %v2874, -inf
    %2903 = vmax.xlane.f32.xlu0 %v2902
    %v2904 = vpop.xlane.xlu0 %2903
    %v2905 = vsel %vm1510, %v2879, -inf
    %2906 = vmax.xlane.f32.xlu0 %v2905
    %v2907 = vpop.xlane.xlu0 %2906
    %v2908 = vsel %vm1510, %v2884, -inf
    %2909 = vmax.xlane.f32.xlu0 %v2908
    %v2910 = vpop.xlane.xlu0 %2909
    %v2911 = vsub.f32 %v2849, %v2889
    %v2912 = vsub.f32 %v2854, %v2892
    %v2913 = vsub.f32 %v2859, %v2895
    %v2914 = vsub.f32 %v2864, %v2898
    %v2915 = vsub.f32 %v2869, %v2901
    %v2916 = vsub.f32 %v2874, %v2904
    %v2917 = vsub.f32 %v2879, %v2907
    %v2918 = vsub.f32 %v2884, %v2910
    %v2919 = vmul.f32 %v2911, 1.442695
    %v2920 = vpow.pop %v2919
    %v2921 = vmul.f32 %v2912, 1.442695
    %v2922 = vpow.pop %v2921
    %v2923 = vmul.f32 %v2913, 1.442695
    %v2924 = vpow.pop %v2923
    %v2925 = vmul.f32 %v2914, 1.442695
    %v2926 = vpow.pop %v2925
    %v2927 = vmul.f32 %v2915, 1.442695
    %v2928 = vpow.pop %v2927
    %v2929 = vmul.f32 %v2916, 1.442695
    %v2930 = vpow.pop %v2929
    %v2931 = vmul.f32 %v2917, 1.442695
    %v2932 = vpow.pop %v2931
    %v2933 = vmul.f32 %v2918, 1.442695
    %v2934 = vpow.pop %v2933
    %v2935 = vsel %vm1510, %v2920, 0.0
    %2936 = vadd.xlane.f32.xlu0 %v2935
    %v2937 = vpop.xlane.xlu0 %2936
    %v2938 = vsel %vm1510, %v2922, 0.0
    %2939 = vadd.xlane.f32.xlu0 %v2938
    %v2940 = vpop.xlane.xlu0 %2939
    %v2941 = vsel %vm1510, %v2924, 0.0
    %2942 = vadd.xlane.f32.xlu0 %v2941
    %v2943 = vpop.xlane.xlu0 %2942
    %v2944 = vsel %vm1510, %v2926, 0.0
    %2945 = vadd.xlane.f32.xlu0 %v2944
    %v2946 = vpop.xlane.xlu0 %2945
    %v2947 = vsel %vm1510, %v2928, 0.0
    %2948 = vadd.xlane.f32.xlu0 %v2947
    %v2949 = vpop.xlane.xlu0 %2948
    %v2950 = vsel %vm1510, %v2930, 0.0
    %2951 = vadd.xlane.f32.xlu0 %v2950
    %v2952 = vpop.xlane.xlu0 %2951
    %v2953 = vsel %vm1510, %v2932, 0.0
    %2954 = vadd.xlane.f32.xlu0 %v2953
    %v2955 = vpop.xlane.xlu0 %2954
    %v2956 = vsel %vm1510, %v2934, 0.0
    %2957 = vadd.xlane.f32.xlu0 %v2956
    %v2958 = vpop.xlane.xlu0 %2957
    %v2959 = vrcp.pop %v2937
    %v2960 = vrcp.pop %v2940
    %v2961 = vrcp.pop %v2943
    %v2962 = vrcp.pop %v2946
    %v2963 = vrcp.pop %v2949
    %v2964 = vrcp.pop %v2952
    %v2965 = vrcp.pop %v2955
    %v2966 = vrcp.pop %v2958
    %v2967 = vmul.f32 %v2937, %v2959
    %v2968 = vmul.f32 %v2940, %v2960
    %v2969 = vmul.f32 %v2943, %v2961
    %v2970 = vmul.f32 %v2946, %v2962
    %v2971 = vmul.f32 %v2949, %v2963
    %v2972 = vmul.f32 %v2952, %v2964
    %v2973 = vmul.f32 %v2955, %v2965
    %v2974 = vmul.f32 %v2958, %v2966
    %v2975 = vsub.f32 2.0, %v2967
    %v2976 = vsub.f32 2.0, %v2968
    %v2977 = vsub.f32 2.0, %v2969
    %v2978 = vsub.f32 2.0, %v2970
    %v2979 = vsub.f32 2.0, %v2971
    %v2980 = vsub.f32 2.0, %v2972
    %v2981 = vsub.f32 2.0, %v2973
    %v2982 = vsub.f32 2.0, %v2974
    %v2983 = vmul.f32 %v2959, %v2975
    %v2984 = vmul.f32 %v2960, %v2976
    %v2985 = vmul.f32 %v2961, %v2977
    %v2986 = vmul.f32 %v2962, %v2978
    %v2987 = vmul.f32 %v2963, %v2979
    %v2988 = vmul.f32 %v2964, %v2980
    %v2989 = vmul.f32 %v2965, %v2981
    %v2990 = vmul.f32 %v2966, %v2982
    %2991 = vrot.lane.b32.xlu0 %v1278, 32
    %v2992 = vpop.permute.xlu0 %2991
    %2993 = vrot.lane.b32.xlu0 %v1283, 32
    %v2994 = vpop.permute.xlu0 %2993
    %2995 = vrot.lane.b32.xlu0 %v1288, 32
    %v2996 = vpop.permute.xlu0 %2995
    %2997 = vrot.lane.b32.xlu0 %v1293, 32
    %v2998 = vpop.permute.xlu0 %2997
    %2999 = vrot.lane.b32.xlu0 %v1298, 32
    %v3000 = vpop.permute.xlu0 %2999
    %3001 = vrot.lane.b32.xlu0 %v1303, 32
    %v3002 = vpop.permute.xlu0 %3001
    %3003 = vrot.lane.b32.xlu0 %v1308, 32
    %v3004 = vpop.permute.xlu0 %3003
    %3005 = vrot.lane.b32.xlu0 %v1313, 32
    %v3006 = vpop.permute.xlu0 %3005
    %v3016 = vsel %vm1510, %v2920, 0
    %v3019 = vsel %vm1510, %v2922, 0
    %v3022 = vsel %vm1510, %v2924, 0
    %v3025 = vsel %vm1510, %v2926, 0
    %v3028 = vsel %vm1510, %v2928, 0
    %v3031 = vsel %vm1510, %v2930, 0
    %v3034 = vsel %vm1510, %v2932, 0
    %v3037 = vsel %vm1510, %v2934, 0
    %3039 = vmatprep.subr.mxu0 0.0
    %3040 = vmatpush1.msra.mxu0 0.0
    %3041 = vmatprep.subr.mxu0 0.0
    %3042 = vmatpush1.msra.mxu0 0.0
    %3043 = vmatprep.subr.mxu0 0.0
    %3044 = vmatpush1.msra.mxu0 0.0
    %3045 = vmatprep.subr.mxu0 0.0
    %3046 = vmatpush1.msra.mxu0 0.0
    %3047 = vmatprep.subr.mxu0 0.0
    %3048 = vmatpush1.msra.mxu0 0.0
    %3049 = vmatprep.subr.mxu0 0.0
    %3050 = vmatpush1.msra.mxu0 0.0
    %3051 = vmatprep.subr.mxu0 0.0
    %3052 = vmatpush1.msra.mxu0 0.0
    %3053 = vmatprep.subr.mxu0 0.0
    %3054 = vmatpush1.msra.mxu0 0.0
    %3055 = vmatprep.subr.mxu0 0.0
    %3056 = vmatpush1.msra.mxu0 %v3006
    %3057 = vmatprep.subr.mxu0 0.0
    %3058 = vmatpush1.msra.mxu0 %v3004
    %3059 = vmatprep.subr.mxu0 0.0
    %3060 = vmatpush1.msra.mxu0 %v3002
    %3061 = vmatprep.subr.mxu0 0.0
    %3062 = vmatpush1.msra.mxu0 %v3000
    %3063 = vmatprep.subr.mxu0 0.0
    %3064 = vmatpush1.msra.mxu0 %v2998
    %3065 = vmatprep.subr.mxu0 0.0
    %3066 = vmatpush1.msra.mxu0 %v2996
    %3067 = vmatprep.subr.mxu0 0.0
    %3068 = vmatpush1.msra.mxu0 %v2994
    %3069 = vmatprep.subr.mxu0 0.0
    %3070 = vmatpush1.msra.mxu0 %v2992
    %3071 = vmatprep.subr.mxu0 0.0
    %3072 = vmatpush2.msra.mxu0 0.0
    %3073 = vmatprep.subr.mxu0 0.0
    %3074 = vmatpush2.msra.mxu0 0.0
    %3075 = vmatprep.subr.mxu0 0.0
    %3076 = vmatpush2.msra.mxu0 0.0
    %3077 = vmatprep.subr.mxu0 0.0
    %3078 = vmatpush2.msra.mxu0 0.0
    %3079 = vmatprep.subr.mxu0 0.0
    %3080 = vmatpush2.msra.mxu0 0.0
    %3081 = vmatprep.subr.mxu0 0.0
    %3082 = vmatpush2.msra.mxu0 0.0
    %3083 = vmatprep.subr.mxu0 0.0
    %3084 = vmatpush2.msra.mxu0 0.0
    %3085 = vmatprep.subr.mxu0 0.0
    %3086 = vmatpush2.msra.mxu0 0.0
    %3087 = vmatprep.subr.mxu0 0.0
    %3088 = vmatpush2.msra.mxu0 0.0
    %3089 = vmatprep.subr.mxu0 0.0
    %3090 = vmatpush2.msra.mxu0 0.0
    %3091 = vmatprep.subr.mxu0 0.0
    %3092 = vmatpush2.msra.mxu0 0.0
    %3093 = vmatprep.subr.mxu0 0.0
    %3094 = vmatpush2.msra.mxu0 0.0
    %3095 = vmatprep.subr.mxu0 0.0
    %3096 = vmatpush2.msra.mxu0 0.0
    %3097 = vmatprep.subr.mxu0 0.0
    %3098 = vmatpush2.msra.mxu0 0.0
    %3099 = vmatprep.subr.mxu0 0.0
    %3100 = vmatpush2.msra.mxu0 0.0
    %3101 = vmatprep.subr.mxu0 0.0
    %3102 = vmatpush2.msra.mxu0 0.0
    %3103 = vmatprep.mubr.f32.mxu0 0.0
    %3104 = vmatmul.mubr.f32.gmra.mxu0 %v3016
    %v3105 = vpop.f32.mrf.mxu0
    %v3106 = vadd.f32 0.0, %v3105
    %v3107 = vpop.f32.mrf.mxu0
    %3108 = vmatprep.mubr.f32.mxu0 0.0
    %3109 = vmatmul.mubr.f32.gmra.mxu0 %v3019
    %v3110 = vpop.f32.mrf.mxu0
    %v3111 = vadd.f32 0.0, %v3110
    %v3112 = vpop.f32.mrf.mxu0
    %3113 = vmatprep.mubr.f32.mxu0 0.0
    %3114 = vmatmul.mubr.f32.gmra.mxu0 %v3022
    %v3115 = vpop.f32.mrf.mxu0
    %v3116 = vadd.f32 0.0, %v3115
    %v3117 = vpop.f32.mrf.mxu0
    %3118 = vmatprep.mubr.f32.mxu0 0.0
    %3119 = vmatmul.mubr.f32.gmra.mxu0 %v3025
    %v3120 = vpop.f32.mrf.mxu0
    %v3121 = vadd.f32 0.0, %v3120
    %v3122 = vpop.f32.mrf.mxu0
    %3123 = vmatprep.mubr.f32.mxu0 0.0
    %3124 = vmatmul.mubr.f32.gmra.mxu0 %v3028
    %v3125 = vpop.f32.mrf.mxu0
    %v3126 = vadd.f32 0.0, %v3125
    %v3127 = vpop.f32.mrf.mxu0
    %3128 = vmatprep.mubr.f32.mxu0 0.0
    %3129 = vmatmul.mubr.f32.gmra.mxu0 %v3031
    %v3130 = vpop.f32.mrf.mxu0
    %v3131 = vadd.f32 0.0, %v3130
    %v3132 = vpop.f32.mrf.mxu0
    %3133 = vmatprep.mubr.f32.mxu0 0.0
    %3134 = vmatmul.mubr.f32.gmra.mxu0 %v3034
    %v3135 = vpop.f32.mrf.mxu0
    %v3136 = vadd.f32 0.0, %v3135
    %v3137 = vpop.f32.mrf.mxu0
    %3138 = vmatprep.mubr.f32.mxu0 0.0
    %3139 = vmatmul.mubr.f32.gmra.mxu0 %v3037
    %v3140 = vpop.f32.mrf.mxu0
    %v3141 = vadd.f32 0.0, %v3140
    %v3142 = vpop.f32.mrf.mxu0
    %3143 = vdwg.mxu0
    %v3144 = vmul.f32 %v3106, %v2983
    %v3145 = vmul.f32 %v3111, %v2984
    %v3146 = vmul.f32 %v3116, %v2985
    %v3147 = vmul.f32 %v3121, %v2986
    %v3148 = vmul.f32 %v3126, %v2987
    %v3149 = vmul.f32 %v3131, %v2988
    %v3150 = vmul.f32 %v3136, %v2989
    %v3151 = vmul.f32 %v3141, %v2990
    %3160 = vrot.lane.b32.xlu0 %v3144, 96
    %v3161 = vpop.permute.xlu0 %3160
    %3162 = vrot.lane.b32.xlu0 %v3145, 96
    %v3163 = vpop.permute.xlu0 %3162
    %3164 = vrot.lane.b32.xlu0 %v3146, 96
    %v3165 = vpop.permute.xlu0 %3164
    %3166 = vrot.lane.b32.xlu0 %v3147, 96
    %v3167 = vpop.permute.xlu0 %3166
    %3168 = vrot.lane.b32.xlu0 %v3148, 96
    %v3169 = vpop.permute.xlu0 %3168
    %3170 = vrot.lane.b32.xlu0 %v3149, 96
    %v3171 = vpop.permute.xlu0 %3170
    %3172 = vrot.lane.b32.xlu0 %v3150, 96
    %v3173 = vpop.permute.xlu0 %3172
    %3174 = vrot.lane.b32.xlu0 %v3151, 96
    %v3175 = vpop.permute.xlu0 %3174
    %vm3184 = vcmask 1048320
    %3185 = vst.msk [vmem:[#allocation2] sm:$0xff] %vm3184, %v3161
    %3186 = vst.msk [vmem:[#allocation2 + $0x8] sm:$0xff] %vm3184, %v3163
    %3187 = vst.msk [vmem:[#allocation2 + $0x10] sm:$0xff] %vm3184, %v3165
    %3188 = vst.msk [vmem:[#allocation2 + $0x18] sm:$0xff] %vm3184, %v3167
    %3189 = vst.msk [vmem:[#allocation2 + $0x20] sm:$0xff] %vm3184, %v3169
    %3190 = vst.msk [vmem:[#allocation2 + $0x28] sm:$0xff] %vm3184, %v3171
    %3191 = vst.msk [vmem:[#allocation2 + $0x30] sm:$0xff] %vm3184, %v3173
    %3192 = vst.msk [vmem:[#allocation2 + $0x38] sm:$0xff] %vm3184, %v3175
    %v3194 = vsel %vm1356, %v1165, 0
    %v3197 = vsel %vm1356, %v1171, 0
    %v3200 = vsel %vm1356, %v1177, 0
    %v3203 = vsel %vm1356, %v1183, 0
    %v3206 = vsel %vm1356, %v1189, 0
    %v3209 = vsel %vm1356, %v1195, 0
    %v3212 = vsel %vm1356, %v1201, 0
    %v3215 = vsel %vm1356, %v1207, 0
    %v3218 = vsel %vm1356, %v1167, 0
    %v3221 = vsel %vm1356, %v1173, 0
    %v3224 = vsel %vm1356, %v1179, 0
    %v3227 = vsel %vm1356, %v1185, 0
    %v3230 = vsel %vm1356, %v1191, 0
    %v3233 = vsel %vm1356, %v1197, 0
    %v3236 = vsel %vm1356, %v1203, 0
    %v3239 = vsel %vm1356, %v1209, 0
    %3241 = vmatprep.subr.mxu0 0.0
    %3242 = vmatpush1.xpose.msra.mxu0 0.0
    %3243 = vmatprep.subr.mxu0 0.0
    %3244 = vmatpush1.xpose.msra.mxu0 0.0
    %3245 = vmatprep.subr.mxu0 0.0
    %3246 = vmatpush1.xpose.msra.mxu0 0.0
    %3247 = vmatprep.subr.mxu0 0.0
    %3248 = vmatpush1.xpose.msra.mxu0 0.0
    %3249 = vmatprep.subr.mxu0 0.0
    %3250 = vmatpush1.xpose.msra.mxu0 0.0
    %3251 = vmatprep.subr.mxu0 0.0
    %3252 = vmatpush1.xpose.msra.mxu0 0.0
    %3253 = vmatprep.subr.mxu0 0.0
    %3254 = vmatpush1.xpose.msra.mxu0 0.0
    %3255 = vmatprep.subr.mxu0 0.0
    %3256 = vmatpush1.xpose.msra.mxu0 0.0
    %3257 = vmatprep.subr.mxu0 0.0
    %3258 = vmatpush1.xpose.msra.mxu0 %v3239
    %3259 = vmatprep.subr.mxu0 0.0
    %3260 = vmatpush1.xpose.msra.mxu0 %v3236
    %3261 = vmatprep.subr.mxu0 0.0
    %3262 = vmatpush1.xpose.msra.mxu0 %v3233
    %3263 = vmatprep.subr.mxu0 0.0
    %3264 = vmatpush1.xpose.msra.mxu0 %v3230
    %3265 = vmatprep.subr.mxu0 0.0
    %3266 = vmatpush1.xpose.msra.mxu0 %v3227
    %3267 = vmatprep.subr.mxu0 0.0
    %3268 = vmatpush1.xpose.msra.mxu0 %v3224
    %3269 = vmatprep.subr.mxu0 0.0
    %3270 = vmatpush1.xpose.msra.mxu0 %v3221
    %3271 = vmatprep.subr.mxu0 0.0
    %3272 = vmatpush1.xpose.msra.mxu0 %v3218
    %3273 = vmatprep.subr.mxu0 0.0
    %3274 = vmatpush2.xpose.msra.mxu0 0.0
    %3275 = vmatprep.subr.mxu0 0.0
    %3276 = vmatpush2.xpose.msra.mxu0 0.0
    %3277 = vmatprep.subr.mxu0 0.0
    %3278 = vmatpush2.xpose.msra.mxu0 0.0
    %3279 = vmatprep.subr.mxu0 0.0
    %3280 = vmatpush2.xpose.msra.mxu0 0.0
    %3281 = vmatprep.subr.mxu0 0.0
    %3282 = vmatpush2.xpose.msra.mxu0 0.0
    %3283 = vmatprep.subr.mxu0 0.0
    %3284 = vmatpush2.xpose.msra.mxu0 0.0
    %3285 = vmatprep.subr.mxu0 0.0
    %3286 = vmatpush2.xpose.msra.mxu0 0.0
    %3287 = vmatprep.subr.mxu0 0.0
    %3288 = vmatpush2.xpose.msra.mxu0 0.0
    %3289 = vmatprep.subr.mxu0 0.0
    %3290 = vmatpush2.xpose.msra.mxu0 0.0
    %3291 = vmatprep.subr.mxu0 0.0
    %3292 = vmatpush2.xpose.msra.mxu0 0.0
    %3293 = vmatprep.subr.mxu0 0.0
    %3294 = vmatpush2.xpose.msra.mxu0 0.0
    %3295 = vmatprep.subr.mxu0 0.0
    %3296 = vmatpush2.xpose.msra.mxu0 0.0
    %3297 = vmatprep.subr.mxu0 0.0
    %3298 = vmatpush2.xpose.msra.mxu0 0.0
    %3299 = vmatprep.subr.mxu0 0.0
    %3300 = vmatpush2.xpose.msra.mxu0 0.0
    %3301 = vmatprep.subr.mxu0 0.0
    %3302 = vmatpush2.xpose.msra.mxu0 0.0
    %3303 = vmatprep.subr.mxu0 0.0
    %3304 = vmatpush2.xpose.msra.mxu0 0.0
    %3305 = vmatprep.mubr.f32.mxu0 0.0
    %3306 = vmatmul.mubr.f32.gmra.mxu0 %v3194
    %v3307 = vpop.f32.mrf.mxu0
    %v3308 = vadd.f32 0.0, %v3307
    %v3309 = vpop.f32.mrf.mxu0
    %3310 = vmatprep.mubr.f32.mxu0 0.0
    %3311 = vmatmul.mubr.f32.gmra.mxu0 %v3197
    %v3312 = vpop.f32.mrf.mxu0
    %v3313 = vadd.f32 0.0, %v3312
    %v3314 = vpop.f32.mrf.mxu0
    %3315 = vmatprep.mubr.f32.mxu0 0.0
    %3316 = vmatmul.mubr.f32.gmra.mxu0 %v3200
    %v3317 = vpop.f32.mrf.mxu0
    %v3318 = vadd.f32 0.0, %v3317
    %v3319 = vpop.f32.mrf.mxu0
    %3320 = vmatprep.mubr.f32.mxu0 0.0
    %3321 = vmatmul.mubr.f32.gmra.mxu0 %v3203
    %v3322 = vpop.f32.mrf.mxu0
    %v3323 = vadd.f32 0.0, %v3322
    %v3324 = vpop.f32.mrf.mxu0
    %3325 = vmatprep.mubr.f32.mxu0 0.0
    %3326 = vmatmul.mubr.f32.gmra.mxu0 %v3206
    %v3327 = vpop.f32.mrf.mxu0
    %v3328 = vadd.f32 0.0, %v3327
    %v3329 = vpop.f32.mrf.mxu0
    %3330 = vmatprep.mubr.f32.mxu0 0.0
    %3331 = vmatmul.mubr.f32.gmra.mxu0 %v3209
    %v3332 = vpop.f32.mrf.mxu0
    %v3333 = vadd.f32 0.0, %v3332
    %v3334 = vpop.f32.mrf.mxu0
    %3335 = vmatprep.mubr.f32.mxu0 0.0
    %3336 = vmatmul.mubr.f32.gmra.mxu0 %v3212
    %v3337 = vpop.f32.mrf.mxu0
    %v3338 = vadd.f32 0.0, %v3337
    %v3339 = vpop.f32.mrf.mxu0
    %3340 = vmatprep.mubr.f32.mxu0 0.0
    %3341 = vmatmul.mubr.f32.gmra.mxu0 %v3215
    %v3342 = vpop.f32.mrf.mxu0
    %v3343 = vadd.f32 0.0, %v3342
    %v3344 = vpop.f32.mrf.mxu0
    %3345 = vdwg.mxu0
    %v3346 = vsel %vm1510, %v3308, -inf
    %3347 = vmax.xlane.f32.xlu0 %v3346
    %v3348 = vpop.xlane.xlu0 %3347
    %v3349 = vsel %vm1510, %v3313, -inf
    %3350 = vmax.xlane.f32.xlu0 %v3349
    %v3351 = vpop.xlane.xlu0 %3350
    %v3352 = vsel %vm1510, %v3318, -inf
    %3353 = vmax.xlane.f32.xlu0 %v3352
    %v3354 = vpop.xlane.xlu0 %3353
    %v3355 = vsel %vm1510, %v3323, -inf
    %3356 = vmax.xlane.f32.xlu0 %v3355
    %v3357 = vpop.xlane.xlu0 %3356
    %v3358 = vsel %vm1510, %v3328, -inf
    %3359 = vmax.xlane.f32.xlu0 %v3358
    %v3360 = vpop.xlane.xlu0 %3359
    %v3361 = vsel %vm1510, %v3333, -inf
    %3362 = vmax.xlane.f32.xlu0 %v3361
    %v3363 = vpop.xlane.xlu0 %3362
    %v3364 = vsel %vm1510, %v3338, -inf
    %3365 = vmax.xlane.f32.xlu0 %v3364
    %v3366 = vpop.xlane.xlu0 %3365
    %v3367 = vsel %vm1510, %v3343, -inf
    %3368 = vmax.xlane.f32.xlu0 %v3367
    %v3369 = vpop.xlane.xlu0 %3368
    %v3370 = vsub.f32 %v3308, %v3348
    %v3371 = vsub.f32 %v3313, %v3351
    %v3372 = vsub.f32 %v3318, %v3354
    %v3373 = vsub.f32 %v3323, %v3357
    %v3374 = vsub.f32 %v3328, %v3360
    %v3375 = vsub.f32 %v3333, %v3363
    %v3376 = vsub.f32 %v3338, %v3366
    %v3377 = vsub.f32 %v3343, %v3369
    %v3378 = vmul.f32 %v3370, 1.442695
    %v3379 = vpow.pop %v3378
    %v3380 = vmul.f32 %v3371, 1.442695
    %v3381 = vpow.pop %v3380
    %v3382 = vmul.f32 %v3372, 1.442695
    %v3383 = vpow.pop %v3382
    %v3384 = vmul.f32 %v3373, 1.442695
    %v3385 = vpow.pop %v3384
    %v3386 = vmul.f32 %v3374, 1.442695
    %v3387 = vpow.pop %v3386
    %v3388 = vmul.f32 %v3375, 1.442695
    %v3389 = vpow.pop %v3388
    %v3390 = vmul.f32 %v3376, 1.442695
    %v3391 = vpow.pop %v3390
    %v3392 = vmul.f32 %v3377, 1.442695
    %v3393 = vpow.pop %v3392
    %v3394 = vsel %vm1510, %v3379, 0.0
    %3395 = vadd.xlane.f32.xlu0 %v3394
    %v3396 = vpop.xlane.xlu0 %3395
    %v3397 = vsel %vm1510, %v3381, 0.0
    %3398 = vadd.xlane.f32.xlu0 %v3397
    %v3399 = vpop.xlane.xlu0 %3398
    %v3400 = vsel %vm1510, %v3383, 0.0
    %3401 = vadd.xlane.f32.xlu0 %v3400
    %v3402 = vpop.xlane.xlu0 %3401
    %v3403 = vsel %vm1510, %v3385, 0.0
    %3404 = vadd.xlane.f32.xlu0 %v3403
    %v3405 = vpop.xlane.xlu0 %3404
    %v3406 = vsel %vm1510, %v3387, 0.0
    %3407 = vadd.xlane.f32.xlu0 %v3406
    %v3408 = vpop.xlane.xlu0 %3407
    %v3409 = vsel %vm1510, %v3389, 0.0
    %3410 = vadd.xlane.f32.xlu0 %v3409
    %v3411 = vpop.xlane.xlu0 %3410
    %v3412 = vsel %vm1510, %v3391, 0.0
    %3413 = vadd.xlane.f32.xlu0 %v3412
    %v3414 = vpop.xlane.xlu0 %3413
    %v3415 = vsel %vm1510, %v3393, 0.0
    %3416 = vadd.xlane.f32.xlu0 %v3415
    %v3417 = vpop.xlane.xlu0 %3416
    %v3418 = vrcp.pop %v3396
    %v3419 = vrcp.pop %v3399
    %v3420 = vrcp.pop %v3402
    %v3421 = vrcp.pop %v3405
    %v3422 = vrcp.pop %v3408
    %v3423 = vrcp.pop %v3411
    %v3424 = vrcp.pop %v3414
    %v3425 = vrcp.pop %v3417
    %v3426 = vmul.f32 %v3396, %v3418
    %v3427 = vmul.f32 %v3399, %v3419
    %v3428 = vmul.f32 %v3402, %v3420
    %v3429 = vmul.f32 %v3405, %v3421
    %v3430 = vmul.f32 %v3408, %v3422
    %v3431 = vmul.f32 %v3411, %v3423
    %v3432 = vmul.f32 %v3414, %v3424
    %v3433 = vmul.f32 %v3417, %v3425
    %v3434 = vsub.f32 2.0, %v3426
    %v3435 = vsub.f32 2.0, %v3427
    %v3436 = vsub.f32 2.0, %v3428
    %v3437 = vsub.f32 2.0, %v3429
    %v3438 = vsub.f32 2.0, %v3430
    %v3439 = vsub.f32 2.0, %v3431
    %v3440 = vsub.f32 2.0, %v3432
    %v3441 = vsub.f32 2.0, %v3433
    %v3442 = vmul.f32 %v3418, %v3434
    %v3443 = vmul.f32 %v3419, %v3435
    %v3444 = vmul.f32 %v3420, %v3436
    %v3445 = vmul.f32 %v3421, %v3437
    %v3446 = vmul.f32 %v3422, %v3438
    %v3447 = vmul.f32 %v3423, %v3439
    %v3448 = vmul.f32 %v3424, %v3440
    %v3449 = vmul.f32 %v3425, %v3441
    %v3451 = vsel %vm1510, %v3379, 0
    %v3454 = vsel %vm1510, %v3381, 0
    %v3457 = vsel %vm1510, %v3383, 0
    %v3460 = vsel %vm1510, %v3385, 0
    %v3463 = vsel %vm1510, %v3387, 0
    %v3466 = vsel %vm1510, %v3389, 0
    %v3469 = vsel %vm1510, %v3391, 0
    %v3472 = vsel %vm1510, %v3393, 0
    %3474 = vmatprep.subr.mxu0 0.0
    %3475 = vmatpush1.msra.mxu0 0.0
    %3476 = vmatprep.subr.mxu0 0.0
    %3477 = vmatpush1.msra.mxu0 0.0
    %3478 = vmatprep.subr.mxu0 0.0
    %3479 = vmatpush1.msra.mxu0 0.0
    %3480 = vmatprep.subr.mxu0 0.0
    %3481 = vmatpush1.msra.mxu0 0.0
    %3482 = vmatprep.subr.mxu0 0.0
    %3483 = vmatpush1.msra.mxu0 0.0
    %3484 = vmatprep.subr.mxu0 0.0
    %3485 = vmatpush1.msra.mxu0 0.0
    %3486 = vmatprep.subr.mxu0 0.0
    %3487 = vmatpush1.msra.mxu0 0.0
    %3488 = vmatprep.subr.mxu0 0.0
    %3489 = vmatpush1.msra.mxu0 0.0
    %3490 = vmatprep.subr.mxu0 0.0
    %3491 = vmatpush1.msra.mxu0 %v1353
    %3492 = vmatprep.subr.mxu0 0.0
    %3493 = vmatpush1.msra.mxu0 %v1348
    %3494 = vmatprep.subr.mxu0 0.0
    %3495 = vmatpush1.msra.mxu0 %v1343
    %3496 = vmatprep.subr.mxu0 0.0
    %3497 = vmatpush1.msra.mxu0 %v1338
    %3498 = vmatprep.subr.mxu0 0.0
    %3499 = vmatpush1.msra.mxu0 %v1333
    %3500 = vmatprep.subr.mxu0 0.0
    %3501 = vmatpush1.msra.mxu0 %v1328
    %3502 = vmatprep.subr.mxu0 0.0
    %3503 = vmatpush1.msra.mxu0 %v1323
    %3504 = vmatprep.subr.mxu0 0.0
    %3505 = vmatpush1.msra.mxu0 %v1318
    %3506 = vmatprep.subr.mxu0 0.0
    %3507 = vmatpush2.msra.mxu0 0.0
    %3508 = vmatprep.subr.mxu0 0.0
    %3509 = vmatpush2.msra.mxu0 0.0
    %3510 = vmatprep.subr.mxu0 0.0
    %3511 = vmatpush2.msra.mxu0 0.0
    %3512 = vmatprep.subr.mxu0 0.0
    %3513 = vmatpush2.msra.mxu0 0.0
    %3514 = vmatprep.subr.mxu0 0.0
    %3515 = vmatpush2.msra.mxu0 0.0
    %3516 = vmatprep.subr.mxu0 0.0
    %3517 = vmatpush2.msra.mxu0 0.0
    %3518 = vmatprep.subr.mxu0 0.0
    %3519 = vmatpush2.msra.mxu0 0.0
    %3520 = vmatprep.subr.mxu0 0.0
    %3521 = vmatpush2.msra.mxu0 0.0
    %3522 = vmatprep.subr.mxu0 0.0
    %3523 = vmatpush2.msra.mxu0 0.0
    %3524 = vmatprep.subr.mxu0 0.0
    %3525 = vmatpush2.msra.mxu0 0.0
    %3526 = vmatprep.subr.mxu0 0.0
    %3527 = vmatpush2.msra.mxu0 0.0
    %3528 = vmatprep.subr.mxu0 0.0
    %3529 = vmatpush2.msra.mxu0 0.0
    %3530 = vmatprep.subr.mxu0 0.0
    %3531 = vmatpush2.msra.mxu0 0.0
    %3532 = vmatprep.subr.mxu0 0.0
    %3533 = vmatpush2.msra.mxu0 0.0
    %3534 = vmatprep.subr.mxu0 0.0
    %3535 = vmatpush2.msra.mxu0 0.0
    %3536 = vmatprep.subr.mxu0 0.0
    %3537 = vmatpush2.msra.mxu0 0.0
    %3538 = vmatprep.mubr.f32.mxu0 0.0
    %3539 = vmatmul.mubr.f32.gmra.mxu0 %v3451
    %v3540 = vpop.f32.mrf.mxu0
    %v3541 = vadd.f32 0.0, %v3540
    %v3542 = vpop.f32.mrf.mxu0
    %3543 = vmatprep.mubr.f32.mxu0 0.0
    %3544 = vmatmul.mubr.f32.gmra.mxu0 %v3454
    %v3545 = vpop.f32.mrf.mxu0
    %v3546 = vadd.f32 0.0, %v3545
    %v3547 = vpop.f32.mrf.mxu0
    %3548 = vmatprep.mubr.f32.mxu0 0.0
    %3549 = vmatmul.mubr.f32.gmra.mxu0 %v3457
    %v3550 = vpop.f32.mrf.mxu0
    %v3551 = vadd.f32 0.0, %v3550
    %v3552 = vpop.f32.mrf.mxu0
    %3553 = vmatprep.mubr.f32.mxu0 0.0
    %3554 = vmatmul.mubr.f32.gmra.mxu0 %v3460
    %v3555 = vpop.f32.mrf.mxu0
    %v3556 = vadd.f32 0.0, %v3555
    %v3557 = vpop.f32.mrf.mxu0
    %3558 = vmatprep.mubr.f32.mxu0 0.0
    %3559 = vmatmul.mubr.f32.gmra.mxu0 %v3463
    %v3560 = vpop.f32.mrf.mxu0
    %v3561 = vadd.f32 0.0, %v3560
    %v3562 = vpop.f32.mrf.mxu0
    %3563 = vmatprep.mubr.f32.mxu0 0.0
    %3564 = vmatmul.mubr.f32.gmra.mxu0 %v3466
    %v3565 = vpop.f32.mrf.mxu0
    %v3566 = vadd.f32 0.0, %v3565
    %v3567 = vpop.f32.mrf.mxu0
    %3568 = vmatprep.mubr.f32.mxu0 0.0
    %3569 = vmatmul.mubr.f32.gmra.mxu0 %v3469
    %v3570 = vpop.f32.mrf.mxu0
    %v3571 = vadd.f32 0.0, %v3570
    %v3572 = vpop.f32.mrf.mxu0
    %3573 = vmatprep.mubr.f32.mxu0 0.0
    %3574 = vmatmul.mubr.f32.gmra.mxu0 %v3472
    %v3575 = vpop.f32.mrf.mxu0
    %v3576 = vadd.f32 0.0, %v3575
    %v3577 = vpop.f32.mrf.mxu0
    %3578 = vdwg.mxu0
    %v3579 = vmul.f32 %v3541, %v3442
    %v3580 = vmul.f32 %v3546, %v3443
    %v3581 = vmul.f32 %v3551, %v3444
    %v3582 = vmul.f32 %v3556, %v3445
    %v3583 = vmul.f32 %v3561, %v3446
    %v3584 = vmul.f32 %v3566, %v3447
    %v3585 = vmul.f32 %v3571, %v3448
    %v3586 = vmul.f32 %v3576, %v3449
    %3587 = vst.msk [vmem:[#allocation2 + $0x40] sm:$0xff] %vm1356, %v3579
    %3588 = vst.msk [vmem:[#allocation2 + $0x48] sm:$0xff] %vm1356, %v3580
    %3589 = vst.msk [vmem:[#allocation2 + $0x50] sm:$0xff] %vm1356, %v3581
    %3590 = vst.msk [vmem:[#allocation2 + $0x58] sm:$0xff] %vm1356, %v3582
    %3591 = vst.msk [vmem:[#allocation2 + $0x60] sm:$0xff] %vm1356, %v3583
    %3592 = vst.msk [vmem:[#allocation2 + $0x68] sm:$0xff] %vm1356, %v3584
    %3593 = vst.msk [vmem:[#allocation2 + $0x70] sm:$0xff] %vm1356, %v3585
    %3594 = vst.msk [vmem:[#allocation2 + $0x78] sm:$0xff] %vm1356, %v3586
    %3595 = vrot.lane.b32.xlu0 %v1165, 96
    %v3596 = vpop.permute.xlu0 %3595
    %3597 = vrot.lane.b32.xlu0 %v1171, 96
    %v3598 = vpop.permute.xlu0 %3597
    %3599 = vrot.lane.b32.xlu0 %v1177, 96
    %v3600 = vpop.permute.xlu0 %3599
    %3601 = vrot.lane.b32.xlu0 %v1183, 96
    %v3602 = vpop.permute.xlu0 %3601
    %3603 = vrot.lane.b32.xlu0 %v1189, 96
    %v3604 = vpop.permute.xlu0 %3603
    %3605 = vrot.lane.b32.xlu0 %v1195, 96
    %v3606 = vpop.permute.xlu0 %3605
    %3607 = vrot.lane.b32.xlu0 %v1201, 96
    %v3608 = vpop.permute.xlu0 %3607
    %3609 = vrot.lane.b32.xlu0 %v1207, 96
    %v3610 = vpop.permute.xlu0 %3609
    %3611 = vrot.lane.b32.xlu0 %v1167, 96
    %v3612 = vpop.permute.xlu0 %3611
    %3613 = vrot.lane.b32.xlu0 %v1173, 96
    %v3614 = vpop.permute.xlu0 %3613
    %3615 = vrot.lane.b32.xlu0 %v1179, 96
    %v3616 = vpop.permute.xlu0 %3615
    %3617 = vrot.lane.b32.xlu0 %v1185, 96
    %v3618 = vpop.permute.xlu0 %3617
    %3619 = vrot.lane.b32.xlu0 %v1191, 96
    %v3620 = vpop.permute.xlu0 %3619
    %3621 = vrot.lane.b32.xlu0 %v1197, 96
    %v3622 = vpop.permute.xlu0 %3621
    %3623 = vrot.lane.b32.xlu0 %v1203, 96
    %v3624 = vpop.permute.xlu0 %3623
    %3625 = vrot.lane.b32.xlu0 %v1209, 96
    %v3626 = vpop.permute.xlu0 %3625
    %v3627 = vsel %vm1356, %v3596, 0
    %v3629 = vsel %vm1356, %v3598, 0
    %v3631 = vsel %vm1356, %v3600, 0
    %v3633 = vsel %vm1356, %v3602, 0
    %v3635 = vsel %vm1356, %v3604, 0
    %v3637 = vsel %vm1356, %v3606, 0
    %v3639 = vsel %vm1356, %v3608, 0
    %v3641 = vsel %vm1356, %v3610, 0
    %v3643 = vsel %vm1356, %v3612, 0
    %v3645 = vsel %vm1356, %v3614, 0
    %v3647 = vsel %vm1356, %v3616, 0
    %v3649 = vsel %vm1356, %v3618, 0
    %v3651 = vsel %vm1356, %v3620, 0
    %v3653 = vsel %vm1356, %v3622, 0
    %v3655 = vsel %vm1356, %v3624, 0
    %v3657 = vsel %vm1356, %v3626, 0
    %3659 = vmatprep.subr.mxu0 0.0
    %3660 = vmatpush1.xpose.msra.mxu0 0.0
    %3661 = vmatprep.subr.mxu0 0.0
    %3662 = vmatpush1.xpose.msra.mxu0 0.0
    %3663 = vmatprep.subr.mxu0 0.0
    %3664 = vmatpush1.xpose.msra.mxu0 0.0
    %3665 = vmatprep.subr.mxu0 0.0
    %3666 = vmatpush1.xpose.msra.mxu0 0.0
    %3667 = vmatprep.subr.mxu0 0.0
    %3668 = vmatpush1.xpose.msra.mxu0 0.0
    %3669 = vmatprep.subr.mxu0 0.0
    %3670 = vmatpush1.xpose.msra.mxu0 0.0
    %3671 = vmatprep.subr.mxu0 0.0
    %3672 = vmatpush1.xpose.msra.mxu0 0.0
    %3673 = vmatprep.subr.mxu0 0.0
    %3674 = vmatpush1.xpose.msra.mxu0 0.0
    %3675 = vmatprep.subr.mxu0 0.0
    %3676 = vmatpush1.xpose.msra.mxu0 %v3657
    %3677 = vmatprep.subr.mxu0 0.0
    %3678 = vmatpush1.xpose.msra.mxu0 %v3655
    %3679 = vmatprep.subr.mxu0 0.0
    %3680 = vmatpush1.xpose.msra.mxu0 %v3653
    %3681 = vmatprep.subr.mxu0 0.0
    %3682 = vmatpush1.xpose.msra.mxu0 %v3651
    %3683 = vmatprep.subr.mxu0 0.0
    %3684 = vmatpush1.xpose.msra.mxu0 %v3649
    %3685 = vmatprep.subr.mxu0 0.0
    %3686 = vmatpush1.xpose.msra.mxu0 %v3647
    %3687 = vmatprep.subr.mxu0 0.0
    %3688 = vmatpush1.xpose.msra.mxu0 %v3645
    %3689 = vmatprep.subr.mxu0 0.0
    %3690 = vmatpush1.xpose.msra.mxu0 %v3643
    %3691 = vmatprep.subr.mxu0 0.0
    %3692 = vmatpush2.xpose.msra.mxu0 0.0
    %3693 = vmatprep.subr.mxu0 0.0
    %3694 = vmatpush2.xpose.msra.mxu0 0.0
    %3695 = vmatprep.subr.mxu0 0.0
    %3696 = vmatpush2.xpose.msra.mxu0 0.0
    %3697 = vmatprep.subr.mxu0 0.0
    %3698 = vmatpush2.xpose.msra.mxu0 0.0
    %3699 = vmatprep.subr.mxu0 0.0
    %3700 = vmatpush2.xpose.msra.mxu0 0.0
    %3701 = vmatprep.subr.mxu0 0.0
    %3702 = vmatpush2.xpose.msra.mxu0 0.0
    %3703 = vmatprep.subr.mxu0 0.0
    %3704 = vmatpush2.xpose.msra.mxu0 0.0
    %3705 = vmatprep.subr.mxu0 0.0
    %3706 = vmatpush2.xpose.msra.mxu0 0.0
    %3707 = vmatprep.subr.mxu0 0.0
    %3708 = vmatpush2.xpose.msra.mxu0 0.0
    %3709 = vmatprep.subr.mxu0 0.0
    %3710 = vmatpush2.xpose.msra.mxu0 0.0
    %3711 = vmatprep.subr.mxu0 0.0
    %3712 = vmatpush2.xpose.msra.mxu0 0.0
    %3713 = vmatprep.subr.mxu0 0.0
    %3714 = vmatpush2.xpose.msra.mxu0 0.0
    %3715 = vmatprep.subr.mxu0 0.0
    %3716 = vmatpush2.xpose.msra.mxu0 0.0
    %3717 = vmatprep.subr.mxu0 0.0
    %3718 = vmatpush2.xpose.msra.mxu0 0.0
    %3719 = vmatprep.subr.mxu0 0.0
    %3720 = vmatpush2.xpose.msra.mxu0 0.0
    %3721 = vmatprep.subr.mxu0 0.0
    %3722 = vmatpush2.xpose.msra.mxu0 0.0
    %3723 = vmatprep.mubr.f32.mxu0 0.0
    %3724 = vmatmul.mubr.f32.gmra.mxu0 %v3627
    %v3725 = vpop.f32.mrf.mxu0
    %v3726 = vadd.f32 0.0, %v3725
    %v3727 = vpop.f32.mrf.mxu0
    %3728 = vmatprep.mubr.f32.mxu0 0.0
    %3729 = vmatmul.mubr.f32.gmra.mxu0 %v3629
    %v3730 = vpop.f32.mrf.mxu0
    %v3731 = vadd.f32 0.0, %v3730
    %v3732 = vpop.f32.mrf.mxu0
    %3733 = vmatprep.mubr.f32.mxu0 0.0
    %3734 = vmatmul.mubr.f32.gmra.mxu0 %v3631
    %v3735 = vpop.f32.mrf.mxu0
    %v3736 = vadd.f32 0.0, %v3735
    %v3737 = vpop.f32.mrf.mxu0
    %3738 = vmatprep.mubr.f32.mxu0 0.0
    %3739 = vmatmul.mubr.f32.gmra.mxu0 %v3633
    %v3740 = vpop.f32.mrf.mxu0
    %v3741 = vadd.f32 0.0, %v3740
    %v3742 = vpop.f32.mrf.mxu0
    %3743 = vmatprep.mubr.f32.mxu0 0.0
    %3744 = vmatmul.mubr.f32.gmra.mxu0 %v3635
    %v3745 = vpop.f32.mrf.mxu0
    %v3746 = vadd.f32 0.0, %v3745
    %v3747 = vpop.f32.mrf.mxu0
    %3748 = vmatprep.mubr.f32.mxu0 0.0
    %3749 = vmatmul.mubr.f32.gmra.mxu0 %v3637
    %v3750 = vpop.f32.mrf.mxu0
    %v3751 = vadd.f32 0.0, %v3750
    %v3752 = vpop.f32.mrf.mxu0
    %3753 = vmatprep.mubr.f32.mxu0 0.0
    %3754 = vmatmul.mubr.f32.gmra.mxu0 %v3639
    %v3755 = vpop.f32.mrf.mxu0
    %v3756 = vadd.f32 0.0, %v3755
    %v3757 = vpop.f32.mrf.mxu0
    %3758 = vmatprep.mubr.f32.mxu0 0.0
    %3759 = vmatmul.mubr.f32.gmra.mxu0 %v3641
    %v3760 = vpop.f32.mrf.mxu0
    %v3761 = vadd.f32 0.0, %v3760
    %v3762 = vpop.f32.mrf.mxu0
    %3763 = vdwg.mxu0
    %v3764 = vsel %vm1510, %v3726, -inf
    %3765 = vmax.xlane.f32.xlu0 %v3764
    %v3766 = vpop.xlane.xlu0 %3765
    %v3767 = vsel %vm1510, %v3731, -inf
    %3768 = vmax.xlane.f32.xlu0 %v3767
    %v3769 = vpop.xlane.xlu0 %3768
    %v3770 = vsel %vm1510, %v3736, -inf
    %3771 = vmax.xlane.f32.xlu0 %v3770
    %v3772 = vpop.xlane.xlu0 %3771
    %v3773 = vsel %vm1510, %v3741, -inf
    %3774 = vmax.xlane.f32.xlu0 %v3773
    %v3775 = vpop.xlane.xlu0 %3774
    %v3776 = vsel %vm1510, %v3746, -inf
    %3777 = vmax.xlane.f32.xlu0 %v3776
    %v3778 = vpop.xlane.xlu0 %3777
    %v3779 = vsel %vm1510, %v3751, -inf
    %3780 = vmax.xlane.f32.xlu0 %v3779
    %v3781 = vpop.xlane.xlu0 %3780
    %v3782 = vsel %vm1510, %v3756, -inf
    %3783 = vmax.xlane.f32.xlu0 %v3782
    %v3784 = vpop.xlane.xlu0 %3783
    %v3785 = vsel %vm1510, %v3761, -inf
    %3786 = vmax.xlane.f32.xlu0 %v3785
    %v3787 = vpop.xlane.xlu0 %3786
    %v3788 = vsub.f32 %v3726, %v3766
    %v3789 = vsub.f32 %v3731, %v3769
    %v3790 = vsub.f32 %v3736, %v3772
    %v3791 = vsub.f32 %v3741, %v3775
    %v3792 = vsub.f32 %v3746, %v3778
    %v3793 = vsub.f32 %v3751, %v3781
    %v3794 = vsub.f32 %v3756, %v3784
    %v3795 = vsub.f32 %v3761, %v3787
    %v3796 = vmul.f32 %v3788, 1.442695
    %v3797 = vpow.pop %v3796
    %v3798 = vmul.f32 %v3789, 1.442695
    %v3799 = vpow.pop %v3798
    %v3800 = vmul.f32 %v3790, 1.442695
    %v3801 = vpow.pop %v3800
    %v3802 = vmul.f32 %v3791, 1.442695
    %v3803 = vpow.pop %v3802
    %v3804 = vmul.f32 %v3792, 1.442695
    %v3805 = vpow.pop %v3804
    %v3806 = vmul.f32 %v3793, 1.442695
    %v3807 = vpow.pop %v3806
    %v3808 = vmul.f32 %v3794, 1.442695
    %v3809 = vpow.pop %v3808
    %v3810 = vmul.f32 %v3795, 1.442695
    %v3811 = vpow.pop %v3810
    %v3812 = vsel %vm1510, %v3797, 0.0
    %3813 = vadd.xlane.f32.xlu0 %v3812
    %v3814 = vpop.xlane.xlu0 %3813
    %v3815 = vsel %vm1510, %v3799, 0.0
    %3816 = vadd.xlane.f32.xlu0 %v3815
    %v3817 = vpop.xlane.xlu0 %3816
    %v3818 = vsel %vm1510, %v3801, 0.0
    %3819 = vadd.xlane.f32.xlu0 %v3818
    %v3820 = vpop.xlane.xlu0 %3819
    %v3821 = vsel %vm1510, %v3803, 0.0
    %3822 = vadd.xlane.f32.xlu0 %v3821
    %v3823 = vpop.xlane.xlu0 %3822
    %v3824 = vsel %vm1510, %v3805, 0.0
    %3825 = vadd.xlane.f32.xlu0 %v3824
    %v3826 = vpop.xlane.xlu0 %3825
    %v3827 = vsel %vm1510, %v3807, 0.0
    %3828 = vadd.xlane.f32.xlu0 %v3827
    %v3829 = vpop.xlane.xlu0 %3828
    %v3830 = vsel %vm1510, %v3809, 0.0
    %3831 = vadd.xlane.f32.xlu0 %v3830
    %v3832 = vpop.xlane.xlu0 %3831
    %v3833 = vsel %vm1510, %v3811, 0.0
    %3834 = vadd.xlane.f32.xlu0 %v3833
    %v3835 = vpop.xlane.xlu0 %3834
    %v3836 = vrcp.pop %v3814
    %v3837 = vrcp.pop %v3817
    %v3838 = vrcp.pop %v3820
    %v3839 = vrcp.pop %v3823
    %v3840 = vrcp.pop %v3826
    %v3841 = vrcp.pop %v3829
    %v3842 = vrcp.pop %v3832
    %v3843 = vrcp.pop %v3835
    %v3844 = vmul.f32 %v3814, %v3836
    %v3845 = vmul.f32 %v3817, %v3837
    %v3846 = vmul.f32 %v3820, %v3838
    %v3847 = vmul.f32 %v3823, %v3839
    %v3848 = vmul.f32 %v3826, %v3840
    %v3849 = vmul.f32 %v3829, %v3841
    %v3850 = vmul.f32 %v3832, %v3842
    %v3851 = vmul.f32 %v3835, %v3843
    %v3852 = vsub.f32 2.0, %v3844
    %v3853 = vsub.f32 2.0, %v3845
    %v3854 = vsub.f32 2.0, %v3846
    %v3855 = vsub.f32 2.0, %v3847
    %v3856 = vsub.f32 2.0, %v3848
    %v3857 = vsub.f32 2.0, %v3849
    %v3858 = vsub.f32 2.0, %v3850
    %v3859 = vsub.f32 2.0, %v3851
    %v3860 = vmul.f32 %v3836, %v3852
    %v3861 = vmul.f32 %v3837, %v3853
    %v3862 = vmul.f32 %v3838, %v3854
    %v3863 = vmul.f32 %v3839, %v3855
    %v3864 = vmul.f32 %v3840, %v3856
    %v3865 = vmul.f32 %v3841, %v3857
    %v3866 = vmul.f32 %v3842, %v3858
    %v3867 = vmul.f32 %v3843, %v3859
    %3876 = vrot.lane.b32.xlu0 %v1318, 96
    %v3877 = vpop.permute.xlu0 %3876
    %3878 = vrot.lane.b32.xlu0 %v1323, 96
    %v3879 = vpop.permute.xlu0 %3878
    %3880 = vrot.lane.b32.xlu0 %v1328, 96
    %v3881 = vpop.permute.xlu0 %3880
    %3882 = vrot.lane.b32.xlu0 %v1333, 96
    %v3883 = vpop.permute.xlu0 %3882
    %3884 = vrot.lane.b32.xlu0 %v1338, 96
    %v3885 = vpop.permute.xlu0 %3884
    %3886 = vrot.lane.b32.xlu0 %v1343, 96
    %v3887 = vpop.permute.xlu0 %3886
    %3888 = vrot.lane.b32.xlu0 %v1348, 96
    %v3889 = vpop.permute.xlu0 %3888
    %3890 = vrot.lane.b32.xlu0 %v1353, 96
    %v3891 = vpop.permute.xlu0 %3890
    %v3901 = vsel %vm1510, %v3797, 0
    %v3904 = vsel %vm1510, %v3799, 0
    %v3907 = vsel %vm1510, %v3801, 0
    %v3910 = vsel %vm1510, %v3803, 0
    %v3913 = vsel %vm1510, %v3805, 0
    %v3916 = vsel %vm1510, %v3807, 0
    %v3919 = vsel %vm1510, %v3809, 0
    %v3922 = vsel %vm1510, %v3811, 0
    %3924 = vmatprep.subr.mxu0 0.0
    %3925 = vmatpush1.msra.mxu0 0.0
    %3926 = vmatprep.subr.mxu0 0.0
    %3927 = vmatpush1.msra.mxu0 0.0
    %3928 = vmatprep.subr.mxu0 0.0
    %3929 = vmatpush1.msra.mxu0 0.0
    %3930 = vmatprep.subr.mxu0 0.0
    %3931 = vmatpush1.msra.mxu0 0.0
    %3932 = vmatprep.subr.mxu0 0.0
    %3933 = vmatpush1.msra.mxu0 0.0
    %3934 = vmatprep.subr.mxu0 0.0
    %3935 = vmatpush1.msra.mxu0 0.0
    %3936 = vmatprep.subr.mxu0 0.0
    %3937 = vmatpush1.msra.mxu0 0.0
    %3938 = vmatprep.subr.mxu0 0.0
    %3939 = vmatpush1.msra.mxu0 0.0
    %3940 = vmatprep.subr.mxu0 0.0
    %3941 = vmatpush1.msra.mxu0 %v3891
    %3942 = vmatprep.subr.mxu0 0.0
    %3943 = vmatpush1.msra.mxu0 %v3889
    %3944 = vmatprep.subr.mxu0 0.0
    %3945 = vmatpush1.msra.mxu0 %v3887
    %3946 = vmatprep.subr.mxu0 0.0
    %3947 = vmatpush1.msra.mxu0 %v3885
    %3948 = vmatprep.subr.mxu0 0.0
    %3949 = vmatpush1.msra.mxu0 %v3883
    %3950 = vmatprep.subr.mxu0 0.0
    %3951 = vmatpush1.msra.mxu0 %v3881
    %3952 = vmatprep.subr.mxu0 0.0
    %3953 = vmatpush1.msra.mxu0 %v3879
    %3954 = vmatprep.subr.mxu0 0.0
    %3955 = vmatpush1.msra.mxu0 %v3877
    %3956 = vmatprep.subr.mxu0 0.0
    %3957 = vmatpush2.msra.mxu0 0.0
    %3958 = vmatprep.subr.mxu0 0.0
    %3959 = vmatpush2.msra.mxu0 0.0
    %3960 = vmatprep.subr.mxu0 0.0
    %3961 = vmatpush2.msra.mxu0 0.0
    %3962 = vmatprep.subr.mxu0 0.0
    %3963 = vmatpush2.msra.mxu0 0.0
    %3964 = vmatprep.subr.mxu0 0.0
    %3965 = vmatpush2.msra.mxu0 0.0
    %3966 = vmatprep.subr.mxu0 0.0
    %3967 = vmatpush2.msra.mxu0 0.0
    %3968 = vmatprep.subr.mxu0 0.0
    %3969 = vmatpush2.msra.mxu0 0.0
    %3970 = vmatprep.subr.mxu0 0.0
    %3971 = vmatpush2.msra.mxu0 0.0
    %3972 = vmatprep.subr.mxu0 0.0
    %3973 = vmatpush2.msra.mxu0 0.0
    %3974 = vmatprep.subr.mxu0 0.0
    %3975 = vmatpush2.msra.mxu0 0.0
    %3976 = vmatprep.subr.mxu0 0.0
    %3977 = vmatpush2.msra.mxu0 0.0
    %3978 = vmatprep.subr.mxu0 0.0
    %3979 = vmatpush2.msra.mxu0 0.0
    %3980 = vmatprep.subr.mxu0 0.0
    %3981 = vmatpush2.msra.mxu0 0.0
    %3982 = vmatprep.subr.mxu0 0.0
    %3983 = vmatpush2.msra.mxu0 0.0
    %3984 = vmatprep.subr.mxu0 0.0
    %3985 = vmatpush2.msra.mxu0 0.0
    %3986 = vmatprep.subr.mxu0 0.0
    %3987 = vmatpush2.msra.mxu0 0.0
    %3988 = vmatprep.mubr.f32.mxu0 0.0
    %3989 = vmatmul.mubr.f32.gmra.mxu0 %v3901
    %v3990 = vpop.f32.mrf.mxu0
    %v3991 = vadd.f32 0.0, %v3990
    %v3992 = vpop.f32.mrf.mxu0
    %3993 = vmatprep.mubr.f32.mxu0 0.0
    %3994 = vmatmul.mubr.f32.gmra.mxu0 %v3904
    %v3995 = vpop.f32.mrf.mxu0
    %v3996 = vadd.f32 0.0, %v3995
    %v3997 = vpop.f32.mrf.mxu0
    %3998 = vmatprep.mubr.f32.mxu0 0.0
    %3999 = vmatmul.mubr.f32.gmra.mxu0 %v3907
    %v4000 = vpop.f32.mrf.mxu0
    %v4001 = vadd.f32 0.0, %v4000
    %v4002 = vpop.f32.mrf.mxu0
    %4003 = vmatprep.mubr.f32.mxu0 0.0
    %4004 = vmatmul.mubr.f32.gmra.mxu0 %v3910
    %v4005 = vpop.f32.mrf.mxu0
    %v4006 = vadd.f32 0.0, %v4005
    %v4007 = vpop.f32.mrf.mxu0
    %4008 = vmatprep.mubr.f32.mxu0 0.0
    %4009 = vmatmul.mubr.f32.gmra.mxu0 %v3913
    %v4010 = vpop.f32.mrf.mxu0
    %v4011 = vadd.f32 0.0, %v4010
    %v4012 = vpop.f32.mrf.mxu0
    %4013 = vmatprep.mubr.f32.mxu0 0.0
    %4014 = vmatmul.mubr.f32.gmra.mxu0 %v3916
    %v4015 = vpop.f32.mrf.mxu0
    %v4016 = vadd.f32 0.0, %v4015
    %v4017 = vpop.f32.mrf.mxu0
    %4018 = vmatprep.mubr.f32.mxu0 0.0
    %4019 = vmatmul.mubr.f32.gmra.mxu0 %v3919
    %v4020 = vpop.f32.mrf.mxu0
    %v4021 = vadd.f32 0.0, %v4020
    %v4022 = vpop.f32.mrf.mxu0
    %4023 = vmatprep.mubr.f32.mxu0 0.0
    %4024 = vmatmul.mubr.f32.gmra.mxu0 %v3922
    %v4025 = vpop.f32.mrf.mxu0
    %v4026 = vadd.f32 0.0, %v4025
    %v4027 = vpop.f32.mrf.mxu0
    %4028 = vdwg.mxu0
    %v4029 = vmul.f32 %v3991, %v3860
    %v4030 = vmul.f32 %v3996, %v3861
    %v4031 = vmul.f32 %v4001, %v3862
    %v4032 = vmul.f32 %v4006, %v3863
    %v4033 = vmul.f32 %v4011, %v3864
    %v4034 = vmul.f32 %v4016, %v3865
    %v4035 = vmul.f32 %v4021, %v3866
    %v4036 = vmul.f32 %v4026, %v3867
    %4045 = vrot.lane.b32.xlu0 %v4029, 32
    %v4046 = vpop.permute.xlu0 %4045
    %4047 = vrot.lane.b32.xlu0 %v4030, 32
    %v4048 = vpop.permute.xlu0 %4047
    %4049 = vrot.lane.b32.xlu0 %v4031, 32
    %v4050 = vpop.permute.xlu0 %4049
    %4051 = vrot.lane.b32.xlu0 %v4032, 32
    %v4052 = vpop.permute.xlu0 %4051
    %4053 = vrot.lane.b32.xlu0 %v4033, 32
    %v4054 = vpop.permute.xlu0 %4053
    %4055 = vrot.lane.b32.xlu0 %v4034, 32
    %v4056 = vpop.permute.xlu0 %4055
    %4057 = vrot.lane.b32.xlu0 %v4035, 32
    %v4058 = vpop.permute.xlu0 %4057
    %4059 = vrot.lane.b32.xlu0 %v4036, 32
    %v4060 = vpop.permute.xlu0 %4059
    %4069 = vst.msk [vmem:[#allocation2 + $0x40] sm:$0xff] %vm2234, %v4046
    %4070 = vst.msk [vmem:[#allocation2 + $0x48] sm:$0xff] %vm2234, %v4048
    %4071 = vst.msk [vmem:[#allocation2 + $0x50] sm:$0xff] %vm2234, %v4050
    %4072 = vst.msk [vmem:[#allocation2 + $0x58] sm:$0xff] %vm2234, %v4052
    %4073 = vst.msk [vmem:[#allocation2 + $0x60] sm:$0xff] %vm2234, %v4054
    %4074 = vst.msk [vmem:[#allocation2 + $0x68] sm:$0xff] %vm2234, %v4056
    %4075 = vst.msk [vmem:[#allocation2 + $0x70] sm:$0xff] %vm2234, %v4058
    %4076 = vst.msk [vmem:[#allocation2 + $0x78] sm:$0xff] %vm2234, %v4060
    %4077 = vrot.lane.b32.xlu0 %v1165, 64
    %v4078 = vpop.permute.xlu0 %4077
    %4079 = vrot.lane.b32.xlu0 %v1171, 64
    %v4080 = vpop.permute.xlu0 %4079
    %4081 = vrot.lane.b32.xlu0 %v1177, 64
    %v4082 = vpop.permute.xlu0 %4081
    %4083 = vrot.lane.b32.xlu0 %v1183, 64
    %v4084 = vpop.permute.xlu0 %4083
    %4085 = vrot.lane.b32.xlu0 %v1189, 64
    %v4086 = vpop.permute.xlu0 %4085
    %4087 = vrot.lane.b32.xlu0 %v1195, 64
    %v4088 = vpop.permute.xlu0 %4087
    %4089 = vrot.lane.b32.xlu0 %v1201, 64
    %v4090 = vpop.permute.xlu0 %4089
    %4091 = vrot.lane.b32.xlu0 %v1207, 64
    %v4092 = vpop.permute.xlu0 %4091
    %4093 = vrot.lane.b32.xlu0 %v1167, 64
    %v4094 = vpop.permute.xlu0 %4093
    %4095 = vrot.lane.b32.xlu0 %v1173, 64
    %v4096 = vpop.permute.xlu0 %4095
    %4097 = vrot.lane.b32.xlu0 %v1179, 64
    %v4098 = vpop.permute.xlu0 %4097
    %4099 = vrot.lane.b32.xlu0 %v1185, 64
    %v4100 = vpop.permute.xlu0 %4099
    %4101 = vrot.lane.b32.xlu0 %v1191, 64
    %v4102 = vpop.permute.xlu0 %4101
    %4103 = vrot.lane.b32.xlu0 %v1197, 64
    %v4104 = vpop.permute.xlu0 %4103
    %4105 = vrot.lane.b32.xlu0 %v1203, 64
    %v4106 = vpop.permute.xlu0 %4105
    %4107 = vrot.lane.b32.xlu0 %v1209, 64
    %v4108 = vpop.permute.xlu0 %4107
    %v4109 = vsel %vm1356, %v4078, 0
    %v4111 = vsel %vm1356, %v4080, 0
    %v4113 = vsel %vm1356, %v4082, 0
    %v4115 = vsel %vm1356, %v4084, 0
    %v4117 = vsel %vm1356, %v4086, 0
    %v4119 = vsel %vm1356, %v4088, 0
    %v4121 = vsel %vm1356, %v4090, 0
    %v4123 = vsel %vm1356, %v4092, 0
    %v4125 = vsel %vm1356, %v4094, 0
    %v4127 = vsel %vm1356, %v4096, 0
    %v4129 = vsel %vm1356, %v4098, 0
    %v4131 = vsel %vm1356, %v4100, 0
    %v4133 = vsel %vm1356, %v4102, 0
    %v4135 = vsel %vm1356, %v4104, 0
    %v4137 = vsel %vm1356, %v4106, 0
    %v4139 = vsel %vm1356, %v4108, 0
    %4141 = vmatprep.subr.mxu0 0.0
    %4142 = vmatpush1.xpose.msra.mxu0 0.0
    %4143 = vmatprep.subr.mxu0 0.0
    %4144 = vmatpush1.xpose.msra.mxu0 0.0
    %4145 = vmatprep.subr.mxu0 0.0
    %4146 = vmatpush1.xpose.msra.mxu0 0.0
    %4147 = vmatprep.subr.mxu0 0.0
    %4148 = vmatpush1.xpose.msra.mxu0 0.0
    %4149 = vmatprep.subr.mxu0 0.0
    %4150 = vmatpush1.xpose.msra.mxu0 0.0
    %4151 = vmatprep.subr.mxu0 0.0
    %4152 = vmatpush1.xpose.msra.mxu0 0.0
    %4153 = vmatprep.subr.mxu0 0.0
    %4154 = vmatpush1.xpose.msra.mxu0 0.0
    %4155 = vmatprep.subr.mxu0 0.0
    %4156 = vmatpush1.xpose.msra.mxu0 0.0
    %4157 = vmatprep.subr.mxu0 0.0
    %4158 = vmatpush1.xpose.msra.mxu0 %v4139
    %4159 = vmatprep.subr.mxu0 0.0
    %4160 = vmatpush1.xpose.msra.mxu0 %v4137
    %4161 = vmatprep.subr.mxu0 0.0
    %4162 = vmatpush1.xpose.msra.mxu0 %v4135
    %4163 = vmatprep.subr.mxu0 0.0
    %4164 = vmatpush1.xpose.msra.mxu0 %v4133
    %4165 = vmatprep.subr.mxu0 0.0
    %4166 = vmatpush1.xpose.msra.mxu0 %v4131
    %4167 = vmatprep.subr.mxu0 0.0
    %4168 = vmatpush1.xpose.msra.mxu0 %v4129
    %4169 = vmatprep.subr.mxu0 0.0
    %4170 = vmatpush1.xpose.msra.mxu0 %v4127
    %4171 = vmatprep.subr.mxu0 0.0
    %4172 = vmatpush1.xpose.msra.mxu0 %v4125
    %4173 = vmatprep.subr.mxu0 0.0
    %4174 = vmatpush2.xpose.msra.mxu0 0.0
    %4175 = vmatprep.subr.mxu0 0.0
    %4176 = vmatpush2.xpose.msra.mxu0 0.0
    %4177 = vmatprep.subr.mxu0 0.0
    %4178 = vmatpush2.xpose.msra.mxu0 0.0
    %4179 = vmatprep.subr.mxu0 0.0
    %4180 = vmatpush2.xpose.msra.mxu0 0.0
    %4181 = vmatprep.subr.mxu0 0.0
    %4182 = vmatpush2.xpose.msra.mxu0 0.0
    %4183 = vmatprep.subr.mxu0 0.0
    %4184 = vmatpush2.xpose.msra.mxu0 0.0
    %4185 = vmatprep.subr.mxu0 0.0
    %4186 = vmatpush2.xpose.msra.mxu0 0.0
    %4187 = vmatprep.subr.mxu0 0.0
    %4188 = vmatpush2.xpose.msra.mxu0 0.0
    %4189 = vmatprep.subr.mxu0 0.0
    %4190 = vmatpush2.xpose.msra.mxu0 0.0
    %4191 = vmatprep.subr.mxu0 0.0
    %4192 = vmatpush2.xpose.msra.mxu0 0.0
    %4193 = vmatprep.subr.mxu0 0.0
    %4194 = vmatpush2.xpose.msra.mxu0 0.0
    %4195 = vmatprep.subr.mxu0 0.0
    %4196 = vmatpush2.xpose.msra.mxu0 0.0
    %4197 = vmatprep.subr.mxu0 0.0
    %4198 = vmatpush2.xpose.msra.mxu0 0.0
    %4199 = vmatprep.subr.mxu0 0.0
    %4200 = vmatpush2.xpose.msra.mxu0 0.0
    %4201 = vmatprep.subr.mxu0 0.0
    %4202 = vmatpush2.xpose.msra.mxu0 0.0
    %4203 = vmatprep.subr.mxu0 0.0
    %4204 = vmatpush2.xpose.msra.mxu0 0.0
    %4205 = vmatprep.mubr.f32.mxu0 0.0
    %4206 = vmatmul.mubr.f32.gmra.mxu0 %v4109
    %v4207 = vpop.f32.mrf.mxu0
    %v4208 = vadd.f32 0.0, %v4207
    %v4209 = vpop.f32.mrf.mxu0
    %4210 = vmatprep.mubr.f32.mxu0 0.0
    %4211 = vmatmul.mubr.f32.gmra.mxu0 %v4111
    %v4212 = vpop.f32.mrf.mxu0
    %v4213 = vadd.f32 0.0, %v4212
    %v4214 = vpop.f32.mrf.mxu0
    %4215 = vmatprep.mubr.f32.mxu0 0.0
    %4216 = vmatmul.mubr.f32.gmra.mxu0 %v4113
    %v4217 = vpop.f32.mrf.mxu0
    %v4218 = vadd.f32 0.0, %v4217
    %v4219 = vpop.f32.mrf.mxu0
    %4220 = vmatprep.mubr.f32.mxu0 0.0
    %4221 = vmatmul.mubr.f32.gmra.mxu0 %v4115
    %v4222 = vpop.f32.mrf.mxu0
    %v4223 = vadd.f32 0.0, %v4222
    %v4224 = vpop.f32.mrf.mxu0
    %4225 = vmatprep.mubr.f32.mxu0 0.0
    %4226 = vmatmul.mubr.f32.gmra.mxu0 %v4117
    %v4227 = vpop.f32.mrf.mxu0
    %v4228 = vadd.f32 0.0, %v4227
    %v4229 = vpop.f32.mrf.mxu0
    %4230 = vmatprep.mubr.f32.mxu0 0.0
    %4231 = vmatmul.mubr.f32.gmra.mxu0 %v4119
    %v4232 = vpop.f32.mrf.mxu0
    %v4233 = vadd.f32 0.0, %v4232
    %v4234 = vpop.f32.mrf.mxu0
    %4235 = vmatprep.mubr.f32.mxu0 0.0
    %4236 = vmatmul.mubr.f32.gmra.mxu0 %v4121
    %v4237 = vpop.f32.mrf.mxu0
    %v4238 = vadd.f32 0.0, %v4237
    %v4239 = vpop.f32.mrf.mxu0
    %4240 = vmatprep.mubr.f32.mxu0 0.0
    %4241 = vmatmul.mubr.f32.gmra.mxu0 %v4123
    %v4242 = vpop.f32.mrf.mxu0
    %v4243 = vadd.f32 0.0, %v4242
    %v4244 = vpop.f32.mrf.mxu0
    %4245 = vdwg.mxu0
    %v4246 = vsel %vm1510, %v4208, -inf
    %4247 = vmax.xlane.f32.xlu0 %v4246
    %v4248 = vpop.xlane.xlu0 %4247
    %v4249 = vsel %vm1510, %v4213, -inf
    %4250 = vmax.xlane.f32.xlu0 %v4249
    %v4251 = vpop.xlane.xlu0 %4250
    %v4252 = vsel %vm1510, %v4218, -inf
    %4253 = vmax.xlane.f32.xlu0 %v4252
    %v4254 = vpop.xlane.xlu0 %4253
    %v4255 = vsel %vm1510, %v4223, -inf
    %4256 = vmax.xlane.f32.xlu0 %v4255
    %v4257 = vpop.xlane.xlu0 %4256
    %v4258 = vsel %vm1510, %v4228, -inf
    %4259 = vmax.xlane.f32.xlu0 %v4258
    %v4260 = vpop.xlane.xlu0 %4259
    %v4261 = vsel %vm1510, %v4233, -inf
    %4262 = vmax.xlane.f32.xlu0 %v4261
    %v4263 = vpop.xlane.xlu0 %4262
    %v4264 = vsel %vm1510, %v4238, -inf
    %4265 = vmax.xlane.f32.xlu0 %v4264
    %v4266 = vpop.xlane.xlu0 %4265
    %v4267 = vsel %vm1510, %v4243, -inf
    %4268 = vmax.xlane.f32.xlu0 %v4267
    %v4269 = vpop.xlane.xlu0 %4268
    %v4270 = vsub.f32 %v4208, %v4248
    %v4271 = vsub.f32 %v4213, %v4251
    %v4272 = vsub.f32 %v4218, %v4254
    %v4273 = vsub.f32 %v4223, %v4257
    %v4274 = vsub.f32 %v4228, %v4260
    %v4275 = vsub.f32 %v4233, %v4263
    %v4276 = vsub.f32 %v4238, %v4266
    %v4277 = vsub.f32 %v4243, %v4269
    %v4278 = vmul.f32 %v4270, 1.442695
    %v4279 = vpow.pop %v4278
    %v4280 = vmul.f32 %v4271, 1.442695
    %v4281 = vpow.pop %v4280
    %v4282 = vmul.f32 %v4272, 1.442695
    %v4283 = vpow.pop %v4282
    %v4284 = vmul.f32 %v4273, 1.442695
    %v4285 = vpow.pop %v4284
    %v4286 = vmul.f32 %v4274, 1.442695
    %v4287 = vpow.pop %v4286
    %v4288 = vmul.f32 %v4275, 1.442695
    %v4289 = vpow.pop %v4288
    %v4290 = vmul.f32 %v4276, 1.442695
    %v4291 = vpow.pop %v4290
    %v4292 = vmul.f32 %v4277, 1.442695
    %v4293 = vpow.pop %v4292
    %v4294 = vsel %vm1510, %v4279, 0.0
    %4295 = vadd.xlane.f32.xlu0 %v4294
    %v4296 = vpop.xlane.xlu0 %4295
    %v4297 = vsel %vm1510, %v4281, 0.0
    %4298 = vadd.xlane.f32.xlu0 %v4297
    %v4299 = vpop.xlane.xlu0 %4298
    %v4300 = vsel %vm1510, %v4283, 0.0
    %4301 = vadd.xlane.f32.xlu0 %v4300
    %v4302 = vpop.xlane.xlu0 %4301
    %v4303 = vsel %vm1510, %v4285, 0.0
    %4304 = vadd.xlane.f32.xlu0 %v4303
    %v4305 = vpop.xlane.xlu0 %4304
    %v4306 = vsel %vm1510, %v4287, 0.0
    %4307 = vadd.xlane.f32.xlu0 %v4306
    %v4308 = vpop.xlane.xlu0 %4307
    %v4309 = vsel %vm1510, %v4289, 0.0
    %4310 = vadd.xlane.f32.xlu0 %v4309
    %v4311 = vpop.xlane.xlu0 %4310
    %v4312 = vsel %vm1510, %v4291, 0.0
    %4313 = vadd.xlane.f32.xlu0 %v4312
    %v4314 = vpop.xlane.xlu0 %4313
    %v4315 = vsel %vm1510, %v4293, 0.0
    %4316 = vadd.xlane.f32.xlu0 %v4315
    %v4317 = vpop.xlane.xlu0 %4316
    %v4318 = vrcp.pop %v4296
    %v4319 = vrcp.pop %v4299
    %v4320 = vrcp.pop %v4302
    %v4321 = vrcp.pop %v4305
    %v4322 = vrcp.pop %v4308
    %v4323 = vrcp.pop %v4311
    %v4324 = vrcp.pop %v4314
    %v4325 = vrcp.pop %v4317
    %v4326 = vmul.f32 %v4296, %v4318
    %v4327 = vmul.f32 %v4299, %v4319
    %v4328 = vmul.f32 %v4302, %v4320
    %v4329 = vmul.f32 %v4305, %v4321
    %v4330 = vmul.f32 %v4308, %v4322
    %v4331 = vmul.f32 %v4311, %v4323
    %v4332 = vmul.f32 %v4314, %v4324
    %v4333 = vmul.f32 %v4317, %v4325
    %v4334 = vsub.f32 2.0, %v4326
    %v4335 = vsub.f32 2.0, %v4327
    %v4336 = vsub.f32 2.0, %v4328
    %v4337 = vsub.f32 2.0, %v4329
    %v4338 = vsub.f32 2.0, %v4330
    %v4339 = vsub.f32 2.0, %v4331
    %v4340 = vsub.f32 2.0, %v4332
    %v4341 = vsub.f32 2.0, %v4333
    %v4342 = vmul.f32 %v4318, %v4334
    %v4343 = vmul.f32 %v4319, %v4335
    %v4344 = vmul.f32 %v4320, %v4336
    %v4345 = vmul.f32 %v4321, %v4337
    %v4346 = vmul.f32 %v4322, %v4338
    %v4347 = vmul.f32 %v4323, %v4339
    %v4348 = vmul.f32 %v4324, %v4340
    %v4349 = vmul.f32 %v4325, %v4341
    %4350 = vrot.lane.b32.xlu0 %v1318, 64
    %v4351 = vpop.permute.xlu0 %4350
    %4352 = vrot.lane.b32.xlu0 %v1323, 64
    %v4353 = vpop.permute.xlu0 %4352
    %4354 = vrot.lane.b32.xlu0 %v1328, 64
    %v4355 = vpop.permute.xlu0 %4354
    %4356 = vrot.lane.b32.xlu0 %v1333, 64
    %v4357 = vpop.permute.xlu0 %4356
    %4358 = vrot.lane.b32.xlu0 %v1338, 64
    %v4359 = vpop.permute.xlu0 %4358
    %4360 = vrot.lane.b32.xlu0 %v1343, 64
    %v4361 = vpop.permute.xlu0 %4360
    %4362 = vrot.lane.b32.xlu0 %v1348, 64
    %v4363 = vpop.permute.xlu0 %4362
    %4364 = vrot.lane.b32.xlu0 %v1353, 64
    %v4365 = vpop.permute.xlu0 %4364
    %v4375 = vsel %vm1510, %v4279, 0
    %v4378 = vsel %vm1510, %v4281, 0
    %v4381 = vsel %vm1510, %v4283, 0
    %v4384 = vsel %vm1510, %v4285, 0
    %v4387 = vsel %vm1510, %v4287, 0
    %v4390 = vsel %vm1510, %v4289, 0
    %v4393 = vsel %vm1510, %v4291, 0
    %v4396 = vsel %vm1510, %v4293, 0
    %4398 = vmatprep.subr.mxu0 0.0
    %4399 = vmatpush1.msra.mxu0 0.0
    %4400 = vmatprep.subr.mxu0 0.0
    %4401 = vmatpush1.msra.mxu0 0.0
    %4402 = vmatprep.subr.mxu0 0.0
    %4403 = vmatpush1.msra.mxu0 0.0
    %4404 = vmatprep.subr.mxu0 0.0
    %4405 = vmatpush1.msra.mxu0 0.0
    %4406 = vmatprep.subr.mxu0 0.0
    %4407 = vmatpush1.msra.mxu0 0.0
    %4408 = vmatprep.subr.mxu0 0.0
    %4409 = vmatpush1.msra.mxu0 0.0
    %4410 = vmatprep.subr.mxu0 0.0
    %4411 = vmatpush1.msra.mxu0 0.0
    %4412 = vmatprep.subr.mxu0 0.0
    %4413 = vmatpush1.msra.mxu0 0.0
    %4414 = vmatprep.subr.mxu0 0.0
    %4415 = vmatpush1.msra.mxu0 %v4365
    %4416 = vmatprep.subr.mxu0 0.0
    %4417 = vmatpush1.msra.mxu0 %v4363
    %4418 = vmatprep.subr.mxu0 0.0
    %4419 = vmatpush1.msra.mxu0 %v4361
    %4420 = vmatprep.subr.mxu0 0.0
    %4421 = vmatpush1.msra.mxu0 %v4359
    %4422 = vmatprep.subr.mxu0 0.0
    %4423 = vmatpush1.msra.mxu0 %v4357
    %4424 = vmatprep.subr.mxu0 0.0
    %4425 = vmatpush1.msra.mxu0 %v4355
    %4426 = vmatprep.subr.mxu0 0.0
    %4427 = vmatpush1.msra.mxu0 %v4353
    %4428 = vmatprep.subr.mxu0 0.0
    %4429 = vmatpush1.msra.mxu0 %v4351
    %4430 = vmatprep.subr.mxu0 0.0
    %4431 = vmatpush2.msra.mxu0 0.0
    %4432 = vmatprep.subr.mxu0 0.0
    %4433 = vmatpush2.msra.mxu0 0.0
    %4434 = vmatprep.subr.mxu0 0.0
    %4435 = vmatpush2.msra.mxu0 0.0
    %4436 = vmatprep.subr.mxu0 0.0
    %4437 = vmatpush2.msra.mxu0 0.0
    %4438 = vmatprep.subr.mxu0 0.0
    %4439 = vmatpush2.msra.mxu0 0.0
    %4440 = vmatprep.subr.mxu0 0.0
    %4441 = vmatpush2.msra.mxu0 0.0
    %4442 = vmatprep.subr.mxu0 0.0
    %4443 = vmatpush2.msra.mxu0 0.0
    %4444 = vmatprep.subr.mxu0 0.0
    %4445 = vmatpush2.msra.mxu0 0.0
    %4446 = vmatprep.subr.mxu0 0.0
    %4447 = vmatpush2.msra.mxu0 0.0
    %4448 = vmatprep.subr.mxu0 0.0
    %4449 = vmatpush2.msra.mxu0 0.0
    %4450 = vmatprep.subr.mxu0 0.0
    %4451 = vmatpush2.msra.mxu0 0.0
    %4452 = vmatprep.subr.mxu0 0.0
    %4453 = vmatpush2.msra.mxu0 0.0
    %4454 = vmatprep.subr.mxu0 0.0
    %4455 = vmatpush2.msra.mxu0 0.0
    %4456 = vmatprep.subr.mxu0 0.0
    %4457 = vmatpush2.msra.mxu0 0.0
    %4458 = vmatprep.subr.mxu0 0.0
    %4459 = vmatpush2.msra.mxu0 0.0
    %4460 = vmatprep.subr.mxu0 0.0
    %4461 = vmatpush2.msra.mxu0 0.0
    %4462 = vmatprep.mubr.f32.mxu0 0.0
    %4463 = vmatmul.mubr.f32.gmra.mxu0 %v4375
    %v4464 = vpop.f32.mrf.mxu0
    %v4465 = vadd.f32 0.0, %v4464
    %v4466 = vpop.f32.mrf.mxu0
    %4467 = vmatprep.mubr.f32.mxu0 0.0
    %4468 = vmatmul.mubr.f32.gmra.mxu0 %v4378
    %v4469 = vpop.f32.mrf.mxu0
    %v4470 = vadd.f32 0.0, %v4469
    %v4471 = vpop.f32.mrf.mxu0
    %4472 = vmatprep.mubr.f32.mxu0 0.0
    %4473 = vmatmul.mubr.f32.gmra.mxu0 %v4381
    %v4474 = vpop.f32.mrf.mxu0
    %v4475 = vadd.f32 0.0, %v4474
    %v4476 = vpop.f32.mrf.mxu0
    %4477 = vmatprep.mubr.f32.mxu0 0.0
    %4478 = vmatmul.mubr.f32.gmra.mxu0 %v4384
    %v4479 = vpop.f32.mrf.mxu0
    %v4480 = vadd.f32 0.0, %v4479
    %v4481 = vpop.f32.mrf.mxu0
    %4482 = vmatprep.mubr.f32.mxu0 0.0
    %4483 = vmatmul.mubr.f32.gmra.mxu0 %v4387
    %v4484 = vpop.f32.mrf.mxu0
    %v4485 = vadd.f32 0.0, %v4484
    %v4486 = vpop.f32.mrf.mxu0
    %4487 = vmatprep.mubr.f32.mxu0 0.0
    %4488 = vmatmul.mubr.f32.gmra.mxu0 %v4390
    %v4489 = vpop.f32.mrf.mxu0
    %v4490 = vadd.f32 0.0, %v4489
    %v4491 = vpop.f32.mrf.mxu0
    %4492 = vmatprep.mubr.f32.mxu0 0.0
    %4493 = vmatmul.mubr.f32.gmra.mxu0 %v4393
    %v4494 = vpop.f32.mrf.mxu0
    %v4495 = vadd.f32 0.0, %v4494
    %v4496 = vpop.f32.mrf.mxu0
    %4497 = vmatprep.mubr.f32.mxu0 0.0
    %4498 = vmatmul.mubr.f32.gmra.mxu0 %v4396
    %v4499 = vpop.f32.mrf.mxu0
    %v4500 = vadd.f32 0.0, %v4499
    %v4501 = vpop.f32.mrf.mxu0
    %4502 = vdwg.mxu0
    %v4503 = vmul.f32 %v4465, %v4342
    %v4504 = vmul.f32 %v4470, %v4343
    %v4505 = vmul.f32 %v4475, %v4344
    %v4506 = vmul.f32 %v4480, %v4345
    %v4507 = vmul.f32 %v4485, %v4346
    %v4508 = vmul.f32 %v4490, %v4347
    %v4509 = vmul.f32 %v4495, %v4348
    %v4510 = vmul.f32 %v4500, %v4349
    %4519 = vrot.lane.b32.xlu0 %v4503, 64
    %v4520 = vpop.permute.xlu0 %4519
    %4521 = vrot.lane.b32.xlu0 %v4504, 64
    %v4522 = vpop.permute.xlu0 %4521
    %4523 = vrot.lane.b32.xlu0 %v4505, 64
    %v4524 = vpop.permute.xlu0 %4523
    %4525 = vrot.lane.b32.xlu0 %v4506, 64
    %v4526 = vpop.permute.xlu0 %4525
    %4527 = vrot.lane.b32.xlu0 %v4507, 64
    %v4528 = vpop.permute.xlu0 %4527
    %4529 = vrot.lane.b32.xlu0 %v4508, 64
    %v4530 = vpop.permute.xlu0 %4529
    %4531 = vrot.lane.b32.xlu0 %v4509, 64
    %v4532 = vpop.permute.xlu0 %4531
    %4533 = vrot.lane.b32.xlu0 %v4510, 64
    %v4534 = vpop.permute.xlu0 %4533
    %4543 = vst.msk [vmem:[#allocation2 + $0x40] sm:$0xff] %vm2709, %v4520
    %4544 = vst.msk [vmem:[#allocation2 + $0x48] sm:$0xff] %vm2709, %v4522
    %4545 = vst.msk [vmem:[#allocation2 + $0x50] sm:$0xff] %vm2709, %v4524
    %4546 = vst.msk [vmem:[#allocation2 + $0x58] sm:$0xff] %vm2709, %v4526
    %4547 = vst.msk [vmem:[#allocation2 + $0x60] sm:$0xff] %vm2709, %v4528
    %4548 = vst.msk [vmem:[#allocation2 + $0x68] sm:$0xff] %vm2709, %v4530
    %4549 = vst.msk [vmem:[#allocation2 + $0x70] sm:$0xff] %vm2709, %v4532
    %4550 = vst.msk [vmem:[#allocation2 + $0x78] sm:$0xff] %vm2709, %v4534
    %4551 = vrot.lane.b32.xlu0 %v1165, 32
    %v4552 = vpop.permute.xlu0 %4551
    %4553 = vrot.lane.b32.xlu0 %v1171, 32
    %v4554 = vpop.permute.xlu0 %4553
    %4555 = vrot.lane.b32.xlu0 %v1177, 32
    %v4556 = vpop.permute.xlu0 %4555
    %4557 = vrot.lane.b32.xlu0 %v1183, 32
    %v4558 = vpop.permute.xlu0 %4557
    %4559 = vrot.lane.b32.xlu0 %v1189, 32
    %v4560 = vpop.permute.xlu0 %4559
    %4561 = vrot.lane.b32.xlu0 %v1195, 32
    %v4562 = vpop.permute.xlu0 %4561
    %4563 = vrot.lane.b32.xlu0 %v1201, 32
    %v4564 = vpop.permute.xlu0 %4563
    %4565 = vrot.lane.b32.xlu0 %v1207, 32
    %v4566 = vpop.permute.xlu0 %4565
    %4567 = vrot.lane.b32.xlu0 %v1167, 32
    %v4568 = vpop.permute.xlu0 %4567
    %4569 = vrot.lane.b32.xlu0 %v1173, 32
    %v4570 = vpop.permute.xlu0 %4569
    %4571 = vrot.lane.b32.xlu0 %v1179, 32
    %v4572 = vpop.permute.xlu0 %4571
    %4573 = vrot.lane.b32.xlu0 %v1185, 32
    %v4574 = vpop.permute.xlu0 %4573
    %4575 = vrot.lane.b32.xlu0 %v1191, 32
    %v4576 = vpop.permute.xlu0 %4575
    %4577 = vrot.lane.b32.xlu0 %v1197, 32
    %v4578 = vpop.permute.xlu0 %4577
    %4579 = vrot.lane.b32.xlu0 %v1203, 32
    %v4580 = vpop.permute.xlu0 %4579
    %4581 = vrot.lane.b32.xlu0 %v1209, 32
    %v4582 = vpop.permute.xlu0 %4581
    %v4583 = vsel %vm1356, %v4552, 0
    %v4585 = vsel %vm1356, %v4554, 0
    %v4587 = vsel %vm1356, %v4556, 0
    %v4589 = vsel %vm1356, %v4558, 0
    %v4591 = vsel %vm1356, %v4560, 0
    %v4593 = vsel %vm1356, %v4562, 0
    %v4595 = vsel %vm1356, %v4564, 0
    %v4597 = vsel %vm1356, %v4566, 0
    %v4599 = vsel %vm1356, %v4568, 0
    %v4601 = vsel %vm1356, %v4570, 0
    %v4603 = vsel %vm1356, %v4572, 0
    %v4605 = vsel %vm1356, %v4574, 0
    %v4607 = vsel %vm1356, %v4576, 0
    %v4609 = vsel %vm1356, %v4578, 0
    %v4611 = vsel %vm1356, %v4580, 0
    %v4613 = vsel %vm1356, %v4582, 0
    %4615 = vmatprep.subr.mxu0 0.0
    %4616 = vmatpush1.xpose.msra.mxu0 0.0
    %4617 = vmatprep.subr.mxu0 0.0
    %4618 = vmatpush1.xpose.msra.mxu0 0.0
    %4619 = vmatprep.subr.mxu0 0.0
    %4620 = vmatpush1.xpose.msra.mxu0 0.0
    %4621 = vmatprep.subr.mxu0 0.0
    %4622 = vmatpush1.xpose.msra.mxu0 0.0
    %4623 = vmatprep.subr.mxu0 0.0
    %4624 = vmatpush1.xpose.msra.mxu0 0.0
    %4625 = vmatprep.subr.mxu0 0.0
    %4626 = vmatpush1.xpose.msra.mxu0 0.0
    %4627 = vmatprep.subr.mxu0 0.0
    %4628 = vmatpush1.xpose.msra.mxu0 0.0
    %4629 = vmatprep.subr.mxu0 0.0
    %4630 = vmatpush1.xpose.msra.mxu0 0.0
    %4631 = vmatprep.subr.mxu0 0.0
    %4632 = vmatpush1.xpose.msra.mxu0 %v4613
    %4633 = vmatprep.subr.mxu0 0.0
    %4634 = vmatpush1.xpose.msra.mxu0 %v4611
    %4635 = vmatprep.subr.mxu0 0.0
    %4636 = vmatpush1.xpose.msra.mxu0 %v4609
    %4637 = vmatprep.subr.mxu0 0.0
    %4638 = vmatpush1.xpose.msra.mxu0 %v4607
    %4639 = vmatprep.subr.mxu0 0.0
    %4640 = vmatpush1.xpose.msra.mxu0 %v4605
    %4641 = vmatprep.subr.mxu0 0.0
    %4642 = vmatpush1.xpose.msra.mxu0 %v4603
    %4643 = vmatprep.subr.mxu0 0.0
    %4644 = vmatpush1.xpose.msra.mxu0 %v4601
    %4645 = vmatprep.subr.mxu0 0.0
    %4646 = vmatpush1.xpose.msra.mxu0 %v4599
    %4647 = vmatprep.subr.mxu0 0.0
    %4648 = vmatpush2.xpose.msra.mxu0 0.0
    %4649 = vmatprep.subr.mxu0 0.0
    %4650 = vmatpush2.xpose.msra.mxu0 0.0
    %4651 = vmatprep.subr.mxu0 0.0
    %4652 = vmatpush2.xpose.msra.mxu0 0.0
    %4653 = vmatprep.subr.mxu0 0.0
    %4654 = vmatpush2.xpose.msra.mxu0 0.0
    %4655 = vmatprep.subr.mxu0 0.0
    %4656 = vmatpush2.xpose.msra.mxu0 0.0
    %4657 = vmatprep.subr.mxu0 0.0
    %4658 = vmatpush2.xpose.msra.mxu0 0.0
    %4659 = vmatprep.subr.mxu0 0.0
    %4660 = vmatpush2.xpose.msra.mxu0 0.0
    %4661 = vmatprep.subr.mxu0 0.0
    %4662 = vmatpush2.xpose.msra.mxu0 0.0
    %4663 = vmatprep.subr.mxu0 0.0
    %4664 = vmatpush2.xpose.msra.mxu0 0.0
    %4665 = vmatprep.subr.mxu0 0.0
    %4666 = vmatpush2.xpose.msra.mxu0 0.0
    %4667 = vmatprep.subr.mxu0 0.0
    %4668 = vmatpush2.xpose.msra.mxu0 0.0
    %4669 = vmatprep.subr.mxu0 0.0
    %4670 = vmatpush2.xpose.msra.mxu0 0.0
    %4671 = vmatprep.subr.mxu0 0.0
    %4672 = vmatpush2.xpose.msra.mxu0 0.0
    %4673 = vmatprep.subr.mxu0 0.0
    %4674 = vmatpush2.xpose.msra.mxu0 0.0
    %4675 = vmatprep.subr.mxu0 0.0
    %4676 = vmatpush2.xpose.msra.mxu0 0.0
    %4677 = vmatprep.subr.mxu0 0.0
    %4678 = vmatpush2.xpose.msra.mxu0 0.0
    %4679 = vmatprep.mubr.f32.mxu0 0.0
    %4680 = vmatmul.mubr.f32.gmra.mxu0 %v4583
    %v4681 = vpop.f32.mrf.mxu0
    %v4682 = vadd.f32 0.0, %v4681
    %v4683 = vpop.f32.mrf.mxu0
    %4684 = vmatprep.mubr.f32.mxu0 0.0
    %4685 = vmatmul.mubr.f32.gmra.mxu0 %v4585
    %v4686 = vpop.f32.mrf.mxu0
    %v4687 = vadd.f32 0.0, %v4686
    %v4688 = vpop.f32.mrf.mxu0
    %4689 = vmatprep.mubr.f32.mxu0 0.0
    %4690 = vmatmul.mubr.f32.gmra.mxu0 %v4587
    %v4691 = vpop.f32.mrf.mxu0
    %v4692 = vadd.f32 0.0, %v4691
    %v4693 = vpop.f32.mrf.mxu0
    %4694 = vmatprep.mubr.f32.mxu0 0.0
    %4695 = vmatmul.mubr.f32.gmra.mxu0 %v4589
    %v4696 = vpop.f32.mrf.mxu0
    %v4697 = vadd.f32 0.0, %v4696
    %v4698 = vpop.f32.mrf.mxu0
    %4699 = vmatprep.mubr.f32.mxu0 0.0
    %4700 = vmatmul.mubr.f32.gmra.mxu0 %v4591
    %v4701 = vpop.f32.mrf.mxu0
    %v4702 = vadd.f32 0.0, %v4701
    %v4703 = vpop.f32.mrf.mxu0
    %4704 = vmatprep.mubr.f32.mxu0 0.0
    %4705 = vmatmul.mubr.f32.gmra.mxu0 %v4593
    %v4706 = vpop.f32.mrf.mxu0
    %v4707 = vadd.f32 0.0, %v4706
    %v4708 = vpop.f32.mrf.mxu0
    %4709 = vmatprep.mubr.f32.mxu0 0.0
    %4710 = vmatmul.mubr.f32.gmra.mxu0 %v4595
    %v4711 = vpop.f32.mrf.mxu0
    %v4712 = vadd.f32 0.0, %v4711
    %v4713 = vpop.f32.mrf.mxu0
    %4714 = vmatprep.mubr.f32.mxu0 0.0
    %4715 = vmatmul.mubr.f32.gmra.mxu0 %v4597
    %v4716 = vpop.f32.mrf.mxu0
    %v4717 = vadd.f32 0.0, %v4716
    %v4718 = vpop.f32.mrf.mxu0
    %4719 = vdwg.mxu0
    %v4720 = vsel %vm1510, %v4682, -inf
    %4721 = vmax.xlane.f32.xlu0 %v4720
    %v4722 = vpop.xlane.xlu0 %4721
    %v4723 = vsel %vm1510, %v4687, -inf
    %4724 = vmax.xlane.f32.xlu0 %v4723
    %v4725 = vpop.xlane.xlu0 %4724
    %v4726 = vsel %vm1510, %v4692, -inf
    %4727 = vmax.xlane.f32.xlu0 %v4726
    %v4728 = vpop.xlane.xlu0 %4727
    %v4729 = vsel %vm1510, %v4697, -inf
    %4730 = vmax.xlane.f32.xlu0 %v4729
    %v4731 = vpop.xlane.xlu0 %4730
    %v4732 = vsel %vm1510, %v4702, -inf
    %4733 = vmax.xlane.f32.xlu0 %v4732
    %v4734 = vpop.xlane.xlu0 %4733
    %v4735 = vsel %vm1510, %v4707, -inf
    %4736 = vmax.xlane.f32.xlu0 %v4735
    %v4737 = vpop.xlane.xlu0 %4736
    %v4738 = vsel %vm1510, %v4712, -inf
    %4739 = vmax.xlane.f32.xlu0 %v4738
    %v4740 = vpop.xlane.xlu0 %4739
    %v4741 = vsel %vm1510, %v4717, -inf
    %4742 = vmax.xlane.f32.xlu0 %v4741
    %v4743 = vpop.xlane.xlu0 %4742
    %v4744 = vsub.f32 %v4682, %v4722
    %v4745 = vsub.f32 %v4687, %v4725
    %v4746 = vsub.f32 %v4692, %v4728
    %v4747 = vsub.f32 %v4697, %v4731
    %v4748 = vsub.f32 %v4702, %v4734
    %v4749 = vsub.f32 %v4707, %v4737
    %v4750 = vsub.f32 %v4712, %v4740
    %v4751 = vsub.f32 %v4717, %v4743
    %v4752 = vmul.f32 %v4744, 1.442695
    %v4753 = vpow.pop %v4752
    %v4754 = vmul.f32 %v4745, 1.442695
    %v4755 = vpow.pop %v4754
    %v4756 = vmul.f32 %v4746, 1.442695
    %v4757 = vpow.pop %v4756
    %v4758 = vmul.f32 %v4747, 1.442695
    %v4759 = vpow.pop %v4758
    %v4760 = vmul.f32 %v4748, 1.442695
    %v4761 = vpow.pop %v4760
    %v4762 = vmul.f32 %v4749, 1.442695
    %v4763 = vpow.pop %v4762
    %v4764 = vmul.f32 %v4750, 1.442695
    %v4765 = vpow.pop %v4764
    %v4766 = vmul.f32 %v4751, 1.442695
    %v4767 = vpow.pop %v4766
    %v4768 = vsel %vm1510, %v4753, 0.0
    %4769 = vadd.xlane.f32.xlu0 %v4768
    %v4770 = vpop.xlane.xlu0 %4769
    %v4771 = vsel %vm1510, %v4755, 0.0
    %4772 = vadd.xlane.f32.xlu0 %v4771
    %v4773 = vpop.xlane.xlu0 %4772
    %v4774 = vsel %vm1510, %v4757, 0.0
    %4775 = vadd.xlane.f32.xlu0 %v4774
    %v4776 = vpop.xlane.xlu0 %4775
    %v4777 = vsel %vm1510, %v4759, 0.0
    %4778 = vadd.xlane.f32.xlu0 %v4777
    %v4779 = vpop.xlane.xlu0 %4778
    %v4780 = vsel %vm1510, %v4761, 0.0
    %4781 = vadd.xlane.f32.xlu0 %v4780
    %v4782 = vpop.xlane.xlu0 %4781
    %v4783 = vsel %vm1510, %v4763, 0.0
    %4784 = vadd.xlane.f32.xlu0 %v4783
    %v4785 = vpop.xlane.xlu0 %4784
    %v4786 = vsel %vm1510, %v4765, 0.0
    %4787 = vadd.xlane.f32.xlu0 %v4786
    %v4788 = vpop.xlane.xlu0 %4787
    %v4789 = vsel %vm1510, %v4767, 0.0
    %4790 = vadd.xlane.f32.xlu0 %v4789
    %v4791 = vpop.xlane.xlu0 %4790
    %v4792 = vrcp.pop %v4770
    %v4793 = vrcp.pop %v4773
    %v4794 = vrcp.pop %v4776
    %v4795 = vrcp.pop %v4779
    %v4796 = vrcp.pop %v4782
    %v4797 = vrcp.pop %v4785
    %v4798 = vrcp.pop %v4788
    %v4799 = vrcp.pop %v4791
    %v4800 = vmul.f32 %v4770, %v4792
    %v4801 = vmul.f32 %v4773, %v4793
    %v4802 = vmul.f32 %v4776, %v4794
    %v4803 = vmul.f32 %v4779, %v4795
    %v4804 = vmul.f32 %v4782, %v4796
    %v4805 = vmul.f32 %v4785, %v4797
    %v4806 = vmul.f32 %v4788, %v4798
    %v4807 = vmul.f32 %v4791, %v4799
    %v4808 = vsub.f32 2.0, %v4800
    %v4809 = vsub.f32 2.0, %v4801
    %v4810 = vsub.f32 2.0, %v4802
    %v4811 = vsub.f32 2.0, %v4803
    %v4812 = vsub.f32 2.0, %v4804
    %v4813 = vsub.f32 2.0, %v4805
    %v4814 = vsub.f32 2.0, %v4806
    %v4815 = vsub.f32 2.0, %v4807
    %v4816 = vmul.f32 %v4792, %v4808
    %v4817 = vmul.f32 %v4793, %v4809
    %v4818 = vmul.f32 %v4794, %v4810
    %v4819 = vmul.f32 %v4795, %v4811
    %v4820 = vmul.f32 %v4796, %v4812
    %v4821 = vmul.f32 %v4797, %v4813
    %v4822 = vmul.f32 %v4798, %v4814
    %v4823 = vmul.f32 %v4799, %v4815
    %4824 = vrot.lane.b32.xlu0 %v1318, 32
    %v4825 = vpop.permute.xlu0 %4824
    %4826 = vrot.lane.b32.xlu0 %v1323, 32
    %v4827 = vpop.permute.xlu0 %4826
    %4828 = vrot.lane.b32.xlu0 %v1328, 32
    %v4829 = vpop.permute.xlu0 %4828
    %4830 = vrot.lane.b32.xlu0 %v1333, 32
    %v4831 = vpop.permute.xlu0 %4830
    %4832 = vrot.lane.b32.xlu0 %v1338, 32
    %v4833 = vpop.permute.xlu0 %4832
    %4834 = vrot.lane.b32.xlu0 %v1343, 32
    %v4835 = vpop.permute.xlu0 %4834
    %4836 = vrot.lane.b32.xlu0 %v1348, 32
    %v4837 = vpop.permute.xlu0 %4836
    %4838 = vrot.lane.b32.xlu0 %v1353, 32
    %v4839 = vpop.permute.xlu0 %4838
    %v4849 = vsel %vm1510, %v4753, 0
    %v4852 = vsel %vm1510, %v4755, 0
    %v4855 = vsel %vm1510, %v4757, 0
    %v4858 = vsel %vm1510, %v4759, 0
    %v4861 = vsel %vm1510, %v4761, 0
    %v4864 = vsel %vm1510, %v4763, 0
    %v4867 = vsel %vm1510, %v4765, 0
    %v4870 = vsel %vm1510, %v4767, 0
    %4872 = vmatprep.subr.mxu0 0.0
    %4873 = vmatpush1.msra.mxu0 0.0
    %4874 = vmatprep.subr.mxu0 0.0
    %4875 = vmatpush1.msra.mxu0 0.0
    %4876 = vmatprep.subr.mxu0 0.0
    %4877 = vmatpush1.msra.mxu0 0.0
    %4878 = vmatprep.subr.mxu0 0.0
    %4879 = vmatpush1.msra.mxu0 0.0
    %4880 = vmatprep.subr.mxu0 0.0
    %4881 = vmatpush1.msra.mxu0 0.0
    %4882 = vmatprep.subr.mxu0 0.0
    %4883 = vmatpush1.msra.mxu0 0.0
    %4884 = vmatprep.subr.mxu0 0.0
    %4885 = vmatpush1.msra.mxu0 0.0
    %4886 = vmatprep.subr.mxu0 0.0
    %4887 = vmatpush1.msra.mxu0 0.0
    %4888 = vmatprep.subr.mxu0 0.0
    %4889 = vmatpush1.msra.mxu0 %v4839
    %4890 = vmatprep.subr.mxu0 0.0
    %4891 = vmatpush1.msra.mxu0 %v4837
    %4892 = vmatprep.subr.mxu0 0.0
    %4893 = vmatpush1.msra.mxu0 %v4835
    %4894 = vmatprep.subr.mxu0 0.0
    %4895 = vmatpush1.msra.mxu0 %v4833
    %4896 = vmatprep.subr.mxu0 0.0
    %4897 = vmatpush1.msra.mxu0 %v4831
    %4898 = vmatprep.subr.mxu0 0.0
    %4899 = vmatpush1.msra.mxu0 %v4829
    %4900 = vmatprep.subr.mxu0 0.0
    %4901 = vmatpush1.msra.mxu0 %v4827
    %4902 = vmatprep.subr.mxu0 0.0
    %4903 = vmatpush1.msra.mxu0 %v4825
    %4904 = vmatprep.subr.mxu0 0.0
    %4905 = vmatpush2.msra.mxu0 0.0
    %4906 = vmatprep.subr.mxu0 0.0
    %4907 = vmatpush2.msra.mxu0 0.0
    %4908 = vmatprep.subr.mxu0 0.0
    %4909 = vmatpush2.msra.mxu0 0.0
    %4910 = vmatprep.subr.mxu0 0.0
    %4911 = vmatpush2.msra.mxu0 0.0
    %4912 = vmatprep.subr.mxu0 0.0
    %4913 = vmatpush2.msra.mxu0 0.0
    %4914 = vmatprep.subr.mxu0 0.0
    %4915 = vmatpush2.msra.mxu0 0.0
    %4916 = vmatprep.subr.mxu0 0.0
    %4917 = vmatpush2.msra.mxu0 0.0
    %4918 = vmatprep.subr.mxu0 0.0
    %4919 = vmatpush2.msra.mxu0 0.0
    %4920 = vmatprep.subr.mxu0 0.0
    %4921 = vmatpush2.msra.mxu0 0.0
    %4922 = vmatprep.subr.mxu0 0.0
    %4923 = vmatpush2.msra.mxu0 0.0
    %4924 = vmatprep.subr.mxu0 0.0
    %4925 = vmatpush2.msra.mxu0 0.0
    %4926 = vmatprep.subr.mxu0 0.0
    %4927 = vmatpush2.msra.mxu0 0.0
    %4928 = vmatprep.subr.mxu0 0.0
    %4929 = vmatpush2.msra.mxu0 0.0
    %4930 = vmatprep.subr.mxu0 0.0
    %4931 = vmatpush2.msra.mxu0 0.0
    %4932 = vmatprep.subr.mxu0 0.0
    %4933 = vmatpush2.msra.mxu0 0.0
    %4934 = vmatprep.subr.mxu0 0.0
    %4935 = vmatpush2.msra.mxu0 0.0
    %4936 = vmatprep.mubr.f32.mxu0 0.0
    %4937 = vmatmul.mubr.f32.gmra.mxu0 %v4849
    %v4938 = vpop.f32.mrf.mxu0
    %v4939 = vadd.f32 0.0, %v4938
    %v4940 = vpop.f32.mrf.mxu0
    %4941 = vmatprep.mubr.f32.mxu0 0.0
    %4942 = vmatmul.mubr.f32.gmra.mxu0 %v4852
    %v4943 = vpop.f32.mrf.mxu0
    %v4944 = vadd.f32 0.0, %v4943
    %v4945 = vpop.f32.mrf.mxu0
    %4946 = vmatprep.mubr.f32.mxu0 0.0
    %4947 = vmatmul.mubr.f32.gmra.mxu0 %v4855
    %v4948 = vpop.f32.mrf.mxu0
    %v4949 = vadd.f32 0.0, %v4948
    %v4950 = vpop.f32.mrf.mxu0
    %4951 = vmatprep.mubr.f32.mxu0 0.0
    %4952 = vmatmul.mubr.f32.gmra.mxu0 %v4858
    %v4953 = vpop.f32.mrf.mxu0
    %v4954 = vadd.f32 0.0, %v4953
    %v4955 = vpop.f32.mrf.mxu0
    %4956 = vmatprep.mubr.f32.mxu0 0.0
    %4957 = vmatmul.mubr.f32.gmra.mxu0 %v4861
    %v4958 = vpop.f32.mrf.mxu0
    %v4959 = vadd.f32 0.0, %v4958
    %v4960 = vpop.f32.mrf.mxu0
    %4961 = vmatprep.mubr.f32.mxu0 0.0
    %4962 = vmatmul.mubr.f32.gmra.mxu0 %v4864
    %v4963 = vpop.f32.mrf.mxu0
    %v4964 = vadd.f32 0.0, %v4963
    %v4965 = vpop.f32.mrf.mxu0
    %4966 = vmatprep.mubr.f32.mxu0 0.0
    %4967 = vmatmul.mubr.f32.gmra.mxu0 %v4867
    %v4968 = vpop.f32.mrf.mxu0
    %v4969 = vadd.f32 0.0, %v4968
    %v4970 = vpop.f32.mrf.mxu0
    %4971 = vmatprep.mubr.f32.mxu0 0.0
    %4972 = vmatmul.mubr.f32.gmra.mxu0 %v4870
    %v4973 = vpop.f32.mrf.mxu0
    %v4974 = vadd.f32 0.0, %v4973
    %v4975 = vpop.f32.mrf.mxu0
    %4976 = vdwg.mxu0
    %v4977 = vmul.f32 %v4939, %v4816
    %v4978 = vmul.f32 %v4944, %v4817
    %v4979 = vmul.f32 %v4949, %v4818
    %v4980 = vmul.f32 %v4954, %v4819
    %v4981 = vmul.f32 %v4959, %v4820
    %v4982 = vmul.f32 %v4964, %v4821
    %v4983 = vmul.f32 %v4969, %v4822
    %v4984 = vmul.f32 %v4974, %v4823
    %4993 = vrot.lane.b32.xlu0 %v4977, 96
    %v4994 = vpop.permute.xlu0 %4993
    %4995 = vrot.lane.b32.xlu0 %v4978, 96
    %v4996 = vpop.permute.xlu0 %4995
    %4997 = vrot.lane.b32.xlu0 %v4979, 96
    %v4998 = vpop.permute.xlu0 %4997
    %4999 = vrot.lane.b32.xlu0 %v4980, 96
    %v5000 = vpop.permute.xlu0 %4999
    %5001 = vrot.lane.b32.xlu0 %v4981, 96
    %v5002 = vpop.permute.xlu0 %5001
    %5003 = vrot.lane.b32.xlu0 %v4982, 96
    %v5004 = vpop.permute.xlu0 %5003
    %5005 = vrot.lane.b32.xlu0 %v4983, 96
    %v5006 = vpop.permute.xlu0 %5005
    %5007 = vrot.lane.b32.xlu0 %v4984, 96
    %v5008 = vpop.permute.xlu0 %5007
    %5017 = vst.msk [vmem:[#allocation2 + $0x40] sm:$0xff] %vm3184, %v4994
    %5018 = vst.msk [vmem:[#allocation2 + $0x48] sm:$0xff] %vm3184, %v4996
    %5019 = vst.msk [vmem:[#allocation2 + $0x50] sm:$0xff] %vm3184, %v4998
    %5020 = vst.msk [vmem:[#allocation2 + $0x58] sm:$0xff] %vm3184, %v5000
    %5021 = vst.msk [vmem:[#allocation2 + $0x60] sm:$0xff] %vm3184, %v5002
    %5022 = vst.msk [vmem:[#allocation2 + $0x68] sm:$0xff] %vm3184, %v5004
    %5023 = vst.msk [vmem:[#allocation2 + $0x70] sm:$0xff] %vm3184, %v5006
    %5024 = vst.msk [vmem:[#allocation2 + $0x78] sm:$0xff] %vm3184, %v5008
    %v5025 = vld [vmem:[#allocation2] sm:$0xff]
    %v5026 = vld [vmem:[#allocation2 + $0x8] sm:$0xff]
    %v5027 = vld [vmem:[#allocation2 + $0x10] sm:$0xff]
    %v5028 = vld [vmem:[#allocation2 + $0x18] sm:$0xff]
    %v5029 = vld [vmem:[#allocation2 + $0x20] sm:$0xff]
    %v5030 = vld [vmem:[#allocation2 + $0x28] sm:$0xff]
    %v5031 = vld [vmem:[#allocation2 + $0x30] sm:$0xff]
    %v5032 = vld [vmem:[#allocation2 + $0x38] sm:$0xff]
    %v5033 = vld [vmem:[#allocation2 + $0x40] sm:$0xff]
    %v5034 = vld [vmem:[#allocation2 + $0x48] sm:$0xff]
    %v5035 = vld [vmem:[#allocation2 + $0x50] sm:$0xff]
    %v5036 = vld [vmem:[#allocation2 + $0x58] sm:$0xff]
    %v5037 = vld [vmem:[#allocation2 + $0x60] sm:$0xff]
    %v5038 = vld [vmem:[#allocation2 + $0x68] sm:$0xff]
    %v5039 = vld [vmem:[#allocation2 + $0x70] sm:$0xff]
    %v5040 = vld [vmem:[#allocation2 + $0x78] sm:$0xff]
    %v5041 = vld [vmem:[#allocation14] sm:$0xff]
    %v5042 = vld [vmem:[#allocation14 + $0x8] sm:$0xff]
    %v5043 = vld [vmem:[#allocation14 + $0x10] sm:$0xff]
    %v5044 = vld [vmem:[#allocation14 + $0x18] sm:$0xff]
    %v5045 = vld [vmem:[#allocation14 + $0x20] sm:$0xff]
    %v5046 = vld [vmem:[#allocation14 + $0x28] sm:$0xff]
    %v5047 = vld [vmem:[#allocation14 + $0x30] sm:$0xff]
    %v5048 = vld [vmem:[#allocation14 + $0x38] sm:$0xff]
    %v5049 = vld [vmem:[#allocation14 + $0x40] sm:$0xff]
    %v5050 = vld [vmem:[#allocation14 + $0x48] sm:$0xff]
    %v5051 = vld [vmem:[#allocation14 + $0x50] sm:$0xff]
    %v5052 = vld [vmem:[#allocation14 + $0x58] sm:$0xff]
    %v5053 = vld [vmem:[#allocation14 + $0x60] sm:$0xff]
    %v5054 = vld [vmem:[#allocation14 + $0x68] sm:$0xff]
    %v5055 = vld [vmem:[#allocation14 + $0x70] sm:$0xff]
    %v5056 = vld [vmem:[#allocation14 + $0x78] sm:$0xff]
    %5057 = vmatprep.subr.mxu0 0.0
    %5058 = vmatpush1.msra.mxu0 %v5056
    %5059 = vmatprep.subr.mxu0 0.0
    %5060 = vmatpush1.msra.mxu0 %v5055
    %5061 = vmatprep.subr.mxu0 0.0
    %5062 = vmatpush1.msra.mxu0 %v5054
    %5063 = vmatprep.subr.mxu0 0.0
    %5064 = vmatpush1.msra.mxu0 %v5053
    %5065 = vmatprep.subr.mxu0 0.0
    %5066 = vmatpush1.msra.mxu0 %v5052
    %5067 = vmatprep.subr.mxu0 0.0
    %5068 = vmatpush1.msra.mxu0 %v5051
    %5069 = vmatprep.subr.mxu0 0.0
    %5070 = vmatpush1.msra.mxu0 %v5050
    %5071 = vmatprep.subr.mxu0 0.0
    %5072 = vmatpush1.msra.mxu0 %v5049
    %5073 = vmatprep.subr.mxu0 0.0
    %5074 = vmatpush1.msra.mxu0 %v5048
    %5075 = vmatprep.subr.mxu0 0.0
    %5076 = vmatpush1.msra.mxu0 %v5047
    %5077 = vmatprep.subr.mxu0 0.0
    %5078 = vmatpush1.msra.mxu0 %v5046
    %5079 = vmatprep.subr.mxu0 0.0
    %5080 = vmatpush1.msra.mxu0 %v5045
    %5081 = vmatprep.subr.mxu0 0.0
    %5082 = vmatpush1.msra.mxu0 %v5044
    %5083 = vmatprep.subr.mxu0 0.0
    %5084 = vmatpush1.msra.mxu0 %v5043
    %5085 = vmatprep.subr.mxu0 0.0
    %5086 = vmatpush1.msra.mxu0 %v5042
    %5087 = vmatprep.subr.mxu0 0.0
    %5088 = vmatpush1.msra.mxu0 %v5041
    %5089 = vmatprep.subr.mxu0 0.0
    %5090 = vmatpush2.msra.mxu0 0.0
    %5091 = vmatprep.subr.mxu0 0.0
    %5092 = vmatpush2.msra.mxu0 0.0
    %5093 = vmatprep.subr.mxu0 0.0
    %5094 = vmatpush2.msra.mxu0 0.0
    %5095 = vmatprep.subr.mxu0 0.0
    %5096 = vmatpush2.msra.mxu0 0.0
    %5097 = vmatprep.subr.mxu0 0.0
    %5098 = vmatpush2.msra.mxu0 0.0
    %5099 = vmatprep.subr.mxu0 0.0
    %5100 = vmatpush2.msra.mxu0 0.0
    %5101 = vmatprep.subr.mxu0 0.0
    %5102 = vmatpush2.msra.mxu0 0.0
    %5103 = vmatprep.subr.mxu0 0.0
    %5104 = vmatpush2.msra.mxu0 0.0
    %5105 = vmatprep.subr.mxu0 0.0
    %5106 = vmatpush2.msra.mxu0 0.0
    %5107 = vmatprep.subr.mxu0 0.0
    %5108 = vmatpush2.msra.mxu0 0.0
    %5109 = vmatprep.subr.mxu0 0.0
    %5110 = vmatpush2.msra.mxu0 0.0
    %5111 = vmatprep.subr.mxu0 0.0
    %5112 = vmatpush2.msra.mxu0 0.0
    %5113 = vmatprep.subr.mxu0 0.0
    %5114 = vmatpush2.msra.mxu0 0.0
    %5115 = vmatprep.subr.mxu0 0.0
    %5116 = vmatpush2.msra.mxu0 0.0
    %5117 = vmatprep.subr.mxu0 0.0
    %5118 = vmatpush2.msra.mxu0 0.0
    %5119 = vmatprep.subr.mxu0 0.0
    %5120 = vmatpush2.msra.mxu0 0.0
    %5121 = vmatprep.mubr.f32.mxu0 0.0
    %5122 = vmatmul.mubr.f32.gmra.mxu0 %v5025
    %v5123 = vpop.f32.mrf.mxu0
    %v5124 = vadd.f32 0.0, %v5123
    %v5125 = vpop.f32.mrf.mxu0
    %5126 = vmatprep.mubr.f32.mxu0 0.0
    %5127 = vmatmul.mubr.f32.gmra.mxu0 %v5026
    %v5128 = vpop.f32.mrf.mxu0
    %v5129 = vadd.f32 0.0, %v5128
    %v5130 = vpop.f32.mrf.mxu0
    %5131 = vmatprep.mubr.f32.mxu0 0.0
    %5132 = vmatmul.mubr.f32.gmra.mxu0 %v5027
    %v5133 = vpop.f32.mrf.mxu0
    %v5134 = vadd.f32 0.0, %v5133
    %v5135 = vpop.f32.mrf.mxu0
    %5136 = vmatprep.mubr.f32.mxu0 0.0
    %5137 = vmatmul.mubr.f32.gmra.mxu0 %v5028
    %v5138 = vpop.f32.mrf.mxu0
    %v5139 = vadd.f32 0.0, %v5138
    %v5140 = vpop.f32.mrf.mxu0
    %5141 = vmatprep.mubr.f32.mxu0 0.0
    %5142 = vmatmul.mubr.f32.gmra.mxu0 %v5029
    %v5143 = vpop.f32.mrf.mxu0
    %v5144 = vadd.f32 0.0, %v5143
    %v5145 = vpop.f32.mrf.mxu0
    %5146 = vmatprep.mubr.f32.mxu0 0.0
    %5147 = vmatmul.mubr.f32.gmra.mxu0 %v5030
    %v5148 = vpop.f32.mrf.mxu0
    %v5149 = vadd.f32 0.0, %v5148
    %v5150 = vpop.f32.mrf.mxu0
    %5151 = vmatprep.mubr.f32.mxu0 0.0
    %5152 = vmatmul.mubr.f32.gmra.mxu0 %v5031
    %v5153 = vpop.f32.mrf.mxu0
    %v5154 = vadd.f32 0.0, %v5153
    %v5155 = vpop.f32.mrf.mxu0
    %5156 = vmatprep.mubr.f32.mxu0 0.0
    %5157 = vmatmul.mubr.f32.gmra.mxu0 %v5032
    %v5158 = vpop.f32.mrf.mxu0
    %v5159 = vadd.f32 0.0, %v5158
    %v5160 = vpop.f32.mrf.mxu0
    %5161 = vmatprep.mubr.f32.mxu0 0.0
    %5162 = vmatmul.mubr.f32.gmra.mxu0 %v5033
    %v5163 = vpop.f32.mrf.mxu0
    %v5164 = vadd.f32 0.0, %v5163
    %v5165 = vpop.f32.mrf.mxu0
    %5166 = vmatprep.mubr.f32.mxu0 0.0
    %5167 = vmatmul.mubr.f32.gmra.mxu0 %v5034
    %v5168 = vpop.f32.mrf.mxu0
    %v5169 = vadd.f32 0.0, %v5168
    %v5170 = vpop.f32.mrf.mxu0
    %5171 = vmatprep.mubr.f32.mxu0 0.0
    %5172 = vmatmul.mubr.f32.gmra.mxu0 %v5035
    %v5173 = vpop.f32.mrf.mxu0
    %v5174 = vadd.f32 0.0, %v5173
    %v5175 = vpop.f32.mrf.mxu0
    %5176 = vmatprep.mubr.f32.mxu0 0.0
    %5177 = vmatmul.mubr.f32.gmra.mxu0 %v5036
    %v5178 = vpop.f32.mrf.mxu0
    %v5179 = vadd.f32 0.0, %v5178
    %v5180 = vpop.f32.mrf.mxu0
    %5181 = vmatprep.mubr.f32.mxu0 0.0
    %5182 = vmatmul.mubr.f32.gmra.mxu0 %v5037
    %v5183 = vpop.f32.mrf.mxu0
    %v5184 = vadd.f32 0.0, %v5183
    %v5185 = vpop.f32.mrf.mxu0
    %5186 = vmatprep.mubr.f32.mxu0 0.0
    %5187 = vmatmul.mubr.f32.gmra.mxu0 %v5038
    %v5188 = vpop.f32.mrf.mxu0
    %v5189 = vadd.f32 0.0, %v5188
    %v5190 = vpop.f32.mrf.mxu0
    %5191 = vmatprep.mubr.f32.mxu0 0.0
    %5192 = vmatmul.mubr.f32.gmra.mxu0 %v5039
    %v5193 = vpop.f32.mrf.mxu0
    %v5194 = vadd.f32 0.0, %v5193
    %v5195 = vpop.f32.mrf.mxu0
    %5196 = vmatprep.mubr.f32.mxu0 0.0
    %5197 = vmatmul.mubr.f32.gmra.mxu0 %v5040
    %v5198 = vpop.f32.mrf.mxu0
    %v5199 = vadd.f32 0.0, %v5198
    %v5200 = vpop.f32.mrf.mxu0
    %5201 = vdwg.mxu0
    %v5202 = vadd.f32 %v746, %v5124
    %v5203 = vadd.f32 %v747, %v5129
    %v5204 = vadd.f32 %v748, %v5134
    %v5205 = vadd.f32 %v749, %v5139
    %v5206 = vadd.f32 %v750, %v5144
    %v5207 = vadd.f32 %v751, %v5149
    %v5208 = vadd.f32 %v752, %v5154
    %v5209 = vadd.f32 %v753, %v5159
    %v5210 = vadd.f32 %v754, %v5164
    %v5211 = vadd.f32 %v755, %v5169
    %v5212 = vadd.f32 %v756, %v5174
    %v5213 = vadd.f32 %v757, %v5179
    %v5214 = vadd.f32 %v758, %v5184
    %v5215 = vadd.f32 %v759, %v5189
    %v5216 = vadd.f32 %v760, %v5194
    %v5217 = vadd.f32 %v761, %v5199
    %v5218 = vld [vmem:[%s8] sm:$0x1]
    %v5220 = vlaneseq
    %v5221 = vshrl.u32 %v5220, 7
    %v5222 = vsub.s32 0, %v5221
    %v5223 = vrot.slane %v5218, %v5222
    %v5225 = vadd.f32 %v5202, %v5223
    %v5226 = vadd.f32 %v5203, %v5223
    %v5227 = vadd.f32 %v5204, %v5223
    %v5228 = vadd.f32 %v5205, %v5223
    %v5229 = vadd.f32 %v5206, %v5223
    %v5230 = vadd.f32 %v5207, %v5223
    %v5231 = vadd.f32 %v5208, %v5223
    %v5232 = vadd.f32 %v5209, %v5223
    %v5233 = vadd.f32 %v5210, %v5223
    %v5234 = vadd.f32 %v5211, %v5223
    %v5235 = vadd.f32 %v5212, %v5223
    %v5236 = vadd.f32 %v5213, %v5223
    %v5237 = vadd.f32 %v5214, %v5223
    %v5238 = vadd.f32 %v5215, %v5223
    %v5239 = vadd.f32 %v5216, %v5223
    %v5240 = vadd.f32 %v5217, %v5223
    %5241 = vadd.xlane.f32.xlu0 %v5225
    %v5242 = vpop.xlane.xlu0 %5241
    %5243 = vadd.xlane.f32.xlu0 %v5226
    %v5244 = vpop.xlane.xlu0 %5243
    %5245 = vadd.xlane.f32.xlu0 %v5227
    %v5246 = vpop.xlane.xlu0 %5245
    %5247 = vadd.xlane.f32.xlu0 %v5228
    %v5248 = vpop.xlane.xlu0 %5247
    %5249 = vadd.xlane.f32.xlu0 %v5229
    %v5250 = vpop.xlane.xlu0 %5249
    %5251 = vadd.xlane.f32.xlu0 %v5230
    %v5252 = vpop.xlane.xlu0 %5251
    %5253 = vadd.xlane.f32.xlu0 %v5231
    %v5254 = vpop.xlane.xlu0 %5253
    %5255 = vadd.xlane.f32.xlu0 %v5232
    %v5256 = vpop.xlane.xlu0 %5255
    %5257 = vadd.xlane.f32.xlu0 %v5233
    %v5258 = vpop.xlane.xlu0 %5257
    %5259 = vadd.xlane.f32.xlu0 %v5234
    %v5260 = vpop.xlane.xlu0 %5259
    %5261 = vadd.xlane.f32.xlu0 %v5235
    %v5262 = vpop.xlane.xlu0 %5261
    %5263 = vadd.xlane.f32.xlu0 %v5236
    %v5264 = vpop.xlane.xlu0 %5263
    %5265 = vadd.xlane.f32.xlu0 %v5237
    %v5266 = vpop.xlane.xlu0 %5265
    %5267 = vadd.xlane.f32.xlu0 %v5238
    %v5268 = vpop.xlane.xlu0 %5267
    %5269 = vadd.xlane.f32.xlu0 %v5239
    %v5270 = vpop.xlane.xlu0 %5269
    %5271 = vadd.xlane.f32.xlu0 %v5240
    %v5272 = vpop.xlane.xlu0 %5271
    %v5273 = vmul.f32 %v5242, %v794
    %v5274 = vmul.f32 %v5244, %v794
    %v5275 = vmul.f32 %v5246, %v794
    %v5276 = vmul.f32 %v5248, %v794
    %v5277 = vmul.f32 %v5250, %v794
    %v5278 = vmul.f32 %v5252, %v794
    %v5279 = vmul.f32 %v5254, %v794
    %v5280 = vmul.f32 %v5256, %v794
    %v5281 = vmul.f32 %v5258, %v794
    %v5282 = vmul.f32 %v5260, %v794
    %v5283 = vmul.f32 %v5262, %v794
    %v5284 = vmul.f32 %v5264, %v794
    %v5285 = vmul.f32 %v5266, %v794
    %v5286 = vmul.f32 %v5268, %v794
    %v5287 = vmul.f32 %v5270, %v794
    %v5288 = vmul.f32 %v5272, %v794
    %v5289 = vsub.f32 %v5225, %v5273
    %v5290 = vsub.f32 %v5226, %v5274
    %v5291 = vsub.f32 %v5227, %v5275
    %v5292 = vsub.f32 %v5228, %v5276
    %v5293 = vsub.f32 %v5229, %v5277
    %v5294 = vsub.f32 %v5230, %v5278
    %v5295 = vsub.f32 %v5231, %v5279
    %v5296 = vsub.f32 %v5232, %v5280
    %v5297 = vsub.f32 %v5233, %v5281
    %v5298 = vsub.f32 %v5234, %v5282
    %v5299 = vsub.f32 %v5235, %v5283
    %v5300 = vsub.f32 %v5236, %v5284
    %v5301 = vsub.f32 %v5237, %v5285
    %v5302 = vsub.f32 %v5238, %v5286
    %v5303 = vsub.f32 %v5239, %v5287
    %v5304 = vsub.f32 %v5240, %v5288
    %v5305 = vmul.f32 %v5289, %v5289
    %v5306 = vmul.f32 %v5290, %v5290
    %v5307 = vmul.f32 %v5291, %v5291
    %v5308 = vmul.f32 %v5292, %v5292
    %v5309 = vmul.f32 %v5293, %v5293
    %v5310 = vmul.f32 %v5294, %v5294
    %v5311 = vmul.f32 %v5295, %v5295
    %v5312 = vmul.f32 %v5296, %v5296
    %v5313 = vmul.f32 %v5297, %v5297
    %v5314 = vmul.f32 %v5298, %v5298
    %v5315 = vmul.f32 %v5299, %v5299
    %v5316 = vmul.f32 %v5300, %v5300
    %v5317 = vmul.f32 %v5301, %v5301
    %v5318 = vmul.f32 %v5302, %v5302
    %v5319 = vmul.f32 %v5303, %v5303
    %v5320 = vmul.f32 %v5304, %v5304
    %5321 = vadd.xlane.f32.xlu0 %v5305
    %v5322 = vpop.xlane.xlu0 %5321
    %5323 = vadd.xlane.f32.xlu0 %v5306
    %v5324 = vpop.xlane.xlu0 %5323
    %5325 = vadd.xlane.f32.xlu0 %v5307
    %v5326 = vpop.xlane.xlu0 %5325
    %5327 = vadd.xlane.f32.xlu0 %v5308
    %v5328 = vpop.xlane.xlu0 %5327
    %5329 = vadd.xlane.f32.xlu0 %v5309
    %v5330 = vpop.xlane.xlu0 %5329
    %5331 = vadd.xlane.f32.xlu0 %v5310
    %v5332 = vpop.xlane.xlu0 %5331
    %5333 = vadd.xlane.f32.xlu0 %v5311
    %v5334 = vpop.xlane.xlu0 %5333
    %5335 = vadd.xlane.f32.xlu0 %v5312
    %v5336 = vpop.xlane.xlu0 %5335
    %5337 = vadd.xlane.f32.xlu0 %v5313
    %v5338 = vpop.xlane.xlu0 %5337
    %5339 = vadd.xlane.f32.xlu0 %v5314
    %v5340 = vpop.xlane.xlu0 %5339
    %5341 = vadd.xlane.f32.xlu0 %v5315
    %v5342 = vpop.xlane.xlu0 %5341
    %5343 = vadd.xlane.f32.xlu0 %v5316
    %v5344 = vpop.xlane.xlu0 %5343
    %5345 = vadd.xlane.f32.xlu0 %v5317
    %v5346 = vpop.xlane.xlu0 %5345
    %5347 = vadd.xlane.f32.xlu0 %v5318
    %v5348 = vpop.xlane.xlu0 %5347
    %5349 = vadd.xlane.f32.xlu0 %v5319
    %v5350 = vpop.xlane.xlu0 %5349
    %5351 = vadd.xlane.f32.xlu0 %v5320
    %v5352 = vpop.xlane.xlu0 %5351
    %v5353 = vmul.f32 %v5322, %v794
    %v5354 = vmul.f32 %v5324, %v794
    %v5355 = vmul.f32 %v5326, %v794
    %v5356 = vmul.f32 %v5328, %v794
    %v5357 = vmul.f32 %v5330, %v794
    %v5358 = vmul.f32 %v5332, %v794
    %v5359 = vmul.f32 %v5334, %v794
    %v5360 = vmul.f32 %v5336, %v794
    %v5361 = vmul.f32 %v5338, %v794
    %v5362 = vmul.f32 %v5340, %v794
    %v5363 = vmul.f32 %v5342, %v794
    %v5364 = vmul.f32 %v5344, %v794
    %v5365 = vmul.f32 %v5346, %v794
    %v5366 = vmul.f32 %v5348, %v794
    %v5367 = vmul.f32 %v5350, %v794
    %v5368 = vmul.f32 %v5352, %v794
    %v5369 = vadd.f32 %v5353, 1e-05
    %v5370 = vadd.f32 %v5354, 1e-05
    %v5371 = vadd.f32 %v5355, 1e-05
    %v5372 = vadd.f32 %v5356, 1e-05
    %v5373 = vadd.f32 %v5357, 1e-05
    %v5374 = vadd.f32 %v5358, 1e-05
    %v5375 = vadd.f32 %v5359, 1e-05
    %v5376 = vadd.f32 %v5360, 1e-05
    %v5377 = vadd.f32 %v5361, 1e-05
    %v5378 = vadd.f32 %v5362, 1e-05
    %v5379 = vadd.f32 %v5363, 1e-05
    %v5380 = vadd.f32 %v5364, 1e-05
    %v5381 = vadd.f32 %v5365, 1e-05
    %v5382 = vadd.f32 %v5366, 1e-05
    %v5383 = vadd.f32 %v5367, 1e-05
    %v5384 = vadd.f32 %v5368, 1e-05
    %v5385 = vrsqrt.pop %v5369
    %v5386 = vrsqrt.pop %v5370
    %v5387 = vrsqrt.pop %v5371
    %v5388 = vrsqrt.pop %v5372
    %v5389 = vrsqrt.pop %v5373
    %v5390 = vrsqrt.pop %v5374
    %v5391 = vrsqrt.pop %v5375
    %v5392 = vrsqrt.pop %v5376
    %v5393 = vrsqrt.pop %v5377
    %v5394 = vrsqrt.pop %v5378
    %v5395 = vrsqrt.pop %v5379
    %v5396 = vrsqrt.pop %v5380
    %v5397 = vrsqrt.pop %v5381
    %v5398 = vrsqrt.pop %v5382
    %v5399 = vrsqrt.pop %v5383
    %v5400 = vrsqrt.pop %v5384
    %v5401 = vmul.f32 %v5289, %v5385
    %v5402 = vmul.f32 %v5290, %v5386
    %v5403 = vmul.f32 %v5291, %v5387
    %v5404 = vmul.f32 %v5292, %v5388
    %v5405 = vmul.f32 %v5293, %v5389
    %v5406 = vmul.f32 %v5294, %v5390
    %v5407 = vmul.f32 %v5295, %v5391
    %v5408 = vmul.f32 %v5296, %v5392
    %v5409 = vmul.f32 %v5297, %v5393
    %v5410 = vmul.f32 %v5298, %v5394
    %v5411 = vmul.f32 %v5299, %v5395
    %v5412 = vmul.f32 %v5300, %v5396
    %v5413 = vmul.f32 %v5301, %v5397
    %v5414 = vmul.f32 %v5302, %v5398
    %v5415 = vmul.f32 %v5303, %v5399
    %v5416 = vmul.f32 %v5304, %v5400
    %v5417 = vld [vmem:[%s9] sm:$0x1]
    %v5419 = vlaneseq
    %v5420 = vshrl.u32 %v5419, 7
    %v5421 = vsub.s32 0, %v5420
    %v5422 = vrot.slane %v5417, %v5421
    %v5424 = vmul.f32 %v5401, %v5422
    %v5425 = vmul.f32 %v5402, %v5422
    %v5426 = vmul.f32 %v5403, %v5422
    %v5427 = vmul.f32 %v5404, %v5422
    %v5428 = vmul.f32 %v5405, %v5422
    %v5429 = vmul.f32 %v5406, %v5422
    %v5430 = vmul.f32 %v5407, %v5422
    %v5431 = vmul.f32 %v5408, %v5422
    %v5432 = vmul.f32 %v5409, %v5422
    %v5433 = vmul.f32 %v5410, %v5422
    %v5434 = vmul.f32 %v5411, %v5422
    %v5435 = vmul.f32 %v5412, %v5422
    %v5436 = vmul.f32 %v5413, %v5422
    %v5437 = vmul.f32 %v5414, %v5422
    %v5438 = vmul.f32 %v5415, %v5422
    %v5439 = vmul.f32 %v5416, %v5422
    %v5440 = vld [vmem:[%s10] sm:$0x1]
    %v5442 = vlaneseq
    %v5443 = vshrl.u32 %v5442, 7
    %v5444 = vsub.s32 0, %v5443
    %v5445 = vrot.slane %v5440, %v5444
    %v5447 = vadd.f32 %v5424, %v5445
    %v5448 = vadd.f32 %v5425, %v5445
    %v5449 = vadd.f32 %v5426, %v5445
    %v5450 = vadd.f32 %v5427, %v5445
    %v5451 = vadd.f32 %v5428, %v5445
    %v5452 = vadd.f32 %v5429, %v5445
    %v5453 = vadd.f32 %v5430, %v5445
    %v5454 = vadd.f32 %v5431, %v5445
    %v5455 = vadd.f32 %v5432, %v5445
    %v5456 = vadd.f32 %v5433, %v5445
    %v5457 = vadd.f32 %v5434, %v5445
    %v5458 = vadd.f32 %v5435, %v5445
    %v5459 = vadd.f32 %v5436, %v5445
    %v5460 = vadd.f32 %v5437, %v5445
    %v5461 = vadd.f32 %v5438, %v5445
    %v5462 = vadd.f32 %v5439, %v5445
    %v5463 = vld [vmem:[#allocation15] sm:$0xff]
    %v5464 = vld [vmem:[#allocation15 + $0x8] sm:$0xff]
    %v5465 = vld [vmem:[#allocation15 + $0x10] sm:$0xff]
    %v5466 = vld [vmem:[#allocation15 + $0x18] sm:$0xff]
    %v5467 = vld [vmem:[#allocation15 + $0x20] sm:$0xff]
    %v5468 = vld [vmem:[#allocation15 + $0x28] sm:$0xff]
    %v5469 = vld [vmem:[#allocation15 + $0x30] sm:$0xff]
    %v5470 = vld [vmem:[#allocation15 + $0x38] sm:$0xff]
    %v5471 = vld [vmem:[#allocation15 + $0x40] sm:$0xff]
    %v5472 = vld [vmem:[#allocation15 + $0x48] sm:$0xff]
    %v5473 = vld [vmem:[#allocation15 + $0x50] sm:$0xff]
    %v5474 = vld [vmem:[#allocation15 + $0x58] sm:$0xff]
    %v5475 = vld [vmem:[#allocation15 + $0x60] sm:$0xff]
    %v5476 = vld [vmem:[#allocation15 + $0x68] sm:$0xff]
    %v5477 = vld [vmem:[#allocation15 + $0x70] sm:$0xff]
    %v5478 = vld [vmem:[#allocation15 + $0x78] sm:$0xff]
    %v5479 = vld [vmem:[#allocation15 + $0x80] sm:$0xff]
    %v5480 = vld [vmem:[#allocation15 + $0x88] sm:$0xff]
    %v5481 = vld [vmem:[#allocation15 + $0x90] sm:$0xff]
    %v5482 = vld [vmem:[#allocation15 + $0x98] sm:$0xff]
    %v5483 = vld [vmem:[#allocation15 + $0xa0] sm:$0xff]
    %v5484 = vld [vmem:[#allocation15 + $0xa8] sm:$0xff]
    %v5485 = vld [vmem:[#allocation15 + $0xb0] sm:$0xff]
    %v5486 = vld [vmem:[#allocation15 + $0xb8] sm:$0xff]
    %v5487 = vld [vmem:[#allocation15 + $0xc0] sm:$0xff]
    %v5488 = vld [vmem:[#allocation15 + $0xc8] sm:$0xff]
    %v5489 = vld [vmem:[#allocation15 + $0xd0] sm:$0xff]
    %v5490 = vld [vmem:[#allocation15 + $0xd8] sm:$0xff]
    %v5491 = vld [vmem:[#allocation15 + $0xe0] sm:$0xff]
    %v5492 = vld [vmem:[#allocation15 + $0xe8] sm:$0xff]
    %v5493 = vld [vmem:[#allocation15 + $0xf0] sm:$0xff]
    %v5494 = vld [vmem:[#allocation15 + $0xf8] sm:$0xff]
    %v5495 = vld [vmem:[#allocation15 + $0x100] sm:$0xff]
    %v5496 = vld [vmem:[#allocation15 + $0x108] sm:$0xff]
    %v5497 = vld [vmem:[#allocation15 + $0x110] sm:$0xff]
    %v5498 = vld [vmem:[#allocation15 + $0x118] sm:$0xff]
    %v5499 = vld [vmem:[#allocation15 + $0x120] sm:$0xff]
    %v5500 = vld [vmem:[#allocation15 + $0x128] sm:$0xff]
    %v5501 = vld [vmem:[#allocation15 + $0x130] sm:$0xff]
    %v5502 = vld [vmem:[#allocation15 + $0x138] sm:$0xff]
    %v5503 = vld [vmem:[#allocation15 + $0x140] sm:$0xff]
    %v5504 = vld [vmem:[#allocation15 + $0x148] sm:$0xff]
    %v5505 = vld [vmem:[#allocation15 + $0x150] sm:$0xff]
    %v5506 = vld [vmem:[#allocation15 + $0x158] sm:$0xff]
    %v5507 = vld [vmem:[#allocation15 + $0x160] sm:$0xff]
    %v5508 = vld [vmem:[#allocation15 + $0x168] sm:$0xff]
    %v5509 = vld [vmem:[#allocation15 + $0x170] sm:$0xff]
    %v5510 = vld [vmem:[#allocation15 + $0x178] sm:$0xff]
    %v5511 = vld [vmem:[#allocation15 + $0x180] sm:$0xff]
    %v5512 = vld [vmem:[#allocation15 + $0x188] sm:$0xff]
    %v5513 = vld [vmem:[#allocation15 + $0x190] sm:$0xff]
    %v5514 = vld [vmem:[#allocation15 + $0x198] sm:$0xff]
    %v5515 = vld [vmem:[#allocation15 + $0x1a0] sm:$0xff]
    %v5516 = vld [vmem:[#allocation15 + $0x1a8] sm:$0xff]
    %v5517 = vld [vmem:[#allocation15 + $0x1b0] sm:$0xff]
    %v5518 = vld [vmem:[#allocation15 + $0x1b8] sm:$0xff]
    %v5519 = vld [vmem:[#allocation15 + $0x1c0] sm:$0xff]
    %v5520 = vld [vmem:[#allocation15 + $0x1c8] sm:$0xff]
    %v5521 = vld [vmem:[#allocation15 + $0x1d0] sm:$0xff]
    %v5522 = vld [vmem:[#allocation15 + $0x1d8] sm:$0xff]
    %v5523 = vld [vmem:[#allocation15 + $0x1e0] sm:$0xff]
    %v5524 = vld [vmem:[#allocation15 + $0x1e8] sm:$0xff]
    %v5525 = vld [vmem:[#allocation15 + $0x1f0] sm:$0xff]
    %v5526 = vld [vmem:[#allocation15 + $0x1f8] sm:$0xff]
    %v5527 = vld [vmem:[%s12] sm:$0xf]
    %v5529 = vlaneseq
    %v5530 = vshrl.u32 %v5529, 7
    %v5531 = vsub.s32 0, %v5530
    %v5532 = vrot.slane %v5527, %v5531
    %v5533 = vlaneseq
    %v5534 = vshrl.u32 %v5533, 7
    %v5535 = vsub.s32 1, %v5534
    %v5536 = vrot.slane %v5527, %v5535
    %v5537 = vlaneseq
    %v5538 = vshrl.u32 %v5537, 7
    %v5539 = vsub.s32 2, %v5538
    %v5540 = vrot.slane %v5527, %v5539
    %v5541 = vlaneseq
    %v5542 = vshrl.u32 %v5541, 7
    %v5543 = vsub.s32 3, %v5542
    %v5544 = vrot.slane %v5527, %v5543
    %5549 = vmatprep.subr.mxu0 %v5524
    %5550 = vmatpush1.msra.mxu0 %v5523
    %5551 = vmatprep.subr.mxu0 %v5520
    %5552 = vmatpush1.msra.mxu0 %v5519
    %5553 = vmatprep.subr.mxu0 %v5516
    %5554 = vmatpush1.msra.mxu0 %v5515
    %5555 = vmatprep.subr.mxu0 %v5512
    %5556 = vmatpush1.msra.mxu0 %v5511
    %5557 = vmatprep.subr.mxu0 %v5508
    %5558 = vmatpush1.msra.mxu0 %v5507
    %5559 = vmatprep.subr.mxu0 %v5504
    %5560 = vmatpush1.msra.mxu0 %v5503
    %5561 = vmatprep.subr.mxu0 %v5500
    %5562 = vmatpush1.msra.mxu0 %v5499
    %5563 = vmatprep.subr.mxu0 %v5496
    %5564 = vmatpush1.msra.mxu0 %v5495
    %5565 = vmatprep.subr.mxu0 %v5492
    %5566 = vmatpush1.msra.mxu0 %v5491
    %5567 = vmatprep.subr.mxu0 %v5488
    %5568 = vmatpush1.msra.mxu0 %v5487
    %5569 = vmatprep.subr.mxu0 %v5484
    %5570 = vmatpush1.msra.mxu0 %v5483
    %5571 = vmatprep.subr.mxu0 %v5480
    %5572 = vmatpush1.msra.mxu0 %v5479
    %5573 = vmatprep.subr.mxu0 %v5476
    %5574 = vmatpush1.msra.mxu0 %v5475
    %5575 = vmatprep.subr.mxu0 %v5472
    %5576 = vmatpush1.msra.mxu0 %v5471
    %5577 = vmatprep.subr.mxu0 %v5468
    %5578 = vmatpush1.msra.mxu0 %v5467
    %5579 = vmatprep.subr.mxu0 %v5464
    %5580 = vmatpush1.msra.mxu0 %v5463
    %5581 = vmatprep.subr.mxu0 0.0
    %5582 = vmatpush2.msra.mxu0 0.0
    %5583 = vmatprep.subr.mxu0 0.0
    %5584 = vmatpush2.msra.mxu0 0.0
    %5585 = vmatprep.subr.mxu0 0.0
    %5586 = vmatpush2.msra.mxu0 0.0
    %5587 = vmatprep.subr.mxu0 0.0
    %5588 = vmatpush2.msra.mxu0 0.0
    %5589 = vmatprep.subr.mxu0 0.0
    %5590 = vmatpush2.msra.mxu0 0.0
    %5591 = vmatprep.subr.mxu0 0.0
    %5592 = vmatpush2.msra.mxu0 0.0
    %5593 = vmatprep.subr.mxu0 0.0
    %5594 = vmatpush2.msra.mxu0 0.0
    %5595 = vmatprep.subr.mxu0 0.0
    %5596 = vmatpush2.msra.mxu0 0.0
    %5597 = vmatprep.subr.mxu0 0.0
    %5598 = vmatpush2.msra.mxu0 0.0
    %5599 = vmatprep.subr.mxu0 0.0
    %5600 = vmatpush2.msra.mxu0 0.0
    %5601 = vmatprep.subr.mxu0 0.0
    %5602 = vmatpush2.msra.mxu0 0.0
    %5603 = vmatprep.subr.mxu0 0.0
    %5604 = vmatpush2.msra.mxu0 0.0
    %5605 = vmatprep.subr.mxu0 0.0
    %5606 = vmatpush2.msra.mxu0 0.0
    %5607 = vmatprep.subr.mxu0 0.0
    %5608 = vmatpush2.msra.mxu0 0.0
    %5609 = vmatprep.subr.mxu0 0.0
    %5610 = vmatpush2.msra.mxu0 0.0
    %5611 = vmatprep.subr.mxu0 0.0
    %5612 = vmatpush2.msra.mxu0 0.0
    %5613 = vmatprep.mubr.f32.mxu0 0.0
    %5614 = vmatmul.mubr.f32.gmra.mxu0 %v5447
    %v5615 = vpop.f32.mrf.mxu0
    %v5616 = vadd.f32 %v5532, %v5615
    %v5617 = vpop.f32.mrf.mxu0
    %v5618 = vadd.f32 %v5536, %v5617
    %5619 = vmatprep.mubr.f32.mxu0 0.0
    %5620 = vmatmul.mubr.f32.gmra.mxu0 %v5448
    %v5621 = vpop.f32.mrf.mxu0
    %v5622 = vadd.f32 %v5532, %v5621
    %v5623 = vpop.f32.mrf.mxu0
    %v5624 = vadd.f32 %v5536, %v5623
    %5625 = vmatprep.mubr.f32.mxu0 0.0
    %5626 = vmatmul.mubr.f32.gmra.mxu0 %v5449
    %v5627 = vpop.f32.mrf.mxu0
    %v5628 = vadd.f32 %v5532, %v5627
    %v5629 = vpop.f32.mrf.mxu0
    %v5630 = vadd.f32 %v5536, %v5629
    %5631 = vmatprep.mubr.f32.mxu0 0.0
    %5632 = vmatmul.mubr.f32.gmra.mxu0 %v5450
    %v5633 = vpop.f32.mrf.mxu0
    %v5634 = vadd.f32 %v5532, %v5633
    %v5635 = vpop.f32.mrf.mxu0
    %v5636 = vadd.f32 %v5536, %v5635
    %5637 = vmatprep.mubr.f32.mxu0 0.0
    %5638 = vmatmul.mubr.f32.gmra.mxu0 %v5451
    %v5639 = vpop.f32.mrf.mxu0
    %v5640 = vadd.f32 %v5532, %v5639
    %v5641 = vpop.f32.mrf.mxu0
    %v5642 = vadd.f32 %v5536, %v5641
    %5643 = vmatprep.mubr.f32.mxu0 0.0
    %5644 = vmatmul.mubr.f32.gmra.mxu0 %v5452
    %v5645 = vpop.f32.mrf.mxu0
    %v5646 = vadd.f32 %v5532, %v5645
    %v5647 = vpop.f32.mrf.mxu0
    %v5648 = vadd.f32 %v5536, %v5647
    %5649 = vmatprep.mubr.f32.mxu0 0.0
    %5650 = vmatmul.mubr.f32.gmra.mxu0 %v5453
    %v5651 = vpop.f32.mrf.mxu0
    %v5652 = vadd.f32 %v5532, %v5651
    %v5653 = vpop.f32.mrf.mxu0
    %v5654 = vadd.f32 %v5536, %v5653
    %5655 = vmatprep.mubr.f32.mxu0 0.0
    %5656 = vmatmul.mubr.f32.gmra.mxu0 %v5454
    %v5657 = vpop.f32.mrf.mxu0
    %v5658 = vadd.f32 %v5532, %v5657
    %v5659 = vpop.f32.mrf.mxu0
    %v5660 = vadd.f32 %v5536, %v5659
    %5661 = vmatprep.mubr.f32.mxu0 0.0
    %5662 = vmatmul.mubr.f32.gmra.mxu0 %v5455
    %v5663 = vpop.f32.mrf.mxu0
    %v5664 = vadd.f32 %v5532, %v5663
    %v5665 = vpop.f32.mrf.mxu0
    %v5666 = vadd.f32 %v5536, %v5665
    %5667 = vmatprep.mubr.f32.mxu0 0.0
    %5668 = vmatmul.mubr.f32.gmra.mxu0 %v5456
    %v5669 = vpop.f32.mrf.mxu0
    %v5670 = vadd.f32 %v5532, %v5669
    %v5671 = vpop.f32.mrf.mxu0
    %v5672 = vadd.f32 %v5536, %v5671
    %5673 = vmatprep.mubr.f32.mxu0 0.0
    %5674 = vmatmul.mubr.f32.gmra.mxu0 %v5457
    %v5675 = vpop.f32.mrf.mxu0
    %v5676 = vadd.f32 %v5532, %v5675
    %v5677 = vpop.f32.mrf.mxu0
    %v5678 = vadd.f32 %v5536, %v5677
    %5679 = vmatprep.mubr.f32.mxu0 0.0
    %5680 = vmatmul.mubr.f32.gmra.mxu0 %v5458
    %v5681 = vpop.f32.mrf.mxu0
    %v5682 = vadd.f32 %v5532, %v5681
    %v5683 = vpop.f32.mrf.mxu0
    %v5684 = vadd.f32 %v5536, %v5683
    %5685 = vmatprep.mubr.f32.mxu0 0.0
    %5686 = vmatmul.mubr.f32.gmra.mxu0 %v5459
    %v5687 = vpop.f32.mrf.mxu0
    %v5688 = vadd.f32 %v5532, %v5687
    %v5689 = vpop.f32.mrf.mxu0
    %v5690 = vadd.f32 %v5536, %v5689
    %5691 = vmatprep.mubr.f32.mxu0 0.0
    %5692 = vmatmul.mubr.f32.gmra.mxu0 %v5460
    %v5693 = vpop.f32.mrf.mxu0
    %v5694 = vadd.f32 %v5532, %v5693
    %v5695 = vpop.f32.mrf.mxu0
    %v5696 = vadd.f32 %v5536, %v5695
    %5697 = vmatprep.mubr.f32.mxu0 0.0
    %5698 = vmatmul.mubr.f32.gmra.mxu0 %v5461
    %v5699 = vpop.f32.mrf.mxu0
    %v5700 = vadd.f32 %v5532, %v5699
    %v5701 = vpop.f32.mrf.mxu0
    %v5702 = vadd.f32 %v5536, %v5701
    %5703 = vmatprep.mubr.f32.mxu0 0.0
    %5704 = vmatmul.mubr.f32.gmra.mxu0 %v5462
    %v5705 = vpop.f32.mrf.mxu0
    %v5706 = vadd.f32 %v5532, %v5705
    %v5707 = vpop.f32.mrf.mxu0
    %v5708 = vadd.f32 %v5536, %v5707
    %5709 = vdwg.mxu0
    %5710 = vmatprep.subr.mxu0 %v5526
    %5711 = vmatpush1.msra.mxu0 %v5525
    %5712 = vmatprep.subr.mxu0 %v5522
    %5713 = vmatpush1.msra.mxu0 %v5521
    %5714 = vmatprep.subr.mxu0 %v5518
    %5715 = vmatpush1.msra.mxu0 %v5517
    %5716 = vmatprep.subr.mxu0 %v5514
    %5717 = vmatpush1.msra.mxu0 %v5513
    %5718 = vmatprep.subr.mxu0 %v5510
    %5719 = vmatpush1.msra.mxu0 %v5509
    %5720 = vmatprep.subr.mxu0 %v5506
    %5721 = vmatpush1.msra.mxu0 %v5505
    %5722 = vmatprep.subr.mxu0 %v5502
    %5723 = vmatpush1.msra.mxu0 %v5501
    %5724 = vmatprep.subr.mxu0 %v5498
    %5725 = vmatpush1.msra.mxu0 %v5497
    %5726 = vmatprep.subr.mxu0 %v5494
    %5727 = vmatpush1.msra.mxu0 %v5493
    %5728 = vmatprep.subr.mxu0 %v5490
    %5729 = vmatpush1.msra.mxu0 %v5489
    %5730 = vmatprep.subr.mxu0 %v5486
    %5731 = vmatpush1.msra.mxu0 %v5485
    %5732 = vmatprep.subr.mxu0 %v5482
    %5733 = vmatpush1.msra.mxu0 %v5481
    %5734 = vmatprep.subr.mxu0 %v5478
    %5735 = vmatpush1.msra.mxu0 %v5477
    %5736 = vmatprep.subr.mxu0 %v5474
    %5737 = vmatpush1.msra.mxu0 %v5473
    %5738 = vmatprep.subr.mxu0 %v5470
    %5739 = vmatpush1.msra.mxu0 %v5469
    %5740 = vmatprep.subr.mxu0 %v5466
    %5741 = vmatpush1.msra.mxu0 %v5465
    %5742 = vmatprep.subr.mxu0 0.0
    %5743 = vmatpush2.msra.mxu0 0.0
    %5744 = vmatprep.subr.mxu0 0.0
    %5745 = vmatpush2.msra.mxu0 0.0
    %5746 = vmatprep.subr.mxu0 0.0
    %5747 = vmatpush2.msra.mxu0 0.0
    %5748 = vmatprep.subr.mxu0 0.0
    %5749 = vmatpush2.msra.mxu0 0.0
    %5750 = vmatprep.subr.mxu0 0.0
    %5751 = vmatpush2.msra.mxu0 0.0
    %5752 = vmatprep.subr.mxu0 0.0
    %5753 = vmatpush2.msra.mxu0 0.0
    %5754 = vmatprep.subr.mxu0 0.0
    %5755 = vmatpush2.msra.mxu0 0.0
    %5756 = vmatprep.subr.mxu0 0.0
    %5757 = vmatpush2.msra.mxu0 0.0
    %5758 = vmatprep.subr.mxu0 0.0
    %5759 = vmatpush2.msra.mxu0 0.0
    %5760 = vmatprep.subr.mxu0 0.0
    %5761 = vmatpush2.msra.mxu0 0.0
    %5762 = vmatprep.subr.mxu0 0.0
    %5763 = vmatpush2.msra.mxu0 0.0
    %5764 = vmatprep.subr.mxu0 0.0
    %5765 = vmatpush2.msra.mxu0 0.0
    %5766 = vmatprep.subr.mxu0 0.0
    %5767 = vmatpush2.msra.mxu0 0.0
    %5768 = vmatprep.subr.mxu0 0.0
    %5769 = vmatpush2.msra.mxu0 0.0
    %5770 = vmatprep.subr.mxu0 0.0
    %5771 = vmatpush2.msra.mxu0 0.0
    %5772 = vmatprep.subr.mxu0 0.0
    %5773 = vmatpush2.msra.mxu0 0.0
    %5774 = vmatprep.mubr.f32.mxu0 0.0
    %5775 = vmatmul.mubr.f32.gmra.mxu0 %v5447
    %v5776 = vpop.f32.mrf.mxu0
    %v5777 = vadd.f32 %v5540, %v5776
    %v5778 = vpop.f32.mrf.mxu0
    %v5779 = vadd.f32 %v5544, %v5778
    %5780 = vmatprep.mubr.f32.mxu0 0.0
    %5781 = vmatmul.mubr.f32.gmra.mxu0 %v5448
    %v5782 = vpop.f32.mrf.mxu0
    %v5783 = vadd.f32 %v5540, %v5782
    %v5784 = vpop.f32.mrf.mxu0
    %v5785 = vadd.f32 %v5544, %v5784
    %5786 = vmatprep.mubr.f32.mxu0 0.0
    %5787 = vmatmul.mubr.f32.gmra.mxu0 %v5449
    %v5788 = vpop.f32.mrf.mxu0
    %v5789 = vadd.f32 %v5540, %v5788
    %v5790 = vpop.f32.mrf.mxu0
    %v5791 = vadd.f32 %v5544, %v5790
    %5792 = vmatprep.mubr.f32.mxu0 0.0
    %5793 = vmatmul.mubr.f32.gmra.mxu0 %v5450
    %v5794 = vpop.f32.mrf.mxu0
    %v5795 = vadd.f32 %v5540, %v5794
    %v5796 = vpop.f32.mrf.mxu0
    %v5797 = vadd.f32 %v5544, %v5796
    %5798 = vmatprep.mubr.f32.mxu0 0.0
    %5799 = vmatmul.mubr.f32.gmra.mxu0 %v5451
    %v5800 = vpop.f32.mrf.mxu0
    %v5801 = vadd.f32 %v5540, %v5800
    %v5802 = vpop.f32.mrf.mxu0
    %v5803 = vadd.f32 %v5544, %v5802
    %5804 = vmatprep.mubr.f32.mxu0 0.0
    %5805 = vmatmul.mubr.f32.gmra.mxu0 %v5452
    %v5806 = vpop.f32.mrf.mxu0
    %v5807 = vadd.f32 %v5540, %v5806
    %v5808 = vpop.f32.mrf.mxu0
    %v5809 = vadd.f32 %v5544, %v5808
    %5810 = vmatprep.mubr.f32.mxu0 0.0
    %5811 = vmatmul.mubr.f32.gmra.mxu0 %v5453
    %v5812 = vpop.f32.mrf.mxu0
    %v5813 = vadd.f32 %v5540, %v5812
    %v5814 = vpop.f32.mrf.mxu0
    %v5815 = vadd.f32 %v5544, %v5814
    %5816 = vmatprep.mubr.f32.mxu0 0.0
    %5817 = vmatmul.mubr.f32.gmra.mxu0 %v5454
    %v5818 = vpop.f32.mrf.mxu0
    %v5819 = vadd.f32 %v5540, %v5818
    %v5820 = vpop.f32.mrf.mxu0
    %v5821 = vadd.f32 %v5544, %v5820
    %5822 = vmatprep.mubr.f32.mxu0 0.0
    %5823 = vmatmul.mubr.f32.gmra.mxu0 %v5455
    %v5824 = vpop.f32.mrf.mxu0
    %v5825 = vadd.f32 %v5540, %v5824
    %v5826 = vpop.f32.mrf.mxu0
    %v5827 = vadd.f32 %v5544, %v5826
    %5828 = vmatprep.mubr.f32.mxu0 0.0
    %5829 = vmatmul.mubr.f32.gmra.mxu0 %v5456
    %v5830 = vpop.f32.mrf.mxu0
    %v5831 = vadd.f32 %v5540, %v5830
    %v5832 = vpop.f32.mrf.mxu0
    %v5833 = vadd.f32 %v5544, %v5832
    %5834 = vmatprep.mubr.f32.mxu0 0.0
    %5835 = vmatmul.mubr.f32.gmra.mxu0 %v5457
    %v5836 = vpop.f32.mrf.mxu0
    %v5837 = vadd.f32 %v5540, %v5836
    %v5838 = vpop.f32.mrf.mxu0
    %v5839 = vadd.f32 %v5544, %v5838
    %5840 = vmatprep.mubr.f32.mxu0 0.0
    %5841 = vmatmul.mubr.f32.gmra.mxu0 %v5458
    %v5842 = vpop.f32.mrf.mxu0
    %v5843 = vadd.f32 %v5540, %v5842
    %v5844 = vpop.f32.mrf.mxu0
    %v5845 = vadd.f32 %v5544, %v5844
    %5846 = vmatprep.mubr.f32.mxu0 0.0
    %5847 = vmatmul.mubr.f32.gmra.mxu0 %v5459
    %v5848 = vpop.f32.mrf.mxu0
    %v5849 = vadd.f32 %v5540, %v5848
    %v5850 = vpop.f32.mrf.mxu0
    %v5851 = vadd.f32 %v5544, %v5850
    %5852 = vmatprep.mubr.f32.mxu0 0.0
    %5853 = vmatmul.mubr.f32.gmra.mxu0 %v5460
    %v5854 = vpop.f32.mrf.mxu0
    %v5855 = vadd.f32 %v5540, %v5854
    %v5856 = vpop.f32.mrf.mxu0
    %v5857 = vadd.f32 %v5544, %v5856
    %5858 = vmatprep.mubr.f32.mxu0 0.0
    %5859 = vmatmul.mubr.f32.gmra.mxu0 %v5461
    %v5860 = vpop.f32.mrf.mxu0
    %v5861 = vadd.f32 %v5540, %v5860
    %v5862 = vpop.f32.mrf.mxu0
    %v5863 = vadd.f32 %v5544, %v5862
    %5864 = vmatprep.mubr.f32.mxu0 0.0
    %5865 = vmatmul.mubr.f32.gmra.mxu0 %v5462
    %v5866 = vpop.f32.mrf.mxu0
    %v5867 = vadd.f32 %v5540, %v5866
    %v5868 = vpop.f32.mrf.mxu0
    %v5869 = vadd.f32 %v5544, %v5868
    %5870 = vdwg.mxu0
    %v5871 = vmul.f32 %v5616, %v5616
    %v5872 = vmul.f32 %v5618, %v5618
    %v5873 = vmul.f32 %v5777, %v5777
    %v5874 = vmul.f32 %v5779, %v5779
    %v5875 = vmul.f32 %v5622, %v5622
    %v5876 = vmul.f32 %v5624, %v5624
    %v5877 = vmul.f32 %v5783, %v5783
    %v5878 = vmul.f32 %v5785, %v5785
    %v5879 = vmul.f32 %v5628, %v5628
    %v5880 = vmul.f32 %v5630, %v5630
    %v5881 = vmul.f32 %v5789, %v5789
    %v5882 = vmul.f32 %v5791, %v5791
    %v5883 = vmul.f32 %v5634, %v5634
    %v5884 = vmul.f32 %v5636, %v5636
    %v5885 = vmul.f32 %v5795, %v5795
    %v5886 = vmul.f32 %v5797, %v5797
    %v5887 = vmul.f32 %v5640, %v5640
    %v5888 = vmul.f32 %v5642, %v5642
    %v5889 = vmul.f32 %v5801, %v5801
    %v5890 = vmul.f32 %v5803, %v5803
    %v5891 = vmul.f32 %v5646, %v5646
    %v5892 = vmul.f32 %v5648, %v5648
    %v5893 = vmul.f32 %v5807, %v5807
    %v5894 = vmul.f32 %v5809, %v5809
    %v5895 = vmul.f32 %v5652, %v5652
    %v5896 = vmul.f32 %v5654, %v5654
    %v5897 = vmul.f32 %v5813, %v5813
    %v5898 = vmul.f32 %v5815, %v5815
    %v5899 = vmul.f32 %v5658, %v5658
    %v5900 = vmul.f32 %v5660, %v5660
    %v5901 = vmul.f32 %v5819, %v5819
    %v5902 = vmul.f32 %v5821, %v5821
    %v5903 = vmul.f32 %v5664, %v5664
    %v5904 = vmul.f32 %v5666, %v5666
    %v5905 = vmul.f32 %v5825, %v5825
    %v5906 = vmul.f32 %v5827, %v5827
    %v5907 = vmul.f32 %v5670, %v5670
    %v5908 = vmul.f32 %v5672, %v5672
    %v5909 = vmul.f32 %v5831, %v5831
    %v5910 = vmul.f32 %v5833, %v5833
    %v5911 = vmul.f32 %v5676, %v5676
    %v5912 = vmul.f32 %v5678, %v5678
    %v5913 = vmul.f32 %v5837, %v5837
    %v5914 = vmul.f32 %v5839, %v5839
    %v5915 = vmul.f32 %v5682, %v5682
    %v5916 = vmul.f32 %v5684, %v5684
    %v5917 = vmul.f32 %v5843, %v5843
    %v5918 = vmul.f32 %v5845, %v5845
    %v5919 = vmul.f32 %v5688, %v5688
    %v5920 = vmul.f32 %v5690, %v5690
    %v5921 = vmul.f32 %v5849, %v5849
    %v5922 = vmul.f32 %v5851, %v5851
    %v5923 = vmul.f32 %v5694, %v5694
    %v5924 = vmul.f32 %v5696, %v5696
    %v5925 = vmul.f32 %v5855, %v5855
    %v5926 = vmul.f32 %v5857, %v5857
    %v5927 = vmul.f32 %v5700, %v5700
    %v5928 = vmul.f32 %v5702, %v5702
    %v5929 = vmul.f32 %v5861, %v5861
    %v5930 = vmul.f32 %v5863, %v5863
    %v5931 = vmul.f32 %v5706, %v5706
    %v5932 = vmul.f32 %v5708, %v5708
    %v5933 = vmul.f32 %v5867, %v5867
    %v5934 = vmul.f32 %v5869, %v5869
    %v5935 = vmul.f32 %v5616, %v5871
    %v5936 = vmul.f32 %v5618, %v5872
    %v5937 = vmul.f32 %v5777, %v5873
    %v5938 = vmul.f32 %v5779, %v5874
    %v5939 = vmul.f32 %v5622, %v5875
    %v5940 = vmul.f32 %v5624, %v5876
    %v5941 = vmul.f32 %v5783, %v5877
    %v5942 = vmul.f32 %v5785, %v5878
    %v5943 = vmul.f32 %v5628, %v5879
    %v5944 = vmul.f32 %v5630, %v5880
    %v5945 = vmul.f32 %v5789, %v5881
    %v5946 = vmul.f32 %v5791, %v5882
    %v5947 = vmul.f32 %v5634, %v5883
    %v5948 = vmul.f32 %v5636, %v5884
    %v5949 = vmul.f32 %v5795, %v5885
    %v5950 = vmul.f32 %v5797, %v5886
    %v5951 = vmul.f32 %v5640, %v5887
    %v5952 = vmul.f32 %v5642, %v5888
    %v5953 = vmul.f32 %v5801, %v5889
    %v5954 = vmul.f32 %v5803, %v5890
    %v5955 = vmul.f32 %v5646, %v5891
    %v5956 = vmul.f32 %v5648, %v5892
    %v5957 = vmul.f32 %v5807, %v5893
    %v5958 = vmul.f32 %v5809, %v5894
    %v5959 = vmul.f32 %v5652, %v5895
    %v5960 = vmul.f32 %v5654, %v5896
    %v5961 = vmul.f32 %v5813, %v5897
    %v5962 = vmul.f32 %v5815, %v5898
    %v5963 = vmul.f32 %v5658, %v5899
    %v5964 = vmul.f32 %v5660, %v5900
    %v5965 = vmul.f32 %v5819, %v5901
    %v5966 = vmul.f32 %v5821, %v5902
    %v5967 = vmul.f32 %v5664, %v5903
    %v5968 = vmul.f32 %v5666, %v5904
    %v5969 = vmul.f32 %v5825, %v5905
    %v5970 = vmul.f32 %v5827, %v5906
    %v5971 = vmul.f32 %v5670, %v5907
    %v5972 = vmul.f32 %v5672, %v5908
    %v5973 = vmul.f32 %v5831, %v5909
    %v5974 = vmul.f32 %v5833, %v5910
    %v5975 = vmul.f32 %v5676, %v5911
    %v5976 = vmul.f32 %v5678, %v5912
    %v5977 = vmul.f32 %v5837, %v5913
    %v5978 = vmul.f32 %v5839, %v5914
    %v5979 = vmul.f32 %v5682, %v5915
    %v5980 = vmul.f32 %v5684, %v5916
    %v5981 = vmul.f32 %v5843, %v5917
    %v5982 = vmul.f32 %v5845, %v5918
    %v5983 = vmul.f32 %v5688, %v5919
    %v5984 = vmul.f32 %v5690, %v5920
    %v5985 = vmul.f32 %v5849, %v5921
    %v5986 = vmul.f32 %v5851, %v5922
    %v5987 = vmul.f32 %v5694, %v5923
    %v5988 = vmul.f32 %v5696, %v5924
    %v5989 = vmul.f32 %v5855, %v5925
    %v5990 = vmul.f32 %v5857, %v5926
    %v5991 = vmul.f32 %v5700, %v5927
    %v5992 = vmul.f32 %v5702, %v5928
    %v5993 = vmul.f32 %v5861, %v5929
    %v5994 = vmul.f32 %v5863, %v5930
    %v5995 = vmul.f32 %v5706, %v5931
    %v5996 = vmul.f32 %v5708, %v5932
    %v5997 = vmul.f32 %v5867, %v5933
    %v5998 = vmul.f32 %v5869, %v5934
    %v5999 = vmul.f32 %v5935, 0.044715
    %v6000 = vmul.f32 %v5936, 0.044715
    %v6001 = vmul.f32 %v5937, 0.044715
    %v6002 = vmul.f32 %v5938, 0.044715
    %v6003 = vmul.f32 %v5939, 0.044715
    %v6004 = vmul.f32 %v5940, 0.044715
    %v6005 = vmul.f32 %v5941, 0.044715
    %v6006 = vmul.f32 %v5942, 0.044715
    %v6007 = vmul.f32 %v5943, 0.044715
    %v6008 = vmul.f32 %v5944, 0.044715
    %v6009 = vmul.f32 %v5945, 0.044715
    %v6010 = vmul.f32 %v5946, 0.044715
    %v6011 = vmul.f32 %v5947, 0.044715
    %v6012 = vmul.f32 %v5948, 0.044715
    %v6013 = vmul.f32 %v5949, 0.044715
    %v6014 = vmul.f32 %v5950, 0.044715
    %v6015 = vmul.f32 %v5951, 0.044715
    %v6016 = vmul.f32 %v5952, 0.044715
    %v6017 = vmul.f32 %v5953, 0.044715
    %v6018 = vmul.f32 %v5954, 0.044715
    %v6019 = vmul.f32 %v5955, 0.044715
    %v6020 = vmul.f32 %v5956, 0.044715
    %v6021 = vmul.f32 %v5957, 0.044715
    %v6022 = vmul.f32 %v5958, 0.044715
    %v6023 = vmul.f32 %v5959, 0.044715
    %v6024 = vmul.f32 %v5960, 0.044715
    %v6025 = vmul.f32 %v5961, 0.044715
    %v6026 = vmul.f32 %v5962, 0.044715
    %v6027 = vmul.f32 %v5963, 0.044715
    %v6028 = vmul.f32 %v5964, 0.044715
    %v6029 = vmul.f32 %v5965, 0.044715
    %v6030 = vmul.f32 %v5966, 0.044715
    %v6031 = vmul.f32 %v5967, 0.044715
    %v6032 = vmul.f32 %v5968, 0.044715
    %v6033 = vmul.f32 %v5969, 0.044715
    %v6034 = vmul.f32 %v5970, 0.044715
    %v6035 = vmul.f32 %v5971, 0.044715
    %v6036 = vmul.f32 %v5972, 0.044715
    %v6037 = vmul.f32 %v5973, 0.044715
    %v6038 = vmul.f32 %v5974, 0.044715
    %v6039 = vmul.f32 %v5975, 0.044715
    %v6040 = vmul.f32 %v5976, 0.044715
    %v6041 = vmul.f32 %v5977, 0.044715
    %v6042 = vmul.f32 %v5978, 0.044715
    %v6043 = vmul.f32 %v5979, 0.044715
    %v6044 = vmul.f32 %v5980, 0.044715
    %v6045 = vmul.f32 %v5981, 0.044715
    %v6046 = vmul.f32 %v5982, 0.044715
    %v6047 = vmul.f32 %v5983, 0.044715
    %v6048 = vmul.f32 %v5984, 0.044715
    %v6049 = vmul.f32 %v5985, 0.044715
    %v6050 = vmul.f32 %v5986, 0.044715
    %v6051 = vmul.f32 %v5987, 0.044715
    %v6052 = vmul.f32 %v5988, 0.044715
    %v6053 = vmul.f32 %v5989, 0.044715
    %v6054 = vmul.f32 %v5990, 0.044715
    %v6055 = vmul.f32 %v5991, 0.044715
    %v6056 = vmul.f32 %v5992, 0.044715
    %v6057 = vmul.f32 %v5993, 0.044715
    %v6058 = vmul.f32 %v5994, 0.044715
    %v6059 = vmul.f32 %v5995, 0.044715
    %v6060 = vmul.f32 %v5996, 0.044715
    %v6061 = vmul.f32 %v5997, 0.044715
    %v6062 = vmul.f32 %v5998, 0.044715
    %v6063 = vadd.f32 %v5616, %v5999
    %v6064 = vadd.f32 %v5618, %v6000
    %v6065 = vadd.f32 %v5777, %v6001
    %v6066 = vadd.f32 %v5779, %v6002
    %v6067 = vadd.f32 %v5622, %v6003
    %v6068 = vadd.f32 %v5624, %v6004
    %v6069 = vadd.f32 %v5783, %v6005
    %v6070 = vadd.f32 %v5785, %v6006
    %v6071 = vadd.f32 %v5628, %v6007
    %v6072 = vadd.f32 %v5630, %v6008
    %v6073 = vadd.f32 %v5789, %v6009
    %v6074 = vadd.f32 %v5791, %v6010
    %v6075 = vadd.f32 %v5634, %v6011
    %v6076 = vadd.f32 %v5636, %v6012
    %v6077 = vadd.f32 %v5795, %v6013
    %v6078 = vadd.f32 %v5797, %v6014
    %v6079 = vadd.f32 %v5640, %v6015
    %v6080 = vadd.f32 %v5642, %v6016
    %v6081 = vadd.f32 %v5801, %v6017
    %v6082 = vadd.f32 %v5803, %v6018
    %v6083 = vadd.f32 %v5646, %v6019
    %v6084 = vadd.f32 %v5648, %v6020
    %v6085 = vadd.f32 %v5807, %v6021
    %v6086 = vadd.f32 %v5809, %v6022
    %v6087 = vadd.f32 %v5652, %v6023
    %v6088 = vadd.f32 %v5654, %v6024
    %v6089 = vadd.f32 %v5813, %v6025
    %v6090 = vadd.f32 %v5815, %v6026
    %v6091 = vadd.f32 %v5658, %v6027
    %v6092 = vadd.f32 %v5660, %v6028
    %v6093 = vadd.f32 %v5819, %v6029
    %v6094 = vadd.f32 %v5821, %v6030
    %v6095 = vadd.f32 %v5664, %v6031
    %v6096 = vadd.f32 %v5666, %v6032
    %v6097 = vadd.f32 %v5825, %v6033
    %v6098 = vadd.f32 %v5827, %v6034
    %v6099 = vadd.f32 %v5670, %v6035
    %v6100 = vadd.f32 %v5672, %v6036
    %v6101 = vadd.f32 %v5831, %v6037
    %v6102 = vadd.f32 %v5833, %v6038
    %v6103 = vadd.f32 %v5676, %v6039
    %v6104 = vadd.f32 %v5678, %v6040
    %v6105 = vadd.f32 %v5837, %v6041
    %v6106 = vadd.f32 %v5839, %v6042
    %v6107 = vadd.f32 %v5682, %v6043
    %v6108 = vadd.f32 %v5684, %v6044
    %v6109 = vadd.f32 %v5843, %v6045
    %v6110 = vadd.f32 %v5845, %v6046
    %v6111 = vadd.f32 %v5688, %v6047
    %v6112 = vadd.f32 %v5690, %v6048
    %v6113 = vadd.f32 %v5849, %v6049
    %v6114 = vadd.f32 %v5851, %v6050
    %v6115 = vadd.f32 %v5694, %v6051
    %v6116 = vadd.f32 %v5696, %v6052
    %v6117 = vadd.f32 %v5855, %v6053
    %v6118 = vadd.f32 %v5857, %v6054
    %v6119 = vadd.f32 %v5700, %v6055
    %v6120 = vadd.f32 %v5702, %v6056
    %v6121 = vadd.f32 %v5861, %v6057
    %v6122 = vadd.f32 %v5863, %v6058
    %v6123 = vadd.f32 %v5706, %v6059
    %v6124 = vadd.f32 %v5708, %v6060
    %v6125 = vadd.f32 %v5867, %v6061
    %v6126 = vadd.f32 %v5869, %v6062
    %v6127 = vmul.f32 %v6063, 0.7978846
    %v6128 = vmul.f32 %v6064, 0.7978846
    %v6129 = vmul.f32 %v6065, 0.7978846
    %v6130 = vmul.f32 %v6066, 0.7978846
    %v6131 = vmul.f32 %v6067, 0.7978846
    %v6132 = vmul.f32 %v6068, 0.7978846
    %v6133 = vmul.f32 %v6069, 0.7978846
    %v6134 = vmul.f32 %v6070, 0.7978846
    %v6135 = vmul.f32 %v6071, 0.7978846
    %v6136 = vmul.f32 %v6072, 0.7978846
    %v6137 = vmul.f32 %v6073, 0.7978846
    %v6138 = vmul.f32 %v6074, 0.7978846
    %v6139 = vmul.f32 %v6075, 0.7978846
    %v6140 = vmul.f32 %v6076, 0.7978846
    %v6141 = vmul.f32 %v6077, 0.7978846
    %v6142 = vmul.f32 %v6078, 0.7978846
    %v6143 = vmul.f32 %v6079, 0.7978846
    %v6144 = vmul.f32 %v6080, 0.7978846
    %v6145 = vmul.f32 %v6081, 0.7978846
    %v6146 = vmul.f32 %v6082, 0.7978846
    %v6147 = vmul.f32 %v6083, 0.7978846
    %v6148 = vmul.f32 %v6084, 0.7978846
    %v6149 = vmul.f32 %v6085, 0.7978846
    %v6150 = vmul.f32 %v6086, 0.7978846
    %v6151 = vmul.f32 %v6087, 0.7978846
    %v6152 = vmul.f32 %v6088, 0.7978846
    %v6153 = vmul.f32 %v6089, 0.7978846
    %v6154 = vmul.f32 %v6090, 0.7978846
    %v6155 = vmul.f32 %v6091, 0.7978846
    %v6156 = vmul.f32 %v6092, 0.7978846
    %v6157 = vmul.f32 %v6093, 0.7978846
    %v6158 = vmul.f32 %v6094, 0.7978846
    %v6159 = vmul.f32 %v6095, 0.7978846
    %v6160 = vmul.f32 %v6096, 0.7978846
    %v6161 = vmul.f32 %v6097, 0.7978846
    %v6162 = vmul.f32 %v6098, 0.7978846
    %v6163 = vmul.f32 %v6099, 0.7978846
    %v6164 = vmul.f32 %v6100, 0.7978846
    %v6165 = vmul.f32 %v6101, 0.7978846
    %v6166 = vmul.f32 %v6102, 0.7978846
    %v6167 = vmul.f32 %v6103, 0.7978846
    %v6168 = vmul.f32 %v6104, 0.7978846
    %v6169 = vmul.f32 %v6105, 0.7978846
    %v6170 = vmul.f32 %v6106, 0.7978846
    %v6171 = vmul.f32 %v6107, 0.7978846
    %v6172 = vmul.f32 %v6108, 0.7978846
    %v6173 = vmul.f32 %v6109, 0.7978846
    %v6174 = vmul.f32 %v6110, 0.7978846
    %v6175 = vmul.f32 %v6111, 0.7978846
    %v6176 = vmul.f32 %v6112, 0.7978846
    %v6177 = vmul.f32 %v6113, 0.7978846
    %v6178 = vmul.f32 %v6114, 0.7978846
    %v6179 = vmul.f32 %v6115, 0.7978846
    %v6180 = vmul.f32 %v6116, 0.7978846
    %v6181 = vmul.f32 %v6117, 0.7978846
    %v6182 = vmul.f32 %v6118, 0.7978846
    %v6183 = vmul.f32 %v6119, 0.7978846
    %v6184 = vmul.f32 %v6120, 0.7978846
    %v6185 = vmul.f32 %v6121, 0.7978846
    %v6186 = vmul.f32 %v6122, 0.7978846
    %v6187 = vmul.f32 %v6123, 0.7978846
    %v6188 = vmul.f32 %v6124, 0.7978846
    %v6189 = vmul.f32 %v6125, 0.7978846
    %v6190 = vmul.f32 %v6126, 0.7978846
    %v6191 = vtanh.pop %v6127
    %v6192 = vtanh.pop %v6128
    %v6193 = vtanh.pop %v6129
    %v6194 = vtanh.pop %v6130
    %v6195 = vtanh.pop %v6131
    %v6196 = vtanh.pop %v6132
    %v6197 = vtanh.pop %v6133
    %v6198 = vtanh.pop %v6134
    %v6199 = vtanh.pop %v6135
    %v6200 = vtanh.pop %v6136
    %v6201 = vtanh.pop %v6137
    %v6202 = vtanh.pop %v6138
    %v6203 = vtanh.pop %v6139
    %v6204 = vtanh.pop %v6140
    %v6205 = vtanh.pop %v6141
    %v6206 = vtanh.pop %v6142
    %v6207 = vtanh.pop %v6143
    %v6208 = vtanh.pop %v6144
    %v6209 = vtanh.pop %v6145
    %v6210 = vtanh.pop %v6146
    %v6211 = vtanh.pop %v6147
    %v6212 = vtanh.pop %v6148
    %v6213 = vtanh.pop %v6149
    %v6214 = vtanh.pop %v6150
    %v6215 = vtanh.pop %v6151
    %v6216 = vtanh.pop %v6152
    %v6217 = vtanh.pop %v6153
    %v6218 = vtanh.pop %v6154
    %v6219 = vtanh.pop %v6155
    %v6220 = vtanh.pop %v6156
    %v6221 = vtanh.pop %v6157
    %v6222 = vtanh.pop %v6158
    %v6223 = vtanh.pop %v6159
    %v6224 = vtanh.pop %v6160
    %v6225 = vtanh.pop %v6161
    %v6226 = vtanh.pop %v6162
    %v6227 = vtanh.pop %v6163
    %v6228 = vtanh.pop %v6164
    %v6229 = vtanh.pop %v6165
    %v6230 = vtanh.pop %v6166
    %v6231 = vtanh.pop %v6167
    %v6232 = vtanh.pop %v6168
    %v6233 = vtanh.pop %v6169
    %v6234 = vtanh.pop %v6170
    %v6235 = vtanh.pop %v6171
    %v6236 = vtanh.pop %v6172
    %v6237 = vtanh.pop %v6173
    %v6238 = vtanh.pop %v6174
    %v6239 = vtanh.pop %v6175
    %v6240 = vtanh.pop %v6176
    %v6241 = vtanh.pop %v6177
    %v6242 = vtanh.pop %v6178
    %v6243 = vtanh.pop %v6179
    %v6244 = vtanh.pop %v6180
    %v6245 = vtanh.pop %v6181
    %v6246 = vtanh.pop %v6182
    %v6247 = vtanh.pop %v6183
    %v6248 = vtanh.pop %v6184
    %v6249 = vtanh.pop %v6185
    %v6250 = vtanh.pop %v6186
    %v6251 = vtanh.pop %v6187
    %v6252 = vtanh.pop %v6188
    %v6253 = vtanh.pop %v6189
    %v6254 = vtanh.pop %v6190
    %v6255 = vadd.f32 %v6191, 1.0
    %v6256 = vadd.f32 %v6192, 1.0
    %v6257 = vadd.f32 %v6193, 1.0
    %v6258 = vadd.f32 %v6194, 1.0
    %v6259 = vadd.f32 %v6195, 1.0
    %v6260 = vadd.f32 %v6196, 1.0
    %v6261 = vadd.f32 %v6197, 1.0
    %v6262 = vadd.f32 %v6198, 1.0
    %v6263 = vadd.f32 %v6199, 1.0
    %v6264 = vadd.f32 %v6200, 1.0
    %v6265 = vadd.f32 %v6201, 1.0
    %v6266 = vadd.f32 %v6202, 1.0
    %v6267 = vadd.f32 %v6203, 1.0
    %v6268 = vadd.f32 %v6204, 1.0
    %v6269 = vadd.f32 %v6205, 1.0
    %v6270 = vadd.f32 %v6206, 1.0
    %v6271 = vadd.f32 %v6207, 1.0
    %v6272 = vadd.f32 %v6208, 1.0
    %v6273 = vadd.f32 %v6209, 1.0
    %v6274 = vadd.f32 %v6210, 1.0
    %v6275 = vadd.f32 %v6211, 1.0
    %v6276 = vadd.f32 %v6212, 1.0
    %v6277 = vadd.f32 %v6213, 1.0
    %v6278 = vadd.f32 %v6214, 1.0
    %v6279 = vadd.f32 %v6215, 1.0
    %v6280 = vadd.f32 %v6216, 1.0
    %v6281 = vadd.f32 %v6217, 1.0
    %v6282 = vadd.f32 %v6218, 1.0
    %v6283 = vadd.f32 %v6219, 1.0
    %v6284 = vadd.f32 %v6220, 1.0
    %v6285 = vadd.f32 %v6221, 1.0
    %v6286 = vadd.f32 %v6222, 1.0
    %v6287 = vadd.f32 %v6223, 1.0
    %v6288 = vadd.f32 %v6224, 1.0
    %v6289 = vadd.f32 %v6225, 1.0
    %v6290 = vadd.f32 %v6226, 1.0
    %v6291 = vadd.f32 %v6227, 1.0
    %v6292 = vadd.f32 %v6228, 1.0
    %v6293 = vadd.f32 %v6229, 1.0
    %v6294 = vadd.f32 %v6230, 1.0
    %v6295 = vadd.f32 %v6231, 1.0
    %v6296 = vadd.f32 %v6232, 1.0
    %v6297 = vadd.f32 %v6233, 1.0
    %v6298 = vadd.f32 %v6234, 1.0
    %v6299 = vadd.f32 %v6235, 1.0
    %v6300 = vadd.f32 %v6236, 1.0
    %v6301 = vadd.f32 %v6237, 1.0
    %v6302 = vadd.f32 %v6238, 1.0
    %v6303 = vadd.f32 %v6239, 1.0
    %v6304 = vadd.f32 %v6240, 1.0
    %v6305 = vadd.f32 %v6241, 1.0
    %v6306 = vadd.f32 %v6242, 1.0
    %v6307 = vadd.f32 %v6243, 1.0
    %v6308 = vadd.f32 %v6244, 1.0
    %v6309 = vadd.f32 %v6245, 1.0
    %v6310 = vadd.f32 %v6246, 1.0
    %v6311 = vadd.f32 %v6247, 1.0
    %v6312 = vadd.f32 %v6248, 1.0
    %v6313 = vadd.f32 %v6249, 1.0
    %v6314 = vadd.f32 %v6250, 1.0
    %v6315 = vadd.f32 %v6251, 1.0
    %v6316 = vadd.f32 %v6252, 1.0
    %v6317 = vadd.f32 %v6253, 1.0
    %v6318 = vadd.f32 %v6254, 1.0
    %v6319 = vmul.f32 %v6255, 0.5
    %v6320 = vmul.f32 %v6256, 0.5
    %v6321 = vmul.f32 %v6257, 0.5
    %v6322 = vmul.f32 %v6258, 0.5
    %v6323 = vmul.f32 %v6259, 0.5
    %v6324 = vmul.f32 %v6260, 0.5
    %v6325 = vmul.f32 %v6261, 0.5
    %v6326 = vmul.f32 %v6262, 0.5
    %v6327 = vmul.f32 %v6263, 0.5
    %v6328 = vmul.f32 %v6264, 0.5
    %v6329 = vmul.f32 %v6265, 0.5
    %v6330 = vmul.f32 %v6266, 0.5
    %v6331 = vmul.f32 %v6267, 0.5
    %v6332 = vmul.f32 %v6268, 0.5
    %v6333 = vmul.f32 %v6269, 0.5
    %v6334 = vmul.f32 %v6270, 0.5
    %v6335 = vmul.f32 %v6271, 0.5
    %v6336 = vmul.f32 %v6272, 0.5
    %v6337 = vmul.f32 %v6273, 0.5
    %v6338 = vmul.f32 %v6274, 0.5
    %v6339 = vmul.f32 %v6275, 0.5
    %v6340 = vmul.f32 %v6276, 0.5
    %v6341 = vmul.f32 %v6277, 0.5
    %v6342 = vmul.f32 %v6278, 0.5
    %v6343 = vmul.f32 %v6279, 0.5
    %v6344 = vmul.f32 %v6280, 0.5
    %v6345 = vmul.f32 %v6281, 0.5
    %v6346 = vmul.f32 %v6282, 0.5
    %v6347 = vmul.f32 %v6283, 0.5
    %v6348 = vmul.f32 %v6284, 0.5
    %v6349 = vmul.f32 %v6285, 0.5
    %v6350 = vmul.f32 %v6286, 0.5
    %v6351 = vmul.f32 %v6287, 0.5
    %v6352 = vmul.f32 %v6288, 0.5
    %v6353 = vmul.f32 %v6289, 0.5
    %v6354 = vmul.f32 %v6290, 0.5
    %v6355 = vmul.f32 %v6291, 0.5
    %v6356 = vmul.f32 %v6292, 0.5
    %v6357 = vmul.f32 %v6293, 0.5
    %v6358 = vmul.f32 %v6294, 0.5
    %v6359 = vmul.f32 %v6295, 0.5
    %v6360 = vmul.f32 %v6296, 0.5
    %v6361 = vmul.f32 %v6297, 0.5
    %v6362 = vmul.f32 %v6298, 0.5
    %v6363 = vmul.f32 %v6299, 0.5
    %v6364 = vmul.f32 %v6300, 0.5
    %v6365 = vmul.f32 %v6301, 0.5
    %v6366 = vmul.f32 %v6302, 0.5
    %v6367 = vmul.f32 %v6303, 0.5
    %v6368 = vmul.f32 %v6304, 0.5
    %v6369 = vmul.f32 %v6305, 0.5
    %v6370 = vmul.f32 %v6306, 0.5
    %v6371 = vmul.f32 %v6307, 0.5
    %v6372 = vmul.f32 %v6308, 0.5
    %v6373 = vmul.f32 %v6309, 0.5
    %v6374 = vmul.f32 %v6310, 0.5
    %v6375 = vmul.f32 %v6311, 0.5
    %v6376 = vmul.f32 %v6312, 0.5
    %v6377 = vmul.f32 %v6313, 0.5
    %v6378 = vmul.f32 %v6314, 0.5
    %v6379 = vmul.f32 %v6315, 0.5
    %v6380 = vmul.f32 %v6316, 0.5
    %v6381 = vmul.f32 %v6317, 0.5
    %v6382 = vmul.f32 %v6318, 0.5
    %v6383 = vmul.f32 %v5616, %v6319
    %v6384 = vmul.f32 %v5618, %v6320
    %v6385 = vmul.f32 %v5777, %v6321
    %v6386 = vmul.f32 %v5779, %v6322
    %v6387 = vmul.f32 %v5622, %v6323
    %v6388 = vmul.f32 %v5624, %v6324
    %v6389 = vmul.f32 %v5783, %v6325
    %v6390 = vmul.f32 %v5785, %v6326
    %v6391 = vmul.f32 %v5628, %v6327
    %v6392 = vmul.f32 %v5630, %v6328
    %v6393 = vmul.f32 %v5789, %v6329
    %v6394 = vmul.f32 %v5791, %v6330
    %v6395 = vmul.f32 %v5634, %v6331
    %v6396 = vmul.f32 %v5636, %v6332
    %v6397 = vmul.f32 %v5795, %v6333
    %v6398 = vmul.f32 %v5797, %v6334
    %v6399 = vmul.f32 %v5640, %v6335
    %v6400 = vmul.f32 %v5642, %v6336
    %v6401 = vmul.f32 %v5801, %v6337
    %v6402 = vmul.f32 %v5803, %v6338
    %v6403 = vmul.f32 %v5646, %v6339
    %v6404 = vmul.f32 %v5648, %v6340
    %v6405 = vmul.f32 %v5807, %v6341
    %v6406 = vmul.f32 %v5809, %v6342
    %v6407 = vmul.f32 %v5652, %v6343
    %v6408 = vmul.f32 %v5654, %v6344
    %v6409 = vmul.f32 %v5813, %v6345
    %v6410 = vmul.f32 %v5815, %v6346
    %v6411 = vmul.f32 %v5658, %v6347
    %v6412 = vmul.f32 %v5660, %v6348
    %v6413 = vmul.f32 %v5819, %v6349
    %v6414 = vmul.f32 %v5821, %v6350
    %v6415 = vmul.f32 %v5664, %v6351
    %v6416 = vmul.f32 %v5666, %v6352
    %v6417 = vmul.f32 %v5825, %v6353
    %v6418 = vmul.f32 %v5827, %v6354
    %v6419 = vmul.f32 %v5670, %v6355
    %v6420 = vmul.f32 %v5672, %v6356
    %v6421 = vmul.f32 %v5831, %v6357
    %v6422 = vmul.f32 %v5833, %v6358
    %v6423 = vmul.f32 %v5676, %v6359
    %v6424 = vmul.f32 %v5678, %v6360
    %v6425 = vmul.f32 %v5837, %v6361
    %v6426 = vmul.f32 %v5839, %v6362
    %v6427 = vmul.f32 %v5682, %v6363
    %v6428 = vmul.f32 %v5684, %v6364
    %v6429 = vmul.f32 %v5843, %v6365
    %v6430 = vmul.f32 %v5845, %v6366
    %v6431 = vmul.f32 %v5688, %v6367
    %v6432 = vmul.f32 %v5690, %v6368
    %v6433 = vmul.f32 %v5849, %v6369
    %v6434 = vmul.f32 %v5851, %v6370
    %v6435 = vmul.f32 %v5694, %v6371
    %v6436 = vmul.f32 %v5696, %v6372
    %v6437 = vmul.f32 %v5855, %v6373
    %v6438 = vmul.f32 %v5857, %v6374
    %v6439 = vmul.f32 %v5700, %v6375
    %v6440 = vmul.f32 %v5702, %v6376
    %v6441 = vmul.f32 %v5861, %v6377
    %v6442 = vmul.f32 %v5863, %v6378
    %v6443 = vmul.f32 %v5706, %v6379
    %v6444 = vmul.f32 %v5708, %v6380
    %v6445 = vmul.f32 %v5867, %v6381
    %v6446 = vmul.f32 %v5869, %v6382
    %v6447 = vld [vmem:[#allocation17] sm:$0xff]
    %v6448 = vld [vmem:[#allocation17 + $0x8] sm:$0xff]
    %v6449 = vld [vmem:[#allocation17 + $0x10] sm:$0xff]
    %v6450 = vld [vmem:[#allocation17 + $0x18] sm:$0xff]
    %v6451 = vld [vmem:[#allocation17 + $0x20] sm:$0xff]
    %v6452 = vld [vmem:[#allocation17 + $0x28] sm:$0xff]
    %v6453 = vld [vmem:[#allocation17 + $0x30] sm:$0xff]
    %v6454 = vld [vmem:[#allocation17 + $0x38] sm:$0xff]
    %v6455 = vld [vmem:[#allocation17 + $0x40] sm:$0xff]
    %v6456 = vld [vmem:[#allocation17 + $0x48] sm:$0xff]
    %v6457 = vld [vmem:[#allocation17 + $0x50] sm:$0xff]
    %v6458 = vld [vmem:[#allocation17 + $0x58] sm:$0xff]
    %v6459 = vld [vmem:[#allocation17 + $0x60] sm:$0xff]
    %v6460 = vld [vmem:[#allocation17 + $0x68] sm:$0xff]
    %v6461 = vld [vmem:[#allocation17 + $0x70] sm:$0xff]
    %v6462 = vld [vmem:[#allocation17 + $0x78] sm:$0xff]
    %v6463 = vld [vmem:[#allocation17 + $0x80] sm:$0xff]
    %v6464 = vld [vmem:[#allocation17 + $0x88] sm:$0xff]
    %v6465 = vld [vmem:[#allocation17 + $0x90] sm:$0xff]
    %v6466 = vld [vmem:[#allocation17 + $0x98] sm:$0xff]
    %v6467 = vld [vmem:[#allocation17 + $0xa0] sm:$0xff]
    %v6468 = vld [vmem:[#allocation17 + $0xa8] sm:$0xff]
    %v6469 = vld [vmem:[#allocation17 + $0xb0] sm:$0xff]
    %v6470 = vld [vmem:[#allocation17 + $0xb8] sm:$0xff]
    %v6471 = vld [vmem:[#allocation17 + $0xc0] sm:$0xff]
    %v6472 = vld [vmem:[#allocation17 + $0xc8] sm:$0xff]
    %v6473 = vld [vmem:[#allocation17 + $0xd0] sm:$0xff]
    %v6474 = vld [vmem:[#allocation17 + $0xd8] sm:$0xff]
    %v6475 = vld [vmem:[#allocation17 + $0xe0] sm:$0xff]
    %v6476 = vld [vmem:[#allocation17 + $0xe8] sm:$0xff]
    %v6477 = vld [vmem:[#allocation17 + $0xf0] sm:$0xff]
    %v6478 = vld [vmem:[#allocation17 + $0xf8] sm:$0xff]
    %v6479 = vld [vmem:[#allocation17 + $0x100] sm:$0xff]
    %v6480 = vld [vmem:[#allocation17 + $0x108] sm:$0xff]
    %v6481 = vld [vmem:[#allocation17 + $0x110] sm:$0xff]
    %v6482 = vld [vmem:[#allocation17 + $0x118] sm:$0xff]
    %v6483 = vld [vmem:[#allocation17 + $0x120] sm:$0xff]
    %v6484 = vld [vmem:[#allocation17 + $0x128] sm:$0xff]
    %v6485 = vld [vmem:[#allocation17 + $0x130] sm:$0xff]
    %v6486 = vld [vmem:[#allocation17 + $0x138] sm:$0xff]
    %v6487 = vld [vmem:[#allocation17 + $0x140] sm:$0xff]
    %v6488 = vld [vmem:[#allocation17 + $0x148] sm:$0xff]
    %v6489 = vld [vmem:[#allocation17 + $0x150] sm:$0xff]
    %v6490 = vld [vmem:[#allocation17 + $0x158] sm:$0xff]
    %v6491 = vld [vmem:[#allocation17 + $0x160] sm:$0xff]
    %v6492 = vld [vmem:[#allocation17 + $0x168] sm:$0xff]
    %v6493 = vld [vmem:[#allocation17 + $0x170] sm:$0xff]
    %v6494 = vld [vmem:[#allocation17 + $0x178] sm:$0xff]
    %v6495 = vld [vmem:[#allocation17 + $0x180] sm:$0xff]
    %v6496 = vld [vmem:[#allocation17 + $0x188] sm:$0xff]
    %v6497 = vld [vmem:[#allocation17 + $0x190] sm:$0xff]
    %v6498 = vld [vmem:[#allocation17 + $0x198] sm:$0xff]
    %v6499 = vld [vmem:[#allocation17 + $0x1a0] sm:$0xff]
    %v6500 = vld [vmem:[#allocation17 + $0x1a8] sm:$0xff]
    %v6501 = vld [vmem:[#allocation17 + $0x1b0] sm:$0xff]
    %v6502 = vld [vmem:[#allocation17 + $0x1b8] sm:$0xff]
    %v6503 = vld [vmem:[#allocation17 + $0x1c0] sm:$0xff]
    %v6504 = vld [vmem:[#allocation17 + $0x1c8] sm:$0xff]
    %v6505 = vld [vmem:[#allocation17 + $0x1d0] sm:$0xff]
    %v6506 = vld [vmem:[#allocation17 + $0x1d8] sm:$0xff]
    %v6507 = vld [vmem:[#allocation17 + $0x1e0] sm:$0xff]
    %v6508 = vld [vmem:[#allocation17 + $0x1e8] sm:$0xff]
    %v6509 = vld [vmem:[#allocation17 + $0x1f0] sm:$0xff]
    %v6510 = vld [vmem:[#allocation17 + $0x1f8] sm:$0xff]
    %v6511 = vld [vmem:[%s14] sm:$0x1]
    %v6513 = vlaneseq
    %v6514 = vshrl.u32 %v6513, 7
    %v6515 = vsub.s32 0, %v6514
    %v6516 = vrot.slane %v6511, %v6515
    %6518 = vmatprep.subr.mxu0 0.0
    %6519 = vmatpush1.msra.mxu0 %v6462
    %6520 = vmatprep.subr.mxu0 0.0
    %6521 = vmatpush1.msra.mxu0 %v6461
    %6522 = vmatprep.subr.mxu0 0.0
    %6523 = vmatpush1.msra.mxu0 %v6460
    %6524 = vmatprep.subr.mxu0 0.0
    %6525 = vmatpush1.msra.mxu0 %v6459
    %6526 = vmatprep.subr.mxu0 0.0
    %6527 = vmatpush1.msra.mxu0 %v6458
    %6528 = vmatprep.subr.mxu0 0.0
    %6529 = vmatpush1.msra.mxu0 %v6457
    %6530 = vmatprep.subr.mxu0 0.0
    %6531 = vmatpush1.msra.mxu0 %v6456
    %6532 = vmatprep.subr.mxu0 0.0
    %6533 = vmatpush1.msra.mxu0 %v6455
    %6534 = vmatprep.subr.mxu0 0.0
    %6535 = vmatpush1.msra.mxu0 %v6454
    %6536 = vmatprep.subr.mxu0 0.0
    %6537 = vmatpush1.msra.mxu0 %v6453
    %6538 = vmatprep.subr.mxu0 0.0
    %6539 = vmatpush1.msra.mxu0 %v6452
    %6540 = vmatprep.subr.mxu0 0.0
    %6541 = vmatpush1.msra.mxu0 %v6451
    %6542 = vmatprep.subr.mxu0 0.0
    %6543 = vmatpush1.msra.mxu0 %v6450
    %6544 = vmatprep.subr.mxu0 0.0
    %6545 = vmatpush1.msra.mxu0 %v6449
    %6546 = vmatprep.subr.mxu0 0.0
    %6547 = vmatpush1.msra.mxu0 %v6448
    %6548 = vmatprep.subr.mxu0 0.0
    %6549 = vmatpush1.msra.mxu0 %v6447
    %6550 = vmatprep.subr.mxu0 0.0
    %6551 = vmatpush2.msra.mxu0 %v6478
    %6552 = vmatprep.subr.mxu0 0.0
    %6553 = vmatpush2.msra.mxu0 %v6477
    %6554 = vmatprep.subr.mxu0 0.0
    %6555 = vmatpush2.msra.mxu0 %v6476
    %6556 = vmatprep.subr.mxu0 0.0
    %6557 = vmatpush2.msra.mxu0 %v6475
    %6558 = vmatprep.subr.mxu0 0.0
    %6559 = vmatpush2.msra.mxu0 %v6474
    %6560 = vmatprep.subr.mxu0 0.0
    %6561 = vmatpush2.msra.mxu0 %v6473
    %6562 = vmatprep.subr.mxu0 0.0
    %6563 = vmatpush2.msra.mxu0 %v6472
    %6564 = vmatprep.subr.mxu0 0.0
    %6565 = vmatpush2.msra.mxu0 %v6471
    %6566 = vmatprep.subr.mxu0 0.0
    %6567 = vmatpush2.msra.mxu0 %v6470
    %6568 = vmatprep.subr.mxu0 0.0
    %6569 = vmatpush2.msra.mxu0 %v6469
    %6570 = vmatprep.subr.mxu0 0.0
    %6571 = vmatpush2.msra.mxu0 %v6468
    %6572 = vmatprep.subr.mxu0 0.0
    %6573 = vmatpush2.msra.mxu0 %v6467
    %6574 = vmatprep.subr.mxu0 0.0
    %6575 = vmatpush2.msra.mxu0 %v6466
    %6576 = vmatprep.subr.mxu0 0.0
    %6577 = vmatpush2.msra.mxu0 %v6465
    %6578 = vmatprep.subr.mxu0 0.0
    %6579 = vmatpush2.msra.mxu0 %v6464
    %6580 = vmatprep.subr.mxu0 0.0
    %6581 = vmatpush2.msra.mxu0 %v6463
    %6582 = vmatprep.mubr.f32.mxu0 %v6384
    %6583 = vmatmul.mubr.f32.gmra.mxu0 %v6383
    %v6584 = vpop.f32.mrf.mxu0
    %v6585 = vadd.f32 %v6516, %v6584
    %v6586 = vpop.f32.mrf.mxu0
    %6587 = vmatprep.mubr.f32.mxu0 %v6388
    %6588 = vmatmul.mubr.f32.gmra.mxu0 %v6387
    %v6589 = vpop.f32.mrf.mxu0
    %v6590 = vadd.f32 %v6516, %v6589
    %v6591 = vpop.f32.mrf.mxu0
    %6592 = vmatprep.mubr.f32.mxu0 %v6392
    %6593 = vmatmul.mubr.f32.gmra.mxu0 %v6391
    %v6594 = vpop.f32.mrf.mxu0
    %v6595 = vadd.f32 %v6516, %v6594
    %v6596 = vpop.f32.mrf.mxu0
    %6597 = vmatprep.mubr.f32.mxu0 %v6396
    %6598 = vmatmul.mubr.f32.gmra.mxu0 %v6395
    %v6599 = vpop.f32.mrf.mxu0
    %v6600 = vadd.f32 %v6516, %v6599
    %v6601 = vpop.f32.mrf.mxu0
    %6602 = vmatprep.mubr.f32.mxu0 %v6400
    %6603 = vmatmul.mubr.f32.gmra.mxu0 %v6399
    %v6604 = vpop.f32.mrf.mxu0
    %v6605 = vadd.f32 %v6516, %v6604
    %v6606 = vpop.f32.mrf.mxu0
    %6607 = vmatprep.mubr.f32.mxu0 %v6404
    %6608 = vmatmul.mubr.f32.gmra.mxu0 %v6403
    %v6609 = vpop.f32.mrf.mxu0
    %v6610 = vadd.f32 %v6516, %v6609
    %v6611 = vpop.f32.mrf.mxu0
    %6612 = vmatprep.mubr.f32.mxu0 %v6408
    %6613 = vmatmul.mubr.f32.gmra.mxu0 %v6407
    %v6614 = vpop.f32.mrf.mxu0
    %v6615 = vadd.f32 %v6516, %v6614
    %v6616 = vpop.f32.mrf.mxu0
    %6617 = vmatprep.mubr.f32.mxu0 %v6412
    %6618 = vmatmul.mubr.f32.gmra.mxu0 %v6411
    %v6619 = vpop.f32.mrf.mxu0
    %v6620 = vadd.f32 %v6516, %v6619
    %v6621 = vpop.f32.mrf.mxu0
    %6622 = vmatprep.mubr.f32.mxu0 %v6416
    %6623 = vmatmul.mubr.f32.gmra.mxu0 %v6415
    %v6624 = vpop.f32.mrf.mxu0
    %v6625 = vadd.f32 %v6516, %v6624
    %v6626 = vpop.f32.mrf.mxu0
    %6627 = vmatprep.mubr.f32.mxu0 %v6420
    %6628 = vmatmul.mubr.f32.gmra.mxu0 %v6419
    %v6629 = vpop.f32.mrf.mxu0
    %v6630 = vadd.f32 %v6516, %v6629
    %v6631 = vpop.f32.mrf.mxu0
    %6632 = vmatprep.mubr.f32.mxu0 %v6424
    %6633 = vmatmul.mubr.f32.gmra.mxu0 %v6423
    %v6634 = vpop.f32.mrf.mxu0
    %v6635 = vadd.f32 %v6516, %v6634
    %v6636 = vpop.f32.mrf.mxu0
    %6637 = vmatprep.mubr.f32.mxu0 %v6428
    %6638 = vmatmul.mubr.f32.gmra.mxu0 %v6427
    %v6639 = vpop.f32.mrf.mxu0
    %v6640 = vadd.f32 %v6516, %v6639
    %v6641 = vpop.f32.mrf.mxu0
    %6642 = vmatprep.mubr.f32.mxu0 %v6432
    %6643 = vmatmul.mubr.f32.gmra.mxu0 %v6431
    %v6644 = vpop.f32.mrf.mxu0
    %v6645 = vadd.f32 %v6516, %v6644
    %v6646 = vpop.f32.mrf.mxu0
    %6647 = vmatprep.mubr.f32.mxu0 %v6436
    %6648 = vmatmul.mubr.f32.gmra.mxu0 %v6435
    %v6649 = vpop.f32.mrf.mxu0
    %v6650 = vadd.f32 %v6516, %v6649
    %v6651 = vpop.f32.mrf.mxu0
    %6652 = vmatprep.mubr.f32.mxu0 %v6440
    %6653 = vmatmul.mubr.f32.gmra.mxu0 %v6439
    %v6654 = vpop.f32.mrf.mxu0
    %v6655 = vadd.f32 %v6516, %v6654
    %v6656 = vpop.f32.mrf.mxu0
    %6657 = vmatprep.mubr.f32.mxu0 %v6444
    %6658 = vmatmul.mubr.f32.gmra.mxu0 %v6443
    %v6659 = vpop.f32.mrf.mxu0
    %v6660 = vadd.f32 %v6516, %v6659
    %v6661 = vpop.f32.mrf.mxu0
    %6662 = vdwg.mxu0
    %6663 = vmatprep.subr.mxu0 0.0
    %6664 = vmatpush1.msra.mxu0 %v6494
    %6665 = vmatprep.subr.mxu0 0.0
    %6666 = vmatpush1.msra.mxu0 %v6493
    %6667 = vmatprep.subr.mxu0 0.0
    %6668 = vmatpush1.msra.mxu0 %v6492
    %6669 = vmatprep.subr.mxu0 0.0
    %6670 = vmatpush1.msra.mxu0 %v6491
    %6671 = vmatprep.subr.mxu0 0.0
    %6672 = vmatpush1.msra.mxu0 %v6490
    %6673 = vmatprep.subr.mxu0 0.0
    %6674 = vmatpush1.msra.mxu0 %v6489
    %6675 = vmatprep.subr.mxu0 0.0
    %6676 = vmatpush1.msra.mxu0 %v6488
    %6677 = vmatprep.subr.mxu0 0.0
    %6678 = vmatpush1.msra.mxu0 %v6487
    %6679 = vmatprep.subr.mxu0 0.0
    %6680 = vmatpush1.msra.mxu0 %v6486
    %6681 = vmatprep.subr.mxu0 0.0
    %6682 = vmatpush1.msra.mxu0 %v6485
    %6683 = vmatprep.subr.mxu0 0.0
    %6684 = vmatpush1.msra.mxu0 %v6484
    %6685 = vmatprep.subr.mxu0 0.0
    %6686 = vmatpush1.msra.mxu0 %v6483
    %6687 = vmatprep.subr.mxu0 0.0
    %6688 = vmatpush1.msra.mxu0 %v6482
    %6689 = vmatprep.subr.mxu0 0.0
    %6690 = vmatpush1.msra.mxu0 %v6481
    %6691 = vmatprep.subr.mxu0 0.0
    %6692 = vmatpush1.msra.mxu0 %v6480
    %6693 = vmatprep.subr.mxu0 0.0
    %6694 = vmatpush1.msra.mxu0 %v6479
    %6695 = vmatprep.subr.mxu0 0.0
    %6696 = vmatpush2.msra.mxu0 %v6510
    %6697 = vmatprep.subr.mxu0 0.0
    %6698 = vmatpush2.msra.mxu0 %v6509
    %6699 = vmatprep.subr.mxu0 0.0
    %6700 = vmatpush2.msra.mxu0 %v6508
    %6701 = vmatprep.subr.mxu0 0.0
    %6702 = vmatpush2.msra.mxu0 %v6507
    %6703 = vmatprep.subr.mxu0 0.0
    %6704 = vmatpush2.msra.mxu0 %v6506
    %6705 = vmatprep.subr.mxu0 0.0
    %6706 = vmatpush2.msra.mxu0 %v6505
    %6707 = vmatprep.subr.mxu0 0.0
    %6708 = vmatpush2.msra.mxu0 %v6504
    %6709 = vmatprep.subr.mxu0 0.0
    %6710 = vmatpush2.msra.mxu0 %v6503
    %6711 = vmatprep.subr.mxu0 0.0
    %6712 = vmatpush2.msra.mxu0 %v6502
    %6713 = vmatprep.subr.mxu0 0.0
    %6714 = vmatpush2.msra.mxu0 %v6501
    %6715 = vmatprep.subr.mxu0 0.0
    %6716 = vmatpush2.msra.mxu0 %v6500
    %6717 = vmatprep.subr.mxu0 0.0
    %6718 = vmatpush2.msra.mxu0 %v6499
    %6719 = vmatprep.subr.mxu0 0.0
    %6720 = vmatpush2.msra.mxu0 %v6498
    %6721 = vmatprep.subr.mxu0 0.0
    %6722 = vmatpush2.msra.mxu0 %v6497
    %6723 = vmatprep.subr.mxu0 0.0
    %6724 = vmatpush2.msra.mxu0 %v6496
    %6725 = vmatprep.subr.mxu0 0.0
    %6726 = vmatpush2.msra.mxu0 %v6495
    %6727 = vmatprep.mubr.f32.mxu0 %v6386
    %6728 = vmatmul.mubr.f32.gmra.mxu0 %v6385
    %v6729 = vpop.f32.mrf.mxu0
    %v6730 = vadd.f32 %v6585, %v6729
    %v6731 = vpop.f32.mrf.mxu0
    %6732 = vmatprep.mubr.f32.mxu0 %v6390
    %6733 = vmatmul.mubr.f32.gmra.mxu0 %v6389
    %v6734 = vpop.f32.mrf.mxu0
    %v6735 = vadd.f32 %v6590, %v6734
    %v6736 = vpop.f32.mrf.mxu0
    %6737 = vmatprep.mubr.f32.mxu0 %v6394
    %6738 = vmatmul.mubr.f32.gmra.mxu0 %v6393
    %v6739 = vpop.f32.mrf.mxu0
    %v6740 = vadd.f32 %v6595, %v6739
    %v6741 = vpop.f32.mrf.mxu0
    %6742 = vmatprep.mubr.f32.mxu0 %v6398
    %6743 = vmatmul.mubr.f32.gmra.mxu0 %v6397
    %v6744 = vpop.f32.mrf.mxu0
    %v6745 = vadd.f32 %v6600, %v6744
    %v6746 = vpop.f32.mrf.mxu0
    %6747 = vmatprep.mubr.f32.mxu0 %v6402
    %6748 = vmatmul.mubr.f32.gmra.mxu0 %v6401
    %v6749 = vpop.f32.mrf.mxu0
    %v6750 = vadd.f32 %v6605, %v6749
    %v6751 = vpop.f32.mrf.mxu0
    %6752 = vmatprep.mubr.f32.mxu0 %v6406
    %6753 = vmatmul.mubr.f32.gmra.mxu0 %v6405
    %v6754 = vpop.f32.mrf.mxu0
    %v6755 = vadd.f32 %v6610, %v6754
    %v6756 = vpop.f32.mrf.mxu0
    %6757 = vmatprep.mubr.f32.mxu0 %v6410
    %6758 = vmatmul.mubr.f32.gmra.mxu0 %v6409
    %v6759 = vpop.f32.mrf.mxu0
    %v6760 = vadd.f32 %v6615, %v6759
    %v6761 = vpop.f32.mrf.mxu0
    %6762 = vmatprep.mubr.f32.mxu0 %v6414
    %6763 = vmatmul.mubr.f32.gmra.mxu0 %v6413
    %v6764 = vpop.f32.mrf.mxu0
    %v6765 = vadd.f32 %v6620, %v6764
    %v6766 = vpop.f32.mrf.mxu0
    %6767 = vmatprep.mubr.f32.mxu0 %v6418
    %6768 = vmatmul.mubr.f32.gmra.mxu0 %v6417
    %v6769 = vpop.f32.mrf.mxu0
    %v6770 = vadd.f32 %v6625, %v6769
    %v6771 = vpop.f32.mrf.mxu0
    %6772 = vmatprep.mubr.f32.mxu0 %v6422
    %6773 = vmatmul.mubr.f32.gmra.mxu0 %v6421
    %v6774 = vpop.f32.mrf.mxu0
    %v6775 = vadd.f32 %v6630, %v6774
    %v6776 = vpop.f32.mrf.mxu0
    %6777 = vmatprep.mubr.f32.mxu0 %v6426
    %6778 = vmatmul.mubr.f32.gmra.mxu0 %v6425
    %v6779 = vpop.f32.mrf.mxu0
    %v6780 = vadd.f32 %v6635, %v6779
    %v6781 = vpop.f32.mrf.mxu0
    %6782 = vmatprep.mubr.f32.mxu0 %v6430
    %6783 = vmatmul.mubr.f32.gmra.mxu0 %v6429
    %v6784 = vpop.f32.mrf.mxu0
    %v6785 = vadd.f32 %v6640, %v6784
    %v6786 = vpop.f32.mrf.mxu0
    %6787 = vmatprep.mubr.f32.mxu0 %v6434
    %6788 = vmatmul.mubr.f32.gmra.mxu0 %v6433
    %v6789 = vpop.f32.mrf.mxu0
    %v6790 = vadd.f32 %v6645, %v6789
    %v6791 = vpop.f32.mrf.mxu0
    %6792 = vmatprep.mubr.f32.mxu0 %v6438
    %6793 = vmatmul.mubr.f32.gmra.mxu0 %v6437
    %v6794 = vpop.f32.mrf.mxu0
    %v6795 = vadd.f32 %v6650, %v6794
    %v6796 = vpop.f32.mrf.mxu0
    %6797 = vmatprep.mubr.f32.mxu0 %v6442
    %6798 = vmatmul.mubr.f32.gmra.mxu0 %v6441
    %v6799 = vpop.f32.mrf.mxu0
    %v6800 = vadd.f32 %v6655, %v6799
    %v6801 = vpop.f32.mrf.mxu0
    %6802 = vmatprep.mubr.f32.mxu0 %v6446
    %6803 = vmatmul.mubr.f32.gmra.mxu0 %v6445
    %v6804 = vpop.f32.mrf.mxu0
    %v6805 = vadd.f32 %v6660, %v6804
    %v6806 = vpop.f32.mrf.mxu0
    %6807 = vdwg.mxu0
    %v6808 = vadd.f32 %v5225, %v6730
    %v6809 = vadd.f32 %v5226, %v6735
    %v6810 = vadd.f32 %v5227, %v6740
    %v6811 = vadd.f32 %v5228, %v6745
    %v6812 = vadd.f32 %v5229, %v6750
    %v6813 = vadd.f32 %v5230, %v6755
    %v6814 = vadd.f32 %v5231, %v6760
    %v6815 = vadd.f32 %v5232, %v6765
    %v6816 = vadd.f32 %v5233, %v6770
    %v6817 = vadd.f32 %v5234, %v6775
    %v6818 = vadd.f32 %v5235, %v6780
    %v6819 = vadd.f32 %v5236, %v6785
    %v6820 = vadd.f32 %v5237, %v6790
    %v6821 = vadd.f32 %v5238, %v6795
    %v6822 = vadd.f32 %v5239, %v6800
    %v6823 = vadd.f32 %v5240, %v6805
    %6824 = vst [vmem:[#allocation18] sm:$0xff] %v6808
    %6825 = vst [vmem:[#allocation18 + $0x8] sm:$0xff] %v6809
    %6826 = vst [vmem:[#allocation18 + $0x10] sm:$0xff] %v6810
    %6827 = vst [vmem:[#allocation18 + $0x18] sm:$0xff] %v6811
    %6828 = vst [vmem:[#allocation18 + $0x20] sm:$0xff] %v6812
    %6829 = vst [vmem:[#allocation18 + $0x28] sm:$0xff] %v6813
    %6830 = vst [vmem:[#allocation18 + $0x30] sm:$0xff] %v6814
    %6831 = vst [vmem:[#allocation18 + $0x38] sm:$0xff] %v6815
    %6832 = vst [vmem:[#allocation18 + $0x40] sm:$0xff] %v6816
    %6833 = vst [vmem:[#allocation18 + $0x48] sm:$0xff] %v6817
    %6834 = vst [vmem:[#allocation18 + $0x50] sm:$0xff] %v6818
    %6835 = vst [vmem:[#allocation18 + $0x58] sm:$0xff] %v6819
    %6836 = vst [vmem:[#allocation18 + $0x60] sm:$0xff] %v6820
    %6837 = vst [vmem:[#allocation18 + $0x68] sm:$0xff] %v6821
    %6838 = vst [vmem:[#allocation18 + $0x70] sm:$0xff] %v6822
    %6839 = vst [vmem:[#allocation18 + $0x78] sm:$0xff] %v6823
    // Predicated region
    $region98: #{tpu_custom_call.1} parent=1 // pred_check
      _
    $region99: #{tpu_custom_call.1} parent=1 // pred_check_branch
      %6841 = sbr.rel (0) target = $region101
    $region100: #{tpu_custom_call.1} parent=1 // pred_region
      %s6843 = ssub.s32 2048, 2048
      %6844 = vsyncadd [#allocation5], %s6843
      %s6845 = sshll.u32 [#allocation18], 4
      %s6846 = int_to_ptr.vmem [resolvable:$true] %s6845
      %6851 = dma.vmem_to_hbm [thread:$0]  %s6846, 2048, %s15, [#allocation5], 128, 128, 8
    $region101: #{tpu_custom_call.1} parent=1 // pred_fallthru
      _
    // Predicated region
    $region102: #{tpu_custom_call.1} parent=1 // pred_check
      _
    $region103: #{tpu_custom_call.1} parent=1 // pred_check_branch
      %6853 = sbr.rel (0) target = $region105
    $region104: #{tpu_custom_call.1} parent=1 // pred_region
      %6854 = dma.done [#allocation5], 2048
    $region105: #{tpu_custom_call.1} parent=1 // pred_fallthru
      _
    %6855 = vsyncpa [#allocation4], 1
    %6856 = vsyncpa [#allocation7], 1
    %6857 = vsyncpa [#allocation10], 1
    %6858 = vsyncpa [#allocation13], 1
    %6859 = vsyncpa [#allocation16], 1
    %6860 = vsyncpa [#allocation5], 1

</llo_original>
